<compile_context>
chip_gen: v6e
topology: v6e:2x2x1
jax: 0.10.0
libtpu: 0.0.40
codegen_flags: <defaults>
</compile_context>

<pallas_src>
import functools

import numpy as np
import jax
import jax.numpy as jnp
from jax.experimental import pallas as pl
from jax.experimental.pallas import tpu as pltpu

# ----------------------------- configuration ------------------------------- #
SIZES = (1, 2, 3, 6)   # PSP pyramid sizes
C5 = 32                # backbone stage-5 channels (2048 in the original)
C4 = 24                # backbone stage-4 channels (1024 in the original)
OUTF = 16              # PSP out_features / dsn mid channels (512 in the original)
NUM_CLASSES = 5
BN_EPS = 1e-5


# --------------------------- host-side helpers ----------------------------- #
def adaptive_pool_matrix(length, size):
    """P such that pooled = P @ x replicates nn.AdaptiveAvgPool (1-D factor)."""
    P = np.zeros((size, length), dtype=np.float32)
    for i in range(size):
        start = (i * length) // size
        end = -((-(i + 1) * length) // size)  # ceil((i+1)*L/size)
        P[i, start:end] = 1.0 / (end - start)
    return P


def bilinear_matrix(out_len, in_len):
    """A such that up = A @ x replicates bilinear upsample, align_corners=True."""
    A = np.zeros((out_len, in_len), dtype=np.float32)
    if in_len == 1:
        A[:, 0] = 1.0
        return A
    if out_len == 1:
        A[0, 0] = 1.0
        return A
    scale = (in_len - 1) / (out_len - 1)
    for y in range(out_len):
        src = y * scale
        i0 = min(int(np.floor(src)), in_len - 1)
        i1 = min(i0 + 1, in_len - 1)
        f = src - i0
        A[y, i0] += 1.0 - f
        A[y, i1] += f
    return A


def fold_bn(bn, conv_bias=None):
    """Fold (optional conv bias +) eval-mode BatchNorm into per-channel scale/shift."""
    s = bn["gamma"] / jnp.sqrt(bn["var"] + BN_EPS)
    b = conv_bias if conv_bias is not None else jnp.zeros_like(bn["mean"])
    shift = (b - bn["mean"]) * s + bn["beta"]
    return s, shift


# ------------------------------ Pallas kernels ------------------------------ #
def _pyramid_kernel(x_ref, w_ref, up_ref, o_ref):
    """prior[s, n] = UP_s @ (X_n @ W_s); grid = (num_sizes, batch)."""
    y = jnp.dot(x_ref[0], w_ref[0], preferred_element_type=jnp.float32)
    o_ref[0] = jnp.dot(up_ref[0], y.astype(jnp.bfloat16),
                       preferred_element_type=jnp.float32).astype(o_ref.dtype)


def pyramid_priors(feats_flat, w_stack, up_stack):
    """All PSP stages (adaptive pool -> 1x1 conv -> bilinear upsample) in one call.

    feats_flat : (N, HW, C)   bf16
    w_stack    : (S, C, F)    bf16  stacked 1x1 stage-conv weights
    up_stack   : (S, HW, HW)  bf16  UP_s = U_s @ P_s
    returns    : (S, N, HW, F) bf16
    """
    N, HW, C = feats_flat.shape
    S, _, F = w_stack.shape
    flops = 2 * S * N * (HW * C * F + HW * HW * F)
    bytes_accessed = (S * N * HW * C * 2 + S * C * F * 2
                      + S * HW * HW * 2 + S * N * HW * F * 2)
    out = pl.pallas_call(
        _pyramid_kernel,
        out_shape=jax.ShapeDtypeStruct((S * N, HW, F), jnp.bfloat16),
        grid=(S, N),
        in_specs=[
            pl.BlockSpec((1, HW, C), lambda s, n: (n, 0, 0)),
            pl.BlockSpec((1, C, F), lambda s, n: (s, 0, 0)),
            pl.BlockSpec((1, HW, HW), lambda s, n: (s, 0, 0)),
        ],
        out_specs=pl.BlockSpec((1, HW, F), lambda s, n: (s * N + n, 0, 0)),
        compiler_params=pltpu.CompilerParams(
            dimension_semantics=("parallel", "parallel")),
        cost_estimate=pl.CostEstimate(flops=flops, transcendentals=0,
                                      bytes_accessed=bytes_accessed),
    )(feats_flat, w_stack, up_stack)
    return out.reshape(S, N, HW, F)


def _conv3x3_kernel(x_ref, w_ref, m_ref, b_ref, o_ref, *, H, W):
    """Folded 3x3 conv + bias for one image (9 shifted-window matmuls).

    x_ref : (1, (H+2)*W + 2, Cin) bf16  H-padded, spatially flattened image with one
                                        guard row of zeros at each end.
    w_ref : (9, Cin, Cout) bf16         per-tap folded weights (tap = ky*3 + kx).
    m_ref : (2, H*W, 1)    bf16         edge masks: [0] kills w==0, [1] kills w==W-1.
    b_ref : (1, Cout)      f32          folded bias.
    o_ref : (1, H*W, Cout) f32
    """
    HW = H * W
    cout = w_ref.shape[-1]
    acc = jnp.zeros((HW, cout), jnp.float32)
    for ky in range(3):
        for kx in range(3):
            # window[f] = x_flat[f + ky*W + kx]  ==  x_padded[h + ky - 1, w + kx - 1]
            win = x_ref[0, pl.ds(ky * W + kx, HW), :]
            if kx == 0:          # left tap wraps onto previous row at w == 0
                win = win * m_ref[0]
            elif kx == 2:        # right tap wraps onto next row at w == W-1
                win = win * m_ref[1]
            acc = acc + jnp.dot(win, w_ref[3 * ky + kx],
                                preferred_element_type=jnp.float32)
    o_ref[0] = (acc + b_ref[...]).astype(o_ref.dtype)


def conv3x3_bias(x_nhwc, w_taps, bias):
    """y = conv3x3(x, w) + bias  (stride 1, padding 1); NHWC in, NHWC out."""
    N, H, W, Cin = x_nhwc.shape
    Cout = w_taps.shape[-1]
    HW = H * W
    L = (H + 2) * W + 2

    # Pad H by 1, flatten spatial, add one guard row front/back so every tap's shifted
    # window is a contiguous (HW, Cin) slice of the flattened image (no im2col in HBM).
    xp = jnp.pad(x_nhwc.astype(jnp.bfloat16), ((0, 0), (1, 1), (0, 0), (0, 0)))
    xp = xp.reshape(N, (H + 2) * W, Cin)
    xp = jnp.pad(xp, ((0, 0), (1, 1), (0, 0)))

    wcol = np.arange(HW) % W
    masks = np.stack([wcol != 0, wcol != W - 1]).astype(np.float32)
    masks = jnp.asarray(masks.reshape(2, HW, 1), dtype=jnp.bfloat16)

    flops = 2 * N * HW * 9 * Cin * Cout
    bytes_accessed = (N * L * Cin * 2 + 9 * Cin * Cout * 2 + 2 * HW * 2
                      + Cout * 4 + N * HW * Cout * 4)
    out = pl.pallas_call(
        functools.partial(_conv3x3_kernel, H=H, W=W),
        out_shape=jax.ShapeDtypeStruct((N, HW, Cout), jnp.float32),
        grid=(N,),
        in_specs=[
            pl.BlockSpec((1, L, Cin), lambda n: (n, 0, 0)),
            pl.BlockSpec((9, Cin, Cout), lambda n: (0, 0, 0)),
            pl.BlockSpec((2, HW, 1), lambda n: (0, 0, 0)),
            pl.BlockSpec((1, Cout), lambda n: (0, 0)),
        ],
        out_specs=pl.BlockSpec((1, HW, Cout), lambda n: (n, 0, 0)),
        compiler_params=pltpu.CompilerParams(dimension_semantics=("parallel",)),
        cost_estimate=pl.CostEstimate(flops=flops, transcendentals=0,
                                      bytes_accessed=bytes_accessed),
    )(xp, w_taps.astype(jnp.bfloat16), masks,
      bias.astype(jnp.float32).reshape(1, Cout))
    return out.reshape(N, H, W, Cout)


# ------------------------------- parameters -------------------------------- #
def _bn_params(key, c):
    k1, k2, k3, k4 = jax.random.split(key, 4)
    return dict(gamma=1.0 + 0.1 * jax.random.normal(k1, (c,), jnp.float32),
                beta=0.1 * jax.random.normal(k2, (c,), jnp.float32),
                mean=0.1 * jax.random.normal(k3, (c,), jnp.float32),
                var=0.5 + jax.random.uniform(k4, (c,), jnp.float32))


def init_params(key):
    ks = jax.random.split(key, 16)
    cat_c = C5 + len(SIZES) * OUTF
    p = {}
    # PSPModule: one 1x1 conv (no bias) per pyramid size       (C5 -> OUTF)
    p["stage_w"] = [0.02 * jax.random.normal(ks[i], (C5, OUTF), jnp.float32)
                    for i in range(len(SIZES))]
    # PSPModule bottleneck: 3x3 conv (no bias, HWIO) + BN + Dropout
    p["bottleneck_w"] = 0.02 * jax.random.normal(ks[4], (3, 3, cat_c, OUTF), jnp.float32)
    p["bottleneck_bn"] = _bn_params(ks[5], OUTF)
    # head final 1x1 conv (OUTF -> num_classes, with bias)
    p["head_w"] = 0.02 * jax.random.normal(ks[6], (OUTF, NUM_CLASSES), jnp.float32)
    p["head_b"] = 0.02 * jax.random.normal(ks[7], (NUM_CLASSES,), jnp.float32)
    # dsn: 3x3 conv (C4 -> OUTF, bias) + BN + Dropout + 1x1 conv (OUTF -> ncls, bias)
    p["dsn_w1"] = 0.02 * jax.random.normal(ks[8], (3, 3, C4, OUTF), jnp.float32)
    p["dsn_b1"] = 0.02 * jax.random.normal(ks[9], (OUTF,), jnp.float32)
    p["dsn_bn"] = _bn_params(ks[10], OUTF)
    p["dsn_w2"] = 0.02 * jax.random.normal(ks[11], (OUTF, NUM_CLASSES), jnp.float32)
    p["dsn_b2"] = 0.02 * jax.random.normal(ks[12], (NUM_CLASSES,), jnp.float32)
    return p


# -------------------------------- forward ---------------------------------- #
def psp_head_forward(p, feats_nhwc):
    """PSPModule(C5, OUTF) followed by Conv2d(OUTF, num_classes, 1), fused."""
    N, H, W, C = feats_nhwc.shape
    HW = H * W
    S = len(SIZES)

    # UP_s = (bilinear upsample, align_corners=True) @ (adaptive avg-pool); the 2-D
    # operator is the Kronecker product of the 1-D factors (row-major h*W + w flatten).
    ups = [np.kron(bilinear_matrix(H, s) @ adaptive_pool_matrix(H, s),
                   bilinear_matrix(W, s) @ adaptive_pool_matrix(W, s))
           for s in SIZES]
    up_stack = jnp.asarray(np.stack(ups), dtype=jnp.bfloat16)          # (S, HW, HW)
    w_stack = jnp.stack(p["stage_w"], axis=0).astype(jnp.bfloat16)      # (S, C, OUTF)

    feats_flat = feats_nhwc.reshape(N, HW, C).astype(jnp.bfloat16)
    priors = pyramid_priors(feats_flat, w_stack, up_stack)              # (S,N,HW,OUTF)
    priors = jnp.transpose(priors, (1, 2, 0, 3)).reshape(N, HW, S * OUTF)

    # torch.cat(priors + [feats], dim=1)  (channel axis is last in NHWC)
    cat = jnp.concatenate([priors, feats_flat], axis=-1).reshape(N, H, W, -1)

    # Fold bottleneck 3x3 conv (no bias) + BN + Dropout(eval) + head 1x1 conv (+bias):
    # exact because the reference Sequential has no nonlinearity in between.
    s_bn, t_bn = fold_bn(p["bottleneck_bn"])
    wb = p["bottleneck_w"].reshape(9, C + S * OUTF, OUTF)
    w_eff = jnp.einsum('kco,of->kcf', wb * s_bn[None, None, :], p["head_w"])
    b_eff = t_bn @ p["head_w"] + p["head_b"]
    return conv3x3_bias(cat, w_eff, b_eff)                              # (N,H,W,ncls)


def dsn_forward(p, feat4_nhwc):
    """dsn: Conv3x3(+bias) + BN + Dropout(eval) + Conv1x1(+bias), folded to one conv."""
    s_bn, t_bn = fold_bn(p["dsn_bn"], conv_bias=p["dsn_b1"])
    w1 = p["dsn_w1"].reshape(9, feat4_nhwc.shape[-1], OUTF)
    w_eff = jnp.einsum('kco,of->kcf', w1 * s_bn[None, None, :], p["dsn_w2"])
    b_eff = t_bn @ p["dsn_w2"] + p["dsn_b2"]
    return conv3x3_bias(feat4_nhwc, w_eff, b_eff)


@jax.jit
def pspnet_forward(p, feat_c4_nchw, feat_c5_nchw):
    """Returns (x_dsn, x), both NCHW, matching PSPNet.forward."""
    feat_c4 = jnp.transpose(feat_c4_nchw, (0, 2, 3, 1)).astype(jnp.float32)
    feat_c5 = jnp.transpose(feat_c5_nchw, (0, 2, 3, 1)).astype(jnp.float32)
    x_dsn = dsn_forward(p, feat_c4)
    x = psp_head_forward(p, feat_c5)
    return (jnp.transpose(x_dsn, (0, 3, 1, 2)),
            jnp.transpose(x, (0, 3, 1, 2)))


# ----------------------- pure-jnp f32 reference (check) --------------------- #
def reference_forward(p, feat_c4_nchw, feat_c5_nchw):
    f4 = jnp.transpose(feat_c4_nchw, (0, 2, 3, 1)).astype(jnp.float32)
    f5 = jnp.transpose(feat_c5_nchw, (0, 2, 3, 1)).astype(jnp.float32)
    N, H, W, C = f5.shape
    HW = H * W

    def conv3x3(x, w_hwio):
        Hh, Ww = x.shape[1], x.shape[2]
        xp = jnp.pad(x, ((0, 0), (1, 1), (1, 1), (0, 0)))
        out = jnp.zeros(x.shape[:3] + (w_hwio.shape[-1],), jnp.float32)
        for ky in range(3):
            for kx in range(3):
                out = out + jnp.einsum('nhwc,co->nhwo',
                                       xp[:, ky:ky + Hh, kx:kx + Ww, :],
                                       w_hwio[ky, kx])
        return out

    x_flat = f5.reshape(N, HW, C)
    priors = []
    for si, s in enumerate(SIZES):
        P2 = jnp.asarray(np.kron(adaptive_pool_matrix(H, s), adaptive_pool_matrix(W, s)))
        U2 = jnp.asarray(np.kron(bilinear_matrix(H, s), bilinear_matrix(W, s)))
        pooled = jnp.einsum('ph,nhc->npc', P2, x_flat)
        conv = jnp.einsum('npc,cf->npf', pooled, p["stage_w"][si])
        priors.append(jnp.einsum('qp,npf->nqf', U2, conv))
    cat = jnp.concatenate(priors + [x_flat], axis=-1).reshape(N, H, W, -1)
    s_bn, t_bn = fold_bn(p["bottleneck_bn"])
    bottle = conv3x3(cat, p["bottleneck_w"]) * s_bn + t_bn
    head = jnp.einsum('nhwc,cf->nhwf', bottle, p["head_w"]) + p["head_b"]

    s2, t2 = fold_bn(p["dsn_bn"], conv_bias=p["dsn_b1"])
    mid = conv3x3(f4, p["dsn_w1"]) * s2 + t2
    dsn = jnp.einsum('nhwc,cf->nhwf', mid, p["dsn_w2"]) + p["dsn_b2"]
    return (jnp.transpose(dsn, (0, 3, 1, 2)), jnp.transpose(head, (0, 3, 1, 2)))


# ---------------------------------- main ------------------------------------ #
if __name__ == "__main__":
    root = jax.random.PRNGKey(0)
    k_param, k_in4, k_in5 = jax.random.split(root, 3)

    params = init_params(k_param)

    N, H, W = 2, 16, 16
    feat_c4 = jax.random.normal(k_in4, (N, C4, H, W), jnp.float32)  # feature_list[-2]
    feat_c5 = jax.random.normal(k_in5, (N, C5, H, W), jnp.float32)  # feature_list[-1]

    x_dsn, x = pspnet_forward(params, feat_c4, feat_c5)
    jax.block_until_ready((x_dsn, x))

    assert x_dsn.shape == (N, NUM_CLASSES, H, W)
    assert x.shape == (N, NUM_CLASSES, H, W)
    assert bool(jnp.all(jnp.isfinite(x_dsn))) and bool(jnp.all(jnp.isfinite(x)))

    # cross-check against an unfused pure-jnp f32 reference (bf16 tolerance)
    r_dsn, r_x = reference_forward(params, feat_c4, feat_c5)
    assert bool(jnp.allclose(x_dsn, r_dsn, atol=5e-3, rtol=5e-2)), "dsn mismatch"
    assert bool(jnp.allclose(x, r_x, atol=5e-3, rtol=5e-2)), "head mismatch"

    print("KERNEL_OK")
</pallas_src>

<mosaic_0001>
module attributes {stable_mosaic.version = 11 : i64} {
  func.func @_conv3x3_kernel(%arg0: i32, %arg1: memref<1x290x24xbf16, #tpu.memory_space<vmem>>, %arg2: memref<9x24x5xbf16, #tpu.memory_space<vmem>>, %arg3: memref<2x256x1xbf16, #tpu.memory_space<vmem>>, %arg4: memref<1x5xf32, #tpu.memory_space<vmem>>, %arg5: memref<1x256x5xf32, #tpu.memory_space<vmem>>) attributes {dimension_semantics = [#tpu.dimension_semantics<parallel>], iteration_bounds = array<i64: 2>, scalar_prefetch = 0 : i64, scratch_operands = 0 : i64, tpu.core_type = #tpu.core_type<tc>, window_params = [{transform_indices = @transform_0, window_bounds = array<i64: 1, 290, 24>}, {pipeline_mode = #tpu.pipeline_mode<synchronous>, transform_indices = @transform_1, window_bounds = array<i64: 9, 24, 5>}, {pipeline_mode = #tpu.pipeline_mode<synchronous>, transform_indices = @transform_2, window_bounds = array<i64: 2, 256, 1>}, {pipeline_mode = #tpu.pipeline_mode<synchronous>, transform_indices = @transform_3, window_bounds = array<i64: 1, 5>}, {transform_indices = @transform_4, window_bounds = array<i64: 1, 256, 5>}]} {
    %cst = arith.constant 0.000000e+00 : f32
    %0 = vector.broadcast %cst : f32 to vector<256x5xf32>
    %c0 = arith.constant 0 : index
    %c0_0 = arith.constant 0 : index
    %c0_1 = arith.constant 0 : index
    %1 = vector.load %arg1[%c0, %c0_0, %c0_1] : memref<1x290x24xbf16, #tpu.memory_space<vmem>>, vector<1x256x24xbf16>
    %2 = vector.shape_cast %1 : vector<1x256x24xbf16> to vector<256x24xbf16>
    %c0_2 = arith.constant 0 : index
    %c0_3 = arith.constant 0 : index
    %c0_4 = arith.constant 0 : index
    %3 = vector.load %arg3[%c0_2, %c0_3, %c0_4] : memref<2x256x1xbf16, #tpu.memory_space<vmem>>, vector<1x256x1xbf16>
    %4 = vector.shape_cast %3 : vector<1x256x1xbf16> to vector<256x1xbf16>
    %5 = vector.broadcast %4 : vector<256x1xbf16> to vector<256x24xbf16>
    %6 = arith.mulf %2, %5 : vector<256x24xbf16>
    %c0_5 = arith.constant 0 : index
    %c0_6 = arith.constant 0 : index
    %c0_7 = arith.constant 0 : index
    %7 = vector.load %arg2[%c0_5, %c0_6, %c0_7] : memref<9x24x5xbf16, #tpu.memory_space<vmem>>, vector<1x24x5xbf16>
    %8 = vector.shape_cast %7 : vector<1x24x5xbf16> to vector<24x5xbf16>
    %cst_8 = arith.constant dense<0.000000e+00> : vector<256x5xf32>
    %9 = tpu.matmul %6, %8, %cst_8 {dimension_numbers = #tpu.dot_dimension_numbers<[1], [0], [0], [1], [0, 0, 1, 1], [], []>} : vector<256x24xbf16>, vector<24x5xbf16>, vector<256x5xf32> -> vector<256x5xf32>
    %10 = arith.addf %0, %9 : vector<256x5xf32>
    %c0_9 = arith.constant 0 : index
    %c1 = arith.constant 1 : index
    %c0_10 = arith.constant 0 : index
    %11 = vector.load %arg1[%c0_9, %c1, %c0_10] : memref<1x290x24xbf16, #tpu.memory_space<vmem>>, vector<1x256x24xbf16>
    %12 = vector.shape_cast %11 : vector<1x256x24xbf16> to vector<256x24xbf16>
    %c1_11 = arith.constant 1 : index
    %c0_12 = arith.constant 0 : index
    %c0_13 = arith.constant 0 : index
    %13 = vector.load %arg2[%c1_11, %c0_12, %c0_13] : memref<9x24x5xbf16, #tpu.memory_space<vmem>>, vector<1x24x5xbf16>
    %14 = vector.shape_cast %13 : vector<1x24x5xbf16> to vector<24x5xbf16>
    %cst_14 = arith.constant dense<0.000000e+00> : vector<256x5xf32>
    %15 = tpu.matmul %12, %14, %cst_14 {dimension_numbers = #tpu.dot_dimension_numbers<[1], [0], [0], [1], [0, 0, 1, 1], [], []>} : vector<256x24xbf16>, vector<24x5xbf16>, vector<256x5xf32> -> vector<256x5xf32>
    %16 = arith.addf %10, %15 : vector<256x5xf32>
    %c0_15 = arith.constant 0 : index
    %c2 = arith.constant 2 : index
    %c0_16 = arith.constant 0 : index
    %17 = vector.load %arg1[%c0_15, %c2, %c0_16] : memref<1x290x24xbf16, #tpu.memory_space<vmem>>, vector<1x256x24xbf16>
    %18 = vector.shape_cast %17 : vector<1x256x24xbf16> to vector<256x24xbf16>
    %c1_17 = arith.constant 1 : index
    %c0_18 = arith.constant 0 : index
    %c0_19 = arith.constant 0 : index
    %19 = vector.load %arg3[%c1_17, %c0_18, %c0_19] : memref<2x256x1xbf16, #tpu.memory_space<vmem>>, vector<1x256x1xbf16>
    %20 = vector.shape_cast %19 : vector<1x256x1xbf16> to vector<256x1xbf16>
    %21 = vector.broadcast %20 : vector<256x1xbf16> to vector<256x24xbf16>
    %22 = arith.mulf %18, %21 : vector<256x24xbf16>
    %c2_20 = arith.constant 2 : index
    %c0_21 = arith.constant 0 : index
    %c0_22 = arith.constant 0 : index
    %23 = vector.load %arg2[%c2_20, %c0_21, %c0_22] : memref<9x24x5xbf16, #tpu.memory_space<vmem>>, vector<1x24x5xbf16>
    %24 = vector.shape_cast %23 : vector<1x24x5xbf16> to vector<24x5xbf16>
    %cst_23 = arith.constant dense<0.000000e+00> : vector<256x5xf32>
    %25 = tpu.matmul %22, %24, %cst_23 {dimension_numbers = #tpu.dot_dimension_numbers<[1], [0], [0], [1], [0, 0, 1, 1], [], []>} : vector<256x24xbf16>, vector<24x5xbf16>, vector<256x5xf32> -> vector<256x5xf32>
    %26 = arith.addf %16, %25 : vector<256x5xf32>
    %c0_24 = arith.constant 0 : index
    %c16 = arith.constant 16 : index
    %c0_25 = arith.constant 0 : index
    %27 = vector.load %arg1[%c0_24, %c16, %c0_25] : memref<1x290x24xbf16, #tpu.memory_space<vmem>>, vector<1x256x24xbf16>
    %28 = vector.shape_cast %27 : vector<1x256x24xbf16> to vector<256x24xbf16>
    %c0_26 = arith.constant 0 : index
    %c0_27 = arith.constant 0 : index
    %c0_28 = arith.constant 0 : index
    %29 = vector.load %arg3[%c0_26, %c0_27, %c0_28] : memref<2x256x1xbf16, #tpu.memory_space<vmem>>, vector<1x256x1xbf16>
    %30 = vector.shape_cast %29 : vector<1x256x1xbf16> to vector<256x1xbf16>
    %31 = vector.broadcast %30 : vector<256x1xbf16> to vector<256x24xbf16>
    %32 = arith.mulf %28, %31 : vector<256x24xbf16>
    %c3 = arith.constant 3 : index
    %c0_29 = arith.constant 0 : index
    %c0_30 = arith.constant 0 : index
    %33 = vector.load %arg2[%c3, %c0_29, %c0_30] : memref<9x24x5xbf16, #tpu.memory_space<vmem>>, vector<1x24x5xbf16>
    %34 = vector.shape_cast %33 : vector<1x24x5xbf16> to vector<24x5xbf16>
    %cst_31 = arith.constant dense<0.000000e+00> : vector<256x5xf32>
    %35 = tpu.matmul %32, %34, %cst_31 {dimension_numbers = #tpu.dot_dimension_numbers<[1], [0], [0], [1], [0, 0, 1, 1], [], []>} : vector<256x24xbf16>, vector<24x5xbf16>, vector<256x5xf32> -> vector<256x5xf32>
    %36 = arith.addf %26, %35 : vector<256x5xf32>
    %c0_32 = arith.constant 0 : index
    %c17 = arith.constant 17 : index
    %c0_33 = arith.constant 0 : index
    %37 = vector.load %arg1[%c0_32, %c17, %c0_33] : memref<1x290x24xbf16, #tpu.memory_space<vmem>>, vector<1x256x24xbf16>
    %38 = vector.shape_cast %37 : vector<1x256x24xbf16> to vector<256x24xbf16>
    %c4 = arith.constant 4 : index
    %c0_34 = arith.constant 0 : index
    %c0_35 = arith.constant 0 : index
    %39 = vector.load %arg2[%c4, %c0_34, %c0_35] : memref<9x24x5xbf16, #tpu.memory_space<vmem>>, vector<1x24x5xbf16>
    %40 = vector.shape_cast %39 : vector<1x24x5xbf16> to vector<24x5xbf16>
    %cst_36 = arith.constant dense<0.000000e+00> : vector<256x5xf32>
    %41 = tpu.matmul %38, %40, %cst_36 {dimension_numbers = #tpu.dot_dimension_numbers<[1], [0], [0], [1], [0, 0, 1, 1], [], []>} : vector<256x24xbf16>, vector<24x5xbf16>, vector<256x5xf32> -> vector<256x5xf32>
    %42 = arith.addf %36, %41 : vector<256x5xf32>
    %c0_37 = arith.constant 0 : index
    %c18 = arith.constant 18 : index
    %c0_38 = arith.constant 0 : index
    %43 = vector.load %arg1[%c0_37, %c18, %c0_38] : memref<1x290x24xbf16, #tpu.memory_space<vmem>>, vector<1x256x24xbf16>
    %44 = vector.shape_cast %43 : vector<1x256x24xbf16> to vector<256x24xbf16>
    %c1_39 = arith.constant 1 : index
    %c0_40 = arith.constant 0 : index
    %c0_41 = arith.constant 0 : index
    %45 = vector.load %arg3[%c1_39, %c0_40, %c0_41] : memref<2x256x1xbf16, #tpu.memory_space<vmem>>, vector<1x256x1xbf16>
    %46 = vector.shape_cast %45 : vector<1x256x1xbf16> to vector<256x1xbf16>
    %47 = vector.broadcast %46 : vector<256x1xbf16> to vector<256x24xbf16>
    %48 = arith.mulf %44, %47 : vector<256x24xbf16>
    %c5 = arith.constant 5 : index
    %c0_42 = arith.constant 0 : index
    %c0_43 = arith.constant 0 : index
    %49 = vector.load %arg2[%c5, %c0_42, %c0_43] : memref<9x24x5xbf16, #tpu.memory_space<vmem>>, vector<1x24x5xbf16>
    %50 = vector.shape_cast %49 : vector<1x24x5xbf16> to vector<24x5xbf16>
    %cst_44 = arith.constant dense<0.000000e+00> : vector<256x5xf32>
    %51 = tpu.matmul %48, %50, %cst_44 {dimension_numbers = #tpu.dot_dimension_numbers<[1], [0], [0], [1], [0, 0, 1, 1], [], []>} : vector<256x24xbf16>, vector<24x5xbf16>, vector<256x5xf32> -> vector<256x5xf32>
    %52 = arith.addf %42, %51 : vector<256x5xf32>
    %c0_45 = arith.constant 0 : index
    %c32 = arith.constant 32 : index
    %c0_46 = arith.constant 0 : index
    %53 = vector.load %arg1[%c0_45, %c32, %c0_46] : memref<1x290x24xbf16, #tpu.memory_space<vmem>>, vector<1x256x24xbf16>
    %54 = vector.shape_cast %53 : vector<1x256x24xbf16> to vector<256x24xbf16>
    %c0_47 = arith.constant 0 : index
    %c0_48 = arith.constant 0 : index
    %c0_49 = arith.constant 0 : index
    %55 = vector.load %arg3[%c0_47, %c0_48, %c0_49] : memref<2x256x1xbf16, #tpu.memory_space<vmem>>, vector<1x256x1xbf16>
    %56 = vector.shape_cast %55 : vector<1x256x1xbf16> to vector<256x1xbf16>
    %57 = vector.broadcast %56 : vector<256x1xbf16> to vector<256x24xbf16>
    %58 = arith.mulf %54, %57 : vector<256x24xbf16>
    %c6 = arith.constant 6 : index
    %c0_50 = arith.constant 0 : index
    %c0_51 = arith.constant 0 : index
    %59 = vector.load %arg2[%c6, %c0_50, %c0_51] : memref<9x24x5xbf16, #tpu.memory_space<vmem>>, vector<1x24x5xbf16>
    %60 = vector.shape_cast %59 : vector<1x24x5xbf16> to vector<24x5xbf16>
    %cst_52 = arith.constant dense<0.000000e+00> : vector<256x5xf32>
    %61 = tpu.matmul %58, %60, %cst_52 {dimension_numbers = #tpu.dot_dimension_numbers<[1], [0], [0], [1], [0, 0, 1, 1], [], []>} : vector<256x24xbf16>, vector<24x5xbf16>, vector<256x5xf32> -> vector<256x5xf32>
    %62 = arith.addf %52, %61 : vector<256x5xf32>
    %c0_53 = arith.constant 0 : index
    %c33 = arith.constant 33 : index
    %c0_54 = arith.constant 0 : index
    %63 = vector.load %arg1[%c0_53, %c33, %c0_54] : memref<1x290x24xbf16, #tpu.memory_space<vmem>>, vector<1x256x24xbf16>
    %64 = vector.shape_cast %63 : vector<1x256x24xbf16> to vector<256x24xbf16>
    %c7 = arith.constant 7 : index
    %c0_55 = arith.constant 0 : index
    %c0_56 = arith.constant 0 : index
    %65 = vector.load %arg2[%c7, %c0_55, %c0_56] : memref<9x24x5xbf16, #tpu.memory_space<vmem>>, vector<1x24x5xbf16>
    %66 = vector.shape_cast %65 : vector<1x24x5xbf16> to vector<24x5xbf16>
    %cst_57 = arith.constant dense<0.000000e+00> : vector<256x5xf32>
    %67 = tpu.matmul %64, %66, %cst_57 {dimension_numbers = #tpu.dot_dimension_numbers<[1], [0], [0], [1], [0, 0, 1, 1], [], []>} : vector<256x24xbf16>, vector<24x5xbf16>, vector<256x5xf32> -> vector<256x5xf32>
    %68 = arith.addf %62, %67 : vector<256x5xf32>
    %c0_58 = arith.constant 0 : index
    %c34 = arith.constant 34 : index
    %c0_59 = arith.constant 0 : index
    %69 = vector.load %arg1[%c0_58, %c34, %c0_59] : memref<1x290x24xbf16, #tpu.memory_space<vmem>>, vector<1x256x24xbf16>
    %70 = vector.shape_cast %69 : vector<1x256x24xbf16> to vector<256x24xbf16>
    %c1_60 = arith.constant 1 : index
    %c0_61 = arith.constant 0 : index
    %c0_62 = arith.constant 0 : index
    %71 = vector.load %arg3[%c1_60, %c0_61, %c0_62] : memref<2x256x1xbf16, #tpu.memory_space<vmem>>, vector<1x256x1xbf16>
    %72 = vector.shape_cast %71 : vector<1x256x1xbf16> to vector<256x1xbf16>
    %73 = vector.broadcast %72 : vector<256x1xbf16> to vector<256x24xbf16>
    %74 = arith.mulf %70, %73 : vector<256x24xbf16>
    %c8 = arith.constant 8 : index
    %c0_63 = arith.constant 0 : index
    %c0_64 = arith.constant 0 : index
    %75 = vector.load %arg2[%c8, %c0_63, %c0_64] : memref<9x24x5xbf16, #tpu.memory_space<vmem>>, vector<1x24x5xbf16>
    %76 = vector.shape_cast %75 : vector<1x24x5xbf16> to vector<24x5xbf16>
    %cst_65 = arith.constant dense<0.000000e+00> : vector<256x5xf32>
    %77 = tpu.matmul %74, %76, %cst_65 {dimension_numbers = #tpu.dot_dimension_numbers<[1], [0], [0], [1], [0, 0, 1, 1], [], []>} : vector<256x24xbf16>, vector<24x5xbf16>, vector<256x5xf32> -> vector<256x5xf32>
    %78 = arith.addf %68, %77 : vector<256x5xf32>
    %c0_66 = arith.constant 0 : index
    %c0_67 = arith.constant 0 : index
    %79 = vector.load %arg4[%c0_66, %c0_67] : memref<1x5xf32, #tpu.memory_space<vmem>>, vector<1x5xf32>
    %80 = vector.broadcast %79 : vector<1x5xf32> to vector<256x5xf32>
    %81 = arith.addf %78, %80 : vector<256x5xf32>
    %c0_68 = arith.constant 0 : index
    %c0_69 = arith.constant 0 : index
    %c0_70 = arith.constant 0 : index
    %82 = vector.load %arg5[%c0_68, %c0_69, %c0_70] : memref<1x256x5xf32, #tpu.memory_space<vmem>>, vector<1x256x5xf32>
    %83 = vector.shape_cast %82 : vector<1x256x5xf32> to vector<256x5xf32>
    %84 = vector.shape_cast %81 : vector<256x5xf32> to vector<1x256x5xf32>
    tpu.vector_store %arg5[%c0_68, %c0_69, %c0_70], %84 {strides = array<i32>} : memref<1x256x5xf32, #tpu.memory_space<vmem>>, vector<1x256x5xf32>,
    return
  }
  func.func @transform_0(%arg0: i32) -> (i32, i32, i32) {
    %c0_i32 = arith.constant 0 : i32
    %c0_i32_0 = arith.constant 0 : i32
    %c0_i32_1 = arith.constant 0 : i32
    return %arg0, %c0_i32, %c0_i32_0 : i32, i32, i32
  }
  func.func @transform_1(%arg0: i32) -> (i32, i32, i32) {
    %c0_i32 = arith.constant 0 : i32
    %c0_i32_0 = arith.constant 0 : i32
    %c0_i32_1 = arith.constant 0 : i32
    %c0_i32_2 = arith.constant 0 : i32
    return %c0_i32, %c0_i32_0, %c0_i32_1 : i32, i32, i32
  }
  func.func @transform_2(%arg0: i32) -> (i32, i32, i32) {
    %c0_i32 = arith.constant 0 : i32
    %c0_i32_0 = arith.constant 0 : i32
    %c0_i32_1 = arith.constant 0 : i32
    %c0_i32_2 = arith.constant 0 : i32
    return %c0_i32, %c0_i32_0, %c0_i32_1 : i32, i32, i32
  }
  func.func @transform_3(%arg0: i32) -> (i32, i32) {
    %c0_i32 = arith.constant 0 : i32
    %c0_i32_0 = arith.constant 0 : i32
    %c0_i32_1 = arith.constant 0 : i32
    return %c0_i32, %c0_i32_0 : i32, i32
  }
  func.func @transform_4(%arg0: i32) -> (i32, i32, i32) {
    %c0_i32 = arith.constant 0 : i32
    %c0_i32_0 = arith.constant 0 : i32
    %c0_i32_1 = arith.constant 0 : i32
    return %arg0, %c0_i32, %c0_i32_0 : i32, i32, i32
  }
}

module attributes {stable_mosaic.version = 11 : i64} {
  func.func @_pyramid_kernel(%arg0: i32, %arg1: i32, %arg2: memref<1x256x32xbf16, #tpu.memory_space<vmem>>, %arg3: memref<1x32x16xbf16, #tpu.memory_space<vmem>>, %arg4: memref<1x256x256xbf16, #tpu.memory_space<vmem>>, %arg5: memref<1x256x16xbf16, #tpu.memory_space<vmem>>) attributes {dimension_semantics = [#tpu.dimension_semantics<parallel>, #tpu.dimension_semantics<parallel>], iteration_bounds = array<i64: 4, 2>, scalar_prefetch = 0 : i64, scratch_operands = 0 : i64, tpu.core_type = #tpu.core_type<tc>, window_params = [{transform_indices = @transform_0, window_bounds = array<i64: 1, 256, 32>}, {transform_indices = @transform_1, window_bounds = array<i64: 1, 32, 16>}, {transform_indices = @transform_2, window_bounds = array<i64: 1, 256, 256>}, {transform_indices = @transform_3, window_bounds = array<i64: 1, 256, 16>}]} {
    %c0 = arith.constant 0 : index
    %c0_0 = arith.constant 0 : index
    %c0_1 = arith.constant 0 : index
    %0 = vector.load %arg2[%c0, %c0_0, %c0_1] : memref<1x256x32xbf16, #tpu.memory_space<vmem>>, vector<1x256x32xbf16>
    %1 = vector.shape_cast %0 : vector<1x256x32xbf16> to vector<256x32xbf16>
    %c0_2 = arith.constant 0 : index
    %c0_3 = arith.constant 0 : index
    %c0_4 = arith.constant 0 : index
    %2 = vector.load %arg3[%c0_2, %c0_3, %c0_4] : memref<1x32x16xbf16, #tpu.memory_space<vmem>>, vector<1x32x16xbf16>
    %3 = vector.shape_cast %2 : vector<1x32x16xbf16> to vector<32x16xbf16>
    %cst = arith.constant dense<0.000000e+00> : vector<256x16xf32>
    %4 = tpu.matmul %1, %3, %cst {dimension_numbers = #tpu.dot_dimension_numbers<[1], [0], [0], [1], [0, 0, 1, 1], [], []>} : vector<256x32xbf16>, vector<32x16xbf16>, vector<256x16xf32> -> vector<256x16xf32>
    %c0_5 = arith.constant 0 : index
    %c0_6 = arith.constant 0 : index
    %c0_7 = arith.constant 0 : index
    %5 = vector.load %arg4[%c0_5, %c0_6, %c0_7] : memref<1x256x256xbf16, #tpu.memory_space<vmem>>, vector<1x256x256xbf16>
    %6 = vector.shape_cast %5 : vector<1x256x256xbf16> to vector<256x256xbf16>
    %7 = arith.truncf %4 : vector<256x16xf32> to vector<256x16xbf16>
    %cst_8 = arith.constant dense<0.000000e+00> : vector<256x16xf32>
    %8 = tpu.matmul %6, %7, %cst_8 {dimension_numbers = #tpu.dot_dimension_numbers<[1], [0], [0], [1], [0, 0, 1, 1], [], []>} : vector<256x256xbf16>, vector<256x16xbf16>, vector<256x16xf32> -> vector<256x16xf32>
    %9 = arith.truncf %8 : vector<256x16xf32> to vector<256x16xbf16>
    %c0_9 = arith.constant 0 : index
    %c0_10 = arith.constant 0 : index
    %c0_11 = arith.constant 0 : index
    %10 = vector.load %arg5[%c0_9, %c0_10, %c0_11] : memref<1x256x16xbf16, #tpu.memory_space<vmem>>, vector<1x256x16xbf16>
    %11 = vector.shape_cast %10 : vector<1x256x16xbf16> to vector<256x16xbf16>
    %12 = vector.shape_cast %9 : vector<256x16xbf16> to vector<1x256x16xbf16>
    tpu.vector_store %arg5[%c0_9, %c0_10, %c0_11], %12 {strides = array<i32>} : memref<1x256x16xbf16, #tpu.memory_space<vmem>>, vector<1x256x16xbf16>,
    return
  }
  func.func @transform_0(%arg0: i32, %arg1: i32) -> (i32, i32, i32) {
    %c0_i32 = arith.constant 0 : i32
    %c0_i32_0 = arith.constant 0 : i32
    %c0_i32_1 = arith.constant 0 : i32
    return %arg1, %c0_i32, %c0_i32_0 : i32, i32, i32
  }
  func.func @transform_1(%arg0: i32, %arg1: i32) -> (i32, i32, i32) {
    %c0_i32 = arith.constant 0 : i32
    %c0_i32_0 = arith.constant 0 : i32
    %c0_i32_1 = arith.constant 0 : i32
    return %arg0, %c0_i32, %c0_i32_0 : i32, i32, i32
  }
  func.func @transform_2(%arg0: i32, %arg1: i32) -> (i32, i32, i32) {
    %c0_i32 = arith.constant 0 : i32
    %c0_i32_0 = arith.constant 0 : i32
    %c0_i32_1 = arith.constant 0 : i32
    return %arg0, %c0_i32, %c0_i32_0 : i32, i32, i32
  }
  func.func @transform_3(%arg0: i32, %arg1: i32) -> (i32, i32, i32) {
    %c2_i32 = arith.constant 2 : i32
    %0 = arith.muli %arg0, %c2_i32 : i32
    %1 = arith.addi %0, %arg1 : i32
    %c0_i32 = arith.constant 0 : i32
    %c0_i32_0 = arith.constant 0 : i32
    %c0_i32_1 = arith.constant 0 : i32
    return %1, %c0_i32, %c0_i32_0 : i32, i32, i32
  }
}

module attributes {stable_mosaic.version = 11 : i64} {
  func.func @_conv3x3_kernel(%arg0: i32, %arg1: memref<1x290x96xbf16, #tpu.memory_space<vmem>>, %arg2: memref<9x96x5xbf16, #tpu.memory_space<vmem>>, %arg3: memref<2x256x1xbf16, #tpu.memory_space<vmem>>, %arg4: memref<1x5xf32, #tpu.memory_space<vmem>>, %arg5: memref<1x256x5xf32, #tpu.memory_space<vmem>>) attributes {dimension_semantics = [#tpu.dimension_semantics<parallel>], iteration_bounds = array<i64: 2>, scalar_prefetch = 0 : i64, scratch_operands = 0 : i64, tpu.core_type = #tpu.core_type<tc>, window_params = [{transform_indices = @transform_0, window_bounds = array<i64: 1, 290, 96>}, {pipeline_mode = #tpu.pipeline_mode<synchronous>, transform_indices = @transform_1, window_bounds = array<i64: 9, 96, 5>}, {pipeline_mode = #tpu.pipeline_mode<synchronous>, transform_indices = @transform_2, window_bounds = array<i64: 2, 256, 1>}, {pipeline_mode = #tpu.pipeline_mode<synchronous>, transform_indices = @transform_3, window_bounds = array<i64: 1, 5>}, {transform_indices = @transform_4, window_bounds = array<i64: 1, 256, 5>}]} {
    %cst = arith.constant 0.000000e+00 : f32
    %0 = vector.broadcast %cst : f32 to vector<256x5xf32>
    %c0 = arith.constant 0 : index
    %c0_0 = arith.constant 0 : index
    %c0_1 = arith.constant 0 : index
    %1 = vector.load %arg1[%c0, %c0_0, %c0_1] : memref<1x290x96xbf16, #tpu.memory_space<vmem>>, vector<1x256x96xbf16>
    %2 = vector.shape_cast %1 : vector<1x256x96xbf16> to vector<256x96xbf16>
    %c0_2 = arith.constant 0 : index
    %c0_3 = arith.constant 0 : index
    %c0_4 = arith.constant 0 : index
    %3 = vector.load %arg3[%c0_2, %c0_3, %c0_4] : memref<2x256x1xbf16, #tpu.memory_space<vmem>>, vector<1x256x1xbf16>
    %4 = vector.shape_cast %3 : vector<1x256x1xbf16> to vector<256x1xbf16>
    %5 = vector.broadcast %4 : vector<256x1xbf16> to vector<256x96xbf16>
    %6 = arith.mulf %2, %5 : vector<256x96xbf16>
    %c0_5 = arith.constant 0 : index
    %c0_6 = arith.constant 0 : index
    %c0_7 = arith.constant 0 : index
    %7 = vector.load %arg2[%c0_5, %c0_6, %c0_7] : memref<9x96x5xbf16, #tpu.memory_space<vmem>>, vector<1x96x5xbf16>
    %8 = vector.shape_cast %7 : vector<1x96x5xbf16> to vector<96x5xbf16>
    %cst_8 = arith.constant dense<0.000000e+00> : vector<256x5xf32>
    %9 = tpu.matmul %6, %8, %cst_8 {dimension_numbers = #tpu.dot_dimension_numbers<[1], [0], [0], [1], [0, 0, 1, 1], [], []>} : vector<256x96xbf16>, vector<96x5xbf16>, vector<256x5xf32> -> vector<256x5xf32>
    %10 = arith.addf %0, %9 : vector<256x5xf32>
    %c0_9 = arith.constant 0 : index
    %c1 = arith.constant 1 : index
    %c0_10 = arith.constant 0 : index
    %11 = vector.load %arg1[%c0_9, %c1, %c0_10] : memref<1x290x96xbf16, #tpu.memory_space<vmem>>, vector<1x256x96xbf16>
    %12 = vector.shape_cast %11 : vector<1x256x96xbf16> to vector<256x96xbf16>
    %c1_11 = arith.constant 1 : index
    %c0_12 = arith.constant 0 : index
    %c0_13 = arith.constant 0 : index
    %13 = vector.load %arg2[%c1_11, %c0_12, %c0_13] : memref<9x96x5xbf16, #tpu.memory_space<vmem>>, vector<1x96x5xbf16>
    %14 = vector.shape_cast %13 : vector<1x96x5xbf16> to vector<96x5xbf16>
    %cst_14 = arith.constant dense<0.000000e+00> : vector<256x5xf32>
    %15 = tpu.matmul %12, %14, %cst_14 {dimension_numbers = #tpu.dot_dimension_numbers<[1], [0], [0], [1], [0, 0, 1, 1], [], []>} : vector<256x96xbf16>, vector<96x5xbf16>, vector<256x5xf32> -> vector<256x5xf32>
    %16 = arith.addf %10, %15 : vector<256x5xf32>
    %c0_15 = arith.constant 0 : index
    %c2 = arith.constant 2 : index
    %c0_16 = arith.constant 0 : index
    %17 = vector.load %arg1[%c0_15, %c2, %c0_16] : memref<1x290x96xbf16, #tpu.memory_space<vmem>>, vector<1x256x96xbf16>
    %18 = vector.shape_cast %17 : vector<1x256x96xbf16> to vector<256x96xbf16>
    %c1_17 = arith.constant 1 : index
    %c0_18 = arith.constant 0 : index
    %c0_19 = arith.constant 0 : index
    %19 = vector.load %arg3[%c1_17, %c0_18, %c0_19] : memref<2x256x1xbf16, #tpu.memory_space<vmem>>, vector<1x256x1xbf16>
    %20 = vector.shape_cast %19 : vector<1x256x1xbf16> to vector<256x1xbf16>
    %21 = vector.broadcast %20 : vector<256x1xbf16> to vector<256x96xbf16>
    %22 = arith.mulf %18, %21 : vector<256x96xbf16>
    %c2_20 = arith.constant 2 : index
    %c0_21 = arith.constant 0 : index
    %c0_22 = arith.constant 0 : index
    %23 = vector.load %arg2[%c2_20, %c0_21, %c0_22] : memref<9x96x5xbf16, #tpu.memory_space<vmem>>, vector<1x96x5xbf16>
    %24 = vector.shape_cast %23 : vector<1x96x5xbf16> to vector<96x5xbf16>
    %cst_23 = arith.constant dense<0.000000e+00> : vector<256x5xf32>
    %25 = tpu.matmul %22, %24, %cst_23 {dimension_numbers = #tpu.dot_dimension_numbers<[1], [0], [0], [1], [0, 0, 1, 1], [], []>} : vector<256x96xbf16>, vector<96x5xbf16>, vector<256x5xf32> -> vector<256x5xf32>
    %26 = arith.addf %16, %25 : vector<256x5xf32>
    %c0_24 = arith.constant 0 : index
    %c16 = arith.constant 16 : index
    %c0_25 = arith.constant 0 : index
    %27 = vector.load %arg1[%c0_24, %c16, %c0_25] : memref<1x290x96xbf16, #tpu.memory_space<vmem>>, vector<1x256x96xbf16>
    %28 = vector.shape_cast %27 : vector<1x256x96xbf16> to vector<256x96xbf16>
    %c0_26 = arith.constant 0 : index
    %c0_27 = arith.constant 0 : index
    %c0_28 = arith.constant 0 : index
    %29 = vector.load %arg3[%c0_26, %c0_27, %c0_28] : memref<2x256x1xbf16, #tpu.memory_space<vmem>>, vector<1x256x1xbf16>
    %30 = vector.shape_cast %29 : vector<1x256x1xbf16> to vector<256x1xbf16>
    %31 = vector.broadcast %30 : vector<256x1xbf16> to vector<256x96xbf16>
    %32 = arith.mulf %28, %31 : vector<256x96xbf16>
    %c3 = arith.constant 3 : index
    %c0_29 = arith.constant 0 : index
    %c0_30 = arith.constant 0 : index
    %33 = vector.load %arg2[%c3, %c0_29, %c0_30] : memref<9x96x5xbf16, #tpu.memory_space<vmem>>, vector<1x96x5xbf16>
    %34 = vector.shape_cast %33 : vector<1x96x5xbf16> to vector<96x5xbf16>
    %cst_31 = arith.constant dense<0.000000e+00> : vector<256x5xf32>
    %35 = tpu.matmul %32, %34, %cst_31 {dimension_numbers = #tpu.dot_dimension_numbers<[1], [0], [0], [1], [0, 0, 1, 1], [], []>} : vector<256x96xbf16>, vector<96x5xbf16>, vector<256x5xf32> -> vector<256x5xf32>
    %36 = arith.addf %26, %35 : vector<256x5xf32>
    %c0_32 = arith.constant 0 : index
    %c17 = arith.constant 17 : index
    %c0_33 = arith.constant 0 : index
    %37 = vector.load %arg1[%c0_32, %c17, %c0_33] : memref<1x290x96xbf16, #tpu.memory_space<vmem>>, vector<1x256x96xbf16>
    %38 = vector.shape_cast %37 : vector<1x256x96xbf16> to vector<256x96xbf16>
    %c4 = arith.constant 4 : index
    %c0_34 = arith.constant 0 : index
    %c0_35 = arith.constant 0 : index
    %39 = vector.load %arg2[%c4, %c0_34, %c0_35] : memref<9x96x5xbf16, #tpu.memory_space<vmem>>, vector<1x96x5xbf16>
    %40 = vector.shape_cast %39 : vector<1x96x5xbf16> to vector<96x5xbf16>
    %cst_36 = arith.constant dense<0.000000e+00> : vector<256x5xf32>
    %41 = tpu.matmul %38, %40, %cst_36 {dimension_numbers = #tpu.dot_dimension_numbers<[1], [0], [0], [1], [0, 0, 1, 1], [], []>} : vector<256x96xbf16>, vector<96x5xbf16>, vector<256x5xf32> -> vector<256x5xf32>
    %42 = arith.addf %36, %41 : vector<256x5xf32>
    %c0_37 = arith.constant 0 : index
    %c18 = arith.constant 18 : index
    %c0_38 = arith.constant 0 : index
    %43 = vector.load %arg1[%c0_37, %c18, %c0_38] : memref<1x290x96xbf16, #tpu.memory_space<vmem>>, vector<1x256x96xbf16>
    %44 = vector.shape_cast %43 : vector<1x256x96xbf16> to vector<256x96xbf16>
    %c1_39 = arith.constant 1 : index
    %c0_40 = arith.constant 0 : index
    %c0_41 = arith.constant 0 : index
    %45 = vector.load %arg3[%c1_39, %c0_40, %c0_41] : memref<2x256x1xbf16, #tpu.memory_space<vmem>>, vector<1x256x1xbf16>
    %46 = vector.shape_cast %45 : vector<1x256x1xbf16> to vector<256x1xbf16>
    %47 = vector.broadcast %46 : vector<256x1xbf16> to vector<256x96xbf16>
    %48 = arith.mulf %44, %47 : vector<256x96xbf16>
    %c5 = arith.constant 5 : index
    %c0_42 = arith.constant 0 : index
    %c0_43 = arith.constant 0 : index
    %49 = vector.load %arg2[%c5, %c0_42, %c0_43] : memref<9x96x5xbf16, #tpu.memory_space<vmem>>, vector<1x96x5xbf16>
    %50 = vector.shape_cast %49 : vector<1x96x5xbf16> to vector<96x5xbf16>
    %cst_44 = arith.constant dense<0.000000e+00> : vector<256x5xf32>
    %51 = tpu.matmul %48, %50, %cst_44 {dimension_numbers = #tpu.dot_dimension_numbers<[1], [0], [0], [1], [0, 0, 1, 1], [], []>} : vector<256x96xbf16>, vector<96x5xbf16>, vector<256x5xf32> -> vector<256x5xf32>
    %52 = arith.addf %42, %51 : vector<256x5xf32>
    %c0_45 = arith.constant 0 : index
    %c32 = arith.constant 32 : index
    %c0_46 = arith.constant 0 : index
    %53 = vector.load %arg1[%c0_45, %c32, %c0_46] : memref<1x290x96xbf16, #tpu.memory_space<vmem>>, vector<1x256x96xbf16>
    %54 = vector.shape_cast %53 : vector<1x256x96xbf16> to vector<256x96xbf16>
    %c0_47 = arith.constant 0 : index
    %c0_48 = arith.constant 0 : index
    %c0_49 = arith.constant 0 : index
    %55 = vector.load %arg3[%c0_47, %c0_48, %c0_49] : memref<2x256x1xbf16, #tpu.memory_space<vmem>>, vector<1x256x1xbf16>
    %56 = vector.shape_cast %55 : vector<1x256x1xbf16> to vector<256x1xbf16>
    %57 = vector.broadcast %56 : vector<256x1xbf16> to vector<256x96xbf16>
    %58 = arith.mulf %54, %57 : vector<256x96xbf16>
    %c6 = arith.constant 6 : index
    %c0_50 = arith.constant 0 : index
    %c0_51 = arith.constant 0 : index
    %59 = vector.load %arg2[%c6, %c0_50, %c0_51] : memref<9x96x5xbf16, #tpu.memory_space<vmem>>, vector<1x96x5xbf16>
    %60 = vector.shape_cast %59 : vector<1x96x5xbf16> to vector<96x5xbf16>
    %cst_52 = arith.constant dense<0.000000e+00> : vector<256x5xf32>
    %61 = tpu.matmul %58, %60, %cst_52 {dimension_numbers = #tpu.dot_dimension_numbers<[1], [0], [0], [1], [0, 0, 1, 1], [], []>} : vector<256x96xbf16>, vector<96x5xbf16>, vector<256x5xf32> -> vector<256x5xf32>
    %62 = arith.addf %52, %61 : vector<256x5xf32>
    %c0_53 = arith.constant 0 : index
    %c33 = arith.constant 33 : index
    %c0_54 = arith.constant 0 : index
    %63 = vector.load %arg1[%c0_53, %c33, %c0_54] : memref<1x290x96xbf16, #tpu.memory_space<vmem>>, vector<1x256x96xbf16>
    %64 = vector.shape_cast %63 : vector<1x256x96xbf16> to vector<256x96xbf16>
    %c7 = arith.constant 7 : index
    %c0_55 = arith.constant 0 : index
    %c0_56 = arith.constant 0 : index
    %65 = vector.load %arg2[%c7, %c0_55, %c0_56] : memref<9x96x5xbf16, #tpu.memory_space<vmem>>, vector<1x96x5xbf16>
    %66 = vector.shape_cast %65 : vector<1x96x5xbf16> to vector<96x5xbf16>
    %cst_57 = arith.constant dense<0.000000e+00> : vector<256x5xf32>
    %67 = tpu.matmul %64, %66, %cst_57 {dimension_numbers = #tpu.dot_dimension_numbers<[1], [0], [0], [1], [0, 0, 1, 1], [], []>} : vector<256x96xbf16>, vector<96x5xbf16>, vector<256x5xf32> -> vector<256x5xf32>
    %68 = arith.addf %62, %67 : vector<256x5xf32>
    %c0_58 = arith.constant 0 : index
    %c34 = arith.constant 34 : index
    %c0_59 = arith.constant 0 : index
    %69 = vector.load %arg1[%c0_58, %c34, %c0_59] : memref<1x290x96xbf16, #tpu.memory_space<vmem>>, vector<1x256x96xbf16>
    %70 = vector.shape_cast %69 : vector<1x256x96xbf16> to vector<256x96xbf16>
    %c1_60 = arith.constant 1 : index
    %c0_61 = arith.constant 0 : index
    %c0_62 = arith.constant 0 : index
    %71 = vector.load %arg3[%c1_60, %c0_61, %c0_62] : memref<2x256x1xbf16, #tpu.memory_space<vmem>>, vector<1x256x1xbf16>
    %72 = vector.shape_cast %71 : vector<1x256x1xbf16> to vector<256x1xbf16>
    %73 = vector.broadcast %72 : vector<256x1xbf16> to vector<256x96xbf16>
    %74 = arith.mulf %70, %73 : vector<256x96xbf16>
    %c8 = arith.constant 8 : index
    %c0_63 = arith.constant 0 : index
    %c0_64 = arith.constant 0 : index
    %75 = vector.load %arg2[%c8, %c0_63, %c0_64] : memref<9x96x5xbf16, #tpu.memory_space<vmem>>, vector<1x96x5xbf16>
    %76 = vector.shape_cast %75 : vector<1x96x5xbf16> to vector<96x5xbf16>
    %cst_65 = arith.constant dense<0.000000e+00> : vector<256x5xf32>
    %77 = tpu.matmul %74, %76, %cst_65 {dimension_numbers = #tpu.dot_dimension_numbers<[1], [0], [0], [1], [0, 0, 1, 1], [], []>} : vector<256x96xbf16>, vector<96x5xbf16>, vector<256x5xf32> -> vector<256x5xf32>
    %78 = arith.addf %68, %77 : vector<256x5xf32>
    %c0_66 = arith.constant 0 : index
    %c0_67 = arith.constant 0 : index
    %79 = vector.load %arg4[%c0_66, %c0_67] : memref<1x5xf32, #tpu.memory_space<vmem>>, vector<1x5xf32>
    %80 = vector.broadcast %79 : vector<1x5xf32> to vector<256x5xf32>
    %81 = arith.addf %78, %80 : vector<256x5xf32>
    %c0_68 = arith.constant 0 : index
    %c0_69 = arith.constant 0 : index
    %c0_70 = arith.constant 0 : index
    %82 = vector.load %arg5[%c0_68, %c0_69, %c0_70] : memref<1x256x5xf32, #tpu.memory_space<vmem>>, vector<1x256x5xf32>
    %83 = vector.shape_cast %82 : vector<1x256x5xf32> to vector<256x5xf32>
    %84 = vector.shape_cast %81 : vector<256x5xf32> to vector<1x256x5xf32>
    tpu.vector_store %arg5[%c0_68, %c0_69, %c0_70], %84 {strides = array<i32>} : memref<1x256x5xf32, #tpu.memory_space<vmem>>, vector<1x256x5xf32>,
    return
  }
  func.func @transform_0(%arg0: i32) -> (i32, i32, i32) {
    %c0_i32 = arith.constant 0 : i32
    %c0_i32_0 = arith.constant 0 : i32
    %c0_i32_1 = arith.constant 0 : i32
    return %arg0, %c0_i32, %c0_i32_0 : i32, i32, i32
  }
  func.func @transform_1(%arg0: i32) -> (i32, i32, i32) {
    %c0_i32 = arith.constant 0 : i32
    %c0_i32_0 = arith.constant 0 : i32
    %c0_i32_1 = arith.constant 0 : i32
    %c0_i32_2 = arith.constant 0 : i32
    return %c0_i32, %c0_i32_0, %c0_i32_1 : i32, i32, i32
  }
  func.func @transform_2(%arg0: i32) -> (i32, i32, i32) {
    %c0_i32 = arith.constant 0 : i32
    %c0_i32_0 = arith.constant 0 : i32
    %c0_i32_1 = arith.constant 0 : i32
    %c0_i32_2 = arith.constant 0 : i32
    return %c0_i32, %c0_i32_0, %c0_i32_1 : i32, i32, i32
  }
  func.func @transform_3(%arg0: i32) -> (i32, i32) {
    %c0_i32 = arith.constant 0 : i32
    %c0_i32_0 = arith.constant 0 : i32
    %c0_i32_1 = arith.constant 0 : i32
    return %c0_i32, %c0_i32_0 : i32, i32
  }
  func.func @transform_4(%arg0: i32) -> (i32, i32, i32) {
    %c0_i32 = arith.constant 0 : i32
    %c0_i32_0 = arith.constant 0 : i32
    %c0_i32_1 = arith.constant 0 : i32
    return %arg0, %c0_i32, %c0_i32_0 : i32, i32, i32
  }
}

</mosaic_0001>

<llo_original>
// kernel: pspnet_forward.4
$region0: #{pspnet_forward.4}
  #allocation0 [shape = 'u32[]', space=smem, size = 0x4, offset = 0x4, fixed_abs, tag = 'smem constant byte address 0x4 - core index']
  #allocation1 [shape = 'u32[144,128]{1,0:T(1,128)}', space=vmem, size = 0x12000, scoped, tag = 'internal scratch']
  %s0 = inlined_call_operand.vmem [shape: bf16[2,256,32], index: 0, kind: input, shape index: {}]
  %s1 = inlined_call_operand.vmem [shape: bf16[4,32,16], index: 1, kind: input, shape index: {}]
  %s2 = inlined_call_operand.vmem [shape: bf16[4,256,256], index: 2, kind: input, shape index: {}]
  %s3 = inlined_call_operand.vmem [shape: bf16[8,256,16], index: 3, kind: output, shape index: {}]
  %s4 = sld [smem:[#allocation0]]
  $region45: #{pspnet_forward.4} parent=0
    _
  %s6 = ssub.s32 1, %s4
  %s7 = scalar_select 0, %s6, %s4
  loop: start=0, step=1, limit=10
  $region2: #{pspnet_forward.4} parent=0 // loop_pre_header
    _
  $region3: #{pspnet_forward.4} parent=0 // loop_header
    %s9 = sphi 0, %s13
    %p10 = scmp.ge.s32.totalorder %s9, 10
    %s16 = sphi 0, %s28
    %s17 = sphi 0, %s24
    %s18 = sphi 0, %s16
    %s19 = sphi 0, %s17
    %s20 = sphi 0, %s18
    %s21 = sphi 0, %s19
    %s31 = sphi 0, %s33
    %s34 = sphi 0, %s31
    %s35 = sphi 0, %s34
    %s51 = sphi 0, %s35
    %s57 = sphi 0, %s59
    %s60 = sphi 0, %s57
    %s61 = sphi 0, %s60
    %s77 = sphi 0, %s61
    %s83 = sphi 0, %s85
    %s86 = sphi 0, %s83
    %s87 = sphi 0, %s86
    %s103 = sphi 0, %s87
    %s113 = sphi 0, %s115
    %s116 = sphi 0, %s113
    %s117 = sphi 0, %s116
    %s133 = sphi 0, %s117
  $region4: #{pspnet_forward.4} parent=0 // loop_header_branch
    %12 = sbr.rel (%p10) target = $region8
  $region5: #{pspnet_forward.4} parent=0 // loop_body
    %s14 = ssub.s32 %s9, 1
    %s15 = ssub.s32 %s9, 2
    %s22 = sadd.s32 1, %s17
    %p23 = scmp.ge.s32.totalorder %s22, 2
    %s24 = scalar_select %p23, 0, %s22
    %s25 = sadd.s32 1, %s16
    %s26 = scalar_select %p23, %s25, %s16
    %p27 = scmp.ge.s32.totalorder %s26, 4
    %s28 = scalar_select %p27, 0, %s26
    %s29 = ssub.s32 %s17, %s24
    %p30 = scmp.eq.s32.totalorder %s29, 0
    %s32 = sadd.s32 %s31, 1
    %s33 = scalar_select %p30, %s31, %s32
    %p36 = pneg %p30
    %p37 = scmp.eq.s32.totalorder %s9, 7
    %p38 = por %p36, %p37
    %p39 = scmp.ne.s32.totalorder %s31, %s34
    %p40 = scmp.eq.s32.totalorder %s9, 0
    %p41 = por %p39, %p40
    %p42 = scmp.ne.s32.totalorder %s31, %s34
    %p43 = scmp.eq.s32.totalorder %s14, 7
    %p44 = por %p42, %p43
    %p45 = scmp.ne.s32.totalorder %s34, %s35
    %p46 = scmp.eq.s32.totalorder %s14, 0
    %p47 = por %p45, %p46
    %p48 = scmp.ne.s32.totalorder %s34, %s35
    %p49 = scmp.eq.s32.totalorder %s15, 7
    %p50 = por %p48, %p49
    %p52 = scmp.ne.s32.totalorder %s35, %s51
    %p53 = scmp.eq.s32.totalorder %s15, 0
    %p54 = por %p52, %p53
    %s55 = ssub.s32 %s16, %s28
    %p56 = scmp.eq.s32.totalorder %s55, 0
    %s58 = sadd.s32 %s57, 1
    %s59 = scalar_select %p56, %s57, %s58
    %p62 = pneg %p56
    %p63 = scmp.eq.s32.totalorder %s9, 7
    %p64 = por %p62, %p63
    %p65 = scmp.ne.s32.totalorder %s57, %s60
    %p66 = scmp.eq.s32.totalorder %s9, 0
    %p67 = por %p65, %p66
    %p68 = scmp.ne.s32.totalorder %s57, %s60
    %p69 = scmp.eq.s32.totalorder %s14, 7
    %p70 = por %p68, %p69
    %p71 = scmp.ne.s32.totalorder %s60, %s61
    %p72 = scmp.eq.s32.totalorder %s14, 0
    %p73 = por %p71, %p72
    %p74 = scmp.ne.s32.totalorder %s60, %s61
    %p75 = scmp.eq.s32.totalorder %s15, 7
    %p76 = por %p74, %p75
    %p78 = scmp.ne.s32.totalorder %s61, %s77
    %p79 = scmp.eq.s32.totalorder %s15, 0
    %p80 = por %p78, %p79
    %s81 = ssub.s32 %s16, %s28
    %p82 = scmp.eq.s32.totalorder %s81, 0
    %s84 = sadd.s32 %s83, 1
    %s85 = scalar_select %p82, %s83, %s84
    %p88 = pneg %p82
    %p89 = scmp.eq.s32.totalorder %s9, 7
    %p90 = por %p88, %p89
    %p91 = scmp.ne.s32.totalorder %s83, %s86
    %p92 = scmp.eq.s32.totalorder %s9, 0
    %p93 = por %p91, %p92
    %p94 = scmp.ne.s32.totalorder %s83, %s86
    %p95 = scmp.eq.s32.totalorder %s14, 7
    %p96 = por %p94, %p95
    %p97 = scmp.ne.s32.totalorder %s86, %s87
    %p98 = scmp.eq.s32.totalorder %s14, 0
    %p99 = por %p97, %p98
    %p100 = scmp.ne.s32.totalorder %s86, %s87
    %p101 = scmp.eq.s32.totalorder %s15, 7
    %p102 = por %p100, %p101
    %p104 = scmp.ne.s32.totalorder %s87, %s103
    %p105 = scmp.eq.s32.totalorder %s15, 0
    %p106 = por %p104, %p105
    %s107 = smul.u32 %s16, 2
    %s108 = sadd.s32 %s107, %s17
    %s109 = smul.u32 %s28, 2
    %s110 = sadd.s32 %s109, %s24
    %s111 = ssub.s32 %s108, %s110
    %p112 = scmp.eq.s32.totalorder %s111, 0
    %s114 = sadd.s32 %s113, 1
    %s115 = scalar_select %p112, %s113, %s114
    %p118 = pneg %p112
    %p119 = scmp.eq.s32.totalorder %s9, 7
    %p120 = por %p118, %p119
    %p121 = scmp.ne.s32.totalorder %s113, %s116
    %p122 = scmp.eq.s32.totalorder %s9, 0
    %p123 = por %p121, %p122
    %p124 = scmp.ne.s32.totalorder %s113, %s116
    %p125 = scmp.eq.s32.totalorder %s14, 7
    %p126 = por %p124, %p125
    %p127 = scmp.ne.s32.totalorder %s116, %s117
    %p128 = scmp.eq.s32.totalorder %s14, 0
    %p129 = por %p127, %p128
    %p130 = scmp.ne.s32.totalorder %s116, %s117
    %p131 = scmp.eq.s32.totalorder %s15, 7
    %p132 = por %p130, %p131
    %p134 = scmp.ne.s32.totalorder %s117, %s133
    %p135 = scmp.eq.s32.totalorder %s15, 0
    %p136 = por %p134, %p135
    %p137 = scmp.le.s32.totalorder 1, %s9
    %p138 = scmp.lt.s32.totalorder %s9, 9
    %p139 = pnand %p137, %p138
    %p140 = pneg %p139
    // Predicated region
    $region9: #{pspnet_forward.4} parent=5 // pred_check
      _
    $region10: #{pspnet_forward.4} parent=5 // pred_check_branch
      %142 = sbr.rel (%p139) target = $region12
    $region11: #{pspnet_forward.4} parent=5 // pred_region
      %s143 = ssub.s32 %s9, 1
    $region12: #{pspnet_forward.4} parent=5 // pred_fallthru
      _
    %p144 = scmp.lt.s32.totalorder %s9, 8
    // Predicated region
    $region13: #{pspnet_forward.4} parent=5 // pred_check
      %p145 = pneg %p144
    $region14: #{pspnet_forward.4} parent=5 // pred_check_branch
      %147 = sbr.rel (%p145) target = $region16
    $region15: #{pspnet_forward.4} parent=5 // pred_region
      // Predicated region
      $region17: #{pspnet_forward.4} parent=15 // pred_check
        %p148 = pneg %p41
      $region18: #{pspnet_forward.4} parent=15 // pred_check_branch
        %150 = sbr.rel (%p148) target = $region20
      $region19: #{pspnet_forward.4} parent=15 // pred_region
        %p151 = scmp.lt.s32.totalorder %s17, 1
        %s152 = scalar_select %p151, %s17, 1
        %s153 = smul.addr %s152, 32
        %s154 = smul.addr %s153, 4
        %s155 = scalar_lea.vmem %s0, %s154
      $region20: #{pspnet_forward.4} parent=15 // pred_fallthru
        _
      // Predicated region
      $region21: #{pspnet_forward.4} parent=15 // pred_check
        %p156 = pneg %p67
      $region22: #{pspnet_forward.4} parent=15 // pred_check_branch
        %158 = sbr.rel (%p156) target = $region24
      $region23: #{pspnet_forward.4} parent=15 // pred_region
        %p159 = scmp.lt.s32.totalorder %s16, 3
        %s160 = scalar_select %p159, %s16, 3
        %s161 = smul.addr %s160, 4
        %s162 = smul.addr %s161, 4
        %s163 = scalar_lea.vmem %s1, %s162
      $region24: #{pspnet_forward.4} parent=15 // pred_fallthru
        _
      // Predicated region
      $region25: #{pspnet_forward.4} parent=15 // pred_check
        %p164 = pneg %p93
      $region26: #{pspnet_forward.4} parent=15 // pred_check_branch
        %166 = sbr.rel (%p164) target = $region28
      $region27: #{pspnet_forward.4} parent=15 // pred_region
        %p167 = scmp.lt.s32.totalorder %s16, 3
        %s168 = scalar_select %p167, %s16, 3
        %s169 = smul.addr %s168, 64
        %s170 = smul.addr %s169, 4
        %s171 = scalar_lea.vmem %s2, %s170
      $region28: #{pspnet_forward.4} parent=15 // pred_fallthru
        _
    $region16: #{pspnet_forward.4} parent=5 // pred_fallthru
      _
    %p172 = scmp.le.s32.totalorder 1, %s9
    %p173 = scmp.lt.s32.totalorder %s9, 9
    %p174 = pnand %p172, %p173
    %p175 = pneg %p174
    // Predicated region
    $region29: #{pspnet_forward.4} parent=5 // pred_check
      _
    $region30: #{pspnet_forward.4} parent=5 // pred_check_branch
      %177 = sbr.rel (%p174) target = $region32
    $region31: #{pspnet_forward.4} parent=5 // pred_region
      %s178 = ssub.s32 %s9, 1
      %p179 = scmp.lt.s32.totalorder %s19, 1
      %s180 = scalar_select %p179, %s19, 1
      %s181 = smul.addr %s180, 32
      %s182 = smul.addr %s181, 4
      %s183 = scalar_lea.vmem %s0, %s182
      %p184 = pneg %p47
      %p185 = pneg %p44
      %p186 = scmp.lt.s32.totalorder %s18, 3
      %s187 = scalar_select %p186, %s18, 3
      %s188 = smul.addr %s187, 4
      %s189 = smul.addr %s188, 4
      %s190 = scalar_lea.vmem %s1, %s189
      %p191 = pneg %p73
      %p192 = pneg %p70
      %p193 = scmp.lt.s32.totalorder %s18, 3
      %s194 = scalar_select %p193, %s18, 3
      %s195 = smul.addr %s194, 64
      %s196 = smul.addr %s195, 4
      %s197 = scalar_lea.vmem %s2, %s196
      %p198 = pneg %p99
      %p199 = pneg %p96
      %p200 = pneg %p129
      %p201 = pneg %p126
      %s202 = smul.u32 %s18, 2
      %s203 = sadd.s32 %s202, %s19
      %p204 = scmp.lt.s32.totalorder %s203, 7
      %s205 = scalar_select %p204, %s203, 7
      %s206 = smul.addr %s205, 32
      %s207 = smul.addr %s206, 4
      %s208 = scalar_lea.vmem %s3, %s207
      %p209 = scmp.lt.s32.totalorder %s19, 1
      %s210 = scalar_select %p209, %s19, 1
      %s211 = smul.addr %s210, 32
      %s212 = smul.addr %s211, 4
      %s213 = scalar_lea.vmem %s0, %s212
      %p214 = scmp.lt.s32.totalorder %s18, 3
      %s215 = scalar_select %p214, %s18, 3
      %s216 = smul.addr %s215, 4
      %s217 = smul.addr %s216, 4
      %s218 = scalar_lea.vmem %s1, %s217
      %p219 = scmp.lt.s32.totalorder %s18, 3
      %s220 = scalar_select %p219, %s18, 3
      %s221 = smul.addr %s220, 64
      %s222 = smul.addr %s221, 4
      %s223 = scalar_lea.vmem %s2, %s222
      %s224 = smul.u32 %s18, 2
      %s225 = sadd.s32 %s224, %s19
      %p226 = scmp.lt.s32.totalorder %s225, 7
      %s227 = scalar_select %p226, %s225, 7
      %s228 = smul.addr %s227, 32
      %s229 = smul.addr %s228, 4
      %s230 = scalar_lea.vmem %s3, %s229
      %s231 = smul.u32 %s18, 2
      %s232 = sadd.s32 %s231, %s19
      %v234 = vld [vmem:[%s213] sm:$0xf]
      %v235 = vld [vmem:[%s213 + $0x4] sm:$0xf]
      %v236 = vld [vmem:[%s213 + $0x8] sm:$0xf]
      %v237 = vld [vmem:[%s213 + $0xc] sm:$0xf]
      %v238 = vld [vmem:[%s213 + $0x10] sm:$0xf]
      %v239 = vld [vmem:[%s213 + $0x14] sm:$0xf]
      %v240 = vld [vmem:[%s213 + $0x18] sm:$0xf]
      %v241 = vld [vmem:[%s213 + $0x1c] sm:$0xf]
      %v242 = vld [vmem:[%s213 + $0x20] sm:$0xf]
      %v243 = vld [vmem:[%s213 + $0x24] sm:$0xf]
      %v244 = vld [vmem:[%s213 + $0x28] sm:$0xf]
      %v245 = vld [vmem:[%s213 + $0x2c] sm:$0xf]
      %v246 = vld [vmem:[%s213 + $0x30] sm:$0xf]
      %v247 = vld [vmem:[%s213 + $0x34] sm:$0xf]
      %v248 = vld [vmem:[%s213 + $0x38] sm:$0xf]
      %v249 = vld [vmem:[%s213 + $0x3c] sm:$0xf]
      %v250 = vld [vmem:[%s213 + $0x40] sm:$0xf]
      %v251 = vld [vmem:[%s213 + $0x44] sm:$0xf]
      %v252 = vld [vmem:[%s213 + $0x48] sm:$0xf]
      %v253 = vld [vmem:[%s213 + $0x4c] sm:$0xf]
      %v254 = vld [vmem:[%s213 + $0x50] sm:$0xf]
      %v255 = vld [vmem:[%s213 + $0x54] sm:$0xf]
      %v256 = vld [vmem:[%s213 + $0x58] sm:$0xf]
      %v257 = vld [vmem:[%s213 + $0x5c] sm:$0xf]
      %v258 = vld [vmem:[%s213 + $0x60] sm:$0xf]
      %v259 = vld [vmem:[%s213 + $0x64] sm:$0xf]
      %v260 = vld [vmem:[%s213 + $0x68] sm:$0xf]
      %v261 = vld [vmem:[%s213 + $0x6c] sm:$0xf]
      %v262 = vld [vmem:[%s213 + $0x70] sm:$0xf]
      %v263 = vld [vmem:[%s213 + $0x74] sm:$0xf]
      %v264 = vld [vmem:[%s213 + $0x78] sm:$0xf]
      %v265 = vld [vmem:[%s213 + $0x7c] sm:$0xf]
      %v266 = vld [vmem:[%s218] sm:$0xf]
      %v267 = vld [vmem:[%s218 + $0x4] sm:$0xf]
      %v268 = vld [vmem:[%s218 + $0x8] sm:$0xf]
      %v269 = vld [vmem:[%s218 + $0xc] sm:$0xf]
      %v302 = vunpack.c.l.b16 %v234
      %v303 = vunpack.c.l.b16 %v235
      %v304 = vunpack.c.l.b16 %v236
      %v305 = vunpack.c.l.b16 %v237
      %v306 = vunpack.c.l.b16 %v238
      %v307 = vunpack.c.l.b16 %v239
      %v308 = vunpack.c.l.b16 %v240
      %v309 = vunpack.c.l.b16 %v241
      %v310 = vunpack.c.l.b16 %v242
      %v311 = vunpack.c.l.b16 %v243
      %v312 = vunpack.c.l.b16 %v244
      %v313 = vunpack.c.l.b16 %v245
      %v314 = vunpack.c.l.b16 %v246
      %v315 = vunpack.c.l.b16 %v247
      %v316 = vunpack.c.l.b16 %v248
      %v317 = vunpack.c.l.b16 %v249
      %v318 = vunpack.c.l.b16 %v250
      %v319 = vunpack.c.l.b16 %v251
      %v320 = vunpack.c.l.b16 %v252
      %v321 = vunpack.c.l.b16 %v253
      %v322 = vunpack.c.l.b16 %v254
      %v323 = vunpack.c.l.b16 %v255
      %v324 = vunpack.c.l.b16 %v256
      %v325 = vunpack.c.l.b16 %v257
      %v326 = vunpack.c.l.b16 %v258
      %v327 = vunpack.c.l.b16 %v259
      %v328 = vunpack.c.l.b16 %v260
      %v329 = vunpack.c.l.b16 %v261
      %v330 = vunpack.c.l.b16 %v262
      %v331 = vunpack.c.l.b16 %v263
      %v332 = vunpack.c.l.b16 %v264
      %v333 = vunpack.c.l.b16 %v265
      %v334 = vpack.c.b16 %v303, %v302
      %v335 = vpack.c.b16 %v305, %v304
      %v336 = vpack.c.b16 %v307, %v306
      %v337 = vpack.c.b16 %v309, %v308
      %v338 = vpack.c.b16 %v311, %v310
      %v339 = vpack.c.b16 %v313, %v312
      %v340 = vpack.c.b16 %v315, %v314
      %v341 = vpack.c.b16 %v317, %v316
      %v342 = vpack.c.b16 %v319, %v318
      %v343 = vpack.c.b16 %v321, %v320
      %v344 = vpack.c.b16 %v323, %v322
      %v345 = vpack.c.b16 %v325, %v324
      %v346 = vpack.c.b16 %v327, %v326
      %v347 = vpack.c.b16 %v329, %v328
      %v348 = vpack.c.b16 %v331, %v330
      %v349 = vpack.c.b16 %v333, %v332
      %v354 = vunpack.c.l.b16 %v266
      %v355 = vunpack.c.l.b16 %v267
      %v356 = vunpack.c.l.b16 %v268
      %v357 = vunpack.c.l.b16 %v269
      %v358 = vpack.c.b16 %v355, %v354
      %v359 = vpack.c.b16 %v357, %v356
      %vm362 = vcmask 261120
      %v364 = vsel %vm362, %v334, 0
      %v367 = vsel %vm362, %v335, 0
      %v370 = vsel %vm362, %v336, 0
      %v373 = vsel %vm362, %v337, 0
      %v376 = vsel %vm362, %v338, 0
      %v379 = vsel %vm362, %v339, 0
      %v382 = vsel %vm362, %v340, 0
      %v385 = vsel %vm362, %v341, 0
      %v388 = vsel %vm362, %v342, 0
      %v391 = vsel %vm362, %v343, 0
      %v394 = vsel %vm362, %v344, 0
      %v397 = vsel %vm362, %v345, 0
      %v400 = vsel %vm362, %v346, 0
      %v403 = vsel %vm362, %v347, 0
      %v406 = vsel %vm362, %v348, 0
      %v409 = vsel %vm362, %v349, 0
      %411 = vmatprep.subr.bf16.mxu0 0
      %412 = vmatpush1.bf16.msra.mxu0 0
      %413 = vmatprep.subr.bf16.mxu0 0
      %414 = vmatpush1.bf16.msra.mxu0 0
      %415 = vmatprep.subr.bf16.mxu0 0
      %416 = vmatpush1.bf16.msra.mxu0 0
      %417 = vmatprep.subr.bf16.mxu0 0
      %418 = vmatpush1.bf16.msra.mxu0 0
      %419 = vmatprep.subr.bf16.mxu0 0
      %420 = vmatpush1.bf16.msra.mxu0 0
      %421 = vmatprep.subr.bf16.mxu0 0
      %422 = vmatpush1.bf16.msra.mxu0 0
      %423 = vmatprep.subr.bf16.mxu0 0
      %424 = vmatpush1.bf16.msra.mxu0 %v359
      %425 = vmatprep.subr.bf16.mxu0 0
      %426 = vmatpush1.bf16.msra.mxu0 %v358
      %427 = vmatprep.subr.bf16.mxu0 0
      %428 = vmatpush2.bf16.msra.mxu0 0
      %429 = vmatprep.subr.bf16.mxu0 0
      %430 = vmatpush2.bf16.msra.mxu0 0
      %431 = vmatprep.subr.bf16.mxu0 0
      %432 = vmatpush2.bf16.msra.mxu0 0
      %433 = vmatprep.subr.bf16.mxu0 0
      %434 = vmatpush2.bf16.msra.mxu0 0
      %435 = vmatprep.subr.bf16.mxu0 0
      %436 = vmatpush2.bf16.msra.mxu0 0
      %437 = vmatprep.subr.bf16.mxu0 0
      %438 = vmatpush2.bf16.msra.mxu0 0
      %439 = vmatprep.subr.bf16.mxu0 0
      %440 = vmatpush2.bf16.msra.mxu0 0
      %441 = vmatprep.subr.bf16.mxu0 0
      %442 = vmatpush2.bf16.msra.mxu0 0
      %443 = vmatprep.mubr.bf16.mxu0 0
      %444 = vmatmul.mubr.bf16.gmra.mxu0 %v364
      %v445 = vpop.f32.mrf.mxu0
      %v446 = vadd.f32 0.0, %v445
      %v447 = vpop.f32.mrf.mxu0
      %v448 = vpop.f32.mrf.mxu0
      %v449 = vadd.f32 0.0, %v448
      %v450 = vpop.f32.mrf.mxu0
      %451 = vmatprep.mubr.bf16.mxu0 0
      %452 = vmatmul.mubr.bf16.gmra.mxu0 %v367
      %v453 = vpop.f32.mrf.mxu0
      %v454 = vadd.f32 0.0, %v453
      %v455 = vpop.f32.mrf.mxu0
      %v456 = vpop.f32.mrf.mxu0
      %v457 = vadd.f32 0.0, %v456
      %v458 = vpop.f32.mrf.mxu0
      %459 = vmatprep.mubr.bf16.mxu0 0
      %460 = vmatmul.mubr.bf16.gmra.mxu0 %v370
      %v461 = vpop.f32.mrf.mxu0
      %v462 = vadd.f32 0.0, %v461
      %v463 = vpop.f32.mrf.mxu0
      %v464 = vpop.f32.mrf.mxu0
      %v465 = vadd.f32 0.0, %v464
      %v466 = vpop.f32.mrf.mxu0
      %467 = vmatprep.mubr.bf16.mxu0 0
      %468 = vmatmul.mubr.bf16.gmra.mxu0 %v373
      %v469 = vpop.f32.mrf.mxu0
      %v470 = vadd.f32 0.0, %v469
      %v471 = vpop.f32.mrf.mxu0
      %v472 = vpop.f32.mrf.mxu0
      %v473 = vadd.f32 0.0, %v472
      %v474 = vpop.f32.mrf.mxu0
      %475 = vmatprep.mubr.bf16.mxu0 0
      %476 = vmatmul.mubr.bf16.gmra.mxu0 %v376
      %v477 = vpop.f32.mrf.mxu0
      %v478 = vadd.f32 0.0, %v477
      %v479 = vpop.f32.mrf.mxu0
      %v480 = vpop.f32.mrf.mxu0
      %v481 = vadd.f32 0.0, %v480
      %v482 = vpop.f32.mrf.mxu0
      %483 = vmatprep.mubr.bf16.mxu0 0
      %484 = vmatmul.mubr.bf16.gmra.mxu0 %v379
      %v485 = vpop.f32.mrf.mxu0
      %v486 = vadd.f32 0.0, %v485
      %v487 = vpop.f32.mrf.mxu0
      %v488 = vpop.f32.mrf.mxu0
      %v489 = vadd.f32 0.0, %v488
      %v490 = vpop.f32.mrf.mxu0
      %491 = vmatprep.mubr.bf16.mxu0 0
      %492 = vmatmul.mubr.bf16.gmra.mxu0 %v382
      %v493 = vpop.f32.mrf.mxu0
      %v494 = vadd.f32 0.0, %v493
      %v495 = vpop.f32.mrf.mxu0
      %v496 = vpop.f32.mrf.mxu0
      %v497 = vadd.f32 0.0, %v496
      %v498 = vpop.f32.mrf.mxu0
      %499 = vmatprep.mubr.bf16.mxu0 0
      %500 = vmatmul.mubr.bf16.gmra.mxu0 %v385
      %v501 = vpop.f32.mrf.mxu0
      %v502 = vadd.f32 0.0, %v501
      %v503 = vpop.f32.mrf.mxu0
      %v504 = vpop.f32.mrf.mxu0
      %v505 = vadd.f32 0.0, %v504
      %v506 = vpop.f32.mrf.mxu0
      %507 = vmatprep.mubr.bf16.mxu0 0
      %508 = vmatmul.mubr.bf16.gmra.mxu0 %v388
      %v509 = vpop.f32.mrf.mxu0
      %v510 = vadd.f32 0.0, %v509
      %v511 = vpop.f32.mrf.mxu0
      %v512 = vpop.f32.mrf.mxu0
      %v513 = vadd.f32 0.0, %v512
      %v514 = vpop.f32.mrf.mxu0
      %515 = vmatprep.mubr.bf16.mxu0 0
      %516 = vmatmul.mubr.bf16.gmra.mxu0 %v391
      %v517 = vpop.f32.mrf.mxu0
      %v518 = vadd.f32 0.0, %v517
      %v519 = vpop.f32.mrf.mxu0
      %v520 = vpop.f32.mrf.mxu0
      %v521 = vadd.f32 0.0, %v520
      %v522 = vpop.f32.mrf.mxu0
      %523 = vmatprep.mubr.bf16.mxu0 0
      %524 = vmatmul.mubr.bf16.gmra.mxu0 %v394
      %v525 = vpop.f32.mrf.mxu0
      %v526 = vadd.f32 0.0, %v525
      %v527 = vpop.f32.mrf.mxu0
      %v528 = vpop.f32.mrf.mxu0
      %v529 = vadd.f32 0.0, %v528
      %v530 = vpop.f32.mrf.mxu0
      %531 = vmatprep.mubr.bf16.mxu0 0
      %532 = vmatmul.mubr.bf16.gmra.mxu0 %v397
      %v533 = vpop.f32.mrf.mxu0
      %v534 = vadd.f32 0.0, %v533
      %v535 = vpop.f32.mrf.mxu0
      %v536 = vpop.f32.mrf.mxu0
      %v537 = vadd.f32 0.0, %v536
      %v538 = vpop.f32.mrf.mxu0
      %539 = vmatprep.mubr.bf16.mxu0 0
      %540 = vmatmul.mubr.bf16.gmra.mxu0 %v400
      %v541 = vpop.f32.mrf.mxu0
      %v542 = vadd.f32 0.0, %v541
      %v543 = vpop.f32.mrf.mxu0
      %v544 = vpop.f32.mrf.mxu0
      %v545 = vadd.f32 0.0, %v544
      %v546 = vpop.f32.mrf.mxu0
      %547 = vmatprep.mubr.bf16.mxu0 0
      %548 = vmatmul.mubr.bf16.gmra.mxu0 %v403
      %v549 = vpop.f32.mrf.mxu0
      %v550 = vadd.f32 0.0, %v549
      %v551 = vpop.f32.mrf.mxu0
      %v552 = vpop.f32.mrf.mxu0
      %v553 = vadd.f32 0.0, %v552
      %v554 = vpop.f32.mrf.mxu0
      %555 = vmatprep.mubr.bf16.mxu0 0
      %556 = vmatmul.mubr.bf16.gmra.mxu0 %v406
      %v557 = vpop.f32.mrf.mxu0
      %v558 = vadd.f32 0.0, %v557
      %v559 = vpop.f32.mrf.mxu0
      %v560 = vpop.f32.mrf.mxu0
      %v561 = vadd.f32 0.0, %v560
      %v562 = vpop.f32.mrf.mxu0
      %563 = vmatprep.mubr.bf16.mxu0 0
      %564 = vmatmul.mubr.bf16.gmra.mxu0 %v409
      %v565 = vpop.f32.mrf.mxu0
      %v566 = vadd.f32 0.0, %v565
      %v567 = vpop.f32.mrf.mxu0
      %v568 = vpop.f32.mrf.mxu0
      %v569 = vadd.f32 0.0, %v568
      %v570 = vpop.f32.mrf.mxu0
      %571 = vdwg.mxu0
      %v572 = vld [vmem:[%s223] sm:$0xff]
      %v573 = vld [vmem:[%s223 + $0x8] sm:$0xff]
      %v574 = vld [vmem:[%s223 + $0x10] sm:$0xff]
      %v575 = vld [vmem:[%s223 + $0x18] sm:$0xff]
      %v576 = vld [vmem:[%s223 + $0x20] sm:$0xff]
      %v577 = vld [vmem:[%s223 + $0x28] sm:$0xff]
      %v578 = vld [vmem:[%s223 + $0x30] sm:$0xff]
      %v579 = vld [vmem:[%s223 + $0x38] sm:$0xff]
      %v580 = vld [vmem:[%s223 + $0x40] sm:$0xff]
      %v581 = vld [vmem:[%s223 + $0x48] sm:$0xff]
      %v582 = vld [vmem:[%s223 + $0x50] sm:$0xff]
      %v583 = vld [vmem:[%s223 + $0x58] sm:$0xff]
      %v584 = vld [vmem:[%s223 + $0x60] sm:$0xff]
      %v585 = vld [vmem:[%s223 + $0x68] sm:$0xff]
      %v586 = vld [vmem:[%s223 + $0x70] sm:$0xff]
      %v587 = vld [vmem:[%s223 + $0x78] sm:$0xff]
      %v588 = vld [vmem:[%s223 + $0x80] sm:$0xff]
      %v589 = vld [vmem:[%s223 + $0x88] sm:$0xff]
      %v590 = vld [vmem:[%s223 + $0x90] sm:$0xff]
      %v591 = vld [vmem:[%s223 + $0x98] sm:$0xff]
      %v592 = vld [vmem:[%s223 + $0xa0] sm:$0xff]
      %v593 = vld [vmem:[%s223 + $0xa8] sm:$0xff]
      %v594 = vld [vmem:[%s223 + $0xb0] sm:$0xff]
      %v595 = vld [vmem:[%s223 + $0xb8] sm:$0xff]
      %v596 = vld [vmem:[%s223 + $0xc0] sm:$0xff]
      %v597 = vld [vmem:[%s223 + $0xc8] sm:$0xff]
      %v598 = vld [vmem:[%s223 + $0xd0] sm:$0xff]
      %v599 = vld [vmem:[%s223 + $0xd8] sm:$0xff]
      %v600 = vld [vmem:[%s223 + $0xe0] sm:$0xff]
      %v601 = vld [vmem:[%s223 + $0xe8] sm:$0xff]
      %v602 = vld [vmem:[%s223 + $0xf0] sm:$0xff]
      %v603 = vld [vmem:[%s223 + $0xf8] sm:$0xff]
      %v604 = vpack.c.bf16 %v449, %v446
      %v605 = vpack.c.bf16 %v457, %v454
      %v606 = vpack.c.bf16 %v465, %v462
      %v607 = vpack.c.bf16 %v473, %v470
      %v608 = vpack.c.bf16 %v481, %v478
      %v609 = vpack.c.bf16 %v489, %v486
      %v610 = vpack.c.bf16 %v497, %v494
      %v611 = vpack.c.bf16 %v505, %v502
      %v612 = vpack.c.bf16 %v513, %v510
      %v613 = vpack.c.bf16 %v521, %v518
      %v614 = vpack.c.bf16 %v529, %v526
      %v615 = vpack.c.bf16 %v537, %v534
      %v616 = vpack.c.bf16 %v545, %v542
      %v617 = vpack.c.bf16 %v553, %v550
      %v618 = vpack.c.bf16 %v561, %v558
      %v619 = vpack.c.bf16 %v569, %v566
      %v652 = vunpack.c.l.b16 %v572
      %v653 = vunpack.c.h.b16 %v572
      %v654 = vunpack.c.l.b16 %v573
      %v655 = vunpack.c.h.b16 %v573
      %v656 = vunpack.c.l.b16 %v574
      %v657 = vunpack.c.h.b16 %v574
      %v658 = vunpack.c.l.b16 %v575
      %v659 = vunpack.c.h.b16 %v575
      %v660 = vunpack.c.l.b16 %v576
      %v661 = vunpack.c.h.b16 %v576
      %v662 = vunpack.c.l.b16 %v577
      %v663 = vunpack.c.h.b16 %v577
      %v664 = vunpack.c.l.b16 %v578
      %v665 = vunpack.c.h.b16 %v578
      %v666 = vunpack.c.l.b16 %v579
      %v667 = vunpack.c.h.b16 %v579
      %v668 = vunpack.c.l.b16 %v580
      %v669 = vunpack.c.h.b16 %v580
      %v670 = vunpack.c.l.b16 %v581
      %v671 = vunpack.c.h.b16 %v581
      %v672 = vunpack.c.l.b16 %v582
      %v673 = vunpack.c.h.b16 %v582
      %v674 = vunpack.c.l.b16 %v583
      %v675 = vunpack.c.h.b16 %v583
      %v676 = vunpack.c.l.b16 %v584
      %v677 = vunpack.c.h.b16 %v584
      %v678 = vunpack.c.l.b16 %v585
      %v679 = vunpack.c.h.b16 %v585
      %v680 = vunpack.c.l.b16 %v586
      %v681 = vunpack.c.h.b16 %v586
      %v682 = vunpack.c.l.b16 %v587
      %v683 = vunpack.c.h.b16 %v587
      %v684 = vunpack.c.l.b16 %v588
      %v685 = vunpack.c.h.b16 %v588
      %v686 = vunpack.c.l.b16 %v589
      %v687 = vunpack.c.h.b16 %v589
      %v688 = vunpack.c.l.b16 %v590
      %v689 = vunpack.c.h.b16 %v590
      %v690 = vunpack.c.l.b16 %v591
      %v691 = vunpack.c.h.b16 %v591
      %v692 = vunpack.c.l.b16 %v592
      %v693 = vunpack.c.h.b16 %v592
      %v694 = vunpack.c.l.b16 %v593
      %v695 = vunpack.c.h.b16 %v593
      %v696 = vunpack.c.l.b16 %v594
      %v697 = vunpack.c.h.b16 %v594
      %v698 = vunpack.c.l.b16 %v595
      %v699 = vunpack.c.h.b16 %v595
      %v700 = vunpack.c.l.b16 %v596
      %v701 = vunpack.c.h.b16 %v596
      %v702 = vunpack.c.l.b16 %v597
      %v703 = vunpack.c.h.b16 %v597
      %v704 = vunpack.c.l.b16 %v598
      %v705 = vunpack.c.h.b16 %v598
      %v706 = vunpack.c.l.b16 %v599
      %v707 = vunpack.c.h.b16 %v599
      %v708 = vunpack.c.l.b16 %v600
      %v709 = vunpack.c.h.b16 %v600
      %v710 = vunpack.c.l.b16 %v601
      %v711 = vunpack.c.h.b16 %v601
      %v712 = vunpack.c.l.b16 %v602
      %v713 = vunpack.c.h.b16 %v602
      %v714 = vunpack.c.l.b16 %v603
      %v715 = vunpack.c.h.b16 %v603
      %v716 = vpack.c.b16 %v654, %v652
      %v717 = vpack.c.b16 %v655, %v653
      %v718 = vpack.c.b16 %v658, %v656
      %v719 = vpack.c.b16 %v659, %v657
      %v720 = vpack.c.b16 %v662, %v660
      %v721 = vpack.c.b16 %v663, %v661
      %v722 = vpack.c.b16 %v666, %v664
      %v723 = vpack.c.b16 %v667, %v665
      %v724 = vpack.c.b16 %v670, %v668
      %v725 = vpack.c.b16 %v671, %v669
      %v726 = vpack.c.b16 %v674, %v672
      %v727 = vpack.c.b16 %v675, %v673
      %v728 = vpack.c.b16 %v678, %v676
      %v729 = vpack.c.b16 %v679, %v677
      %v730 = vpack.c.b16 %v682, %v680
      %v731 = vpack.c.b16 %v683, %v681
      %v732 = vpack.c.b16 %v686, %v684
      %v733 = vpack.c.b16 %v687, %v685
      %v734 = vpack.c.b16 %v690, %v688
      %v735 = vpack.c.b16 %v691, %v689
      %v736 = vpack.c.b16 %v694, %v692
      %v737 = vpack.c.b16 %v695, %v693
      %v738 = vpack.c.b16 %v698, %v696
      %v739 = vpack.c.b16 %v699, %v697
      %v740 = vpack.c.b16 %v702, %v700
      %v741 = vpack.c.b16 %v703, %v701
      %v742 = vpack.c.b16 %v706, %v704
      %v743 = vpack.c.b16 %v707, %v705
      %v744 = vpack.c.b16 %v710, %v708
      %v745 = vpack.c.b16 %v711, %v709
      %v746 = vpack.c.b16 %v714, %v712
      %v747 = vpack.c.b16 %v715, %v713
      %780 = vmatprep.subr.bf16.mxu0 0
      %781 = vmatpush1.bf16.msra.mxu0 %v611
      %782 = vmatprep.subr.bf16.mxu0 0
      %783 = vmatpush1.bf16.msra.mxu0 %v610
      %784 = vmatprep.subr.bf16.mxu0 0
      %785 = vmatpush1.bf16.msra.mxu0 %v609
      %786 = vmatprep.subr.bf16.mxu0 0
      %787 = vmatpush1.bf16.msra.mxu0 %v608
      %788 = vmatprep.subr.bf16.mxu0 0
      %789 = vmatpush1.bf16.msra.mxu0 %v607
      %790 = vmatprep.subr.bf16.mxu0 0
      %791 = vmatpush1.bf16.msra.mxu0 %v606
      %792 = vmatprep.subr.bf16.mxu0 0
      %793 = vmatpush1.bf16.msra.mxu0 %v605
      %794 = vmatprep.subr.bf16.mxu0 0
      %795 = vmatpush1.bf16.msra.mxu0 %v604
      %796 = vmatprep.subr.bf16.mxu0 0
      %797 = vmatpush2.bf16.msra.mxu0 %v619
      %798 = vmatprep.subr.bf16.mxu0 0
      %799 = vmatpush2.bf16.msra.mxu0 %v618
      %800 = vmatprep.subr.bf16.mxu0 0
      %801 = vmatpush2.bf16.msra.mxu0 %v617
      %802 = vmatprep.subr.bf16.mxu0 0
      %803 = vmatpush2.bf16.msra.mxu0 %v616
      %804 = vmatprep.subr.bf16.mxu0 0
      %805 = vmatpush2.bf16.msra.mxu0 %v615
      %806 = vmatprep.subr.bf16.mxu0 0
      %807 = vmatpush2.bf16.msra.mxu0 %v614
      %808 = vmatprep.subr.bf16.mxu0 0
      %809 = vmatpush2.bf16.msra.mxu0 %v613
      %810 = vmatprep.subr.bf16.mxu0 0
      %811 = vmatpush2.bf16.msra.mxu0 %v612
      %812 = vmatprep.mubr.bf16.mxu0 %v717
      %813 = vmatmul.mubr.bf16.gmra.mxu0 %v716
      %v814 = vpop.f32.mrf.mxu0
      %v815 = vadd.f32 0.0, %v814
      %v816 = vpop.f32.mrf.mxu0
      %v817 = vpop.f32.mrf.mxu0
      %v818 = vadd.f32 0.0, %v817
      %v819 = vpop.f32.mrf.mxu0
      %820 = vmatprep.mubr.bf16.mxu0 %v719
      %821 = vmatmul.mubr.bf16.gmra.mxu0 %v718
      %v822 = vpop.f32.mrf.mxu0
      %v823 = vadd.f32 0.0, %v822
      %v824 = vpop.f32.mrf.mxu0
      %v825 = vpop.f32.mrf.mxu0
      %v826 = vadd.f32 0.0, %v825
      %v827 = vpop.f32.mrf.mxu0
      %828 = vmatprep.mubr.bf16.mxu0 %v721
      %829 = vmatmul.mubr.bf16.gmra.mxu0 %v720
      %v830 = vpop.f32.mrf.mxu0
      %v831 = vadd.f32 0.0, %v830
      %v832 = vpop.f32.mrf.mxu0
      %v833 = vpop.f32.mrf.mxu0
      %v834 = vadd.f32 0.0, %v833
      %v835 = vpop.f32.mrf.mxu0
      %836 = vmatprep.mubr.bf16.mxu0 %v723
      %837 = vmatmul.mubr.bf16.gmra.mxu0 %v722
      %v838 = vpop.f32.mrf.mxu0
      %v839 = vadd.f32 0.0, %v838
      %v840 = vpop.f32.mrf.mxu0
      %v841 = vpop.f32.mrf.mxu0
      %v842 = vadd.f32 0.0, %v841
      %v843 = vpop.f32.mrf.mxu0
      %844 = vmatprep.mubr.bf16.mxu0 %v725
      %845 = vmatmul.mubr.bf16.gmra.mxu0 %v724
      %v846 = vpop.f32.mrf.mxu0
      %v847 = vadd.f32 0.0, %v846
      %v848 = vpop.f32.mrf.mxu0
      %v849 = vpop.f32.mrf.mxu0
      %v850 = vadd.f32 0.0, %v849
      %v851 = vpop.f32.mrf.mxu0
      %852 = vmatprep.mubr.bf16.mxu0 %v727
      %853 = vmatmul.mubr.bf16.gmra.mxu0 %v726
      %v854 = vpop.f32.mrf.mxu0
      %v855 = vadd.f32 0.0, %v854
      %v856 = vpop.f32.mrf.mxu0
      %v857 = vpop.f32.mrf.mxu0
      %v858 = vadd.f32 0.0, %v857
      %v859 = vpop.f32.mrf.mxu0
      %860 = vmatprep.mubr.bf16.mxu0 %v729
      %861 = vmatmul.mubr.bf16.gmra.mxu0 %v728
      %v862 = vpop.f32.mrf.mxu0
      %v863 = vadd.f32 0.0, %v862
      %v864 = vpop.f32.mrf.mxu0
      %v865 = vpop.f32.mrf.mxu0
      %v866 = vadd.f32 0.0, %v865
      %v867 = vpop.f32.mrf.mxu0
      %868 = vmatprep.mubr.bf16.mxu0 %v731
      %869 = vmatmul.mubr.bf16.gmra.mxu0 %v730
      %v870 = vpop.f32.mrf.mxu0
      %v871 = vadd.f32 0.0, %v870
      %v872 = vpop.f32.mrf.mxu0
      %v873 = vpop.f32.mrf.mxu0
      %v874 = vadd.f32 0.0, %v873
      %v875 = vpop.f32.mrf.mxu0
      %876 = vmatprep.mubr.bf16.mxu0 %v733
      %877 = vmatmul.mubr.bf16.gmra.mxu0 %v732
      %v878 = vpop.f32.mrf.mxu0
      %v879 = vadd.f32 0.0, %v878
      %v880 = vpop.f32.mrf.mxu0
      %v881 = vpop.f32.mrf.mxu0
      %v882 = vadd.f32 0.0, %v881
      %v883 = vpop.f32.mrf.mxu0
      %884 = vmatprep.mubr.bf16.mxu0 %v735
      %885 = vmatmul.mubr.bf16.gmra.mxu0 %v734
      %v886 = vpop.f32.mrf.mxu0
      %v887 = vadd.f32 0.0, %v886
      %v888 = vpop.f32.mrf.mxu0
      %v889 = vpop.f32.mrf.mxu0
      %v890 = vadd.f32 0.0, %v889
      %v891 = vpop.f32.mrf.mxu0
      %892 = vmatprep.mubr.bf16.mxu0 %v737
      %893 = vmatmul.mubr.bf16.gmra.mxu0 %v736
      %v894 = vpop.f32.mrf.mxu0
      %v895 = vadd.f32 0.0, %v894
      %v896 = vpop.f32.mrf.mxu0
      %v897 = vpop.f32.mrf.mxu0
      %v898 = vadd.f32 0.0, %v897
      %v899 = vpop.f32.mrf.mxu0
      %900 = vmatprep.mubr.bf16.mxu0 %v739
      %901 = vmatmul.mubr.bf16.gmra.mxu0 %v738
      %v902 = vpop.f32.mrf.mxu0
      %v903 = vadd.f32 0.0, %v902
      %v904 = vpop.f32.mrf.mxu0
      %v905 = vpop.f32.mrf.mxu0
      %v906 = vadd.f32 0.0, %v905
      %v907 = vpop.f32.mrf.mxu0
      %908 = vmatprep.mubr.bf16.mxu0 %v741
      %909 = vmatmul.mubr.bf16.gmra.mxu0 %v740
      %v910 = vpop.f32.mrf.mxu0
      %v911 = vadd.f32 0.0, %v910
      %v912 = vpop.f32.mrf.mxu0
      %v913 = vpop.f32.mrf.mxu0
      %v914 = vadd.f32 0.0, %v913
      %v915 = vpop.f32.mrf.mxu0
      %916 = vmatprep.mubr.bf16.mxu0 %v743
      %917 = vmatmul.mubr.bf16.gmra.mxu0 %v742
      %v918 = vpop.f32.mrf.mxu0
      %v919 = vadd.f32 0.0, %v918
      %v920 = vpop.f32.mrf.mxu0
      %v921 = vpop.f32.mrf.mxu0
      %v922 = vadd.f32 0.0, %v921
      %v923 = vpop.f32.mrf.mxu0
      %924 = vmatprep.mubr.bf16.mxu0 %v745
      %925 = vmatmul.mubr.bf16.gmra.mxu0 %v744
      %v926 = vpop.f32.mrf.mxu0
      %v927 = vadd.f32 0.0, %v926
      %v928 = vpop.f32.mrf.mxu0
      %v929 = vpop.f32.mrf.mxu0
      %v930 = vadd.f32 0.0, %v929
      %v931 = vpop.f32.mrf.mxu0
      %932 = vmatprep.mubr.bf16.mxu0 %v747
      %933 = vmatmul.mubr.bf16.gmra.mxu0 %v746
      %v934 = vpop.f32.mrf.mxu0
      %v935 = vadd.f32 0.0, %v934
      %v936 = vpop.f32.mrf.mxu0
      %v937 = vpop.f32.mrf.mxu0
      %v938 = vadd.f32 0.0, %v937
      %v939 = vpop.f32.mrf.mxu0
      %940 = vdwg.mxu0
      %v941 = vpack.c.bf16 %v818, %v815
      %v942 = vpack.c.bf16 %v826, %v823
      %v943 = vpack.c.bf16 %v834, %v831
      %v944 = vpack.c.bf16 %v842, %v839
      %v945 = vpack.c.bf16 %v850, %v847
      %v946 = vpack.c.bf16 %v858, %v855
      %v947 = vpack.c.bf16 %v866, %v863
      %v948 = vpack.c.bf16 %v874, %v871
      %v949 = vpack.c.bf16 %v882, %v879
      %v950 = vpack.c.bf16 %v890, %v887
      %v951 = vpack.c.bf16 %v898, %v895
      %v952 = vpack.c.bf16 %v906, %v903
      %v953 = vpack.c.bf16 %v914, %v911
      %v954 = vpack.c.bf16 %v922, %v919
      %v955 = vpack.c.bf16 %v930, %v927
      %v956 = vpack.c.bf16 %v938, %v935
      %v973 = vunpack.c.l.b16 %v941
      %v974 = vunpack.c.h.b16 %v941
      %v975 = vunpack.c.l.b16 %v942
      %v976 = vunpack.c.h.b16 %v942
      %v977 = vunpack.c.l.b16 %v943
      %v978 = vunpack.c.h.b16 %v943
      %v979 = vunpack.c.l.b16 %v944
      %v980 = vunpack.c.h.b16 %v944
      %v981 = vunpack.c.l.b16 %v945
      %v982 = vunpack.c.h.b16 %v945
      %v983 = vunpack.c.l.b16 %v946
      %v984 = vunpack.c.h.b16 %v946
      %v985 = vunpack.c.l.b16 %v947
      %v986 = vunpack.c.h.b16 %v947
      %v987 = vunpack.c.l.b16 %v948
      %v988 = vunpack.c.h.b16 %v948
      %v989 = vunpack.c.l.b16 %v949
      %v990 = vunpack.c.h.b16 %v949
      %v991 = vunpack.c.l.b16 %v950
      %v992 = vunpack.c.h.b16 %v950
      %v993 = vunpack.c.l.b16 %v951
      %v994 = vunpack.c.h.b16 %v951
      %v995 = vunpack.c.l.b16 %v952
      %v996 = vunpack.c.h.b16 %v952
      %v997 = vunpack.c.l.b16 %v953
      %v998 = vunpack.c.h.b16 %v953
      %v999 = vunpack.c.l.b16 %v954
      %v1000 = vunpack.c.h.b16 %v954
      %v1001 = vunpack.c.l.b16 %v955
      %v1002 = vunpack.c.h.b16 %v955
      %v1003 = vunpack.c.l.b16 %v956
      %v1004 = vunpack.c.h.b16 %v956
      %v1005 = vpack.c.b16 %v973, %v973
      %v1006 = vpack.c.b16 %v974, %v974
      %v1007 = vpack.c.b16 %v975, %v975
      %v1008 = vpack.c.b16 %v976, %v976
      %v1009 = vpack.c.b16 %v977, %v977
      %v1010 = vpack.c.b16 %v978, %v978
      %v1011 = vpack.c.b16 %v979, %v979
      %v1012 = vpack.c.b16 %v980, %v980
      %v1013 = vpack.c.b16 %v981, %v981
      %v1014 = vpack.c.b16 %v982, %v982
      %v1015 = vpack.c.b16 %v983, %v983
      %v1016 = vpack.c.b16 %v984, %v984
      %v1017 = vpack.c.b16 %v985, %v985
      %v1018 = vpack.c.b16 %v986, %v986
      %v1019 = vpack.c.b16 %v987, %v987
      %v1020 = vpack.c.b16 %v988, %v988
      %v1021 = vpack.c.b16 %v989, %v989
      %v1022 = vpack.c.b16 %v990, %v990
      %v1023 = vpack.c.b16 %v991, %v991
      %v1024 = vpack.c.b16 %v992, %v992
      %v1025 = vpack.c.b16 %v993, %v993
      %v1026 = vpack.c.b16 %v994, %v994
      %v1027 = vpack.c.b16 %v995, %v995
      %v1028 = vpack.c.b16 %v996, %v996
      %v1029 = vpack.c.b16 %v997, %v997
      %v1030 = vpack.c.b16 %v998, %v998
      %v1031 = vpack.c.b16 %v999, %v999
      %v1032 = vpack.c.b16 %v1000, %v1000
      %v1033 = vpack.c.b16 %v1001, %v1001
      %v1034 = vpack.c.b16 %v1002, %v1002
      %v1035 = vpack.c.b16 %v1003, %v1003
      %v1036 = vpack.c.b16 %v1004, %v1004
      %vm1069 = vcmask 125952
      %1070 = vst.msk [vmem:[%s230] sm:$0xf] %vm1069, %v1005
      %1071 = vst.msk [vmem:[%s230 + $0x4] sm:$0xf] %vm1069, %v1006
      %1072 = vst.msk [vmem:[%s230 + $0x8] sm:$0xf] %vm1069, %v1007
      %1073 = vst.msk [vmem:[%s230 + $0xc] sm:$0xf] %vm1069, %v1008
      %1074 = vst.msk [vmem:[%s230 + $0x10] sm:$0xf] %vm1069, %v1009
      %1075 = vst.msk [vmem:[%s230 + $0x14] sm:$0xf] %vm1069, %v1010
      %1076 = vst.msk [vmem:[%s230 + $0x18] sm:$0xf] %vm1069, %v1011
      %1077 = vst.msk [vmem:[%s230 + $0x1c] sm:$0xf] %vm1069, %v1012
      %1078 = vst.msk [vmem:[%s230 + $0x20] sm:$0xf] %vm1069, %v1013
      %1079 = vst.msk [vmem:[%s230 + $0x24] sm:$0xf] %vm1069, %v1014
      %1080 = vst.msk [vmem:[%s230 + $0x28] sm:$0xf] %vm1069, %v1015
      %1081 = vst.msk [vmem:[%s230 + $0x2c] sm:$0xf] %vm1069, %v1016
      %1082 = vst.msk [vmem:[%s230 + $0x30] sm:$0xf] %vm1069, %v1017
      %1083 = vst.msk [vmem:[%s230 + $0x34] sm:$0xf] %vm1069, %v1018
      %1084 = vst.msk [vmem:[%s230 + $0x38] sm:$0xf] %vm1069, %v1019
      %1085 = vst.msk [vmem:[%s230 + $0x3c] sm:$0xf] %vm1069, %v1020
      %1086 = vst.msk [vmem:[%s230 + $0x40] sm:$0xf] %vm1069, %v1021
      %1087 = vst.msk [vmem:[%s230 + $0x44] sm:$0xf] %vm1069, %v1022
      %1088 = vst.msk [vmem:[%s230 + $0x48] sm:$0xf] %vm1069, %v1023
      %1089 = vst.msk [vmem:[%s230 + $0x4c] sm:$0xf] %vm1069, %v1024
      %1090 = vst.msk [vmem:[%s230 + $0x50] sm:$0xf] %vm1069, %v1025
      %1091 = vst.msk [vmem:[%s230 + $0x54] sm:$0xf] %vm1069, %v1026
      %1092 = vst.msk [vmem:[%s230 + $0x58] sm:$0xf] %vm1069, %v1027
      %1093 = vst.msk [vmem:[%s230 + $0x5c] sm:$0xf] %vm1069, %v1028
      %1094 = vst.msk [vmem:[%s230 + $0x60] sm:$0xf] %vm1069, %v1029
      %1095 = vst.msk [vmem:[%s230 + $0x64] sm:$0xf] %vm1069, %v1030
      %1096 = vst.msk [vmem:[%s230 + $0x68] sm:$0xf] %vm1069, %v1031
      %1097 = vst.msk [vmem:[%s230 + $0x6c] sm:$0xf] %vm1069, %v1032
      %1098 = vst.msk [vmem:[%s230 + $0x70] sm:$0xf] %vm1069, %v1033
      %1099 = vst.msk [vmem:[%s230 + $0x74] sm:$0xf] %vm1069, %v1034
      %1100 = vst.msk [vmem:[%s230 + $0x78] sm:$0xf] %vm1069, %v1035
      %1101 = vst.msk [vmem:[%s230 + $0x7c] sm:$0xf] %vm1069, %v1036
      %s1102 = smul.u32 %s18, 2
      %s1103 = sadd.s32 %s1102, %s19
      %p1104 = scmp.lt.s32.totalorder %s1103, 7
      %s1105 = scalar_select %p1104, %s1103, 7
      %s1106 = smul.addr %s1105, 32
      %s1107 = smul.addr %s1106, 4
      %s1108 = scalar_lea.vmem %s3, %s1107
      // Predicated region
      $region33: #{pspnet_forward.4} parent=31 // pred_check
        %p1109 = pneg %p126
      $region34: #{pspnet_forward.4} parent=31 // pred_check_branch
        %1111 = sbr.rel (%p1109) target = $region36
      $region35: #{pspnet_forward.4} parent=31 // pred_region
        %s1112 = smul.u32 %s18, 2
        %s1113 = sadd.s32 %s1112, %s19
      $region36: #{pspnet_forward.4} parent=31 // pred_fallthru
        _
    $region32: #{pspnet_forward.4} parent=5 // pred_fallthru
      _
    %p1114 = scmp.le.s32.totalorder 2, %s9
    // Predicated region
    $region37: #{pspnet_forward.4} parent=5 // pred_check
      %p1115 = pneg %p1114
    $region38: #{pspnet_forward.4} parent=5 // pred_check_branch
      %1117 = sbr.rel (%p1115) target = $region40
    $region39: #{pspnet_forward.4} parent=5 // pred_region
      %s1118 = ssub.s32 %s9, 2
      // Predicated region
      $region41: #{pspnet_forward.4} parent=39 // pred_check
        %p1119 = pneg %p132
      $region42: #{pspnet_forward.4} parent=39 // pred_check_branch
        %1121 = sbr.rel (%p1119) target = $region44
      $region43: #{pspnet_forward.4} parent=39 // pred_region
        %s1122 = smul.u32 %s20, 2
        %s1123 = sadd.s32 %s1122, %s21
        %p1124 = scmp.lt.s32.totalorder %s1123, 7
        %s1125 = scalar_select %p1124, %s1123, 7
        %s1126 = smul.addr %s1125, 32
        %s1127 = smul.addr %s1126, 4
        %s1128 = scalar_lea.vmem %s3, %s1127
      $region44: #{pspnet_forward.4} parent=39 // pred_fallthru
        _
    $region40: #{pspnet_forward.4} parent=5 // pred_fallthru
      _
  $region6: #{pspnet_forward.4} parent=0 // loop_footer
    %s13 = sadd.s32 1, %s9
  $region7: #{pspnet_forward.4} parent=0 // loop_footer_branch
    %8 = sbr.rel target = $region3
  $region8: #{pspnet_forward.4} parent=0 // loop_exit
    _

// kernel: pspnet_forward.3
$region0: #{pspnet_forward.3}
  #allocation0 [shape = 'u32[]', space=smem, size = 0x4, offset = 0x4, fixed_abs, tag = 'smem constant byte address 0x4 - core index']
  #allocation1 [shape = 'u32[144,128]{1,0:T(1,128)}', space=vmem, size = 0x12000, scoped, tag = 'internal scratch']
  %s0 = inlined_call_operand.vmem [shape: bf16[2,290,24], index: 0, kind: input, shape index: {}]
  %s1 = inlined_call_operand.vmem [shape: bf16[9,24,5], index: 1, kind: input, shape index: {}]
  %s2 = inlined_call_operand.vmem [shape: bf16[2,256,1], index: 2, kind: input, shape index: {}]
  %s3 = inlined_call_operand.vmem [shape: f32[1,5], index: 3, kind: input, shape index: {}]
  %s4 = inlined_call_operand.vmem [shape: f32[2,256,5], index: 4, kind: output, shape index: {}]
  %s5 = sld [smem:[#allocation0]]
  $region49: #{pspnet_forward.3} parent=0
    _
  %s7 = ssub.s32 1, %s5
  %s8 = scalar_select 0, %s7, %s5
  loop: start=0, step=1, limit=4
  $region2: #{pspnet_forward.3} parent=0 // loop_pre_header
    _
  $region3: #{pspnet_forward.3} parent=0 // loop_header
    %s10 = sphi 0, %s14
    %p11 = scmp.ge.s32.totalorder %s10, 4
    %s20 = sphi 0, %s22
    %s23 = sphi 0, %s20
    %s24 = sphi 0, %s23
    %s40 = sphi 0, %s24
    %s44 = sphi 0, %s44
    %s46 = sphi 0, %s44
    %s47 = sphi 0, %s46
    %s61 = sphi 0, %s47
    %s65 = sphi 0, %s65
    %s67 = sphi 0, %s65
    %s68 = sphi 0, %s67
    %s82 = sphi 0, %s68
    %s86 = sphi 0, %s86
    %s88 = sphi 0, %s86
    %s89 = sphi 0, %s88
    %s103 = sphi 0, %s89
    %s109 = sphi 0, %s111
    %s112 = sphi 0, %s109
    %s113 = sphi 0, %s112
    %s129 = sphi 0, %s113
  $region4: #{pspnet_forward.3} parent=0 // loop_header_branch
    %13 = sbr.rel (%p11) target = $region8
  $region5: #{pspnet_forward.3} parent=0 // loop_body
    %s15 = ssub.s32 %s10, 1
    %s16 = ssub.s32 %s10, 2
    %s17 = sadd.s32 %s10, 1
    %s18 = ssub.s32 %s10, %s17
    %p19 = scmp.eq.s32.totalorder %s18, 0
    %s21 = sadd.s32 %s20, 1
    %s22 = scalar_select %p19, %s20, %s21
    %p25 = pneg %p19
    %p26 = scmp.eq.s32.totalorder %s10, 1
    %p27 = por %p25, %p26
    %p28 = scmp.ne.s32.totalorder %s20, %s23
    %p29 = scmp.eq.s32.totalorder %s10, 0
    %p30 = por %p28, %p29
    %p31 = scmp.ne.s32.totalorder %s20, %s23
    %p32 = scmp.eq.s32.totalorder %s15, 1
    %p33 = por %p31, %p32
    %p34 = scmp.ne.s32.totalorder %s23, %s24
    %p35 = scmp.eq.s32.totalorder %s15, 0
    %p36 = por %p34, %p35
    %p37 = scmp.ne.s32.totalorder %s23, %s24
    %p38 = scmp.eq.s32.totalorder %s16, 1
    %p39 = por %p37, %p38
    %p41 = scmp.ne.s32.totalorder %s24, %s40
    %p42 = scmp.eq.s32.totalorder %s16, 0
    %p43 = por %p41, %p42
    %s45 = sadd.s32 %s44, 1
    %p48 = scmp.eq.s32.totalorder %s10, 1
    %p49 = scmp.ne.s32.totalorder %s44, %s46
    %p50 = scmp.eq.s32.totalorder %s10, 0
    %p51 = por %p49, %p50
    %p52 = scmp.ne.s32.totalorder %s44, %s46
    %p53 = scmp.eq.s32.totalorder %s15, 1
    %p54 = por %p52, %p53
    %p55 = scmp.ne.s32.totalorder %s46, %s47
    %p56 = scmp.eq.s32.totalorder %s15, 0
    %p57 = por %p55, %p56
    %p58 = scmp.ne.s32.totalorder %s46, %s47
    %p59 = scmp.eq.s32.totalorder %s16, 1
    %p60 = por %p58, %p59
    %p62 = scmp.ne.s32.totalorder %s47, %s61
    %p63 = scmp.eq.s32.totalorder %s16, 0
    %p64 = por %p62, %p63
    %s66 = sadd.s32 %s65, 1
    %p69 = scmp.eq.s32.totalorder %s10, 1
    %p70 = scmp.ne.s32.totalorder %s65, %s67
    %p71 = scmp.eq.s32.totalorder %s10, 0
    %p72 = por %p70, %p71
    %p73 = scmp.ne.s32.totalorder %s65, %s67
    %p74 = scmp.eq.s32.totalorder %s15, 1
    %p75 = por %p73, %p74
    %p76 = scmp.ne.s32.totalorder %s67, %s68
    %p77 = scmp.eq.s32.totalorder %s15, 0
    %p78 = por %p76, %p77
    %p79 = scmp.ne.s32.totalorder %s67, %s68
    %p80 = scmp.eq.s32.totalorder %s16, 1
    %p81 = por %p79, %p80
    %p83 = scmp.ne.s32.totalorder %s68, %s82
    %p84 = scmp.eq.s32.totalorder %s16, 0
    %p85 = por %p83, %p84
    %s87 = sadd.s32 %s86, 1
    %p90 = scmp.eq.s32.totalorder %s10, 1
    %p91 = scmp.ne.s32.totalorder %s86, %s88
    %p92 = scmp.eq.s32.totalorder %s10, 0
    %p93 = por %p91, %p92
    %p94 = scmp.ne.s32.totalorder %s86, %s88
    %p95 = scmp.eq.s32.totalorder %s15, 1
    %p96 = por %p94, %p95
    %p97 = scmp.ne.s32.totalorder %s88, %s89
    %p98 = scmp.eq.s32.totalorder %s15, 0
    %p99 = por %p97, %p98
    %p100 = scmp.ne.s32.totalorder %s88, %s89
    %p101 = scmp.eq.s32.totalorder %s16, 1
    %p102 = por %p100, %p101
    %p104 = scmp.ne.s32.totalorder %s89, %s103
    %p105 = scmp.eq.s32.totalorder %s16, 0
    %p106 = por %p104, %p105
    %s107 = ssub.s32 %s10, %s17
    %p108 = scmp.eq.s32.totalorder %s107, 0
    %s110 = sadd.s32 %s109, 1
    %s111 = scalar_select %p108, %s109, %s110
    %p114 = pneg %p108
    %p115 = scmp.eq.s32.totalorder %s10, 1
    %p116 = por %p114, %p115
    %p117 = scmp.ne.s32.totalorder %s109, %s112
    %p118 = scmp.eq.s32.totalorder %s10, 0
    %p119 = por %p117, %p118
    %p120 = scmp.ne.s32.totalorder %s109, %s112
    %p121 = scmp.eq.s32.totalorder %s15, 1
    %p122 = por %p120, %p121
    %p123 = scmp.ne.s32.totalorder %s112, %s113
    %p124 = scmp.eq.s32.totalorder %s15, 0
    %p125 = por %p123, %p124
    %p126 = scmp.ne.s32.totalorder %s112, %s113
    %p127 = scmp.eq.s32.totalorder %s16, 1
    %p128 = por %p126, %p127
    %p130 = scmp.ne.s32.totalorder %s113, %s129
    %p131 = scmp.eq.s32.totalorder %s16, 0
    %p132 = por %p130, %p131
    %p133 = scmp.le.s32.totalorder 1, %s10
    %p134 = scmp.lt.s32.totalorder %s10, 3
    %p135 = pnand %p133, %p134
    %p136 = pneg %p135
    // Predicated region
    $region9: #{pspnet_forward.3} parent=5 // pred_check
      _
    $region10: #{pspnet_forward.3} parent=5 // pred_check_branch
      %138 = sbr.rel (%p135) target = $region12
    $region11: #{pspnet_forward.3} parent=5 // pred_region
      %s139 = ssub.s32 %s10, 1
      // Predicated region
      $region13: #{pspnet_forward.3} parent=11 // pred_check
        %p140 = pneg %p57
      $region14: #{pspnet_forward.3} parent=11 // pred_check_branch
        %142 = sbr.rel (%p140) target = $region16
      $region15: #{pspnet_forward.3} parent=11 // pred_region
        _
      $region16: #{pspnet_forward.3} parent=11 // pred_fallthru
        _
      // Predicated region
      $region17: #{pspnet_forward.3} parent=11 // pred_check
        %p143 = pneg %p78
      $region18: #{pspnet_forward.3} parent=11 // pred_check_branch
        %145 = sbr.rel (%p143) target = $region20
      $region19: #{pspnet_forward.3} parent=11 // pred_region
        _
      $region20: #{pspnet_forward.3} parent=11 // pred_fallthru
        _
      // Predicated region
      $region21: #{pspnet_forward.3} parent=11 // pred_check
        %p146 = pneg %p99
      $region22: #{pspnet_forward.3} parent=11 // pred_check_branch
        %148 = sbr.rel (%p146) target = $region24
      $region23: #{pspnet_forward.3} parent=11 // pred_region
        _
      $region24: #{pspnet_forward.3} parent=11 // pred_fallthru
        _
    $region12: #{pspnet_forward.3} parent=5 // pred_fallthru
      _
    %p149 = scmp.lt.s32.totalorder %s10, 2
    // Predicated region
    $region25: #{pspnet_forward.3} parent=5 // pred_check
      %p150 = pneg %p149
    $region26: #{pspnet_forward.3} parent=5 // pred_check_branch
      %152 = sbr.rel (%p150) target = $region28
    $region27: #{pspnet_forward.3} parent=5 // pred_region
      // Predicated region
      $region29: #{pspnet_forward.3} parent=27 // pred_check
        %p153 = pneg %p30
      $region30: #{pspnet_forward.3} parent=27 // pred_check_branch
        %155 = sbr.rel (%p153) target = $region32
      $region31: #{pspnet_forward.3} parent=27 // pred_region
        %p156 = scmp.lt.s32.totalorder %s10, 1
        %s157 = scalar_select %p156, %s10, 1
        %s158 = smul.addr %s157, 37
        %s159 = smul.addr %s158, 4
        %s160 = scalar_lea.vmem %s0, %s159
      $region32: #{pspnet_forward.3} parent=27 // pred_fallthru
        _
    $region28: #{pspnet_forward.3} parent=5 // pred_fallthru
      _
    %p161 = scmp.le.s32.totalorder 1, %s10
    %p162 = scmp.lt.s32.totalorder %s10, 3
    %p163 = pnand %p161, %p162
    %p164 = pneg %p163
    // Predicated region
    $region33: #{pspnet_forward.3} parent=5 // pred_check
      _
    $region34: #{pspnet_forward.3} parent=5 // pred_check_branch
      %166 = sbr.rel (%p163) target = $region36
    $region35: #{pspnet_forward.3} parent=5 // pred_region
      %s167 = ssub.s32 %s10, 1
      %p168 = scmp.lt.s32.totalorder %s15, 1
      %s169 = scalar_select %p168, %s15, 1
      %s170 = smul.addr %s169, 37
      %s171 = smul.addr %s170, 4
      %s172 = scalar_lea.vmem %s0, %s171
      %p173 = pneg %p36
      %p174 = pneg %p33
      %p175 = pneg %p57
      %p176 = pneg %p54
      %p177 = pneg %p78
      %p178 = pneg %p75
      %p179 = pneg %p99
      %p180 = pneg %p96
      %p181 = pneg %p125
      %p182 = pneg %p122
      %p183 = scmp.lt.s32.totalorder %s15, 1
      %s184 = scalar_select %p183, %s15, 1
      %s185 = smul.addr %s184, 32
      %s186 = smul.addr %s185, 8
      %s187 = scalar_lea.vmem %s4, %s186
      %p188 = scmp.lt.s32.totalorder %s15, 1
      %s189 = scalar_select %p188, %s15, 1
      %s190 = smul.addr %s189, 37
      %s191 = smul.addr %s190, 4
      %s192 = scalar_lea.vmem %s0, %s191
      %p193 = scmp.lt.s32.totalorder %s15, 1
      %s194 = scalar_select %p193, %s15, 1
      %s195 = smul.addr %s194, 32
      %s196 = smul.addr %s195, 8
      %s197 = scalar_lea.vmem %s4, %s196
      %v199 = vld [vmem:[%s192] sm:$0xf]
      %v200 = vld [vmem:[%s192 + $0x4] sm:$0xf]
      %v201 = vld [vmem:[%s192 + $0x8] sm:$0xf]
      %v202 = vld [vmem:[%s192 + $0xc] sm:$0xf]
      %v203 = vld [vmem:[%s192 + $0x10] sm:$0xf]
      %v204 = vld [vmem:[%s192 + $0x14] sm:$0xf]
      %v205 = vld [vmem:[%s192 + $0x18] sm:$0xf]
      %v206 = vld [vmem:[%s192 + $0x1c] sm:$0xf]
      %v207 = vld [vmem:[%s192 + $0x20] sm:$0xf]
      %v208 = vld [vmem:[%s192 + $0x24] sm:$0xf]
      %v209 = vld [vmem:[%s192 + $0x28] sm:$0xf]
      %v210 = vld [vmem:[%s192 + $0x2c] sm:$0xf]
      %v211 = vld [vmem:[%s192 + $0x30] sm:$0xf]
      %v212 = vld [vmem:[%s192 + $0x34] sm:$0xf]
      %v213 = vld [vmem:[%s192 + $0x38] sm:$0xf]
      %v214 = vld [vmem:[%s192 + $0x3c] sm:$0xf]
      %v215 = vld [vmem:[%s192 + $0x40] sm:$0xf]
      %v216 = vld [vmem:[%s192 + $0x44] sm:$0xf]
      %v217 = vld [vmem:[%s192 + $0x48] sm:$0xf]
      %v218 = vld [vmem:[%s192 + $0x4c] sm:$0xf]
      %v219 = vld [vmem:[%s192 + $0x50] sm:$0xf]
      %v220 = vld [vmem:[%s192 + $0x54] sm:$0xf]
      %v221 = vld [vmem:[%s192 + $0x58] sm:$0xf]
      %v222 = vld [vmem:[%s192 + $0x5c] sm:$0xf]
      %v223 = vld [vmem:[%s192 + $0x60] sm:$0xf]
      %v224 = vld [vmem:[%s192 + $0x64] sm:$0xf]
      %v225 = vld [vmem:[%s192 + $0x68] sm:$0xf]
      %v226 = vld [vmem:[%s192 + $0x6c] sm:$0xf]
      %v227 = vld [vmem:[%s192 + $0x70] sm:$0xf]
      %v228 = vld [vmem:[%s192 + $0x74] sm:$0xf]
      %v229 = vld [vmem:[%s192 + $0x78] sm:$0xf]
      %v230 = vld [vmem:[%s192 + $0x7c] sm:$0xf]
      %v231 = vld [vmem:[%s2] sm:$0xf]
      %v232 = vld [vmem:[%s2 + $0x4] sm:$0xf]
      %v233 = vld [vmem:[%s2 + $0x8] sm:$0xf]
      %v234 = vld [vmem:[%s2 + $0xc] sm:$0xf]
      %v235 = vld [vmem:[%s2 + $0x10] sm:$0xf]
      %v236 = vld [vmem:[%s2 + $0x14] sm:$0xf]
      %v237 = vld [vmem:[%s2 + $0x18] sm:$0xf]
      %v238 = vld [vmem:[%s2 + $0x1c] sm:$0xf]
      %v239 = vld [vmem:[%s2 + $0x20] sm:$0xf]
      %v240 = vld [vmem:[%s2 + $0x24] sm:$0xf]
      %v241 = vld [vmem:[%s2 + $0x28] sm:$0xf]
      %v242 = vld [vmem:[%s2 + $0x2c] sm:$0xf]
      %v243 = vld [vmem:[%s2 + $0x30] sm:$0xf]
      %v244 = vld [vmem:[%s2 + $0x34] sm:$0xf]
      %v245 = vld [vmem:[%s2 + $0x38] sm:$0xf]
      %v246 = vld [vmem:[%s2 + $0x3c] sm:$0xf]
      %v247 = vld [vmem:[%s2 + $0x40] sm:$0xf]
      %v248 = vld [vmem:[%s2 + $0x44] sm:$0xf]
      %v249 = vld [vmem:[%s2 + $0x48] sm:$0xf]
      %v250 = vld [vmem:[%s2 + $0x4c] sm:$0xf]
      %v251 = vld [vmem:[%s2 + $0x50] sm:$0xf]
      %v252 = vld [vmem:[%s2 + $0x54] sm:$0xf]
      %v253 = vld [vmem:[%s2 + $0x58] sm:$0xf]
      %v254 = vld [vmem:[%s2 + $0x5c] sm:$0xf]
      %v255 = vld [vmem:[%s2 + $0x60] sm:$0xf]
      %v256 = vld [vmem:[%s2 + $0x64] sm:$0xf]
      %v257 = vld [vmem:[%s2 + $0x68] sm:$0xf]
      %v258 = vld [vmem:[%s2 + $0x6c] sm:$0xf]
      %v259 = vld [vmem:[%s2 + $0x70] sm:$0xf]
      %v260 = vld [vmem:[%s2 + $0x74] sm:$0xf]
      %v261 = vld [vmem:[%s2 + $0x78] sm:$0xf]
      %v262 = vld [vmem:[%s2 + $0x7c] sm:$0xf]
      %264 = vset.pattern.permute.xlu0 0
      %265 = vperm.xlu0 %264, %v231
      %v266 = vpop.permute.xlu0 %265
      %v269 = vunpack.c.l.s4 839922192
      %v270 = vunpack.c.0.s8 %v269
      %v271 = vlaneseq
      %v272 = vshrl.u32 %v271, 7
      %v273 = vsub.s32 %v270, %v272
      %v274 = vrot.slane %v266, %v273
      %276 = vset.pattern.permute.xlu0 0
      %277 = vperm.xlu0 %276, %v232
      %v278 = vpop.permute.xlu0 %277
      %v281 = vunpack.c.l.s4 839922192
      %v282 = vunpack.c.0.s8 %v281
      %v283 = vlaneseq
      %v284 = vshrl.u32 %v283, 7
      %v285 = vsub.s32 %v282, %v284
      %v286 = vrot.slane %v278, %v285
      %288 = vset.pattern.permute.xlu0 0
      %289 = vperm.xlu0 %288, %v233
      %v290 = vpop.permute.xlu0 %289
      %v293 = vunpack.c.l.s4 839922192
      %v294 = vunpack.c.0.s8 %v293
      %v295 = vlaneseq
      %v296 = vshrl.u32 %v295, 7
      %v297 = vsub.s32 %v294, %v296
      %v298 = vrot.slane %v290, %v297
      %300 = vset.pattern.permute.xlu0 0
      %301 = vperm.xlu0 %300, %v234
      %v302 = vpop.permute.xlu0 %301
      %v305 = vunpack.c.l.s4 839922192
      %v306 = vunpack.c.0.s8 %v305
      %v307 = vlaneseq
      %v308 = vshrl.u32 %v307, 7
      %v309 = vsub.s32 %v306, %v308
      %v310 = vrot.slane %v302, %v309
      %312 = vset.pattern.permute.xlu0 0
      %313 = vperm.xlu0 %312, %v235
      %v314 = vpop.permute.xlu0 %313
      %v317 = vunpack.c.l.s4 839922192
      %v318 = vunpack.c.0.s8 %v317
      %v319 = vlaneseq
      %v320 = vshrl.u32 %v319, 7
      %v321 = vsub.s32 %v318, %v320
      %v322 = vrot.slane %v314, %v321
      %324 = vset.pattern.permute.xlu0 0
      %325 = vperm.xlu0 %324, %v236
      %v326 = vpop.permute.xlu0 %325
      %v329 = vunpack.c.l.s4 839922192
      %v330 = vunpack.c.0.s8 %v329
      %v331 = vlaneseq
      %v332 = vshrl.u32 %v331, 7
      %v333 = vsub.s32 %v330, %v332
      %v334 = vrot.slane %v326, %v333
      %336 = vset.pattern.permute.xlu0 0
      %337 = vperm.xlu0 %336, %v237
      %v338 = vpop.permute.xlu0 %337
      %v341 = vunpack.c.l.s4 839922192
      %v342 = vunpack.c.0.s8 %v341
      %v343 = vlaneseq
      %v344 = vshrl.u32 %v343, 7
      %v345 = vsub.s32 %v342, %v344
      %v346 = vrot.slane %v338, %v345
      %348 = vset.pattern.permute.xlu0 0
      %349 = vperm.xlu0 %348, %v238
      %v350 = vpop.permute.xlu0 %349
      %v353 = vunpack.c.l.s4 839922192
      %v354 = vunpack.c.0.s8 %v353
      %v355 = vlaneseq
      %v356 = vshrl.u32 %v355, 7
      %v357 = vsub.s32 %v354, %v356
      %v358 = vrot.slane %v350, %v357
      %360 = vset.pattern.permute.xlu0 0
      %361 = vperm.xlu0 %360, %v239
      %v362 = vpop.permute.xlu0 %361
      %v365 = vunpack.c.l.s4 839922192
      %v366 = vunpack.c.0.s8 %v365
      %v367 = vlaneseq
      %v368 = vshrl.u32 %v367, 7
      %v369 = vsub.s32 %v366, %v368
      %v370 = vrot.slane %v362, %v369
      %372 = vset.pattern.permute.xlu0 0
      %373 = vperm.xlu0 %372, %v240
      %v374 = vpop.permute.xlu0 %373
      %v377 = vunpack.c.l.s4 839922192
      %v378 = vunpack.c.0.s8 %v377
      %v379 = vlaneseq
      %v380 = vshrl.u32 %v379, 7
      %v381 = vsub.s32 %v378, %v380
      %v382 = vrot.slane %v374, %v381
      %384 = vset.pattern.permute.xlu0 0
      %385 = vperm.xlu0 %384, %v241
      %v386 = vpop.permute.xlu0 %385
      %v389 = vunpack.c.l.s4 839922192
      %v390 = vunpack.c.0.s8 %v389
      %v391 = vlaneseq
      %v392 = vshrl.u32 %v391, 7
      %v393 = vsub.s32 %v390, %v392
      %v394 = vrot.slane %v386, %v393
      %396 = vset.pattern.permute.xlu0 0
      %397 = vperm.xlu0 %396, %v242
      %v398 = vpop.permute.xlu0 %397
      %v401 = vunpack.c.l.s4 839922192
      %v402 = vunpack.c.0.s8 %v401
      %v403 = vlaneseq
      %v404 = vshrl.u32 %v403, 7
      %v405 = vsub.s32 %v402, %v404
      %v406 = vrot.slane %v398, %v405
      %408 = vset.pattern.permute.xlu0 0
      %409 = vperm.xlu0 %408, %v243
      %v410 = vpop.permute.xlu0 %409
      %v413 = vunpack.c.l.s4 839922192
      %v414 = vunpack.c.0.s8 %v413
      %v415 = vlaneseq
      %v416 = vshrl.u32 %v415, 7
      %v417 = vsub.s32 %v414, %v416
      %v418 = vrot.slane %v410, %v417
      %420 = vset.pattern.permute.xlu0 0
      %421 = vperm.xlu0 %420, %v244
      %v422 = vpop.permute.xlu0 %421
      %v425 = vunpack.c.l.s4 839922192
      %v426 = vunpack.c.0.s8 %v425
      %v427 = vlaneseq
      %v428 = vshrl.u32 %v427, 7
      %v429 = vsub.s32 %v426, %v428
      %v430 = vrot.slane %v422, %v429
      %432 = vset.pattern.permute.xlu0 0
      %433 = vperm.xlu0 %432, %v245
      %v434 = vpop.permute.xlu0 %433
      %v437 = vunpack.c.l.s4 839922192
      %v438 = vunpack.c.0.s8 %v437
      %v439 = vlaneseq
      %v440 = vshrl.u32 %v439, 7
      %v441 = vsub.s32 %v438, %v440
      %v442 = vrot.slane %v434, %v441
      %444 = vset.pattern.permute.xlu0 0
      %445 = vperm.xlu0 %444, %v246
      %v446 = vpop.permute.xlu0 %445
      %v449 = vunpack.c.l.s4 839922192
      %v450 = vunpack.c.0.s8 %v449
      %v451 = vlaneseq
      %v452 = vshrl.u32 %v451, 7
      %v453 = vsub.s32 %v450, %v452
      %v454 = vrot.slane %v446, %v453
      %456 = vset.pattern.permute.xlu0 0
      %457 = vperm.xlu0 %456, %v247
      %v458 = vpop.permute.xlu0 %457
      %v461 = vunpack.c.l.s4 839922192
      %v462 = vunpack.c.0.s8 %v461
      %v463 = vlaneseq
      %v464 = vshrl.u32 %v463, 7
      %v465 = vsub.s32 %v462, %v464
      %v466 = vrot.slane %v458, %v465
      %468 = vset.pattern.permute.xlu0 0
      %469 = vperm.xlu0 %468, %v248
      %v470 = vpop.permute.xlu0 %469
      %v473 = vunpack.c.l.s4 839922192
      %v474 = vunpack.c.0.s8 %v473
      %v475 = vlaneseq
      %v476 = vshrl.u32 %v475, 7
      %v477 = vsub.s32 %v474, %v476
      %v478 = vrot.slane %v470, %v477
      %480 = vset.pattern.permute.xlu0 0
      %481 = vperm.xlu0 %480, %v249
      %v482 = vpop.permute.xlu0 %481
      %v485 = vunpack.c.l.s4 839922192
      %v486 = vunpack.c.0.s8 %v485
      %v487 = vlaneseq
      %v488 = vshrl.u32 %v487, 7
      %v489 = vsub.s32 %v486, %v488
      %v490 = vrot.slane %v482, %v489
      %492 = vset.pattern.permute.xlu0 0
      %493 = vperm.xlu0 %492, %v250
      %v494 = vpop.permute.xlu0 %493
      %v497 = vunpack.c.l.s4 839922192
      %v498 = vunpack.c.0.s8 %v497
      %v499 = vlaneseq
      %v500 = vshrl.u32 %v499, 7
      %v501 = vsub.s32 %v498, %v500
      %v502 = vrot.slane %v494, %v501
      %504 = vset.pattern.permute.xlu0 0
      %505 = vperm.xlu0 %504, %v251
      %v506 = vpop.permute.xlu0 %505
      %v509 = vunpack.c.l.s4 839922192
      %v510 = vunpack.c.0.s8 %v509
      %v511 = vlaneseq
      %v512 = vshrl.u32 %v511, 7
      %v513 = vsub.s32 %v510, %v512
      %v514 = vrot.slane %v506, %v513
      %516 = vset.pattern.permute.xlu0 0
      %517 = vperm.xlu0 %516, %v252
      %v518 = vpop.permute.xlu0 %517
      %v521 = vunpack.c.l.s4 839922192
      %v522 = vunpack.c.0.s8 %v521
      %v523 = vlaneseq
      %v524 = vshrl.u32 %v523, 7
      %v525 = vsub.s32 %v522, %v524
      %v526 = vrot.slane %v518, %v525
      %528 = vset.pattern.permute.xlu0 0
      %529 = vperm.xlu0 %528, %v253
      %v530 = vpop.permute.xlu0 %529
      %v533 = vunpack.c.l.s4 839922192
      %v534 = vunpack.c.0.s8 %v533
      %v535 = vlaneseq
      %v536 = vshrl.u32 %v535, 7
      %v537 = vsub.s32 %v534, %v536
      %v538 = vrot.slane %v530, %v537
      %540 = vset.pattern.permute.xlu0 0
      %541 = vperm.xlu0 %540, %v254
      %v542 = vpop.permute.xlu0 %541
      %v545 = vunpack.c.l.s4 839922192
      %v546 = vunpack.c.0.s8 %v545
      %v547 = vlaneseq
      %v548 = vshrl.u32 %v547, 7
      %v549 = vsub.s32 %v546, %v548
      %v550 = vrot.slane %v542, %v549
      %552 = vset.pattern.permute.xlu0 0
      %553 = vperm.xlu0 %552, %v255
      %v554 = vpop.permute.xlu0 %553
      %v557 = vunpack.c.l.s4 839922192
      %v558 = vunpack.c.0.s8 %v557
      %v559 = vlaneseq
      %v560 = vshrl.u32 %v559, 7
      %v561 = vsub.s32 %v558, %v560
      %v562 = vrot.slane %v554, %v561
      %564 = vset.pattern.permute.xlu0 0
      %565 = vperm.xlu0 %564, %v256
      %v566 = vpop.permute.xlu0 %565
      %v569 = vunpack.c.l.s4 839922192
      %v570 = vunpack.c.0.s8 %v569
      %v571 = vlaneseq
      %v572 = vshrl.u32 %v571, 7
      %v573 = vsub.s32 %v570, %v572
      %v574 = vrot.slane %v566, %v573
      %576 = vset.pattern.permute.xlu0 0
      %577 = vperm.xlu0 %576, %v257
      %v578 = vpop.permute.xlu0 %577
      %v581 = vunpack.c.l.s4 839922192
      %v582 = vunpack.c.0.s8 %v581
      %v583 = vlaneseq
      %v584 = vshrl.u32 %v583, 7
      %v585 = vsub.s32 %v582, %v584
      %v586 = vrot.slane %v578, %v585
      %588 = vset.pattern.permute.xlu0 0
      %589 = vperm.xlu0 %588, %v258
      %v590 = vpop.permute.xlu0 %589
      %v593 = vunpack.c.l.s4 839922192
      %v594 = vunpack.c.0.s8 %v593
      %v595 = vlaneseq
      %v596 = vshrl.u32 %v595, 7
      %v597 = vsub.s32 %v594, %v596
      %v598 = vrot.slane %v590, %v597
      %600 = vset.pattern.permute.xlu0 0
      %601 = vperm.xlu0 %600, %v259
      %v602 = vpop.permute.xlu0 %601
      %v605 = vunpack.c.l.s4 839922192
      %v606 = vunpack.c.0.s8 %v605
      %v607 = vlaneseq
      %v608 = vshrl.u32 %v607, 7
      %v609 = vsub.s32 %v606, %v608
      %v610 = vrot.slane %v602, %v609
      %612 = vset.pattern.permute.xlu0 0
      %613 = vperm.xlu0 %612, %v260
      %v614 = vpop.permute.xlu0 %613
      %v617 = vunpack.c.l.s4 839922192
      %v618 = vunpack.c.0.s8 %v617
      %v619 = vlaneseq
      %v620 = vshrl.u32 %v619, 7
      %v621 = vsub.s32 %v618, %v620
      %v622 = vrot.slane %v614, %v621
      %624 = vset.pattern.permute.xlu0 0
      %625 = vperm.xlu0 %624, %v261
      %v626 = vpop.permute.xlu0 %625
      %v629 = vunpack.c.l.s4 839922192
      %v630 = vunpack.c.0.s8 %v629
      %v631 = vlaneseq
      %v632 = vshrl.u32 %v631, 7
      %v633 = vsub.s32 %v630, %v632
      %v634 = vrot.slane %v626, %v633
      %636 = vset.pattern.permute.xlu0 0
      %637 = vperm.xlu0 %636, %v262
      %v638 = vpop.permute.xlu0 %637
      %v641 = vunpack.c.l.s4 839922192
      %v642 = vunpack.c.0.s8 %v641
      %v643 = vlaneseq
      %v644 = vshrl.u32 %v643, 7
      %v645 = vsub.s32 %v642, %v644
      %v646 = vrot.slane %v638, %v645
      %v647 = vmul.bf16 %v199, %v274
      %v648 = vmul.bf16 %v200, %v286
      %v649 = vmul.bf16 %v201, %v298
      %v650 = vmul.bf16 %v202, %v310
      %v651 = vmul.bf16 %v203, %v322
      %v652 = vmul.bf16 %v204, %v334
      %v653 = vmul.bf16 %v205, %v346
      %v654 = vmul.bf16 %v206, %v358
      %v655 = vmul.bf16 %v207, %v370
      %v656 = vmul.bf16 %v208, %v382
      %v657 = vmul.bf16 %v209, %v394
      %v658 = vmul.bf16 %v210, %v406
      %v659 = vmul.bf16 %v211, %v418
      %v660 = vmul.bf16 %v212, %v430
      %v661 = vmul.bf16 %v213, %v442
      %v662 = vmul.bf16 %v214, %v454
      %v663 = vmul.bf16 %v215, %v466
      %v664 = vmul.bf16 %v216, %v478
      %v665 = vmul.bf16 %v217, %v490
      %v666 = vmul.bf16 %v218, %v502
      %v667 = vmul.bf16 %v219, %v514
      %v668 = vmul.bf16 %v220, %v526
      %v669 = vmul.bf16 %v221, %v538
      %v670 = vmul.bf16 %v222, %v550
      %v671 = vmul.bf16 %v223, %v562
      %v672 = vmul.bf16 %v224, %v574
      %v673 = vmul.bf16 %v225, %v586
      %v674 = vmul.bf16 %v226, %v598
      %v675 = vmul.bf16 %v227, %v610
      %v676 = vmul.bf16 %v228, %v622
      %v677 = vmul.bf16 %v229, %v634
      %v678 = vmul.bf16 %v230, %v646
      %v679 = vld [vmem:[%s1] sm:$0xf]
      %v680 = vld [vmem:[%s1 + $0x4] sm:$0xf]
      %v681 = vld [vmem:[%s1 + $0x8] sm:$0xf]
      %v682 = vld [vmem:[%s192] sm:$0xf]
      %v683 = vld [vmem:[%s192 + $0x4] sm:$0xf]
      %v684 = vld [vmem:[%s192 + $0x8] sm:$0xf]
      %v685 = vld [vmem:[%s192 + $0xc] sm:$0xf]
      %v686 = vld [vmem:[%s192 + $0x10] sm:$0xf]
      %v687 = vld [vmem:[%s192 + $0x14] sm:$0xf]
      %v688 = vld [vmem:[%s192 + $0x18] sm:$0xf]
      %v689 = vld [vmem:[%s192 + $0x1c] sm:$0xf]
      %v690 = vld [vmem:[%s192 + $0x20] sm:$0xf]
      %v691 = vld [vmem:[%s192 + $0x24] sm:$0xf]
      %v692 = vld [vmem:[%s192 + $0x28] sm:$0xf]
      %v693 = vld [vmem:[%s192 + $0x2c] sm:$0xf]
      %v694 = vld [vmem:[%s192 + $0x30] sm:$0xf]
      %v695 = vld [vmem:[%s192 + $0x34] sm:$0xf]
      %v696 = vld [vmem:[%s192 + $0x38] sm:$0xf]
      %v697 = vld [vmem:[%s192 + $0x3c] sm:$0xf]
      %v698 = vld [vmem:[%s192 + $0x40] sm:$0xf]
      %v699 = vld [vmem:[%s192 + $0x44] sm:$0xf]
      %v700 = vld [vmem:[%s192 + $0x48] sm:$0xf]
      %v701 = vld [vmem:[%s192 + $0x4c] sm:$0xf]
      %v702 = vld [vmem:[%s192 + $0x50] sm:$0xf]
      %v703 = vld [vmem:[%s192 + $0x54] sm:$0xf]
      %v704 = vld [vmem:[%s192 + $0x58] sm:$0xf]
      %v705 = vld [vmem:[%s192 + $0x5c] sm:$0xf]
      %v706 = vld [vmem:[%s192 + $0x60] sm:$0xf]
      %v707 = vld [vmem:[%s192 + $0x64] sm:$0xf]
      %v708 = vld [vmem:[%s192 + $0x68] sm:$0xf]
      %v709 = vld [vmem:[%s192 + $0x6c] sm:$0xf]
      %v710 = vld [vmem:[%s192 + $0x70] sm:$0xf]
      %v711 = vld [vmem:[%s192 + $0x74] sm:$0xf]
      %v712 = vld [vmem:[%s192 + $0x78] sm:$0xf]
      %v713 = vld [vmem:[%s192 + $0x7c] sm:$0xf]
      %v714 = vld [vmem:[%s192 + $0x80] sm:$0x1]
      %s715 = scalar_lea.vmem %s1, 12
      %v716 = vld [vmem:[%s715] sm:$0xf]
      %v717 = vld [vmem:[%s715 + $0x4] sm:$0xf]
      %v718 = vld [vmem:[%s715 + $0x8] sm:$0xf]
      %v752 = vunpack.c.l.b16 %v682
      %v753 = vunpack.c.l.b16 %v683
      %v754 = vunpack.c.l.b16 %v684
      %v755 = vunpack.c.l.b16 %v685
      %v756 = vunpack.c.l.b16 %v686
      %v757 = vunpack.c.l.b16 %v687
      %v758 = vunpack.c.l.b16 %v688
      %v759 = vunpack.c.l.b16 %v689
      %v760 = vunpack.c.l.b16 %v690
      %v761 = vunpack.c.l.b16 %v691
      %v762 = vunpack.c.l.b16 %v692
      %v763 = vunpack.c.l.b16 %v693
      %v764 = vunpack.c.l.b16 %v694
      %v765 = vunpack.c.l.b16 %v695
      %v766 = vunpack.c.l.b16 %v696
      %v767 = vunpack.c.l.b16 %v697
      %v768 = vunpack.c.l.b16 %v698
      %v769 = vunpack.c.l.b16 %v699
      %v770 = vunpack.c.l.b16 %v700
      %v771 = vunpack.c.l.b16 %v701
      %v772 = vunpack.c.l.b16 %v702
      %v773 = vunpack.c.l.b16 %v703
      %v774 = vunpack.c.l.b16 %v704
      %v775 = vunpack.c.l.b16 %v705
      %v776 = vunpack.c.l.b16 %v706
      %v777 = vunpack.c.l.b16 %v707
      %v778 = vunpack.c.l.b16 %v708
      %v779 = vunpack.c.l.b16 %v709
      %v780 = vunpack.c.l.b16 %v710
      %v781 = vunpack.c.l.b16 %v711
      %v782 = vunpack.c.l.b16 %v712
      %v783 = vunpack.c.l.b16 %v713
      %v784 = vunpack.c.l.b16 %v714
      %v785 = vpack.c.b16 %v753, %v752
      %v786 = vpack.c.b16 %v755, %v754
      %v787 = vpack.c.b16 %v757, %v756
      %v788 = vpack.c.b16 %v759, %v758
      %v789 = vpack.c.b16 %v761, %v760
      %v790 = vpack.c.b16 %v763, %v762
      %v791 = vpack.c.b16 %v765, %v764
      %v792 = vpack.c.b16 %v767, %v766
      %v793 = vpack.c.b16 %v769, %v768
      %v794 = vpack.c.b16 %v771, %v770
      %v795 = vpack.c.b16 %v773, %v772
      %v796 = vpack.c.b16 %v775, %v774
      %v797 = vpack.c.b16 %v777, %v776
      %v798 = vpack.c.b16 %v779, %v778
      %v799 = vpack.c.b16 %v781, %v780
      %v800 = vpack.c.b16 %v783, %v782
      %v801 = vpack.c.b16 %v784, %v784
      %vm802 = vsmask.f32 7424
      %v804 = vshrl.u32 %v785, 16
      %v806 = vshll.u32 %v785, 16
      %v808 = vrot.slane %v806, 1
      %v809 = vor.u32 %v804, %v808
      %v811 = vshll.u32 %v786, 16
      %v813 = vrot.slane %v811, 1
      %v814 = vsel %vm802, %v809, %v813
      %v815 = vshrl.u32 %v786, 16
      %v817 = vor.u32 %v815, %v813
      %v819 = vshll.u32 %v787, 16
      %v821 = vrot.slane %v819, 1
      %v822 = vsel %vm802, %v817, %v821
      %v823 = vshrl.u32 %v787, 16
      %v825 = vor.u32 %v823, %v821
      %v827 = vshll.u32 %v788, 16
      %v829 = vrot.slane %v827, 1
      %v830 = vsel %vm802, %v825, %v829
      %v831 = vshrl.u32 %v788, 16
      %v833 = vor.u32 %v831, %v829
      %v835 = vshll.u32 %v789, 16
      %v837 = vrot.slane %v835, 1
      %v838 = vsel %vm802, %v833, %v837
      %v839 = vshrl.u32 %v789, 16
      %v841 = vor.u32 %v839, %v837
      %v843 = vshll.u32 %v790, 16
      %v845 = vrot.slane %v843, 1
      %v846 = vsel %vm802, %v841, %v845
      %v847 = vshrl.u32 %v790, 16
      %v849 = vor.u32 %v847, %v845
      %v851 = vshll.u32 %v791, 16
      %v853 = vrot.slane %v851, 1
      %v854 = vsel %vm802, %v849, %v853
      %v855 = vshrl.u32 %v791, 16
      %v857 = vor.u32 %v855, %v853
      %v859 = vshll.u32 %v792, 16
      %v861 = vrot.slane %v859, 1
      %v862 = vsel %vm802, %v857, %v861
      %v863 = vshrl.u32 %v792, 16
      %v865 = vor.u32 %v863, %v861
      %v867 = vshll.u32 %v793, 16
      %v869 = vrot.slane %v867, 1
      %v870 = vsel %vm802, %v865, %v869
      %v871 = vshrl.u32 %v793, 16
      %v873 = vor.u32 %v871, %v869
      %v875 = vshll.u32 %v794, 16
      %v877 = vrot.slane %v875, 1
      %v878 = vsel %vm802, %v873, %v877
      %v879 = vshrl.u32 %v794, 16
      %v881 = vor.u32 %v879, %v877
      %v883 = vshll.u32 %v795, 16
      %v885 = vrot.slane %v883, 1
      %v886 = vsel %vm802, %v881, %v885
      %v887 = vshrl.u32 %v795, 16
      %v889 = vor.u32 %v887, %v885
      %v891 = vshll.u32 %v796, 16
      %v893 = vrot.slane %v891, 1
      %v894 = vsel %vm802, %v889, %v893
      %v895 = vshrl.u32 %v796, 16
      %v897 = vor.u32 %v895, %v893
      %v899 = vshll.u32 %v797, 16
      %v901 = vrot.slane %v899, 1
      %v902 = vsel %vm802, %v897, %v901
      %v903 = vshrl.u32 %v797, 16
      %v905 = vor.u32 %v903, %v901
      %v907 = vshll.u32 %v798, 16
      %v909 = vrot.slane %v907, 1
      %v910 = vsel %vm802, %v905, %v909
      %v911 = vshrl.u32 %v798, 16
      %v913 = vor.u32 %v911, %v909
      %v915 = vshll.u32 %v799, 16
      %v917 = vrot.slane %v915, 1
      %v918 = vsel %vm802, %v913, %v917
      %v919 = vshrl.u32 %v799, 16
      %v921 = vor.u32 %v919, %v917
      %v923 = vshll.u32 %v800, 16
      %v925 = vrot.slane %v923, 1
      %v926 = vsel %vm802, %v921, %v925
      %v927 = vshrl.u32 %v800, 16
      %v929 = vor.u32 %v927, %v925
      %v931 = vshll.u32 %v801, 16
      %v933 = vrot.slane %v931, 1
      %v934 = vsel %vm802, %v929, %v933
      %v938 = vunpack.c.l.b16 %v716
      %v939 = vunpack.c.l.b16 %v717
      %v940 = vunpack.c.l.b16 %v718
      %v941 = vpack.c.b16 %v939, %v938
      %v942 = vpack.c.b16 %v940, %v940
      %vm944 = vcmask 195584
      %v946 = vsel %vm944, %v814, 0
      %v949 = vsel %vm944, %v822, 0
      %v952 = vsel %vm944, %v830, 0
      %v955 = vsel %vm944, %v838, 0
      %v958 = vsel %vm944, %v846, 0
      %v961 = vsel %vm944, %v854, 0
      %v964 = vsel %vm944, %v862, 0
      %v967 = vsel %vm944, %v870, 0
      %v970 = vsel %vm944, %v878, 0
      %v973 = vsel %vm944, %v886, 0
      %v976 = vsel %vm944, %v894, 0
      %v979 = vsel %vm944, %v902, 0
      %v982 = vsel %vm944, %v910, 0
      %v985 = vsel %vm944, %v918, 0
      %v988 = vsel %vm944, %v926, 0
      %v991 = vsel %vm944, %v934, 0
      %vm993 = vcmask 1043456
      %v995 = vsel %vm993, %v942, 0
      %997 = vmatprep.subr.bf16.mxu0 0
      %998 = vmatpush1.bf16.msra.mxu0 0
      %999 = vmatprep.subr.bf16.mxu0 0
      %1000 = vmatpush1.bf16.msra.mxu0 0
      %1001 = vmatprep.subr.bf16.mxu0 0
      %1002 = vmatpush1.bf16.msra.mxu0 0
      %1003 = vmatprep.subr.bf16.mxu0 0
      %1004 = vmatpush1.bf16.msra.mxu0 0
      %1005 = vmatprep.subr.bf16.mxu0 0
      %1006 = vmatpush1.bf16.msra.mxu0 0
      %1007 = vmatprep.subr.bf16.mxu0 0
      %1008 = vmatpush1.bf16.msra.mxu0 0
      %1009 = vmatprep.subr.bf16.mxu0 0
      %1010 = vmatpush1.bf16.msra.mxu0 %v995
      %1011 = vmatprep.subr.bf16.mxu0 0
      %1012 = vmatpush1.bf16.msra.mxu0 %v941
      %1013 = vmatprep.subr.bf16.mxu0 0
      %1014 = vmatpush2.bf16.msra.mxu0 0
      %1015 = vmatprep.subr.bf16.mxu0 0
      %1016 = vmatpush2.bf16.msra.mxu0 0
      %1017 = vmatprep.subr.bf16.mxu0 0
      %1018 = vmatpush2.bf16.msra.mxu0 0
      %1019 = vmatprep.subr.bf16.mxu0 0
      %1020 = vmatpush2.bf16.msra.mxu0 0
      %1021 = vmatprep.subr.bf16.mxu0 0
      %1022 = vmatpush2.bf16.msra.mxu0 0
      %1023 = vmatprep.subr.bf16.mxu0 0
      %1024 = vmatpush2.bf16.msra.mxu0 0
      %1025 = vmatprep.subr.bf16.mxu0 0
      %1026 = vmatpush2.bf16.msra.mxu0 0
      %1027 = vmatprep.subr.bf16.mxu0 0
      %1028 = vmatpush2.bf16.msra.mxu0 0
      %1029 = vmatprep.mubr.bf16.mxu0 0
      %1030 = vmatmul.mubr.bf16.gmra.mxu0 %v946
      %v1031 = vpop.f32.mrf.mxu0
      %v1032 = vadd.f32 0.0, %v1031
      %v1033 = vpop.f32.mrf.mxu0
      %v1034 = vpop.f32.mrf.mxu0
      %v1035 = vadd.f32 0.0, %v1034
      %v1036 = vpop.f32.mrf.mxu0
      %1037 = vmatprep.mubr.bf16.mxu0 0
      %1038 = vmatmul.mubr.bf16.gmra.mxu0 %v949
      %v1039 = vpop.f32.mrf.mxu0
      %v1040 = vadd.f32 0.0, %v1039
      %v1041 = vpop.f32.mrf.mxu0
      %v1042 = vpop.f32.mrf.mxu0
      %v1043 = vadd.f32 0.0, %v1042
      %v1044 = vpop.f32.mrf.mxu0
      %1045 = vmatprep.mubr.bf16.mxu0 0
      %1046 = vmatmul.mubr.bf16.gmra.mxu0 %v952
      %v1047 = vpop.f32.mrf.mxu0
      %v1048 = vadd.f32 0.0, %v1047
      %v1049 = vpop.f32.mrf.mxu0
      %v1050 = vpop.f32.mrf.mxu0
      %v1051 = vadd.f32 0.0, %v1050
      %v1052 = vpop.f32.mrf.mxu0
      %1053 = vmatprep.mubr.bf16.mxu0 0
      %1054 = vmatmul.mubr.bf16.gmra.mxu0 %v955
      %v1055 = vpop.f32.mrf.mxu0
      %v1056 = vadd.f32 0.0, %v1055
      %v1057 = vpop.f32.mrf.mxu0
      %v1058 = vpop.f32.mrf.mxu0
      %v1059 = vadd.f32 0.0, %v1058
      %v1060 = vpop.f32.mrf.mxu0
      %1061 = vmatprep.mubr.bf16.mxu0 0
      %1062 = vmatmul.mubr.bf16.gmra.mxu0 %v958
      %v1063 = vpop.f32.mrf.mxu0
      %v1064 = vadd.f32 0.0, %v1063
      %v1065 = vpop.f32.mrf.mxu0
      %v1066 = vpop.f32.mrf.mxu0
      %v1067 = vadd.f32 0.0, %v1066
      %v1068 = vpop.f32.mrf.mxu0
      %1069 = vmatprep.mubr.bf16.mxu0 0
      %1070 = vmatmul.mubr.bf16.gmra.mxu0 %v961
      %v1071 = vpop.f32.mrf.mxu0
      %v1072 = vadd.f32 0.0, %v1071
      %v1073 = vpop.f32.mrf.mxu0
      %v1074 = vpop.f32.mrf.mxu0
      %v1075 = vadd.f32 0.0, %v1074
      %v1076 = vpop.f32.mrf.mxu0
      %1077 = vmatprep.mubr.bf16.mxu0 0
      %1078 = vmatmul.mubr.bf16.gmra.mxu0 %v964
      %v1079 = vpop.f32.mrf.mxu0
      %v1080 = vadd.f32 0.0, %v1079
      %v1081 = vpop.f32.mrf.mxu0
      %v1082 = vpop.f32.mrf.mxu0
      %v1083 = vadd.f32 0.0, %v1082
      %v1084 = vpop.f32.mrf.mxu0
      %1085 = vmatprep.mubr.bf16.mxu0 0
      %1086 = vmatmul.mubr.bf16.gmra.mxu0 %v967
      %v1087 = vpop.f32.mrf.mxu0
      %v1088 = vadd.f32 0.0, %v1087
      %v1089 = vpop.f32.mrf.mxu0
      %v1090 = vpop.f32.mrf.mxu0
      %v1091 = vadd.f32 0.0, %v1090
      %v1092 = vpop.f32.mrf.mxu0
      %1093 = vmatprep.mubr.bf16.mxu0 0
      %1094 = vmatmul.mubr.bf16.gmra.mxu0 %v970
      %v1095 = vpop.f32.mrf.mxu0
      %v1096 = vadd.f32 0.0, %v1095
      %v1097 = vpop.f32.mrf.mxu0
      %v1098 = vpop.f32.mrf.mxu0
      %v1099 = vadd.f32 0.0, %v1098
      %v1100 = vpop.f32.mrf.mxu0
      %1101 = vmatprep.mubr.bf16.mxu0 0
      %1102 = vmatmul.mubr.bf16.gmra.mxu0 %v973
      %v1103 = vpop.f32.mrf.mxu0
      %v1104 = vadd.f32 0.0, %v1103
      %v1105 = vpop.f32.mrf.mxu0
      %v1106 = vpop.f32.mrf.mxu0
      %v1107 = vadd.f32 0.0, %v1106
      %v1108 = vpop.f32.mrf.mxu0
      %1109 = vmatprep.mubr.bf16.mxu0 0
      %1110 = vmatmul.mubr.bf16.gmra.mxu0 %v976
      %v1111 = vpop.f32.mrf.mxu0
      %v1112 = vadd.f32 0.0, %v1111
      %v1113 = vpop.f32.mrf.mxu0
      %v1114 = vpop.f32.mrf.mxu0
      %v1115 = vadd.f32 0.0, %v1114
      %v1116 = vpop.f32.mrf.mxu0
      %1117 = vmatprep.mubr.bf16.mxu0 0
      %1118 = vmatmul.mubr.bf16.gmra.mxu0 %v979
      %v1119 = vpop.f32.mrf.mxu0
      %v1120 = vadd.f32 0.0, %v1119
      %v1121 = vpop.f32.mrf.mxu0
      %v1122 = vpop.f32.mrf.mxu0
      %v1123 = vadd.f32 0.0, %v1122
      %v1124 = vpop.f32.mrf.mxu0
      %1125 = vmatprep.mubr.bf16.mxu0 0
      %1126 = vmatmul.mubr.bf16.gmra.mxu0 %v982
      %v1127 = vpop.f32.mrf.mxu0
      %v1128 = vadd.f32 0.0, %v1127
      %v1129 = vpop.f32.mrf.mxu0
      %v1130 = vpop.f32.mrf.mxu0
      %v1131 = vadd.f32 0.0, %v1130
      %v1132 = vpop.f32.mrf.mxu0
      %1133 = vmatprep.mubr.bf16.mxu0 0
      %1134 = vmatmul.mubr.bf16.gmra.mxu0 %v985
      %v1135 = vpop.f32.mrf.mxu0
      %v1136 = vadd.f32 0.0, %v1135
      %v1137 = vpop.f32.mrf.mxu0
      %v1138 = vpop.f32.mrf.mxu0
      %v1139 = vadd.f32 0.0, %v1138
      %v1140 = vpop.f32.mrf.mxu0
      %1141 = vmatprep.mubr.bf16.mxu0 0
      %1142 = vmatmul.mubr.bf16.gmra.mxu0 %v988
      %v1143 = vpop.f32.mrf.mxu0
      %v1144 = vadd.f32 0.0, %v1143
      %v1145 = vpop.f32.mrf.mxu0
      %v1146 = vpop.f32.mrf.mxu0
      %v1147 = vadd.f32 0.0, %v1146
      %v1148 = vpop.f32.mrf.mxu0
      %1149 = vmatprep.mubr.bf16.mxu0 0
      %1150 = vmatmul.mubr.bf16.gmra.mxu0 %v991
      %v1151 = vpop.f32.mrf.mxu0
      %v1152 = vadd.f32 0.0, %v1151
      %v1153 = vpop.f32.mrf.mxu0
      %v1154 = vpop.f32.mrf.mxu0
      %v1155 = vadd.f32 0.0, %v1154
      %v1156 = vpop.f32.mrf.mxu0
      %1157 = vdwg.mxu0
      %v1190 = vunpack.c.l.b16 %v647
      %v1191 = vunpack.c.l.b16 %v648
      %v1192 = vunpack.c.l.b16 %v649
      %v1193 = vunpack.c.l.b16 %v650
      %v1194 = vunpack.c.l.b16 %v651
      %v1195 = vunpack.c.l.b16 %v652
      %v1196 = vunpack.c.l.b16 %v653
      %v1197 = vunpack.c.l.b16 %v654
      %v1198 = vunpack.c.l.b16 %v655
      %v1199 = vunpack.c.l.b16 %v656
      %v1200 = vunpack.c.l.b16 %v657
      %v1201 = vunpack.c.l.b16 %v658
      %v1202 = vunpack.c.l.b16 %v659
      %v1203 = vunpack.c.l.b16 %v660
      %v1204 = vunpack.c.l.b16 %v661
      %v1205 = vunpack.c.l.b16 %v662
      %v1206 = vunpack.c.l.b16 %v663
      %v1207 = vunpack.c.l.b16 %v664
      %v1208 = vunpack.c.l.b16 %v665
      %v1209 = vunpack.c.l.b16 %v666
      %v1210 = vunpack.c.l.b16 %v667
      %v1211 = vunpack.c.l.b16 %v668
      %v1212 = vunpack.c.l.b16 %v669
      %v1213 = vunpack.c.l.b16 %v670
      %v1214 = vunpack.c.l.b16 %v671
      %v1215 = vunpack.c.l.b16 %v672
      %v1216 = vunpack.c.l.b16 %v673
      %v1217 = vunpack.c.l.b16 %v674
      %v1218 = vunpack.c.l.b16 %v675
      %v1219 = vunpack.c.l.b16 %v676
      %v1220 = vunpack.c.l.b16 %v677
      %v1221 = vunpack.c.l.b16 %v678
      %v1222 = vpack.c.b16 %v1191, %v1190
      %v1223 = vpack.c.b16 %v1193, %v1192
      %v1224 = vpack.c.b16 %v1195, %v1194
      %v1225 = vpack.c.b16 %v1197, %v1196
      %v1226 = vpack.c.b16 %v1199, %v1198
      %v1227 = vpack.c.b16 %v1201, %v1200
      %v1228 = vpack.c.b16 %v1203, %v1202
      %v1229 = vpack.c.b16 %v1205, %v1204
      %v1230 = vpack.c.b16 %v1207, %v1206
      %v1231 = vpack.c.b16 %v1209, %v1208
      %v1232 = vpack.c.b16 %v1211, %v1210
      %v1233 = vpack.c.b16 %v1213, %v1212
      %v1234 = vpack.c.b16 %v1215, %v1214
      %v1235 = vpack.c.b16 %v1217, %v1216
      %v1236 = vpack.c.b16 %v1219, %v1218
      %v1237 = vpack.c.b16 %v1221, %v1220
      %v1241 = vunpack.c.l.b16 %v679
      %v1242 = vunpack.c.l.b16 %v680
      %v1243 = vunpack.c.l.b16 %v681
      %v1244 = vpack.c.b16 %v1242, %v1241
      %v1245 = vpack.c.b16 %v1243, %v1243
      %v1248 = vsel %vm944, %v1222, 0
      %v1251 = vsel %vm944, %v1223, 0
      %v1254 = vsel %vm944, %v1224, 0
      %v1257 = vsel %vm944, %v1225, 0
      %v1260 = vsel %vm944, %v1226, 0
      %v1263 = vsel %vm944, %v1227, 0
      %v1266 = vsel %vm944, %v1228, 0
      %v1269 = vsel %vm944, %v1229, 0
      %v1272 = vsel %vm944, %v1230, 0
      %v1275 = vsel %vm944, %v1231, 0
      %v1278 = vsel %vm944, %v1232, 0
      %v1281 = vsel %vm944, %v1233, 0
      %v1284 = vsel %vm944, %v1234, 0
      %v1287 = vsel %vm944, %v1235, 0
      %v1290 = vsel %vm944, %v1236, 0
      %v1293 = vsel %vm944, %v1237, 0
      %v1296 = vsel %vm993, %v1245, 0
      %1298 = vmatprep.subr.bf16.mxu0 0
      %1299 = vmatpush1.bf16.msra.mxu0 0
      %1300 = vmatprep.subr.bf16.mxu0 0
      %1301 = vmatpush1.bf16.msra.mxu0 0
      %1302 = vmatprep.subr.bf16.mxu0 0
      %1303 = vmatpush1.bf16.msra.mxu0 0
      %1304 = vmatprep.subr.bf16.mxu0 0
      %1305 = vmatpush1.bf16.msra.mxu0 0
      %1306 = vmatprep.subr.bf16.mxu0 0
      %1307 = vmatpush1.bf16.msra.mxu0 0
      %1308 = vmatprep.subr.bf16.mxu0 0
      %1309 = vmatpush1.bf16.msra.mxu0 0
      %1310 = vmatprep.subr.bf16.mxu0 0
      %1311 = vmatpush1.bf16.msra.mxu0 %v1296
      %1312 = vmatprep.subr.bf16.mxu0 0
      %1313 = vmatpush1.bf16.msra.mxu0 %v1244
      %1314 = vmatprep.subr.bf16.mxu0 0
      %1315 = vmatpush2.bf16.msra.mxu0 0
      %1316 = vmatprep.subr.bf16.mxu0 0
      %1317 = vmatpush2.bf16.msra.mxu0 0
      %1318 = vmatprep.subr.bf16.mxu0 0
      %1319 = vmatpush2.bf16.msra.mxu0 0
      %1320 = vmatprep.subr.bf16.mxu0 0
      %1321 = vmatpush2.bf16.msra.mxu0 0
      %1322 = vmatprep.subr.bf16.mxu0 0
      %1323 = vmatpush2.bf16.msra.mxu0 0
      %1324 = vmatprep.subr.bf16.mxu0 0
      %1325 = vmatpush2.bf16.msra.mxu0 0
      %1326 = vmatprep.subr.bf16.mxu0 0
      %1327 = vmatpush2.bf16.msra.mxu0 0
      %1328 = vmatprep.subr.bf16.mxu0 0
      %1329 = vmatpush2.bf16.msra.mxu0 0
      %1330 = vmatprep.mubr.bf16.mxu0 0
      %1331 = vmatmul.mubr.bf16.gmra.mxu0 %v1248
      %v1332 = vpop.f32.mrf.mxu0
      %v1333 = vadd.f32 %v1032, %v1332
      %v1334 = vpop.f32.mrf.mxu0
      %v1335 = vpop.f32.mrf.mxu0
      %v1336 = vadd.f32 %v1035, %v1335
      %v1337 = vpop.f32.mrf.mxu0
      %1338 = vmatprep.mubr.bf16.mxu0 0
      %1339 = vmatmul.mubr.bf16.gmra.mxu0 %v1251
      %v1340 = vpop.f32.mrf.mxu0
      %v1341 = vadd.f32 %v1040, %v1340
      %v1342 = vpop.f32.mrf.mxu0
      %v1343 = vpop.f32.mrf.mxu0
      %v1344 = vadd.f32 %v1043, %v1343
      %v1345 = vpop.f32.mrf.mxu0
      %1346 = vmatprep.mubr.bf16.mxu0 0
      %1347 = vmatmul.mubr.bf16.gmra.mxu0 %v1254
      %v1348 = vpop.f32.mrf.mxu0
      %v1349 = vadd.f32 %v1048, %v1348
      %v1350 = vpop.f32.mrf.mxu0
      %v1351 = vpop.f32.mrf.mxu0
      %v1352 = vadd.f32 %v1051, %v1351
      %v1353 = vpop.f32.mrf.mxu0
      %1354 = vmatprep.mubr.bf16.mxu0 0
      %1355 = vmatmul.mubr.bf16.gmra.mxu0 %v1257
      %v1356 = vpop.f32.mrf.mxu0
      %v1357 = vadd.f32 %v1056, %v1356
      %v1358 = vpop.f32.mrf.mxu0
      %v1359 = vpop.f32.mrf.mxu0
      %v1360 = vadd.f32 %v1059, %v1359
      %v1361 = vpop.f32.mrf.mxu0
      %1362 = vmatprep.mubr.bf16.mxu0 0
      %1363 = vmatmul.mubr.bf16.gmra.mxu0 %v1260
      %v1364 = vpop.f32.mrf.mxu0
      %v1365 = vadd.f32 %v1064, %v1364
      %v1366 = vpop.f32.mrf.mxu0
      %v1367 = vpop.f32.mrf.mxu0
      %v1368 = vadd.f32 %v1067, %v1367
      %v1369 = vpop.f32.mrf.mxu0
      %1370 = vmatprep.mubr.bf16.mxu0 0
      %1371 = vmatmul.mubr.bf16.gmra.mxu0 %v1263
      %v1372 = vpop.f32.mrf.mxu0
      %v1373 = vadd.f32 %v1072, %v1372
      %v1374 = vpop.f32.mrf.mxu0
      %v1375 = vpop.f32.mrf.mxu0
      %v1376 = vadd.f32 %v1075, %v1375
      %v1377 = vpop.f32.mrf.mxu0
      %1378 = vmatprep.mubr.bf16.mxu0 0
      %1379 = vmatmul.mubr.bf16.gmra.mxu0 %v1266
      %v1380 = vpop.f32.mrf.mxu0
      %v1381 = vadd.f32 %v1080, %v1380
      %v1382 = vpop.f32.mrf.mxu0
      %v1383 = vpop.f32.mrf.mxu0
      %v1384 = vadd.f32 %v1083, %v1383
      %v1385 = vpop.f32.mrf.mxu0
      %1386 = vmatprep.mubr.bf16.mxu0 0
      %1387 = vmatmul.mubr.bf16.gmra.mxu0 %v1269
      %v1388 = vpop.f32.mrf.mxu0
      %v1389 = vadd.f32 %v1088, %v1388
      %v1390 = vpop.f32.mrf.mxu0
      %v1391 = vpop.f32.mrf.mxu0
      %v1392 = vadd.f32 %v1091, %v1391
      %v1393 = vpop.f32.mrf.mxu0
      %1394 = vmatprep.mubr.bf16.mxu0 0
      %1395 = vmatmul.mubr.bf16.gmra.mxu0 %v1272
      %v1396 = vpop.f32.mrf.mxu0
      %v1397 = vadd.f32 %v1096, %v1396
      %v1398 = vpop.f32.mrf.mxu0
      %v1399 = vpop.f32.mrf.mxu0
      %v1400 = vadd.f32 %v1099, %v1399
      %v1401 = vpop.f32.mrf.mxu0
      %1402 = vmatprep.mubr.bf16.mxu0 0
      %1403 = vmatmul.mubr.bf16.gmra.mxu0 %v1275
      %v1404 = vpop.f32.mrf.mxu0
      %v1405 = vadd.f32 %v1104, %v1404
      %v1406 = vpop.f32.mrf.mxu0
      %v1407 = vpop.f32.mrf.mxu0
      %v1408 = vadd.f32 %v1107, %v1407
      %v1409 = vpop.f32.mrf.mxu0
      %1410 = vmatprep.mubr.bf16.mxu0 0
      %1411 = vmatmul.mubr.bf16.gmra.mxu0 %v1278
      %v1412 = vpop.f32.mrf.mxu0
      %v1413 = vadd.f32 %v1112, %v1412
      %v1414 = vpop.f32.mrf.mxu0
      %v1415 = vpop.f32.mrf.mxu0
      %v1416 = vadd.f32 %v1115, %v1415
      %v1417 = vpop.f32.mrf.mxu0
      %1418 = vmatprep.mubr.bf16.mxu0 0
      %1419 = vmatmul.mubr.bf16.gmra.mxu0 %v1281
      %v1420 = vpop.f32.mrf.mxu0
      %v1421 = vadd.f32 %v1120, %v1420
      %v1422 = vpop.f32.mrf.mxu0
      %v1423 = vpop.f32.mrf.mxu0
      %v1424 = vadd.f32 %v1123, %v1423
      %v1425 = vpop.f32.mrf.mxu0
      %1426 = vmatprep.mubr.bf16.mxu0 0
      %1427 = vmatmul.mubr.bf16.gmra.mxu0 %v1284
      %v1428 = vpop.f32.mrf.mxu0
      %v1429 = vadd.f32 %v1128, %v1428
      %v1430 = vpop.f32.mrf.mxu0
      %v1431 = vpop.f32.mrf.mxu0
      %v1432 = vadd.f32 %v1131, %v1431
      %v1433 = vpop.f32.mrf.mxu0
      %1434 = vmatprep.mubr.bf16.mxu0 0
      %1435 = vmatmul.mubr.bf16.gmra.mxu0 %v1287
      %v1436 = vpop.f32.mrf.mxu0
      %v1437 = vadd.f32 %v1136, %v1436
      %v1438 = vpop.f32.mrf.mxu0
      %v1439 = vpop.f32.mrf.mxu0
      %v1440 = vadd.f32 %v1139, %v1439
      %v1441 = vpop.f32.mrf.mxu0
      %1442 = vmatprep.mubr.bf16.mxu0 0
      %1443 = vmatmul.mubr.bf16.gmra.mxu0 %v1290
      %v1444 = vpop.f32.mrf.mxu0
      %v1445 = vadd.f32 %v1144, %v1444
      %v1446 = vpop.f32.mrf.mxu0
      %v1447 = vpop.f32.mrf.mxu0
      %v1448 = vadd.f32 %v1147, %v1447
      %v1449 = vpop.f32.mrf.mxu0
      %1450 = vmatprep.mubr.bf16.mxu0 0
      %1451 = vmatmul.mubr.bf16.gmra.mxu0 %v1293
      %v1452 = vpop.f32.mrf.mxu0
      %v1453 = vadd.f32 %v1152, %v1452
      %v1454 = vpop.f32.mrf.mxu0
      %v1455 = vpop.f32.mrf.mxu0
      %v1456 = vadd.f32 %v1155, %v1455
      %v1457 = vpop.f32.mrf.mxu0
      %1458 = vdwg.mxu0
      %v1459 = vld [vmem:[%s192] sm:$0xe]
      %s1460 = scalar_lea.vmem %s2, 128
      %v1461 = vld [vmem:[%s1460] sm:$0xf]
      %v1462 = vld [vmem:[%s1460 + $0x4] sm:$0xf]
      %v1463 = vld [vmem:[%s1460 + $0x8] sm:$0xf]
      %v1464 = vld [vmem:[%s1460 + $0xc] sm:$0xf]
      %v1465 = vld [vmem:[%s1460 + $0x10] sm:$0xf]
      %v1466 = vld [vmem:[%s1460 + $0x14] sm:$0xf]
      %v1467 = vld [vmem:[%s1460 + $0x18] sm:$0xf]
      %v1468 = vld [vmem:[%s1460 + $0x1c] sm:$0xf]
      %v1469 = vld [vmem:[%s1460 + $0x20] sm:$0xf]
      %v1470 = vld [vmem:[%s1460 + $0x24] sm:$0xf]
      %v1471 = vld [vmem:[%s1460 + $0x28] sm:$0xf]
      %v1472 = vld [vmem:[%s1460 + $0x2c] sm:$0xf]
      %v1473 = vld [vmem:[%s1460 + $0x30] sm:$0xf]
      %v1474 = vld [vmem:[%s1460 + $0x34] sm:$0xf]
      %v1475 = vld [vmem:[%s1460 + $0x38] sm:$0xf]
      %v1476 = vld [vmem:[%s1460 + $0x3c] sm:$0xf]
      %v1477 = vld [vmem:[%s1460 + $0x40] sm:$0xf]
      %v1478 = vld [vmem:[%s1460 + $0x44] sm:$0xf]
      %v1479 = vld [vmem:[%s1460 + $0x48] sm:$0xf]
      %v1480 = vld [vmem:[%s1460 + $0x4c] sm:$0xf]
      %v1481 = vld [vmem:[%s1460 + $0x50] sm:$0xf]
      %v1482 = vld [vmem:[%s1460 + $0x54] sm:$0xf]
      %v1483 = vld [vmem:[%s1460 + $0x58] sm:$0xf]
      %v1484 = vld [vmem:[%s1460 + $0x5c] sm:$0xf]
      %v1485 = vld [vmem:[%s1460 + $0x60] sm:$0xf]
      %v1486 = vld [vmem:[%s1460 + $0x64] sm:$0xf]
      %v1487 = vld [vmem:[%s1460 + $0x68] sm:$0xf]
      %v1488 = vld [vmem:[%s1460 + $0x6c] sm:$0xf]
      %v1489 = vld [vmem:[%s1460 + $0x70] sm:$0xf]
      %v1490 = vld [vmem:[%s1460 + $0x74] sm:$0xf]
      %v1491 = vld [vmem:[%s1460 + $0x78] sm:$0xf]
      %v1492 = vld [vmem:[%s1460 + $0x7c] sm:$0xf]
      %1494 = vset.pattern.permute.xlu0 0
      %1495 = vperm.xlu0 %1494, %v1461
      %v1496 = vpop.permute.xlu0 %1495
      %v1499 = vunpack.c.l.s4 839922192
      %v1500 = vunpack.c.0.s8 %v1499
      %v1501 = vlaneseq
      %v1502 = vshrl.u32 %v1501, 7
      %v1503 = vsub.s32 %v1500, %v1502
      %v1504 = vrot.slane %v1496, %v1503
      %1506 = vset.pattern.permute.xlu0 0
      %1507 = vperm.xlu0 %1506, %v1462
      %v1508 = vpop.permute.xlu0 %1507
      %v1511 = vunpack.c.l.s4 839922192
      %v1512 = vunpack.c.0.s8 %v1511
      %v1513 = vlaneseq
      %v1514 = vshrl.u32 %v1513, 7
      %v1515 = vsub.s32 %v1512, %v1514
      %v1516 = vrot.slane %v1508, %v1515
      %1518 = vset.pattern.permute.xlu0 0
      %1519 = vperm.xlu0 %1518, %v1463
      %v1520 = vpop.permute.xlu0 %1519
      %v1523 = vunpack.c.l.s4 839922192
      %v1524 = vunpack.c.0.s8 %v1523
      %v1525 = vlaneseq
      %v1526 = vshrl.u32 %v1525, 7
      %v1527 = vsub.s32 %v1524, %v1526
      %v1528 = vrot.slane %v1520, %v1527
      %1530 = vset.pattern.permute.xlu0 0
      %1531 = vperm.xlu0 %1530, %v1464
      %v1532 = vpop.permute.xlu0 %1531
      %v1535 = vunpack.c.l.s4 839922192
      %v1536 = vunpack.c.0.s8 %v1535
      %v1537 = vlaneseq
      %v1538 = vshrl.u32 %v1537, 7
      %v1539 = vsub.s32 %v1536, %v1538
      %v1540 = vrot.slane %v1532, %v1539
      %1542 = vset.pattern.permute.xlu0 0
      %1543 = vperm.xlu0 %1542, %v1465
      %v1544 = vpop.permute.xlu0 %1543
      %v1547 = vunpack.c.l.s4 839922192
      %v1548 = vunpack.c.0.s8 %v1547
      %v1549 = vlaneseq
      %v1550 = vshrl.u32 %v1549, 7
      %v1551 = vsub.s32 %v1548, %v1550
      %v1552 = vrot.slane %v1544, %v1551
      %1554 = vset.pattern.permute.xlu0 0
      %1555 = vperm.xlu0 %1554, %v1466
      %v1556 = vpop.permute.xlu0 %1555
      %v1559 = vunpack.c.l.s4 839922192
      %v1560 = vunpack.c.0.s8 %v1559
      %v1561 = vlaneseq
      %v1562 = vshrl.u32 %v1561, 7
      %v1563 = vsub.s32 %v1560, %v1562
      %v1564 = vrot.slane %v1556, %v1563
      %1566 = vset.pattern.permute.xlu0 0
      %1567 = vperm.xlu0 %1566, %v1467
      %v1568 = vpop.permute.xlu0 %1567
      %v1571 = vunpack.c.l.s4 839922192
      %v1572 = vunpack.c.0.s8 %v1571
      %v1573 = vlaneseq
      %v1574 = vshrl.u32 %v1573, 7
      %v1575 = vsub.s32 %v1572, %v1574
      %v1576 = vrot.slane %v1568, %v1575
      %1578 = vset.pattern.permute.xlu0 0
      %1579 = vperm.xlu0 %1578, %v1468
      %v1580 = vpop.permute.xlu0 %1579
      %v1583 = vunpack.c.l.s4 839922192
      %v1584 = vunpack.c.0.s8 %v1583
      %v1585 = vlaneseq
      %v1586 = vshrl.u32 %v1585, 7
      %v1587 = vsub.s32 %v1584, %v1586
      %v1588 = vrot.slane %v1580, %v1587
      %1590 = vset.pattern.permute.xlu0 0
      %1591 = vperm.xlu0 %1590, %v1469
      %v1592 = vpop.permute.xlu0 %1591
      %v1595 = vunpack.c.l.s4 839922192
      %v1596 = vunpack.c.0.s8 %v1595
      %v1597 = vlaneseq
      %v1598 = vshrl.u32 %v1597, 7
      %v1599 = vsub.s32 %v1596, %v1598
      %v1600 = vrot.slane %v1592, %v1599
      %1602 = vset.pattern.permute.xlu0 0
      %1603 = vperm.xlu0 %1602, %v1470
      %v1604 = vpop.permute.xlu0 %1603
      %v1607 = vunpack.c.l.s4 839922192
      %v1608 = vunpack.c.0.s8 %v1607
      %v1609 = vlaneseq
      %v1610 = vshrl.u32 %v1609, 7
      %v1611 = vsub.s32 %v1608, %v1610
      %v1612 = vrot.slane %v1604, %v1611
      %1614 = vset.pattern.permute.xlu0 0
      %1615 = vperm.xlu0 %1614, %v1471
      %v1616 = vpop.permute.xlu0 %1615
      %v1619 = vunpack.c.l.s4 839922192
      %v1620 = vunpack.c.0.s8 %v1619
      %v1621 = vlaneseq
      %v1622 = vshrl.u32 %v1621, 7
      %v1623 = vsub.s32 %v1620, %v1622
      %v1624 = vrot.slane %v1616, %v1623
      %1626 = vset.pattern.permute.xlu0 0
      %1627 = vperm.xlu0 %1626, %v1472
      %v1628 = vpop.permute.xlu0 %1627
      %v1631 = vunpack.c.l.s4 839922192
      %v1632 = vunpack.c.0.s8 %v1631
      %v1633 = vlaneseq
      %v1634 = vshrl.u32 %v1633, 7
      %v1635 = vsub.s32 %v1632, %v1634
      %v1636 = vrot.slane %v1628, %v1635
      %1638 = vset.pattern.permute.xlu0 0
      %1639 = vperm.xlu0 %1638, %v1473
      %v1640 = vpop.permute.xlu0 %1639
      %v1643 = vunpack.c.l.s4 839922192
      %v1644 = vunpack.c.0.s8 %v1643
      %v1645 = vlaneseq
      %v1646 = vshrl.u32 %v1645, 7
      %v1647 = vsub.s32 %v1644, %v1646
      %v1648 = vrot.slane %v1640, %v1647
      %1650 = vset.pattern.permute.xlu0 0
      %1651 = vperm.xlu0 %1650, %v1474
      %v1652 = vpop.permute.xlu0 %1651
      %v1655 = vunpack.c.l.s4 839922192
      %v1656 = vunpack.c.0.s8 %v1655
      %v1657 = vlaneseq
      %v1658 = vshrl.u32 %v1657, 7
      %v1659 = vsub.s32 %v1656, %v1658
      %v1660 = vrot.slane %v1652, %v1659
      %1662 = vset.pattern.permute.xlu0 0
      %1663 = vperm.xlu0 %1662, %v1475
      %v1664 = vpop.permute.xlu0 %1663
      %v1667 = vunpack.c.l.s4 839922192
      %v1668 = vunpack.c.0.s8 %v1667
      %v1669 = vlaneseq
      %v1670 = vshrl.u32 %v1669, 7
      %v1671 = vsub.s32 %v1668, %v1670
      %v1672 = vrot.slane %v1664, %v1671
      %1674 = vset.pattern.permute.xlu0 0
      %1675 = vperm.xlu0 %1674, %v1476
      %v1676 = vpop.permute.xlu0 %1675
      %v1679 = vunpack.c.l.s4 839922192
      %v1680 = vunpack.c.0.s8 %v1679
      %v1681 = vlaneseq
      %v1682 = vshrl.u32 %v1681, 7
      %v1683 = vsub.s32 %v1680, %v1682
      %v1684 = vrot.slane %v1676, %v1683
      %1686 = vset.pattern.permute.xlu0 0
      %1687 = vperm.xlu0 %1686, %v1477
      %v1688 = vpop.permute.xlu0 %1687
      %v1691 = vunpack.c.l.s4 839922192
      %v1692 = vunpack.c.0.s8 %v1691
      %v1693 = vlaneseq
      %v1694 = vshrl.u32 %v1693, 7
      %v1695 = vsub.s32 %v1692, %v1694
      %v1696 = vrot.slane %v1688, %v1695
      %1698 = vset.pattern.permute.xlu0 0
      %1699 = vperm.xlu0 %1698, %v1478
      %v1700 = vpop.permute.xlu0 %1699
      %v1703 = vunpack.c.l.s4 839922192
      %v1704 = vunpack.c.0.s8 %v1703
      %v1705 = vlaneseq
      %v1706 = vshrl.u32 %v1705, 7
      %v1707 = vsub.s32 %v1704, %v1706
      %v1708 = vrot.slane %v1700, %v1707
      %1710 = vset.pattern.permute.xlu0 0
      %1711 = vperm.xlu0 %1710, %v1479
      %v1712 = vpop.permute.xlu0 %1711
      %v1715 = vunpack.c.l.s4 839922192
      %v1716 = vunpack.c.0.s8 %v1715
      %v1717 = vlaneseq
      %v1718 = vshrl.u32 %v1717, 7
      %v1719 = vsub.s32 %v1716, %v1718
      %v1720 = vrot.slane %v1712, %v1719
      %1722 = vset.pattern.permute.xlu0 0
      %1723 = vperm.xlu0 %1722, %v1480
      %v1724 = vpop.permute.xlu0 %1723
      %v1727 = vunpack.c.l.s4 839922192
      %v1728 = vunpack.c.0.s8 %v1727
      %v1729 = vlaneseq
      %v1730 = vshrl.u32 %v1729, 7
      %v1731 = vsub.s32 %v1728, %v1730
      %v1732 = vrot.slane %v1724, %v1731
      %1734 = vset.pattern.permute.xlu0 0
      %1735 = vperm.xlu0 %1734, %v1481
      %v1736 = vpop.permute.xlu0 %1735
      %v1739 = vunpack.c.l.s4 839922192
      %v1740 = vunpack.c.0.s8 %v1739
      %v1741 = vlaneseq
      %v1742 = vshrl.u32 %v1741, 7
      %v1743 = vsub.s32 %v1740, %v1742
      %v1744 = vrot.slane %v1736, %v1743
      %1746 = vset.pattern.permute.xlu0 0
      %1747 = vperm.xlu0 %1746, %v1482
      %v1748 = vpop.permute.xlu0 %1747
      %v1751 = vunpack.c.l.s4 839922192
      %v1752 = vunpack.c.0.s8 %v1751
      %v1753 = vlaneseq
      %v1754 = vshrl.u32 %v1753, 7
      %v1755 = vsub.s32 %v1752, %v1754
      %v1756 = vrot.slane %v1748, %v1755
      %1758 = vset.pattern.permute.xlu0 0
      %1759 = vperm.xlu0 %1758, %v1483
      %v1760 = vpop.permute.xlu0 %1759
      %v1763 = vunpack.c.l.s4 839922192
      %v1764 = vunpack.c.0.s8 %v1763
      %v1765 = vlaneseq
      %v1766 = vshrl.u32 %v1765, 7
      %v1767 = vsub.s32 %v1764, %v1766
      %v1768 = vrot.slane %v1760, %v1767
      %1770 = vset.pattern.permute.xlu0 0
      %1771 = vperm.xlu0 %1770, %v1484
      %v1772 = vpop.permute.xlu0 %1771
      %v1775 = vunpack.c.l.s4 839922192
      %v1776 = vunpack.c.0.s8 %v1775
      %v1777 = vlaneseq
      %v1778 = vshrl.u32 %v1777, 7
      %v1779 = vsub.s32 %v1776, %v1778
      %v1780 = vrot.slane %v1772, %v1779
      %1782 = vset.pattern.permute.xlu0 0
      %1783 = vperm.xlu0 %1782, %v1485
      %v1784 = vpop.permute.xlu0 %1783
      %v1787 = vunpack.c.l.s4 839922192
      %v1788 = vunpack.c.0.s8 %v1787
      %v1789 = vlaneseq
      %v1790 = vshrl.u32 %v1789, 7
      %v1791 = vsub.s32 %v1788, %v1790
      %v1792 = vrot.slane %v1784, %v1791
      %1794 = vset.pattern.permute.xlu0 0
      %1795 = vperm.xlu0 %1794, %v1486
      %v1796 = vpop.permute.xlu0 %1795
      %v1799 = vunpack.c.l.s4 839922192
      %v1800 = vunpack.c.0.s8 %v1799
      %v1801 = vlaneseq
      %v1802 = vshrl.u32 %v1801, 7
      %v1803 = vsub.s32 %v1800, %v1802
      %v1804 = vrot.slane %v1796, %v1803
      %1806 = vset.pattern.permute.xlu0 0
      %1807 = vperm.xlu0 %1806, %v1487
      %v1808 = vpop.permute.xlu0 %1807
      %v1811 = vunpack.c.l.s4 839922192
      %v1812 = vunpack.c.0.s8 %v1811
      %v1813 = vlaneseq
      %v1814 = vshrl.u32 %v1813, 7
      %v1815 = vsub.s32 %v1812, %v1814
      %v1816 = vrot.slane %v1808, %v1815
      %1818 = vset.pattern.permute.xlu0 0
      %1819 = vperm.xlu0 %1818, %v1488
      %v1820 = vpop.permute.xlu0 %1819
      %v1823 = vunpack.c.l.s4 839922192
      %v1824 = vunpack.c.0.s8 %v1823
      %v1825 = vlaneseq
      %v1826 = vshrl.u32 %v1825, 7
      %v1827 = vsub.s32 %v1824, %v1826
      %v1828 = vrot.slane %v1820, %v1827
      %1830 = vset.pattern.permute.xlu0 0
      %1831 = vperm.xlu0 %1830, %v1489
      %v1832 = vpop.permute.xlu0 %1831
      %v1835 = vunpack.c.l.s4 839922192
      %v1836 = vunpack.c.0.s8 %v1835
      %v1837 = vlaneseq
      %v1838 = vshrl.u32 %v1837, 7
      %v1839 = vsub.s32 %v1836, %v1838
      %v1840 = vrot.slane %v1832, %v1839
      %1842 = vset.pattern.permute.xlu0 0
      %1843 = vperm.xlu0 %1842, %v1490
      %v1844 = vpop.permute.xlu0 %1843
      %v1847 = vunpack.c.l.s4 839922192
      %v1848 = vunpack.c.0.s8 %v1847
      %v1849 = vlaneseq
      %v1850 = vshrl.u32 %v1849, 7
      %v1851 = vsub.s32 %v1848, %v1850
      %v1852 = vrot.slane %v1844, %v1851
      %1854 = vset.pattern.permute.xlu0 0
      %1855 = vperm.xlu0 %1854, %v1491
      %v1856 = vpop.permute.xlu0 %1855
      %v1859 = vunpack.c.l.s4 839922192
      %v1860 = vunpack.c.0.s8 %v1859
      %v1861 = vlaneseq
      %v1862 = vshrl.u32 %v1861, 7
      %v1863 = vsub.s32 %v1860, %v1862
      %v1864 = vrot.slane %v1856, %v1863
      %1866 = vset.pattern.permute.xlu0 0
      %1867 = vperm.xlu0 %1866, %v1492
      %v1868 = vpop.permute.xlu0 %1867
      %v1871 = vunpack.c.l.s4 839922192
      %v1872 = vunpack.c.0.s8 %v1871
      %v1873 = vlaneseq
      %v1874 = vshrl.u32 %v1873, 7
      %v1875 = vsub.s32 %v1872, %v1874
      %v1876 = vrot.slane %v1868, %v1875
      %vm1909 = vcmask 1040384
      %vm1910 = vcmask 1044484
      %vm1911 = vmor %vm1909, %vm1910
      %v1912 = vrot.slane %v1504, 7
      %v1913 = vrot.slane %v1912, 4
      %v1914 = vrot.slane %v1516, 7
      %v1915 = vsel %vm1911, %v1913, %v1914
      %v1916 = vrot.slane %v1914, 4
      %v1917 = vrot.slane %v1528, 7
      %v1918 = vsel %vm1911, %v1916, %v1917
      %v1919 = vrot.slane %v1917, 4
      %v1920 = vrot.slane %v1540, 7
      %v1921 = vsel %vm1911, %v1919, %v1920
      %v1922 = vrot.slane %v1920, 4
      %v1923 = vrot.slane %v1552, 7
      %v1924 = vsel %vm1911, %v1922, %v1923
      %v1925 = vrot.slane %v1923, 4
      %v1926 = vrot.slane %v1564, 7
      %v1927 = vsel %vm1911, %v1925, %v1926
      %v1928 = vrot.slane %v1926, 4
      %v1929 = vrot.slane %v1576, 7
      %v1930 = vsel %vm1911, %v1928, %v1929
      %v1931 = vrot.slane %v1929, 4
      %v1932 = vrot.slane %v1588, 7
      %v1933 = vsel %vm1911, %v1931, %v1932
      %v1934 = vrot.slane %v1932, 4
      %v1935 = vrot.slane %v1600, 7
      %v1936 = vsel %vm1911, %v1934, %v1935
      %v1937 = vrot.slane %v1935, 4
      %v1938 = vrot.slane %v1612, 7
      %v1939 = vsel %vm1911, %v1937, %v1938
      %v1940 = vrot.slane %v1938, 4
      %v1941 = vrot.slane %v1624, 7
      %v1942 = vsel %vm1911, %v1940, %v1941
      %v1943 = vrot.slane %v1941, 4
      %v1944 = vrot.slane %v1636, 7
      %v1945 = vsel %vm1911, %v1943, %v1944
      %v1946 = vrot.slane %v1944, 4
      %v1947 = vrot.slane %v1648, 7
      %v1948 = vsel %vm1911, %v1946, %v1947
      %v1949 = vrot.slane %v1947, 4
      %v1950 = vrot.slane %v1660, 7
      %v1951 = vsel %vm1911, %v1949, %v1950
      %v1952 = vrot.slane %v1950, 4
      %v1953 = vrot.slane %v1672, 7
      %v1954 = vsel %vm1911, %v1952, %v1953
      %v1955 = vrot.slane %v1953, 4
      %v1956 = vrot.slane %v1684, 7
      %v1957 = vsel %vm1911, %v1955, %v1956
      %v1958 = vrot.slane %v1956, 4
      %v1959 = vrot.slane %v1696, 7
      %v1960 = vsel %vm1911, %v1958, %v1959
      %v1961 = vrot.slane %v1959, 4
      %v1962 = vrot.slane %v1708, 7
      %v1963 = vsel %vm1911, %v1961, %v1962
      %v1964 = vrot.slane %v1962, 4
      %v1965 = vrot.slane %v1720, 7
      %v1966 = vsel %vm1911, %v1964, %v1965
      %v1967 = vrot.slane %v1965, 4
      %v1968 = vrot.slane %v1732, 7
      %v1969 = vsel %vm1911, %v1967, %v1968
      %v1970 = vrot.slane %v1968, 4
      %v1971 = vrot.slane %v1744, 7
      %v1972 = vsel %vm1911, %v1970, %v1971
      %v1973 = vrot.slane %v1971, 4
      %v1974 = vrot.slane %v1756, 7
      %v1975 = vsel %vm1911, %v1973, %v1974
      %v1976 = vrot.slane %v1974, 4
      %v1977 = vrot.slane %v1768, 7
      %v1978 = vsel %vm1911, %v1976, %v1977
      %v1979 = vrot.slane %v1977, 4
      %v1980 = vrot.slane %v1780, 7
      %v1981 = vsel %vm1911, %v1979, %v1980
      %v1982 = vrot.slane %v1980, 4
      %v1983 = vrot.slane %v1792, 7
      %v1984 = vsel %vm1911, %v1982, %v1983
      %v1985 = vrot.slane %v1983, 4
      %v1986 = vrot.slane %v1804, 7
      %v1987 = vsel %vm1911, %v1985, %v1986
      %v1988 = vrot.slane %v1986, 4
      %v1989 = vrot.slane %v1816, 7
      %v1990 = vsel %vm1911, %v1988, %v1989
      %v1991 = vrot.slane %v1989, 4
      %v1992 = vrot.slane %v1828, 7
      %v1993 = vsel %vm1911, %v1991, %v1992
      %v1994 = vrot.slane %v1992, 4
      %v1995 = vrot.slane %v1840, 7
      %v1996 = vsel %vm1911, %v1994, %v1995
      %v1997 = vrot.slane %v1995, 4
      %v1998 = vrot.slane %v1852, 7
      %v1999 = vsel %vm1911, %v1997, %v1998
      %v2000 = vrot.slane %v1998, 4
      %v2001 = vrot.slane %v1864, 7
      %v2002 = vsel %vm1911, %v2000, %v2001
      %v2003 = vrot.slane %v2001, 4
      %v2004 = vrot.slane %v1876, 7
      %v2005 = vsel %vm1911, %v2003, %v2004
      %v2006 = vrot.slane %v2004, 4
      %v2040 = vmul.bf16 %v1459, %v1912
      %v2041 = vmul.bf16 %v683, %v1915
      %v2042 = vmul.bf16 %v684, %v1918
      %v2043 = vmul.bf16 %v685, %v1921
      %v2044 = vmul.bf16 %v686, %v1924
      %v2045 = vmul.bf16 %v687, %v1927
      %v2046 = vmul.bf16 %v688, %v1930
      %v2047 = vmul.bf16 %v689, %v1933
      %v2048 = vmul.bf16 %v690, %v1936
      %v2049 = vmul.bf16 %v691, %v1939
      %v2050 = vmul.bf16 %v692, %v1942
      %v2051 = vmul.bf16 %v693, %v1945
      %v2052 = vmul.bf16 %v694, %v1948
      %v2053 = vmul.bf16 %v695, %v1951
      %v2054 = vmul.bf16 %v696, %v1954
      %v2055 = vmul.bf16 %v697, %v1957
      %v2056 = vmul.bf16 %v698, %v1960
      %v2057 = vmul.bf16 %v699, %v1963
      %v2058 = vmul.bf16 %v700, %v1966
      %v2059 = vmul.bf16 %v701, %v1969
      %v2060 = vmul.bf16 %v702, %v1972
      %v2061 = vmul.bf16 %v703, %v1975
      %v2062 = vmul.bf16 %v704, %v1978
      %v2063 = vmul.bf16 %v705, %v1981
      %v2064 = vmul.bf16 %v706, %v1984
      %v2065 = vmul.bf16 %v707, %v1987
      %v2066 = vmul.bf16 %v708, %v1990
      %v2067 = vmul.bf16 %v709, %v1993
      %v2068 = vmul.bf16 %v710, %v1996
      %v2069 = vmul.bf16 %v711, %v1999
      %v2070 = vmul.bf16 %v712, %v2002
      %v2071 = vmul.bf16 %v713, %v2005
      %v2072 = vmul.bf16 %v714, %v2006
      %s2073 = scalar_lea.vmem %s1, 24
      %v2074 = vld [vmem:[%s2073] sm:$0xf]
      %v2075 = vld [vmem:[%s2073 + $0x4] sm:$0xf]
      %v2076 = vld [vmem:[%s2073 + $0x8] sm:$0xf]
      %v2110 = vunpack.c.l.b16 %v2040
      %v2111 = vunpack.c.l.b16 %v2041
      %v2112 = vunpack.c.l.b16 %v2042
      %v2113 = vunpack.c.l.b16 %v2043
      %v2114 = vunpack.c.l.b16 %v2044
      %v2115 = vunpack.c.l.b16 %v2045
      %v2116 = vunpack.c.l.b16 %v2046
      %v2117 = vunpack.c.l.b16 %v2047
      %v2118 = vunpack.c.l.b16 %v2048
      %v2119 = vunpack.c.l.b16 %v2049
      %v2120 = vunpack.c.l.b16 %v2050
      %v2121 = vunpack.c.l.b16 %v2051
      %v2122 = vunpack.c.l.b16 %v2052
      %v2123 = vunpack.c.l.b16 %v2053
      %v2124 = vunpack.c.l.b16 %v2054
      %v2125 = vunpack.c.l.b16 %v2055
      %v2126 = vunpack.c.l.b16 %v2056
      %v2127 = vunpack.c.l.b16 %v2057
      %v2128 = vunpack.c.l.b16 %v2058
      %v2129 = vunpack.c.l.b16 %v2059
      %v2130 = vunpack.c.l.b16 %v2060
      %v2131 = vunpack.c.l.b16 %v2061
      %v2132 = vunpack.c.l.b16 %v2062
      %v2133 = vunpack.c.l.b16 %v2063
      %v2134 = vunpack.c.l.b16 %v2064
      %v2135 = vunpack.c.l.b16 %v2065
      %v2136 = vunpack.c.l.b16 %v2066
      %v2137 = vunpack.c.l.b16 %v2067
      %v2138 = vunpack.c.l.b16 %v2068
      %v2139 = vunpack.c.l.b16 %v2069
      %v2140 = vunpack.c.l.b16 %v2070
      %v2141 = vunpack.c.l.b16 %v2071
      %v2142 = vunpack.c.l.b16 %v2072
      %v2143 = vpack.c.b16 %v2111, %v2110
      %v2144 = vpack.c.b16 %v2113, %v2112
      %v2145 = vpack.c.b16 %v2115, %v2114
      %v2146 = vpack.c.b16 %v2117, %v2116
      %v2147 = vpack.c.b16 %v2119, %v2118
      %v2148 = vpack.c.b16 %v2121, %v2120
      %v2149 = vpack.c.b16 %v2123, %v2122
      %v2150 = vpack.c.b16 %v2125, %v2124
      %v2151 = vpack.c.b16 %v2127, %v2126
      %v2152 = vpack.c.b16 %v2129, %v2128
      %v2153 = vpack.c.b16 %v2131, %v2130
      %v2154 = vpack.c.b16 %v2133, %v2132
      %v2155 = vpack.c.b16 %v2135, %v2134
      %v2156 = vpack.c.b16 %v2137, %v2136
      %v2157 = vpack.c.b16 %v2139, %v2138
      %v2158 = vpack.c.b16 %v2141, %v2140
      %v2159 = vpack.c.b16 %v2142, %v2142
      %vm2160 = vcmask 1046528
      %v2161 = vrot.slane %v2143, 1
      %v2162 = vrot.slane %v2144, 1
      %v2163 = vsel %vm2160, %v2161, %v2162
      %v2164 = vrot.slane %v2145, 1
      %v2165 = vsel %vm2160, %v2162, %v2164
      %v2166 = vrot.slane %v2146, 1
      %v2167 = vsel %vm2160, %v2164, %v2166
      %v2168 = vrot.slane %v2147, 1
      %v2169 = vsel %vm2160, %v2166, %v2168
      %v2170 = vrot.slane %v2148, 1
      %v2171 = vsel %vm2160, %v2168, %v2170
      %v2172 = vrot.slane %v2149, 1
      %v2173 = vsel %vm2160, %v2170, %v2172
      %v2174 = vrot.slane %v2150, 1
      %v2175 = vsel %vm2160, %v2172, %v2174
      %v2176 = vrot.slane %v2151, 1
      %v2177 = vsel %vm2160, %v2174, %v2176
      %v2178 = vrot.slane %v2152, 1
      %v2179 = vsel %vm2160, %v2176, %v2178
      %v2180 = vrot.slane %v2153, 1
      %v2181 = vsel %vm2160, %v2178, %v2180
      %v2182 = vrot.slane %v2154, 1
      %v2183 = vsel %vm2160, %v2180, %v2182
      %v2184 = vrot.slane %v2155, 1
      %v2185 = vsel %vm2160, %v2182, %v2184
      %v2186 = vrot.slane %v2156, 1
      %v2187 = vsel %vm2160, %v2184, %v2186
      %v2188 = vrot.slane %v2157, 1
      %v2189 = vsel %vm2160, %v2186, %v2188
      %v2190 = vrot.slane %v2158, 1
      %v2191 = vsel %vm2160, %v2188, %v2190
      %v2192 = vrot.slane %v2159, 1
      %v2193 = vsel %vm2160, %v2190, %v2192
      %v2197 = vunpack.c.l.b16 %v2074
      %v2198 = vunpack.c.l.b16 %v2075
      %v2199 = vunpack.c.l.b16 %v2076
      %v2200 = vpack.c.b16 %v2198, %v2197
      %v2201 = vpack.c.b16 %v2199, %v2199
      %v2204 = vsel %vm944, %v2163, 0
      %v2207 = vsel %vm944, %v2165, 0
      %v2210 = vsel %vm944, %v2167, 0
      %v2213 = vsel %vm944, %v2169, 0
      %v2216 = vsel %vm944, %v2171, 0
      %v2219 = vsel %vm944, %v2173, 0
      %v2222 = vsel %vm944, %v2175, 0
      %v2225 = vsel %vm944, %v2177, 0
      %v2228 = vsel %vm944, %v2179, 0
      %v2231 = vsel %vm944, %v2181, 0
      %v2234 = vsel %vm944, %v2183, 0
      %v2237 = vsel %vm944, %v2185, 0
      %v2240 = vsel %vm944, %v2187, 0
      %v2243 = vsel %vm944, %v2189, 0
      %v2246 = vsel %vm944, %v2191, 0
      %v2249 = vsel %vm944, %v2193, 0
      %v2252 = vsel %vm993, %v2201, 0
      %2254 = vmatprep.subr.bf16.mxu0 0
      %2255 = vmatpush1.bf16.msra.mxu0 0
      %2256 = vmatprep.subr.bf16.mxu0 0
      %2257 = vmatpush1.bf16.msra.mxu0 0
      %2258 = vmatprep.subr.bf16.mxu0 0
      %2259 = vmatpush1.bf16.msra.mxu0 0
      %2260 = vmatprep.subr.bf16.mxu0 0
      %2261 = vmatpush1.bf16.msra.mxu0 0
      %2262 = vmatprep.subr.bf16.mxu0 0
      %2263 = vmatpush1.bf16.msra.mxu0 0
      %2264 = vmatprep.subr.bf16.mxu0 0
      %2265 = vmatpush1.bf16.msra.mxu0 0
      %2266 = vmatprep.subr.bf16.mxu0 0
      %2267 = vmatpush1.bf16.msra.mxu0 %v2252
      %2268 = vmatprep.subr.bf16.mxu0 0
      %2269 = vmatpush1.bf16.msra.mxu0 %v2200
      %2270 = vmatprep.subr.bf16.mxu0 0
      %2271 = vmatpush2.bf16.msra.mxu0 0
      %2272 = vmatprep.subr.bf16.mxu0 0
      %2273 = vmatpush2.bf16.msra.mxu0 0
      %2274 = vmatprep.subr.bf16.mxu0 0
      %2275 = vmatpush2.bf16.msra.mxu0 0
      %2276 = vmatprep.subr.bf16.mxu0 0
      %2277 = vmatpush2.bf16.msra.mxu0 0
      %2278 = vmatprep.subr.bf16.mxu0 0
      %2279 = vmatpush2.bf16.msra.mxu0 0
      %2280 = vmatprep.subr.bf16.mxu0 0
      %2281 = vmatpush2.bf16.msra.mxu0 0
      %2282 = vmatprep.subr.bf16.mxu0 0
      %2283 = vmatpush2.bf16.msra.mxu0 0
      %2284 = vmatprep.subr.bf16.mxu0 0
      %2285 = vmatpush2.bf16.msra.mxu0 0
      %2286 = vmatprep.mubr.bf16.mxu0 0
      %2287 = vmatmul.mubr.bf16.gmra.mxu0 %v2204
      %v2288 = vpop.f32.mrf.mxu0
      %v2289 = vadd.f32 0.0, %v2288
      %v2290 = vpop.f32.mrf.mxu0
      %v2291 = vpop.f32.mrf.mxu0
      %v2292 = vadd.f32 0.0, %v2291
      %v2293 = vpop.f32.mrf.mxu0
      %2294 = vmatprep.mubr.bf16.mxu0 0
      %2295 = vmatmul.mubr.bf16.gmra.mxu0 %v2207
      %v2296 = vpop.f32.mrf.mxu0
      %v2297 = vadd.f32 0.0, %v2296
      %v2298 = vpop.f32.mrf.mxu0
      %v2299 = vpop.f32.mrf.mxu0
      %v2300 = vadd.f32 0.0, %v2299
      %v2301 = vpop.f32.mrf.mxu0
      %2302 = vmatprep.mubr.bf16.mxu0 0
      %2303 = vmatmul.mubr.bf16.gmra.mxu0 %v2210
      %v2304 = vpop.f32.mrf.mxu0
      %v2305 = vadd.f32 0.0, %v2304
      %v2306 = vpop.f32.mrf.mxu0
      %v2307 = vpop.f32.mrf.mxu0
      %v2308 = vadd.f32 0.0, %v2307
      %v2309 = vpop.f32.mrf.mxu0
      %2310 = vmatprep.mubr.bf16.mxu0 0
      %2311 = vmatmul.mubr.bf16.gmra.mxu0 %v2213
      %v2312 = vpop.f32.mrf.mxu0
      %v2313 = vadd.f32 0.0, %v2312
      %v2314 = vpop.f32.mrf.mxu0
      %v2315 = vpop.f32.mrf.mxu0
      %v2316 = vadd.f32 0.0, %v2315
      %v2317 = vpop.f32.mrf.mxu0
      %2318 = vmatprep.mubr.bf16.mxu0 0
      %2319 = vmatmul.mubr.bf16.gmra.mxu0 %v2216
      %v2320 = vpop.f32.mrf.mxu0
      %v2321 = vadd.f32 0.0, %v2320
      %v2322 = vpop.f32.mrf.mxu0
      %v2323 = vpop.f32.mrf.mxu0
      %v2324 = vadd.f32 0.0, %v2323
      %v2325 = vpop.f32.mrf.mxu0
      %2326 = vmatprep.mubr.bf16.mxu0 0
      %2327 = vmatmul.mubr.bf16.gmra.mxu0 %v2219
      %v2328 = vpop.f32.mrf.mxu0
      %v2329 = vadd.f32 0.0, %v2328
      %v2330 = vpop.f32.mrf.mxu0
      %v2331 = vpop.f32.mrf.mxu0
      %v2332 = vadd.f32 0.0, %v2331
      %v2333 = vpop.f32.mrf.mxu0
      %2334 = vmatprep.mubr.bf16.mxu0 0
      %2335 = vmatmul.mubr.bf16.gmra.mxu0 %v2222
      %v2336 = vpop.f32.mrf.mxu0
      %v2337 = vadd.f32 0.0, %v2336
      %v2338 = vpop.f32.mrf.mxu0
      %v2339 = vpop.f32.mrf.mxu0
      %v2340 = vadd.f32 0.0, %v2339
      %v2341 = vpop.f32.mrf.mxu0
      %2342 = vmatprep.mubr.bf16.mxu0 0
      %2343 = vmatmul.mubr.bf16.gmra.mxu0 %v2225
      %v2344 = vpop.f32.mrf.mxu0
      %v2345 = vadd.f32 0.0, %v2344
      %v2346 = vpop.f32.mrf.mxu0
      %v2347 = vpop.f32.mrf.mxu0
      %v2348 = vadd.f32 0.0, %v2347
      %v2349 = vpop.f32.mrf.mxu0
      %2350 = vmatprep.mubr.bf16.mxu0 0
      %2351 = vmatmul.mubr.bf16.gmra.mxu0 %v2228
      %v2352 = vpop.f32.mrf.mxu0
      %v2353 = vadd.f32 0.0, %v2352
      %v2354 = vpop.f32.mrf.mxu0
      %v2355 = vpop.f32.mrf.mxu0
      %v2356 = vadd.f32 0.0, %v2355
      %v2357 = vpop.f32.mrf.mxu0
      %2358 = vmatprep.mubr.bf16.mxu0 0
      %2359 = vmatmul.mubr.bf16.gmra.mxu0 %v2231
      %v2360 = vpop.f32.mrf.mxu0
      %v2361 = vadd.f32 0.0, %v2360
      %v2362 = vpop.f32.mrf.mxu0
      %v2363 = vpop.f32.mrf.mxu0
      %v2364 = vadd.f32 0.0, %v2363
      %v2365 = vpop.f32.mrf.mxu0
      %2366 = vmatprep.mubr.bf16.mxu0 0
      %2367 = vmatmul.mubr.bf16.gmra.mxu0 %v2234
      %v2368 = vpop.f32.mrf.mxu0
      %v2369 = vadd.f32 0.0, %v2368
      %v2370 = vpop.f32.mrf.mxu0
      %v2371 = vpop.f32.mrf.mxu0
      %v2372 = vadd.f32 0.0, %v2371
      %v2373 = vpop.f32.mrf.mxu0
      %2374 = vmatprep.mubr.bf16.mxu0 0
      %2375 = vmatmul.mubr.bf16.gmra.mxu0 %v2237
      %v2376 = vpop.f32.mrf.mxu0
      %v2377 = vadd.f32 0.0, %v2376
      %v2378 = vpop.f32.mrf.mxu0
      %v2379 = vpop.f32.mrf.mxu0
      %v2380 = vadd.f32 0.0, %v2379
      %v2381 = vpop.f32.mrf.mxu0
      %2382 = vmatprep.mubr.bf16.mxu0 0
      %2383 = vmatmul.mubr.bf16.gmra.mxu0 %v2240
      %v2384 = vpop.f32.mrf.mxu0
      %v2385 = vadd.f32 0.0, %v2384
      %v2386 = vpop.f32.mrf.mxu0
      %v2387 = vpop.f32.mrf.mxu0
      %v2388 = vadd.f32 0.0, %v2387
      %v2389 = vpop.f32.mrf.mxu0
      %2390 = vmatprep.mubr.bf16.mxu0 0
      %2391 = vmatmul.mubr.bf16.gmra.mxu0 %v2243
      %v2392 = vpop.f32.mrf.mxu0
      %v2393 = vadd.f32 0.0, %v2392
      %v2394 = vpop.f32.mrf.mxu0
      %v2395 = vpop.f32.mrf.mxu0
      %v2396 = vadd.f32 0.0, %v2395
      %v2397 = vpop.f32.mrf.mxu0
      %2398 = vmatprep.mubr.bf16.mxu0 0
      %2399 = vmatmul.mubr.bf16.gmra.mxu0 %v2246
      %v2400 = vpop.f32.mrf.mxu0
      %v2401 = vadd.f32 0.0, %v2400
      %v2402 = vpop.f32.mrf.mxu0
      %v2403 = vpop.f32.mrf.mxu0
      %v2404 = vadd.f32 0.0, %v2403
      %v2405 = vpop.f32.mrf.mxu0
      %2406 = vmatprep.mubr.bf16.mxu0 0
      %2407 = vmatmul.mubr.bf16.gmra.mxu0 %v2249
      %v2408 = vpop.f32.mrf.mxu0
      %v2409 = vadd.f32 0.0, %v2408
      %v2410 = vpop.f32.mrf.mxu0
      %v2411 = vpop.f32.mrf.mxu0
      %v2412 = vadd.f32 0.0, %v2411
      %v2413 = vpop.f32.mrf.mxu0
      %2414 = vdwg.mxu0
      %v2415 = vadd.f32 %v1333, %v2289
      %v2416 = vadd.f32 %v1336, %v2292
      %v2417 = vadd.f32 %v1341, %v2297
      %v2418 = vadd.f32 %v1344, %v2300
      %v2419 = vadd.f32 %v1349, %v2305
      %v2420 = vadd.f32 %v1352, %v2308
      %v2421 = vadd.f32 %v1357, %v2313
      %v2422 = vadd.f32 %v1360, %v2316
      %v2423 = vadd.f32 %v1365, %v2321
      %v2424 = vadd.f32 %v1368, %v2324
      %v2425 = vadd.f32 %v1373, %v2329
      %v2426 = vadd.f32 %v1376, %v2332
      %v2427 = vadd.f32 %v1381, %v2337
      %v2428 = vadd.f32 %v1384, %v2340
      %v2429 = vadd.f32 %v1389, %v2345
      %v2430 = vadd.f32 %v1392, %v2348
      %v2431 = vadd.f32 %v1397, %v2353
      %v2432 = vadd.f32 %v1400, %v2356
      %v2433 = vadd.f32 %v1405, %v2361
      %v2434 = vadd.f32 %v1408, %v2364
      %v2435 = vadd.f32 %v1413, %v2369
      %v2436 = vadd.f32 %v1416, %v2372
      %v2437 = vadd.f32 %v1421, %v2377
      %v2438 = vadd.f32 %v1424, %v2380
      %v2439 = vadd.f32 %v1429, %v2385
      %v2440 = vadd.f32 %v1432, %v2388
      %v2441 = vadd.f32 %v1437, %v2393
      %v2442 = vadd.f32 %v1440, %v2396
      %v2443 = vadd.f32 %v1445, %v2401
      %v2444 = vadd.f32 %v1448, %v2404
      %v2445 = vadd.f32 %v1453, %v2409
      %v2446 = vadd.f32 %v1456, %v2412
      %v2447 = vld [vmem:[%s192 + $0x8] sm:$0xf]
      %v2448 = vld [vmem:[%s192 + $0xc] sm:$0xf]
      %v2449 = vld [vmem:[%s192 + $0x10] sm:$0xf]
      %v2450 = vld [vmem:[%s192 + $0x14] sm:$0xf]
      %v2451 = vld [vmem:[%s192 + $0x18] sm:$0xf]
      %v2452 = vld [vmem:[%s192 + $0x1c] sm:$0xf]
      %v2453 = vld [vmem:[%s192 + $0x20] sm:$0xf]
      %v2454 = vld [vmem:[%s192 + $0x24] sm:$0xf]
      %v2455 = vld [vmem:[%s192 + $0x28] sm:$0xf]
      %v2456 = vld [vmem:[%s192 + $0x2c] sm:$0xf]
      %v2457 = vld [vmem:[%s192 + $0x30] sm:$0xf]
      %v2458 = vld [vmem:[%s192 + $0x34] sm:$0xf]
      %v2459 = vld [vmem:[%s192 + $0x38] sm:$0xf]
      %v2460 = vld [vmem:[%s192 + $0x3c] sm:$0xf]
      %v2461 = vld [vmem:[%s192 + $0x40] sm:$0xf]
      %v2462 = vld [vmem:[%s192 + $0x44] sm:$0xf]
      %v2463 = vld [vmem:[%s192 + $0x48] sm:$0xf]
      %v2464 = vld [vmem:[%s192 + $0x4c] sm:$0xf]
      %v2465 = vld [vmem:[%s192 + $0x50] sm:$0xf]
      %v2466 = vld [vmem:[%s192 + $0x54] sm:$0xf]
      %v2467 = vld [vmem:[%s192 + $0x58] sm:$0xf]
      %v2468 = vld [vmem:[%s192 + $0x5c] sm:$0xf]
      %v2469 = vld [vmem:[%s192 + $0x60] sm:$0xf]
      %v2470 = vld [vmem:[%s192 + $0x64] sm:$0xf]
      %v2471 = vld [vmem:[%s192 + $0x68] sm:$0xf]
      %v2472 = vld [vmem:[%s192 + $0x6c] sm:$0xf]
      %v2473 = vld [vmem:[%s192 + $0x70] sm:$0xf]
      %v2474 = vld [vmem:[%s192 + $0x74] sm:$0xf]
      %v2475 = vld [vmem:[%s192 + $0x78] sm:$0xf]
      %v2476 = vld [vmem:[%s192 + $0x7c] sm:$0xf]
      %v2477 = vld [vmem:[%s192 + $0x80] sm:$0xf]
      %v2478 = vld [vmem:[%s192 + $0x84] sm:$0xf]
      %v2479 = vmul.bf16 %v2447, %v274
      %v2480 = vmul.bf16 %v2448, %v286
      %v2481 = vmul.bf16 %v2449, %v298
      %v2482 = vmul.bf16 %v2450, %v310
      %v2483 = vmul.bf16 %v2451, %v322
      %v2484 = vmul.bf16 %v2452, %v334
      %v2485 = vmul.bf16 %v2453, %v346
      %v2486 = vmul.bf16 %v2454, %v358
      %v2487 = vmul.bf16 %v2455, %v370
      %v2488 = vmul.bf16 %v2456, %v382
      %v2489 = vmul.bf16 %v2457, %v394
      %v2490 = vmul.bf16 %v2458, %v406
      %v2491 = vmul.bf16 %v2459, %v418
      %v2492 = vmul.bf16 %v2460, %v430
      %v2493 = vmul.bf16 %v2461, %v442
      %v2494 = vmul.bf16 %v2462, %v454
      %v2495 = vmul.bf16 %v2463, %v466
      %v2496 = vmul.bf16 %v2464, %v478
      %v2497 = vmul.bf16 %v2465, %v490
      %v2498 = vmul.bf16 %v2466, %v502
      %v2499 = vmul.bf16 %v2467, %v514
      %v2500 = vmul.bf16 %v2468, %v526
      %v2501 = vmul.bf16 %v2469, %v538
      %v2502 = vmul.bf16 %v2470, %v550
      %v2503 = vmul.bf16 %v2471, %v562
      %v2504 = vmul.bf16 %v2472, %v574
      %v2505 = vmul.bf16 %v2473, %v586
      %v2506 = vmul.bf16 %v2474, %v598
      %v2507 = vmul.bf16 %v2475, %v610
      %v2508 = vmul.bf16 %v2476, %v622
      %v2509 = vmul.bf16 %v2477, %v634
      %v2510 = vmul.bf16 %v2478, %v646
      %s2511 = scalar_lea.vmem %s1, 36
      %v2512 = vld [vmem:[%s2511] sm:$0xf]
      %v2513 = vld [vmem:[%s2511 + $0x4] sm:$0xf]
      %v2514 = vld [vmem:[%s2511 + $0x8] sm:$0xf]
      %v2547 = vunpack.c.l.b16 %v2479
      %v2548 = vunpack.c.l.b16 %v2480
      %v2549 = vunpack.c.l.b16 %v2481
      %v2550 = vunpack.c.l.b16 %v2482
      %v2551 = vunpack.c.l.b16 %v2483
      %v2552 = vunpack.c.l.b16 %v2484
      %v2553 = vunpack.c.l.b16 %v2485
      %v2554 = vunpack.c.l.b16 %v2486
      %v2555 = vunpack.c.l.b16 %v2487
      %v2556 = vunpack.c.l.b16 %v2488
      %v2557 = vunpack.c.l.b16 %v2489
      %v2558 = vunpack.c.l.b16 %v2490
      %v2559 = vunpack.c.l.b16 %v2491
      %v2560 = vunpack.c.l.b16 %v2492
      %v2561 = vunpack.c.l.b16 %v2493
      %v2562 = vunpack.c.l.b16 %v2494
      %v2563 = vunpack.c.l.b16 %v2495
      %v2564 = vunpack.c.l.b16 %v2496
      %v2565 = vunpack.c.l.b16 %v2497
      %v2566 = vunpack.c.l.b16 %v2498
      %v2567 = vunpack.c.l.b16 %v2499
      %v2568 = vunpack.c.l.b16 %v2500
      %v2569 = vunpack.c.l.b16 %v2501
      %v2570 = vunpack.c.l.b16 %v2502
      %v2571 = vunpack.c.l.b16 %v2503
      %v2572 = vunpack.c.l.b16 %v2504
      %v2573 = vunpack.c.l.b16 %v2505
      %v2574 = vunpack.c.l.b16 %v2506
      %v2575 = vunpack.c.l.b16 %v2507
      %v2576 = vunpack.c.l.b16 %v2508
      %v2577 = vunpack.c.l.b16 %v2509
      %v2578 = vunpack.c.l.b16 %v2510
      %v2579 = vpack.c.b16 %v2548, %v2547
      %v2580 = vpack.c.b16 %v2550, %v2549
      %v2581 = vpack.c.b16 %v2552, %v2551
      %v2582 = vpack.c.b16 %v2554, %v2553
      %v2583 = vpack.c.b16 %v2556, %v2555
      %v2584 = vpack.c.b16 %v2558, %v2557
      %v2585 = vpack.c.b16 %v2560, %v2559
      %v2586 = vpack.c.b16 %v2562, %v2561
      %v2587 = vpack.c.b16 %v2564, %v2563
      %v2588 = vpack.c.b16 %v2566, %v2565
      %v2589 = vpack.c.b16 %v2568, %v2567
      %v2590 = vpack.c.b16 %v2570, %v2569
      %v2591 = vpack.c.b16 %v2572, %v2571
      %v2592 = vpack.c.b16 %v2574, %v2573
      %v2593 = vpack.c.b16 %v2576, %v2575
      %v2594 = vpack.c.b16 %v2578, %v2577
      %v2598 = vunpack.c.l.b16 %v2512
      %v2599 = vunpack.c.l.b16 %v2513
      %v2600 = vunpack.c.l.b16 %v2514
      %v2601 = vpack.c.b16 %v2599, %v2598
      %v2602 = vpack.c.b16 %v2600, %v2600
      %v2605 = vsel %vm944, %v2579, 0
      %v2608 = vsel %vm944, %v2580, 0
      %v2611 = vsel %vm944, %v2581, 0
      %v2614 = vsel %vm944, %v2582, 0
      %v2617 = vsel %vm944, %v2583, 0
      %v2620 = vsel %vm944, %v2584, 0
      %v2623 = vsel %vm944, %v2585, 0
      %v2626 = vsel %vm944, %v2586, 0
      %v2629 = vsel %vm944, %v2587, 0
      %v2632 = vsel %vm944, %v2588, 0
      %v2635 = vsel %vm944, %v2589, 0
      %v2638 = vsel %vm944, %v2590, 0
      %v2641 = vsel %vm944, %v2591, 0
      %v2644 = vsel %vm944, %v2592, 0
      %v2647 = vsel %vm944, %v2593, 0
      %v2650 = vsel %vm944, %v2594, 0
      %v2653 = vsel %vm993, %v2602, 0
      %2655 = vmatprep.subr.bf16.mxu0 0
      %2656 = vmatpush1.bf16.msra.mxu0 0
      %2657 = vmatprep.subr.bf16.mxu0 0
      %2658 = vmatpush1.bf16.msra.mxu0 0
      %2659 = vmatprep.subr.bf16.mxu0 0
      %2660 = vmatpush1.bf16.msra.mxu0 0
      %2661 = vmatprep.subr.bf16.mxu0 0
      %2662 = vmatpush1.bf16.msra.mxu0 0
      %2663 = vmatprep.subr.bf16.mxu0 0
      %2664 = vmatpush1.bf16.msra.mxu0 0
      %2665 = vmatprep.subr.bf16.mxu0 0
      %2666 = vmatpush1.bf16.msra.mxu0 0
      %2667 = vmatprep.subr.bf16.mxu0 0
      %2668 = vmatpush1.bf16.msra.mxu0 %v2653
      %2669 = vmatprep.subr.bf16.mxu0 0
      %2670 = vmatpush1.bf16.msra.mxu0 %v2601
      %2671 = vmatprep.subr.bf16.mxu0 0
      %2672 = vmatpush2.bf16.msra.mxu0 0
      %2673 = vmatprep.subr.bf16.mxu0 0
      %2674 = vmatpush2.bf16.msra.mxu0 0
      %2675 = vmatprep.subr.bf16.mxu0 0
      %2676 = vmatpush2.bf16.msra.mxu0 0
      %2677 = vmatprep.subr.bf16.mxu0 0
      %2678 = vmatpush2.bf16.msra.mxu0 0
      %2679 = vmatprep.subr.bf16.mxu0 0
      %2680 = vmatpush2.bf16.msra.mxu0 0
      %2681 = vmatprep.subr.bf16.mxu0 0
      %2682 = vmatpush2.bf16.msra.mxu0 0
      %2683 = vmatprep.subr.bf16.mxu0 0
      %2684 = vmatpush2.bf16.msra.mxu0 0
      %2685 = vmatprep.subr.bf16.mxu0 0
      %2686 = vmatpush2.bf16.msra.mxu0 0
      %2687 = vmatprep.mubr.bf16.mxu0 0
      %2688 = vmatmul.mubr.bf16.gmra.mxu0 %v2605
      %v2689 = vpop.f32.mrf.mxu0
      %v2690 = vadd.f32 0.0, %v2689
      %v2691 = vpop.f32.mrf.mxu0
      %v2692 = vpop.f32.mrf.mxu0
      %v2693 = vadd.f32 0.0, %v2692
      %v2694 = vpop.f32.mrf.mxu0
      %2695 = vmatprep.mubr.bf16.mxu0 0
      %2696 = vmatmul.mubr.bf16.gmra.mxu0 %v2608
      %v2697 = vpop.f32.mrf.mxu0
      %v2698 = vadd.f32 0.0, %v2697
      %v2699 = vpop.f32.mrf.mxu0
      %v2700 = vpop.f32.mrf.mxu0
      %v2701 = vadd.f32 0.0, %v2700
      %v2702 = vpop.f32.mrf.mxu0
      %2703 = vmatprep.mubr.bf16.mxu0 0
      %2704 = vmatmul.mubr.bf16.gmra.mxu0 %v2611
      %v2705 = vpop.f32.mrf.mxu0
      %v2706 = vadd.f32 0.0, %v2705
      %v2707 = vpop.f32.mrf.mxu0
      %v2708 = vpop.f32.mrf.mxu0
      %v2709 = vadd.f32 0.0, %v2708
      %v2710 = vpop.f32.mrf.mxu0
      %2711 = vmatprep.mubr.bf16.mxu0 0
      %2712 = vmatmul.mubr.bf16.gmra.mxu0 %v2614
      %v2713 = vpop.f32.mrf.mxu0
      %v2714 = vadd.f32 0.0, %v2713
      %v2715 = vpop.f32.mrf.mxu0
      %v2716 = vpop.f32.mrf.mxu0
      %v2717 = vadd.f32 0.0, %v2716
      %v2718 = vpop.f32.mrf.mxu0
      %2719 = vmatprep.mubr.bf16.mxu0 0
      %2720 = vmatmul.mubr.bf16.gmra.mxu0 %v2617
      %v2721 = vpop.f32.mrf.mxu0
      %v2722 = vadd.f32 0.0, %v2721
      %v2723 = vpop.f32.mrf.mxu0
      %v2724 = vpop.f32.mrf.mxu0
      %v2725 = vadd.f32 0.0, %v2724
      %v2726 = vpop.f32.mrf.mxu0
      %2727 = vmatprep.mubr.bf16.mxu0 0
      %2728 = vmatmul.mubr.bf16.gmra.mxu0 %v2620
      %v2729 = vpop.f32.mrf.mxu0
      %v2730 = vadd.f32 0.0, %v2729
      %v2731 = vpop.f32.mrf.mxu0
      %v2732 = vpop.f32.mrf.mxu0
      %v2733 = vadd.f32 0.0, %v2732
      %v2734 = vpop.f32.mrf.mxu0
      %2735 = vmatprep.mubr.bf16.mxu0 0
      %2736 = vmatmul.mubr.bf16.gmra.mxu0 %v2623
      %v2737 = vpop.f32.mrf.mxu0
      %v2738 = vadd.f32 0.0, %v2737
      %v2739 = vpop.f32.mrf.mxu0
      %v2740 = vpop.f32.mrf.mxu0
      %v2741 = vadd.f32 0.0, %v2740
      %v2742 = vpop.f32.mrf.mxu0
      %2743 = vmatprep.mubr.bf16.mxu0 0
      %2744 = vmatmul.mubr.bf16.gmra.mxu0 %v2626
      %v2745 = vpop.f32.mrf.mxu0
      %v2746 = vadd.f32 0.0, %v2745
      %v2747 = vpop.f32.mrf.mxu0
      %v2748 = vpop.f32.mrf.mxu0
      %v2749 = vadd.f32 0.0, %v2748
      %v2750 = vpop.f32.mrf.mxu0
      %2751 = vmatprep.mubr.bf16.mxu0 0
      %2752 = vmatmul.mubr.bf16.gmra.mxu0 %v2629
      %v2753 = vpop.f32.mrf.mxu0
      %v2754 = vadd.f32 0.0, %v2753
      %v2755 = vpop.f32.mrf.mxu0
      %v2756 = vpop.f32.mrf.mxu0
      %v2757 = vadd.f32 0.0, %v2756
      %v2758 = vpop.f32.mrf.mxu0
      %2759 = vmatprep.mubr.bf16.mxu0 0
      %2760 = vmatmul.mubr.bf16.gmra.mxu0 %v2632
      %v2761 = vpop.f32.mrf.mxu0
      %v2762 = vadd.f32 0.0, %v2761
      %v2763 = vpop.f32.mrf.mxu0
      %v2764 = vpop.f32.mrf.mxu0
      %v2765 = vadd.f32 0.0, %v2764
      %v2766 = vpop.f32.mrf.mxu0
      %2767 = vmatprep.mubr.bf16.mxu0 0
      %2768 = vmatmul.mubr.bf16.gmra.mxu0 %v2635
      %v2769 = vpop.f32.mrf.mxu0
      %v2770 = vadd.f32 0.0, %v2769
      %v2771 = vpop.f32.mrf.mxu0
      %v2772 = vpop.f32.mrf.mxu0
      %v2773 = vadd.f32 0.0, %v2772
      %v2774 = vpop.f32.mrf.mxu0
      %2775 = vmatprep.mubr.bf16.mxu0 0
      %2776 = vmatmul.mubr.bf16.gmra.mxu0 %v2638
      %v2777 = vpop.f32.mrf.mxu0
      %v2778 = vadd.f32 0.0, %v2777
      %v2779 = vpop.f32.mrf.mxu0
      %v2780 = vpop.f32.mrf.mxu0
      %v2781 = vadd.f32 0.0, %v2780
      %v2782 = vpop.f32.mrf.mxu0
      %2783 = vmatprep.mubr.bf16.mxu0 0
      %2784 = vmatmul.mubr.bf16.gmra.mxu0 %v2641
      %v2785 = vpop.f32.mrf.mxu0
      %v2786 = vadd.f32 0.0, %v2785
      %v2787 = vpop.f32.mrf.mxu0
      %v2788 = vpop.f32.mrf.mxu0
      %v2789 = vadd.f32 0.0, %v2788
      %v2790 = vpop.f32.mrf.mxu0
      %2791 = vmatprep.mubr.bf16.mxu0 0
      %2792 = vmatmul.mubr.bf16.gmra.mxu0 %v2644
      %v2793 = vpop.f32.mrf.mxu0
      %v2794 = vadd.f32 0.0, %v2793
      %v2795 = vpop.f32.mrf.mxu0
      %v2796 = vpop.f32.mrf.mxu0
      %v2797 = vadd.f32 0.0, %v2796
      %v2798 = vpop.f32.mrf.mxu0
      %2799 = vmatprep.mubr.bf16.mxu0 0
      %2800 = vmatmul.mubr.bf16.gmra.mxu0 %v2647
      %v2801 = vpop.f32.mrf.mxu0
      %v2802 = vadd.f32 0.0, %v2801
      %v2803 = vpop.f32.mrf.mxu0
      %v2804 = vpop.f32.mrf.mxu0
      %v2805 = vadd.f32 0.0, %v2804
      %v2806 = vpop.f32.mrf.mxu0
      %2807 = vmatprep.mubr.bf16.mxu0 0
      %2808 = vmatmul.mubr.bf16.gmra.mxu0 %v2650
      %v2809 = vpop.f32.mrf.mxu0
      %v2810 = vadd.f32 0.0, %v2809
      %v2811 = vpop.f32.mrf.mxu0
      %v2812 = vpop.f32.mrf.mxu0
      %v2813 = vadd.f32 0.0, %v2812
      %v2814 = vpop.f32.mrf.mxu0
      %2815 = vdwg.mxu0
      %v2816 = vadd.f32 %v2415, %v2690
      %v2817 = vadd.f32 %v2416, %v2693
      %v2818 = vadd.f32 %v2417, %v2698
      %v2819 = vadd.f32 %v2418, %v2701
      %v2820 = vadd.f32 %v2419, %v2706
      %v2821 = vadd.f32 %v2420, %v2709
      %v2822 = vadd.f32 %v2421, %v2714
      %v2823 = vadd.f32 %v2422, %v2717
      %v2824 = vadd.f32 %v2423, %v2722
      %v2825 = vadd.f32 %v2424, %v2725
      %v2826 = vadd.f32 %v2425, %v2730
      %v2827 = vadd.f32 %v2426, %v2733
      %v2828 = vadd.f32 %v2427, %v2738
      %v2829 = vadd.f32 %v2428, %v2741
      %v2830 = vadd.f32 %v2429, %v2746
      %v2831 = vadd.f32 %v2430, %v2749
      %v2832 = vadd.f32 %v2431, %v2754
      %v2833 = vadd.f32 %v2432, %v2757
      %v2834 = vadd.f32 %v2433, %v2762
      %v2835 = vadd.f32 %v2434, %v2765
      %v2836 = vadd.f32 %v2435, %v2770
      %v2837 = vadd.f32 %v2436, %v2773
      %v2838 = vadd.f32 %v2437, %v2778
      %v2839 = vadd.f32 %v2438, %v2781
      %v2840 = vadd.f32 %v2439, %v2786
      %v2841 = vadd.f32 %v2440, %v2789
      %v2842 = vadd.f32 %v2441, %v2794
      %v2843 = vadd.f32 %v2442, %v2797
      %v2844 = vadd.f32 %v2443, %v2802
      %v2845 = vadd.f32 %v2444, %v2805
      %v2846 = vadd.f32 %v2445, %v2810
      %v2847 = vadd.f32 %v2446, %v2813
      %v2848 = vld [vmem:[%s192 + $0x8] sm:$0xf]
      %v2849 = vld [vmem:[%s192 + $0xc] sm:$0xf]
      %v2850 = vld [vmem:[%s192 + $0x10] sm:$0xf]
      %v2851 = vld [vmem:[%s192 + $0x14] sm:$0xf]
      %v2852 = vld [vmem:[%s192 + $0x18] sm:$0xf]
      %v2853 = vld [vmem:[%s192 + $0x1c] sm:$0xf]
      %v2854 = vld [vmem:[%s192 + $0x20] sm:$0xf]
      %v2855 = vld [vmem:[%s192 + $0x24] sm:$0xf]
      %v2856 = vld [vmem:[%s192 + $0x28] sm:$0xf]
      %v2857 = vld [vmem:[%s192 + $0x2c] sm:$0xf]
      %v2858 = vld [vmem:[%s192 + $0x30] sm:$0xf]
      %v2859 = vld [vmem:[%s192 + $0x34] sm:$0xf]
      %v2860 = vld [vmem:[%s192 + $0x38] sm:$0xf]
      %v2861 = vld [vmem:[%s192 + $0x3c] sm:$0xf]
      %v2862 = vld [vmem:[%s192 + $0x40] sm:$0xf]
      %v2863 = vld [vmem:[%s192 + $0x44] sm:$0xf]
      %v2864 = vld [vmem:[%s192 + $0x48] sm:$0xf]
      %v2865 = vld [vmem:[%s192 + $0x4c] sm:$0xf]
      %v2866 = vld [vmem:[%s192 + $0x50] sm:$0xf]
      %v2867 = vld [vmem:[%s192 + $0x54] sm:$0xf]
      %v2868 = vld [vmem:[%s192 + $0x58] sm:$0xf]
      %v2869 = vld [vmem:[%s192 + $0x5c] sm:$0xf]
      %v2870 = vld [vmem:[%s192 + $0x60] sm:$0xf]
      %v2871 = vld [vmem:[%s192 + $0x64] sm:$0xf]
      %v2872 = vld [vmem:[%s192 + $0x68] sm:$0xf]
      %v2873 = vld [vmem:[%s192 + $0x6c] sm:$0xf]
      %v2874 = vld [vmem:[%s192 + $0x70] sm:$0xf]
      %v2875 = vld [vmem:[%s192 + $0x74] sm:$0xf]
      %v2876 = vld [vmem:[%s192 + $0x78] sm:$0xf]
      %v2877 = vld [vmem:[%s192 + $0x7c] sm:$0xf]
      %v2878 = vld [vmem:[%s192 + $0x80] sm:$0xf]
      %v2879 = vld [vmem:[%s192 + $0x84] sm:$0xf]
      %v2880 = vld [vmem:[%s192 + $0x88] sm:$0x1]
      %s2881 = scalar_lea.vmem %s1, 48
      %v2882 = vld [vmem:[%s2881] sm:$0xf]
      %v2883 = vld [vmem:[%s2881 + $0x4] sm:$0xf]
      %v2884 = vld [vmem:[%s2881 + $0x8] sm:$0xf]
      %v2918 = vunpack.c.l.b16 %v2848
      %v2919 = vunpack.c.l.b16 %v2849
      %v2920 = vunpack.c.l.b16 %v2850
      %v2921 = vunpack.c.l.b16 %v2851
      %v2922 = vunpack.c.l.b16 %v2852
      %v2923 = vunpack.c.l.b16 %v2853
      %v2924 = vunpack.c.l.b16 %v2854
      %v2925 = vunpack.c.l.b16 %v2855
      %v2926 = vunpack.c.l.b16 %v2856
      %v2927 = vunpack.c.l.b16 %v2857
      %v2928 = vunpack.c.l.b16 %v2858
      %v2929 = vunpack.c.l.b16 %v2859
      %v2930 = vunpack.c.l.b16 %v2860
      %v2931 = vunpack.c.l.b16 %v2861
      %v2932 = vunpack.c.l.b16 %v2862
      %v2933 = vunpack.c.l.b16 %v2863
      %v2934 = vunpack.c.l.b16 %v2864
      %v2935 = vunpack.c.l.b16 %v2865
      %v2936 = vunpack.c.l.b16 %v2866
      %v2937 = vunpack.c.l.b16 %v2867
      %v2938 = vunpack.c.l.b16 %v2868
      %v2939 = vunpack.c.l.b16 %v2869
      %v2940 = vunpack.c.l.b16 %v2870
      %v2941 = vunpack.c.l.b16 %v2871
      %v2942 = vunpack.c.l.b16 %v2872
      %v2943 = vunpack.c.l.b16 %v2873
      %v2944 = vunpack.c.l.b16 %v2874
      %v2945 = vunpack.c.l.b16 %v2875
      %v2946 = vunpack.c.l.b16 %v2876
      %v2947 = vunpack.c.l.b16 %v2877
      %v2948 = vunpack.c.l.b16 %v2878
      %v2949 = vunpack.c.l.b16 %v2879
      %v2950 = vunpack.c.l.b16 %v2880
      %v2951 = vpack.c.b16 %v2919, %v2918
      %v2952 = vpack.c.b16 %v2921, %v2920
      %v2953 = vpack.c.b16 %v2923, %v2922
      %v2954 = vpack.c.b16 %v2925, %v2924
      %v2955 = vpack.c.b16 %v2927, %v2926
      %v2956 = vpack.c.b16 %v2929, %v2928
      %v2957 = vpack.c.b16 %v2931, %v2930
      %v2958 = vpack.c.b16 %v2933, %v2932
      %v2959 = vpack.c.b16 %v2935, %v2934
      %v2960 = vpack.c.b16 %v2937, %v2936
      %v2961 = vpack.c.b16 %v2939, %v2938
      %v2962 = vpack.c.b16 %v2941, %v2940
      %v2963 = vpack.c.b16 %v2943, %v2942
      %v2964 = vpack.c.b16 %v2945, %v2944
      %v2965 = vpack.c.b16 %v2947, %v2946
      %v2966 = vpack.c.b16 %v2949, %v2948
      %v2967 = vpack.c.b16 %v2950, %v2950
      %v2969 = vshrl.u32 %v2951, 16
      %v2971 = vshll.u32 %v2951, 16
      %v2973 = vrot.slane %v2971, 1
      %v2974 = vor.u32 %v2969, %v2973
      %v2976 = vshll.u32 %v2952, 16
      %v2978 = vrot.slane %v2976, 1
      %v2979 = vsel %vm802, %v2974, %v2978
      %v2980 = vshrl.u32 %v2952, 16
      %v2982 = vor.u32 %v2980, %v2978
      %v2984 = vshll.u32 %v2953, 16
      %v2986 = vrot.slane %v2984, 1
      %v2987 = vsel %vm802, %v2982, %v2986
      %v2988 = vshrl.u32 %v2953, 16
      %v2990 = vor.u32 %v2988, %v2986
      %v2992 = vshll.u32 %v2954, 16
      %v2994 = vrot.slane %v2992, 1
      %v2995 = vsel %vm802, %v2990, %v2994
      %v2996 = vshrl.u32 %v2954, 16
      %v2998 = vor.u32 %v2996, %v2994
      %v3000 = vshll.u32 %v2955, 16
      %v3002 = vrot.slane %v3000, 1
      %v3003 = vsel %vm802, %v2998, %v3002
      %v3004 = vshrl.u32 %v2955, 16
      %v3006 = vor.u32 %v3004, %v3002
      %v3008 = vshll.u32 %v2956, 16
      %v3010 = vrot.slane %v3008, 1
      %v3011 = vsel %vm802, %v3006, %v3010
      %v3012 = vshrl.u32 %v2956, 16
      %v3014 = vor.u32 %v3012, %v3010
      %v3016 = vshll.u32 %v2957, 16
      %v3018 = vrot.slane %v3016, 1
      %v3019 = vsel %vm802, %v3014, %v3018
      %v3020 = vshrl.u32 %v2957, 16
      %v3022 = vor.u32 %v3020, %v3018
      %v3024 = vshll.u32 %v2958, 16
      %v3026 = vrot.slane %v3024, 1
      %v3027 = vsel %vm802, %v3022, %v3026
      %v3028 = vshrl.u32 %v2958, 16
      %v3030 = vor.u32 %v3028, %v3026
      %v3032 = vshll.u32 %v2959, 16
      %v3034 = vrot.slane %v3032, 1
      %v3035 = vsel %vm802, %v3030, %v3034
      %v3036 = vshrl.u32 %v2959, 16
      %v3038 = vor.u32 %v3036, %v3034
      %v3040 = vshll.u32 %v2960, 16
      %v3042 = vrot.slane %v3040, 1
      %v3043 = vsel %vm802, %v3038, %v3042
      %v3044 = vshrl.u32 %v2960, 16
      %v3046 = vor.u32 %v3044, %v3042
      %v3048 = vshll.u32 %v2961, 16
      %v3050 = vrot.slane %v3048, 1
      %v3051 = vsel %vm802, %v3046, %v3050
      %v3052 = vshrl.u32 %v2961, 16
      %v3054 = vor.u32 %v3052, %v3050
      %v3056 = vshll.u32 %v2962, 16
      %v3058 = vrot.slane %v3056, 1
      %v3059 = vsel %vm802, %v3054, %v3058
      %v3060 = vshrl.u32 %v2962, 16
      %v3062 = vor.u32 %v3060, %v3058
      %v3064 = vshll.u32 %v2963, 16
      %v3066 = vrot.slane %v3064, 1
      %v3067 = vsel %vm802, %v3062, %v3066
      %v3068 = vshrl.u32 %v2963, 16
      %v3070 = vor.u32 %v3068, %v3066
      %v3072 = vshll.u32 %v2964, 16
      %v3074 = vrot.slane %v3072, 1
      %v3075 = vsel %vm802, %v3070, %v3074
      %v3076 = vshrl.u32 %v2964, 16
      %v3078 = vor.u32 %v3076, %v3074
      %v3080 = vshll.u32 %v2965, 16
      %v3082 = vrot.slane %v3080, 1
      %v3083 = vsel %vm802, %v3078, %v3082
      %v3084 = vshrl.u32 %v2965, 16
      %v3086 = vor.u32 %v3084, %v3082
      %v3088 = vshll.u32 %v2966, 16
      %v3090 = vrot.slane %v3088, 1
      %v3091 = vsel %vm802, %v3086, %v3090
      %v3092 = vshrl.u32 %v2966, 16
      %v3094 = vor.u32 %v3092, %v3090
      %v3096 = vshll.u32 %v2967, 16
      %v3098 = vrot.slane %v3096, 1
      %v3099 = vsel %vm802, %v3094, %v3098
      %v3103 = vunpack.c.l.b16 %v2882
      %v3104 = vunpack.c.l.b16 %v2883
      %v3105 = vunpack.c.l.b16 %v2884
      %v3106 = vpack.c.b16 %v3104, %v3103
      %v3107 = vpack.c.b16 %v3105, %v3105
      %v3110 = vsel %vm944, %v2979, 0
      %v3113 = vsel %vm944, %v2987, 0
      %v3116 = vsel %vm944, %v2995, 0
      %v3119 = vsel %vm944, %v3003, 0
      %v3122 = vsel %vm944, %v3011, 0
      %v3125 = vsel %vm944, %v3019, 0
      %v3128 = vsel %vm944, %v3027, 0
      %v3131 = vsel %vm944, %v3035, 0
      %v3134 = vsel %vm944, %v3043, 0
      %v3137 = vsel %vm944, %v3051, 0
      %v3140 = vsel %vm944, %v3059, 0
      %v3143 = vsel %vm944, %v3067, 0
      %v3146 = vsel %vm944, %v3075, 0
      %v3149 = vsel %vm944, %v3083, 0
      %v3152 = vsel %vm944, %v3091, 0
      %v3155 = vsel %vm944, %v3099, 0
      %v3158 = vsel %vm993, %v3107, 0
      %3160 = vmatprep.subr.bf16.mxu0 0
      %3161 = vmatpush1.bf16.msra.mxu0 0
      %3162 = vmatprep.subr.bf16.mxu0 0
      %3163 = vmatpush1.bf16.msra.mxu0 0
      %3164 = vmatprep.subr.bf16.mxu0 0
      %3165 = vmatpush1.bf16.msra.mxu0 0
      %3166 = vmatprep.subr.bf16.mxu0 0
      %3167 = vmatpush1.bf16.msra.mxu0 0
      %3168 = vmatprep.subr.bf16.mxu0 0
      %3169 = vmatpush1.bf16.msra.mxu0 0
      %3170 = vmatprep.subr.bf16.mxu0 0
      %3171 = vmatpush1.bf16.msra.mxu0 0
      %3172 = vmatprep.subr.bf16.mxu0 0
      %3173 = vmatpush1.bf16.msra.mxu0 %v3158
      %3174 = vmatprep.subr.bf16.mxu0 0
      %3175 = vmatpush1.bf16.msra.mxu0 %v3106
      %3176 = vmatprep.subr.bf16.mxu0 0
      %3177 = vmatpush2.bf16.msra.mxu0 0
      %3178 = vmatprep.subr.bf16.mxu0 0
      %3179 = vmatpush2.bf16.msra.mxu0 0
      %3180 = vmatprep.subr.bf16.mxu0 0
      %3181 = vmatpush2.bf16.msra.mxu0 0
      %3182 = vmatprep.subr.bf16.mxu0 0
      %3183 = vmatpush2.bf16.msra.mxu0 0
      %3184 = vmatprep.subr.bf16.mxu0 0
      %3185 = vmatpush2.bf16.msra.mxu0 0
      %3186 = vmatprep.subr.bf16.mxu0 0
      %3187 = vmatpush2.bf16.msra.mxu0 0
      %3188 = vmatprep.subr.bf16.mxu0 0
      %3189 = vmatpush2.bf16.msra.mxu0 0
      %3190 = vmatprep.subr.bf16.mxu0 0
      %3191 = vmatpush2.bf16.msra.mxu0 0
      %3192 = vmatprep.mubr.bf16.mxu0 0
      %3193 = vmatmul.mubr.bf16.gmra.mxu0 %v3110
      %v3194 = vpop.f32.mrf.mxu0
      %v3195 = vadd.f32 0.0, %v3194
      %v3196 = vpop.f32.mrf.mxu0
      %v3197 = vpop.f32.mrf.mxu0
      %v3198 = vadd.f32 0.0, %v3197
      %v3199 = vpop.f32.mrf.mxu0
      %3200 = vmatprep.mubr.bf16.mxu0 0
      %3201 = vmatmul.mubr.bf16.gmra.mxu0 %v3113
      %v3202 = vpop.f32.mrf.mxu0
      %v3203 = vadd.f32 0.0, %v3202
      %v3204 = vpop.f32.mrf.mxu0
      %v3205 = vpop.f32.mrf.mxu0
      %v3206 = vadd.f32 0.0, %v3205
      %v3207 = vpop.f32.mrf.mxu0
      %3208 = vmatprep.mubr.bf16.mxu0 0
      %3209 = vmatmul.mubr.bf16.gmra.mxu0 %v3116
      %v3210 = vpop.f32.mrf.mxu0
      %v3211 = vadd.f32 0.0, %v3210
      %v3212 = vpop.f32.mrf.mxu0
      %v3213 = vpop.f32.mrf.mxu0
      %v3214 = vadd.f32 0.0, %v3213
      %v3215 = vpop.f32.mrf.mxu0
      %3216 = vmatprep.mubr.bf16.mxu0 0
      %3217 = vmatmul.mubr.bf16.gmra.mxu0 %v3119
      %v3218 = vpop.f32.mrf.mxu0
      %v3219 = vadd.f32 0.0, %v3218
      %v3220 = vpop.f32.mrf.mxu0
      %v3221 = vpop.f32.mrf.mxu0
      %v3222 = vadd.f32 0.0, %v3221
      %v3223 = vpop.f32.mrf.mxu0
      %3224 = vmatprep.mubr.bf16.mxu0 0
      %3225 = vmatmul.mubr.bf16.gmra.mxu0 %v3122
      %v3226 = vpop.f32.mrf.mxu0
      %v3227 = vadd.f32 0.0, %v3226
      %v3228 = vpop.f32.mrf.mxu0
      %v3229 = vpop.f32.mrf.mxu0
      %v3230 = vadd.f32 0.0, %v3229
      %v3231 = vpop.f32.mrf.mxu0
      %3232 = vmatprep.mubr.bf16.mxu0 0
      %3233 = vmatmul.mubr.bf16.gmra.mxu0 %v3125
      %v3234 = vpop.f32.mrf.mxu0
      %v3235 = vadd.f32 0.0, %v3234
      %v3236 = vpop.f32.mrf.mxu0
      %v3237 = vpop.f32.mrf.mxu0
      %v3238 = vadd.f32 0.0, %v3237
      %v3239 = vpop.f32.mrf.mxu0
      %3240 = vmatprep.mubr.bf16.mxu0 0
      %3241 = vmatmul.mubr.bf16.gmra.mxu0 %v3128
      %v3242 = vpop.f32.mrf.mxu0
      %v3243 = vadd.f32 0.0, %v3242
      %v3244 = vpop.f32.mrf.mxu0
      %v3245 = vpop.f32.mrf.mxu0
      %v3246 = vadd.f32 0.0, %v3245
      %v3247 = vpop.f32.mrf.mxu0
      %3248 = vmatprep.mubr.bf16.mxu0 0
      %3249 = vmatmul.mubr.bf16.gmra.mxu0 %v3131
      %v3250 = vpop.f32.mrf.mxu0
      %v3251 = vadd.f32 0.0, %v3250
      %v3252 = vpop.f32.mrf.mxu0
      %v3253 = vpop.f32.mrf.mxu0
      %v3254 = vadd.f32 0.0, %v3253
      %v3255 = vpop.f32.mrf.mxu0
      %3256 = vmatprep.mubr.bf16.mxu0 0
      %3257 = vmatmul.mubr.bf16.gmra.mxu0 %v3134
      %v3258 = vpop.f32.mrf.mxu0
      %v3259 = vadd.f32 0.0, %v3258
      %v3260 = vpop.f32.mrf.mxu0
      %v3261 = vpop.f32.mrf.mxu0
      %v3262 = vadd.f32 0.0, %v3261
      %v3263 = vpop.f32.mrf.mxu0
      %3264 = vmatprep.mubr.bf16.mxu0 0
      %3265 = vmatmul.mubr.bf16.gmra.mxu0 %v3137
      %v3266 = vpop.f32.mrf.mxu0
      %v3267 = vadd.f32 0.0, %v3266
      %v3268 = vpop.f32.mrf.mxu0
      %v3269 = vpop.f32.mrf.mxu0
      %v3270 = vadd.f32 0.0, %v3269
      %v3271 = vpop.f32.mrf.mxu0
      %3272 = vmatprep.mubr.bf16.mxu0 0
      %3273 = vmatmul.mubr.bf16.gmra.mxu0 %v3140
      %v3274 = vpop.f32.mrf.mxu0
      %v3275 = vadd.f32 0.0, %v3274
      %v3276 = vpop.f32.mrf.mxu0
      %v3277 = vpop.f32.mrf.mxu0
      %v3278 = vadd.f32 0.0, %v3277
      %v3279 = vpop.f32.mrf.mxu0
      %3280 = vmatprep.mubr.bf16.mxu0 0
      %3281 = vmatmul.mubr.bf16.gmra.mxu0 %v3143
      %v3282 = vpop.f32.mrf.mxu0
      %v3283 = vadd.f32 0.0, %v3282
      %v3284 = vpop.f32.mrf.mxu0
      %v3285 = vpop.f32.mrf.mxu0
      %v3286 = vadd.f32 0.0, %v3285
      %v3287 = vpop.f32.mrf.mxu0
      %3288 = vmatprep.mubr.bf16.mxu0 0
      %3289 = vmatmul.mubr.bf16.gmra.mxu0 %v3146
      %v3290 = vpop.f32.mrf.mxu0
      %v3291 = vadd.f32 0.0, %v3290
      %v3292 = vpop.f32.mrf.mxu0
      %v3293 = vpop.f32.mrf.mxu0
      %v3294 = vadd.f32 0.0, %v3293
      %v3295 = vpop.f32.mrf.mxu0
      %3296 = vmatprep.mubr.bf16.mxu0 0
      %3297 = vmatmul.mubr.bf16.gmra.mxu0 %v3149
      %v3298 = vpop.f32.mrf.mxu0
      %v3299 = vadd.f32 0.0, %v3298
      %v3300 = vpop.f32.mrf.mxu0
      %v3301 = vpop.f32.mrf.mxu0
      %v3302 = vadd.f32 0.0, %v3301
      %v3303 = vpop.f32.mrf.mxu0
      %3304 = vmatprep.mubr.bf16.mxu0 0
      %3305 = vmatmul.mubr.bf16.gmra.mxu0 %v3152
      %v3306 = vpop.f32.mrf.mxu0
      %v3307 = vadd.f32 0.0, %v3306
      %v3308 = vpop.f32.mrf.mxu0
      %v3309 = vpop.f32.mrf.mxu0
      %v3310 = vadd.f32 0.0, %v3309
      %v3311 = vpop.f32.mrf.mxu0
      %3312 = vmatprep.mubr.bf16.mxu0 0
      %3313 = vmatmul.mubr.bf16.gmra.mxu0 %v3155
      %v3314 = vpop.f32.mrf.mxu0
      %v3315 = vadd.f32 0.0, %v3314
      %v3316 = vpop.f32.mrf.mxu0
      %v3317 = vpop.f32.mrf.mxu0
      %v3318 = vadd.f32 0.0, %v3317
      %v3319 = vpop.f32.mrf.mxu0
      %3320 = vdwg.mxu0
      %v3321 = vadd.f32 %v2816, %v3195
      %v3322 = vadd.f32 %v2817, %v3198
      %v3323 = vadd.f32 %v2818, %v3203
      %v3324 = vadd.f32 %v2819, %v3206
      %v3325 = vadd.f32 %v2820, %v3211
      %v3326 = vadd.f32 %v2821, %v3214
      %v3327 = vadd.f32 %v2822, %v3219
      %v3328 = vadd.f32 %v2823, %v3222
      %v3329 = vadd.f32 %v2824, %v3227
      %v3330 = vadd.f32 %v2825, %v3230
      %v3331 = vadd.f32 %v2826, %v3235
      %v3332 = vadd.f32 %v2827, %v3238
      %v3333 = vadd.f32 %v2828, %v3243
      %v3334 = vadd.f32 %v2829, %v3246
      %v3335 = vadd.f32 %v2830, %v3251
      %v3336 = vadd.f32 %v2831, %v3254
      %v3337 = vadd.f32 %v2832, %v3259
      %v3338 = vadd.f32 %v2833, %v3262
      %v3339 = vadd.f32 %v2834, %v3267
      %v3340 = vadd.f32 %v2835, %v3270
      %v3341 = vadd.f32 %v2836, %v3275
      %v3342 = vadd.f32 %v2837, %v3278
      %v3343 = vadd.f32 %v2838, %v3283
      %v3344 = vadd.f32 %v2839, %v3286
      %v3345 = vadd.f32 %v2840, %v3291
      %v3346 = vadd.f32 %v2841, %v3294
      %v3347 = vadd.f32 %v2842, %v3299
      %v3348 = vadd.f32 %v2843, %v3302
      %v3349 = vadd.f32 %v2844, %v3307
      %v3350 = vadd.f32 %v2845, %v3310
      %v3351 = vadd.f32 %v2846, %v3315
      %v3352 = vadd.f32 %v2847, %v3318
      %v3353 = vld [vmem:[%s192 + $0x8] sm:$0xe]
      %v3354 = vmul.bf16 %v3353, %v1912
      %v3355 = vmul.bf16 %v2849, %v1915
      %v3356 = vmul.bf16 %v2850, %v1918
      %v3357 = vmul.bf16 %v2851, %v1921
      %v3358 = vmul.bf16 %v2852, %v1924
      %v3359 = vmul.bf16 %v2853, %v1927
      %v3360 = vmul.bf16 %v2854, %v1930
      %v3361 = vmul.bf16 %v2855, %v1933
      %v3362 = vmul.bf16 %v2856, %v1936
      %v3363 = vmul.bf16 %v2857, %v1939
      %v3364 = vmul.bf16 %v2858, %v1942
      %v3365 = vmul.bf16 %v2859, %v1945
      %v3366 = vmul.bf16 %v2860, %v1948
      %v3367 = vmul.bf16 %v2861, %v1951
      %v3368 = vmul.bf16 %v2862, %v1954
      %v3369 = vmul.bf16 %v2863, %v1957
      %v3370 = vmul.bf16 %v2864, %v1960
      %v3371 = vmul.bf16 %v2865, %v1963
      %v3372 = vmul.bf16 %v2866, %v1966
      %v3373 = vmul.bf16 %v2867, %v1969
      %v3374 = vmul.bf16 %v2868, %v1972
      %v3375 = vmul.bf16 %v2869, %v1975
      %v3376 = vmul.bf16 %v2870, %v1978
      %v3377 = vmul.bf16 %v2871, %v1981
      %v3378 = vmul.bf16 %v2872, %v1984
      %v3379 = vmul.bf16 %v2873, %v1987
      %v3380 = vmul.bf16 %v2874, %v1990
      %v3381 = vmul.bf16 %v2875, %v1993
      %v3382 = vmul.bf16 %v2876, %v1996
      %v3383 = vmul.bf16 %v2877, %v1999
      %v3384 = vmul.bf16 %v2878, %v2002
      %v3385 = vmul.bf16 %v2879, %v2005
      %v3386 = vmul.bf16 %v2880, %v2006
      %s3387 = scalar_lea.vmem %s1, 60
      %v3388 = vld [vmem:[%s3387] sm:$0xf]
      %v3389 = vld [vmem:[%s3387 + $0x4] sm:$0xf]
      %v3390 = vld [vmem:[%s3387 + $0x8] sm:$0xf]
      %v3424 = vunpack.c.l.b16 %v3354
      %v3425 = vunpack.c.l.b16 %v3355
      %v3426 = vunpack.c.l.b16 %v3356
      %v3427 = vunpack.c.l.b16 %v3357
      %v3428 = vunpack.c.l.b16 %v3358
      %v3429 = vunpack.c.l.b16 %v3359
      %v3430 = vunpack.c.l.b16 %v3360
      %v3431 = vunpack.c.l.b16 %v3361
      %v3432 = vunpack.c.l.b16 %v3362
      %v3433 = vunpack.c.l.b16 %v3363
      %v3434 = vunpack.c.l.b16 %v3364
      %v3435 = vunpack.c.l.b16 %v3365
      %v3436 = vunpack.c.l.b16 %v3366
      %v3437 = vunpack.c.l.b16 %v3367
      %v3438 = vunpack.c.l.b16 %v3368
      %v3439 = vunpack.c.l.b16 %v3369
      %v3440 = vunpack.c.l.b16 %v3370
      %v3441 = vunpack.c.l.b16 %v3371
      %v3442 = vunpack.c.l.b16 %v3372
      %v3443 = vunpack.c.l.b16 %v3373
      %v3444 = vunpack.c.l.b16 %v3374
      %v3445 = vunpack.c.l.b16 %v3375
      %v3446 = vunpack.c.l.b16 %v3376
      %v3447 = vunpack.c.l.b16 %v3377
      %v3448 = vunpack.c.l.b16 %v3378
      %v3449 = vunpack.c.l.b16 %v3379
      %v3450 = vunpack.c.l.b16 %v3380
      %v3451 = vunpack.c.l.b16 %v3381
      %v3452 = vunpack.c.l.b16 %v3382
      %v3453 = vunpack.c.l.b16 %v3383
      %v3454 = vunpack.c.l.b16 %v3384
      %v3455 = vunpack.c.l.b16 %v3385
      %v3456 = vunpack.c.l.b16 %v3386
      %v3457 = vpack.c.b16 %v3425, %v3424
      %v3458 = vpack.c.b16 %v3427, %v3426
      %v3459 = vpack.c.b16 %v3429, %v3428
      %v3460 = vpack.c.b16 %v3431, %v3430
      %v3461 = vpack.c.b16 %v3433, %v3432
      %v3462 = vpack.c.b16 %v3435, %v3434
      %v3463 = vpack.c.b16 %v3437, %v3436
      %v3464 = vpack.c.b16 %v3439, %v3438
      %v3465 = vpack.c.b16 %v3441, %v3440
      %v3466 = vpack.c.b16 %v3443, %v3442
      %v3467 = vpack.c.b16 %v3445, %v3444
      %v3468 = vpack.c.b16 %v3447, %v3446
      %v3469 = vpack.c.b16 %v3449, %v3448
      %v3470 = vpack.c.b16 %v3451, %v3450
      %v3471 = vpack.c.b16 %v3453, %v3452
      %v3472 = vpack.c.b16 %v3455, %v3454
      %v3473 = vpack.c.b16 %v3456, %v3456
      %v3474 = vrot.slane %v3457, 1
      %v3475 = vrot.slane %v3458, 1
      %v3476 = vsel %vm2160, %v3474, %v3475
      %v3477 = vrot.slane %v3459, 1
      %v3478 = vsel %vm2160, %v3475, %v3477
      %v3479 = vrot.slane %v3460, 1
      %v3480 = vsel %vm2160, %v3477, %v3479
      %v3481 = vrot.slane %v3461, 1
      %v3482 = vsel %vm2160, %v3479, %v3481
      %v3483 = vrot.slane %v3462, 1
      %v3484 = vsel %vm2160, %v3481, %v3483
      %v3485 = vrot.slane %v3463, 1
      %v3486 = vsel %vm2160, %v3483, %v3485
      %v3487 = vrot.slane %v3464, 1
      %v3488 = vsel %vm2160, %v3485, %v3487
      %v3489 = vrot.slane %v3465, 1
      %v3490 = vsel %vm2160, %v3487, %v3489
      %v3491 = vrot.slane %v3466, 1
      %v3492 = vsel %vm2160, %v3489, %v3491
      %v3493 = vrot.slane %v3467, 1
      %v3494 = vsel %vm2160, %v3491, %v3493
      %v3495 = vrot.slane %v3468, 1
      %v3496 = vsel %vm2160, %v3493, %v3495
      %v3497 = vrot.slane %v3469, 1
      %v3498 = vsel %vm2160, %v3495, %v3497
      %v3499 = vrot.slane %v3470, 1
      %v3500 = vsel %vm2160, %v3497, %v3499
      %v3501 = vrot.slane %v3471, 1
      %v3502 = vsel %vm2160, %v3499, %v3501
      %v3503 = vrot.slane %v3472, 1
      %v3504 = vsel %vm2160, %v3501, %v3503
      %v3505 = vrot.slane %v3473, 1
      %v3506 = vsel %vm2160, %v3503, %v3505
      %v3510 = vunpack.c.l.b16 %v3388
      %v3511 = vunpack.c.l.b16 %v3389
      %v3512 = vunpack.c.l.b16 %v3390
      %v3513 = vpack.c.b16 %v3511, %v3510
      %v3514 = vpack.c.b16 %v3512, %v3512
      %v3517 = vsel %vm944, %v3476, 0
      %v3520 = vsel %vm944, %v3478, 0
      %v3523 = vsel %vm944, %v3480, 0
      %v3526 = vsel %vm944, %v3482, 0
      %v3529 = vsel %vm944, %v3484, 0
      %v3532 = vsel %vm944, %v3486, 0
      %v3535 = vsel %vm944, %v3488, 0
      %v3538 = vsel %vm944, %v3490, 0
      %v3541 = vsel %vm944, %v3492, 0
      %v3544 = vsel %vm944, %v3494, 0
      %v3547 = vsel %vm944, %v3496, 0
      %v3550 = vsel %vm944, %v3498, 0
      %v3553 = vsel %vm944, %v3500, 0
      %v3556 = vsel %vm944, %v3502, 0
      %v3559 = vsel %vm944, %v3504, 0
      %v3562 = vsel %vm944, %v3506, 0
      %v3565 = vsel %vm993, %v3514, 0
      %3567 = vmatprep.subr.bf16.mxu0 0
      %3568 = vmatpush1.bf16.msra.mxu0 0
      %3569 = vmatprep.subr.bf16.mxu0 0
      %3570 = vmatpush1.bf16.msra.mxu0 0
      %3571 = vmatprep.subr.bf16.mxu0 0
      %3572 = vmatpush1.bf16.msra.mxu0 0
      %3573 = vmatprep.subr.bf16.mxu0 0
      %3574 = vmatpush1.bf16.msra.mxu0 0
      %3575 = vmatprep.subr.bf16.mxu0 0
      %3576 = vmatpush1.bf16.msra.mxu0 0
      %3577 = vmatprep.subr.bf16.mxu0 0
      %3578 = vmatpush1.bf16.msra.mxu0 0
      %3579 = vmatprep.subr.bf16.mxu0 0
      %3580 = vmatpush1.bf16.msra.mxu0 %v3565
      %3581 = vmatprep.subr.bf16.mxu0 0
      %3582 = vmatpush1.bf16.msra.mxu0 %v3513
      %3583 = vmatprep.subr.bf16.mxu0 0
      %3584 = vmatpush2.bf16.msra.mxu0 0
      %3585 = vmatprep.subr.bf16.mxu0 0
      %3586 = vmatpush2.bf16.msra.mxu0 0
      %3587 = vmatprep.subr.bf16.mxu0 0
      %3588 = vmatpush2.bf16.msra.mxu0 0
      %3589 = vmatprep.subr.bf16.mxu0 0
      %3590 = vmatpush2.bf16.msra.mxu0 0
      %3591 = vmatprep.subr.bf16.mxu0 0
      %3592 = vmatpush2.bf16.msra.mxu0 0
      %3593 = vmatprep.subr.bf16.mxu0 0
      %3594 = vmatpush2.bf16.msra.mxu0 0
      %3595 = vmatprep.subr.bf16.mxu0 0
      %3596 = vmatpush2.bf16.msra.mxu0 0
      %3597 = vmatprep.subr.bf16.mxu0 0
      %3598 = vmatpush2.bf16.msra.mxu0 0
      %3599 = vmatprep.mubr.bf16.mxu0 0
      %3600 = vmatmul.mubr.bf16.gmra.mxu0 %v3517
      %v3601 = vpop.f32.mrf.mxu0
      %v3602 = vadd.f32 0.0, %v3601
      %v3603 = vpop.f32.mrf.mxu0
      %v3604 = vpop.f32.mrf.mxu0
      %v3605 = vadd.f32 0.0, %v3604
      %v3606 = vpop.f32.mrf.mxu0
      %3607 = vmatprep.mubr.bf16.mxu0 0
      %3608 = vmatmul.mubr.bf16.gmra.mxu0 %v3520
      %v3609 = vpop.f32.mrf.mxu0
      %v3610 = vadd.f32 0.0, %v3609
      %v3611 = vpop.f32.mrf.mxu0
      %v3612 = vpop.f32.mrf.mxu0
      %v3613 = vadd.f32 0.0, %v3612
      %v3614 = vpop.f32.mrf.mxu0
      %3615 = vmatprep.mubr.bf16.mxu0 0
      %3616 = vmatmul.mubr.bf16.gmra.mxu0 %v3523
      %v3617 = vpop.f32.mrf.mxu0
      %v3618 = vadd.f32 0.0, %v3617
      %v3619 = vpop.f32.mrf.mxu0
      %v3620 = vpop.f32.mrf.mxu0
      %v3621 = vadd.f32 0.0, %v3620
      %v3622 = vpop.f32.mrf.mxu0
      %3623 = vmatprep.mubr.bf16.mxu0 0
      %3624 = vmatmul.mubr.bf16.gmra.mxu0 %v3526
      %v3625 = vpop.f32.mrf.mxu0
      %v3626 = vadd.f32 0.0, %v3625
      %v3627 = vpop.f32.mrf.mxu0
      %v3628 = vpop.f32.mrf.mxu0
      %v3629 = vadd.f32 0.0, %v3628
      %v3630 = vpop.f32.mrf.mxu0
      %3631 = vmatprep.mubr.bf16.mxu0 0
      %3632 = vmatmul.mubr.bf16.gmra.mxu0 %v3529
      %v3633 = vpop.f32.mrf.mxu0
      %v3634 = vadd.f32 0.0, %v3633
      %v3635 = vpop.f32.mrf.mxu0
      %v3636 = vpop.f32.mrf.mxu0
      %v3637 = vadd.f32 0.0, %v3636
      %v3638 = vpop.f32.mrf.mxu0
      %3639 = vmatprep.mubr.bf16.mxu0 0
      %3640 = vmatmul.mubr.bf16.gmra.mxu0 %v3532
      %v3641 = vpop.f32.mrf.mxu0
      %v3642 = vadd.f32 0.0, %v3641
      %v3643 = vpop.f32.mrf.mxu0
      %v3644 = vpop.f32.mrf.mxu0
      %v3645 = vadd.f32 0.0, %v3644
      %v3646 = vpop.f32.mrf.mxu0
      %3647 = vmatprep.mubr.bf16.mxu0 0
      %3648 = vmatmul.mubr.bf16.gmra.mxu0 %v3535
      %v3649 = vpop.f32.mrf.mxu0
      %v3650 = vadd.f32 0.0, %v3649
      %v3651 = vpop.f32.mrf.mxu0
      %v3652 = vpop.f32.mrf.mxu0
      %v3653 = vadd.f32 0.0, %v3652
      %v3654 = vpop.f32.mrf.mxu0
      %3655 = vmatprep.mubr.bf16.mxu0 0
      %3656 = vmatmul.mubr.bf16.gmra.mxu0 %v3538
      %v3657 = vpop.f32.mrf.mxu0
      %v3658 = vadd.f32 0.0, %v3657
      %v3659 = vpop.f32.mrf.mxu0
      %v3660 = vpop.f32.mrf.mxu0
      %v3661 = vadd.f32 0.0, %v3660
      %v3662 = vpop.f32.mrf.mxu0
      %3663 = vmatprep.mubr.bf16.mxu0 0
      %3664 = vmatmul.mubr.bf16.gmra.mxu0 %v3541
      %v3665 = vpop.f32.mrf.mxu0
      %v3666 = vadd.f32 0.0, %v3665
      %v3667 = vpop.f32.mrf.mxu0
      %v3668 = vpop.f32.mrf.mxu0
      %v3669 = vadd.f32 0.0, %v3668
      %v3670 = vpop.f32.mrf.mxu0
      %3671 = vmatprep.mubr.bf16.mxu0 0
      %3672 = vmatmul.mubr.bf16.gmra.mxu0 %v3544
      %v3673 = vpop.f32.mrf.mxu0
      %v3674 = vadd.f32 0.0, %v3673
      %v3675 = vpop.f32.mrf.mxu0
      %v3676 = vpop.f32.mrf.mxu0
      %v3677 = vadd.f32 0.0, %v3676
      %v3678 = vpop.f32.mrf.mxu0
      %3679 = vmatprep.mubr.bf16.mxu0 0
      %3680 = vmatmul.mubr.bf16.gmra.mxu0 %v3547
      %v3681 = vpop.f32.mrf.mxu0
      %v3682 = vadd.f32 0.0, %v3681
      %v3683 = vpop.f32.mrf.mxu0
      %v3684 = vpop.f32.mrf.mxu0
      %v3685 = vadd.f32 0.0, %v3684
      %v3686 = vpop.f32.mrf.mxu0
      %3687 = vmatprep.mubr.bf16.mxu0 0
      %3688 = vmatmul.mubr.bf16.gmra.mxu0 %v3550
      %v3689 = vpop.f32.mrf.mxu0
      %v3690 = vadd.f32 0.0, %v3689
      %v3691 = vpop.f32.mrf.mxu0
      %v3692 = vpop.f32.mrf.mxu0
      %v3693 = vadd.f32 0.0, %v3692
      %v3694 = vpop.f32.mrf.mxu0
      %3695 = vmatprep.mubr.bf16.mxu0 0
      %3696 = vmatmul.mubr.bf16.gmra.mxu0 %v3553
      %v3697 = vpop.f32.mrf.mxu0
      %v3698 = vadd.f32 0.0, %v3697
      %v3699 = vpop.f32.mrf.mxu0
      %v3700 = vpop.f32.mrf.mxu0
      %v3701 = vadd.f32 0.0, %v3700
      %v3702 = vpop.f32.mrf.mxu0
      %3703 = vmatprep.mubr.bf16.mxu0 0
      %3704 = vmatmul.mubr.bf16.gmra.mxu0 %v3556
      %v3705 = vpop.f32.mrf.mxu0
      %v3706 = vadd.f32 0.0, %v3705
      %v3707 = vpop.f32.mrf.mxu0
      %v3708 = vpop.f32.mrf.mxu0
      %v3709 = vadd.f32 0.0, %v3708
      %v3710 = vpop.f32.mrf.mxu0
      %3711 = vmatprep.mubr.bf16.mxu0 0
      %3712 = vmatmul.mubr.bf16.gmra.mxu0 %v3559
      %v3713 = vpop.f32.mrf.mxu0
      %v3714 = vadd.f32 0.0, %v3713
      %v3715 = vpop.f32.mrf.mxu0
      %v3716 = vpop.f32.mrf.mxu0
      %v3717 = vadd.f32 0.0, %v3716
      %v3718 = vpop.f32.mrf.mxu0
      %3719 = vmatprep.mubr.bf16.mxu0 0
      %3720 = vmatmul.mubr.bf16.gmra.mxu0 %v3562
      %v3721 = vpop.f32.mrf.mxu0
      %v3722 = vadd.f32 0.0, %v3721
      %v3723 = vpop.f32.mrf.mxu0
      %v3724 = vpop.f32.mrf.mxu0
      %v3725 = vadd.f32 0.0, %v3724
      %v3726 = vpop.f32.mrf.mxu0
      %3727 = vdwg.mxu0
      %v3728 = vadd.f32 %v3321, %v3602
      %v3729 = vadd.f32 %v3322, %v3605
      %v3730 = vadd.f32 %v3323, %v3610
      %v3731 = vadd.f32 %v3324, %v3613
      %v3732 = vadd.f32 %v3325, %v3618
      %v3733 = vadd.f32 %v3326, %v3621
      %v3734 = vadd.f32 %v3327, %v3626
      %v3735 = vadd.f32 %v3328, %v3629
      %v3736 = vadd.f32 %v3329, %v3634
      %v3737 = vadd.f32 %v3330, %v3637
      %v3738 = vadd.f32 %v3331, %v3642
      %v3739 = vadd.f32 %v3332, %v3645
      %v3740 = vadd.f32 %v3333, %v3650
      %v3741 = vadd.f32 %v3334, %v3653
      %v3742 = vadd.f32 %v3335, %v3658
      %v3743 = vadd.f32 %v3336, %v3661
      %v3744 = vadd.f32 %v3337, %v3666
      %v3745 = vadd.f32 %v3338, %v3669
      %v3746 = vadd.f32 %v3339, %v3674
      %v3747 = vadd.f32 %v3340, %v3677
      %v3748 = vadd.f32 %v3341, %v3682
      %v3749 = vadd.f32 %v3342, %v3685
      %v3750 = vadd.f32 %v3343, %v3690
      %v3751 = vadd.f32 %v3344, %v3693
      %v3752 = vadd.f32 %v3345, %v3698
      %v3753 = vadd.f32 %v3346, %v3701
      %v3754 = vadd.f32 %v3347, %v3706
      %v3755 = vadd.f32 %v3348, %v3709
      %v3756 = vadd.f32 %v3349, %v3714
      %v3757 = vadd.f32 %v3350, %v3717
      %v3758 = vadd.f32 %v3351, %v3722
      %v3759 = vadd.f32 %v3352, %v3725
      %v3760 = vld [vmem:[%s192 + $0x10] sm:$0xf]
      %v3761 = vld [vmem:[%s192 + $0x14] sm:$0xf]
      %v3762 = vld [vmem:[%s192 + $0x18] sm:$0xf]
      %v3763 = vld [vmem:[%s192 + $0x1c] sm:$0xf]
      %v3764 = vld [vmem:[%s192 + $0x20] sm:$0xf]
      %v3765 = vld [vmem:[%s192 + $0x24] sm:$0xf]
      %v3766 = vld [vmem:[%s192 + $0x28] sm:$0xf]
      %v3767 = vld [vmem:[%s192 + $0x2c] sm:$0xf]
      %v3768 = vld [vmem:[%s192 + $0x30] sm:$0xf]
      %v3769 = vld [vmem:[%s192 + $0x34] sm:$0xf]
      %v3770 = vld [vmem:[%s192 + $0x38] sm:$0xf]
      %v3771 = vld [vmem:[%s192 + $0x3c] sm:$0xf]
      %v3772 = vld [vmem:[%s192 + $0x40] sm:$0xf]
      %v3773 = vld [vmem:[%s192 + $0x44] sm:$0xf]
      %v3774 = vld [vmem:[%s192 + $0x48] sm:$0xf]
      %v3775 = vld [vmem:[%s192 + $0x4c] sm:$0xf]
      %v3776 = vld [vmem:[%s192 + $0x50] sm:$0xf]
      %v3777 = vld [vmem:[%s192 + $0x54] sm:$0xf]
      %v3778 = vld [vmem:[%s192 + $0x58] sm:$0xf]
      %v3779 = vld [vmem:[%s192 + $0x5c] sm:$0xf]
      %v3780 = vld [vmem:[%s192 + $0x60] sm:$0xf]
      %v3781 = vld [vmem:[%s192 + $0x64] sm:$0xf]
      %v3782 = vld [vmem:[%s192 + $0x68] sm:$0xf]
      %v3783 = vld [vmem:[%s192 + $0x6c] sm:$0xf]
      %v3784 = vld [vmem:[%s192 + $0x70] sm:$0xf]
      %v3785 = vld [vmem:[%s192 + $0x74] sm:$0xf]
      %v3786 = vld [vmem:[%s192 + $0x78] sm:$0xf]
      %v3787 = vld [vmem:[%s192 + $0x7c] sm:$0xf]
      %v3788 = vld [vmem:[%s192 + $0x80] sm:$0xf]
      %v3789 = vld [vmem:[%s192 + $0x84] sm:$0xf]
      %v3790 = vld [vmem:[%s192 + $0x88] sm:$0xf]
      %v3791 = vld [vmem:[%s192 + $0x8c] sm:$0xf]
      %v3792 = vmul.bf16 %v3760, %v274
      %v3793 = vmul.bf16 %v3761, %v286
      %v3794 = vmul.bf16 %v3762, %v298
      %v3795 = vmul.bf16 %v3763, %v310
      %v3796 = vmul.bf16 %v3764, %v322
      %v3797 = vmul.bf16 %v3765, %v334
      %v3798 = vmul.bf16 %v3766, %v346
      %v3799 = vmul.bf16 %v3767, %v358
      %v3800 = vmul.bf16 %v3768, %v370
      %v3801 = vmul.bf16 %v3769, %v382
      %v3802 = vmul.bf16 %v3770, %v394
      %v3803 = vmul.bf16 %v3771, %v406
      %v3804 = vmul.bf16 %v3772, %v418
      %v3805 = vmul.bf16 %v3773, %v430
      %v3806 = vmul.bf16 %v3774, %v442
      %v3807 = vmul.bf16 %v3775, %v454
      %v3808 = vmul.bf16 %v3776, %v466
      %v3809 = vmul.bf16 %v3777, %v478
      %v3810 = vmul.bf16 %v3778, %v490
      %v3811 = vmul.bf16 %v3779, %v502
      %v3812 = vmul.bf16 %v3780, %v514
      %v3813 = vmul.bf16 %v3781, %v526
      %v3814 = vmul.bf16 %v3782, %v538
      %v3815 = vmul.bf16 %v3783, %v550
      %v3816 = vmul.bf16 %v3784, %v562
      %v3817 = vmul.bf16 %v3785, %v574
      %v3818 = vmul.bf16 %v3786, %v586
      %v3819 = vmul.bf16 %v3787, %v598
      %v3820 = vmul.bf16 %v3788, %v610
      %v3821 = vmul.bf16 %v3789, %v622
      %v3822 = vmul.bf16 %v3790, %v634
      %v3823 = vmul.bf16 %v3791, %v646
      %s3824 = scalar_lea.vmem %s1, 72
      %v3825 = vld [vmem:[%s3824] sm:$0xf]
      %v3826 = vld [vmem:[%s3824 + $0x4] sm:$0xf]
      %v3827 = vld [vmem:[%s3824 + $0x8] sm:$0xf]
      %v3860 = vunpack.c.l.b16 %v3792
      %v3861 = vunpack.c.l.b16 %v3793
      %v3862 = vunpack.c.l.b16 %v3794
      %v3863 = vunpack.c.l.b16 %v3795
      %v3864 = vunpack.c.l.b16 %v3796
      %v3865 = vunpack.c.l.b16 %v3797
      %v3866 = vunpack.c.l.b16 %v3798
      %v3867 = vunpack.c.l.b16 %v3799
      %v3868 = vunpack.c.l.b16 %v3800
      %v3869 = vunpack.c.l.b16 %v3801
      %v3870 = vunpack.c.l.b16 %v3802
      %v3871 = vunpack.c.l.b16 %v3803
      %v3872 = vunpack.c.l.b16 %v3804
      %v3873 = vunpack.c.l.b16 %v3805
      %v3874 = vunpack.c.l.b16 %v3806
      %v3875 = vunpack.c.l.b16 %v3807
      %v3876 = vunpack.c.l.b16 %v3808
      %v3877 = vunpack.c.l.b16 %v3809
      %v3878 = vunpack.c.l.b16 %v3810
      %v3879 = vunpack.c.l.b16 %v3811
      %v3880 = vunpack.c.l.b16 %v3812
      %v3881 = vunpack.c.l.b16 %v3813
      %v3882 = vunpack.c.l.b16 %v3814
      %v3883 = vunpack.c.l.b16 %v3815
      %v3884 = vunpack.c.l.b16 %v3816
      %v3885 = vunpack.c.l.b16 %v3817
      %v3886 = vunpack.c.l.b16 %v3818
      %v3887 = vunpack.c.l.b16 %v3819
      %v3888 = vunpack.c.l.b16 %v3820
      %v3889 = vunpack.c.l.b16 %v3821
      %v3890 = vunpack.c.l.b16 %v3822
      %v3891 = vunpack.c.l.b16 %v3823
      %v3892 = vpack.c.b16 %v3861, %v3860
      %v3893 = vpack.c.b16 %v3863, %v3862
      %v3894 = vpack.c.b16 %v3865, %v3864
      %v3895 = vpack.c.b16 %v3867, %v3866
      %v3896 = vpack.c.b16 %v3869, %v3868
      %v3897 = vpack.c.b16 %v3871, %v3870
      %v3898 = vpack.c.b16 %v3873, %v3872
      %v3899 = vpack.c.b16 %v3875, %v3874
      %v3900 = vpack.c.b16 %v3877, %v3876
      %v3901 = vpack.c.b16 %v3879, %v3878
      %v3902 = vpack.c.b16 %v3881, %v3880
      %v3903 = vpack.c.b16 %v3883, %v3882
      %v3904 = vpack.c.b16 %v3885, %v3884
      %v3905 = vpack.c.b16 %v3887, %v3886
      %v3906 = vpack.c.b16 %v3889, %v3888
      %v3907 = vpack.c.b16 %v3891, %v3890
      %v3911 = vunpack.c.l.b16 %v3825
      %v3912 = vunpack.c.l.b16 %v3826
      %v3913 = vunpack.c.l.b16 %v3827
      %v3914 = vpack.c.b16 %v3912, %v3911
      %v3915 = vpack.c.b16 %v3913, %v3913
      %v3918 = vsel %vm944, %v3892, 0
      %v3921 = vsel %vm944, %v3893, 0
      %v3924 = vsel %vm944, %v3894, 0
      %v3927 = vsel %vm944, %v3895, 0
      %v3930 = vsel %vm944, %v3896, 0
      %v3933 = vsel %vm944, %v3897, 0
      %v3936 = vsel %vm944, %v3898, 0
      %v3939 = vsel %vm944, %v3899, 0
      %v3942 = vsel %vm944, %v3900, 0
      %v3945 = vsel %vm944, %v3901, 0
      %v3948 = vsel %vm944, %v3902, 0
      %v3951 = vsel %vm944, %v3903, 0
      %v3954 = vsel %vm944, %v3904, 0
      %v3957 = vsel %vm944, %v3905, 0
      %v3960 = vsel %vm944, %v3906, 0
      %v3963 = vsel %vm944, %v3907, 0
      %v3966 = vsel %vm993, %v3915, 0
      %3968 = vmatprep.subr.bf16.mxu0 0
      %3969 = vmatpush1.bf16.msra.mxu0 0
      %3970 = vmatprep.subr.bf16.mxu0 0
      %3971 = vmatpush1.bf16.msra.mxu0 0
      %3972 = vmatprep.subr.bf16.mxu0 0
      %3973 = vmatpush1.bf16.msra.mxu0 0
      %3974 = vmatprep.subr.bf16.mxu0 0
      %3975 = vmatpush1.bf16.msra.mxu0 0
      %3976 = vmatprep.subr.bf16.mxu0 0
      %3977 = vmatpush1.bf16.msra.mxu0 0
      %3978 = vmatprep.subr.bf16.mxu0 0
      %3979 = vmatpush1.bf16.msra.mxu0 0
      %3980 = vmatprep.subr.bf16.mxu0 0
      %3981 = vmatpush1.bf16.msra.mxu0 %v3966
      %3982 = vmatprep.subr.bf16.mxu0 0
      %3983 = vmatpush1.bf16.msra.mxu0 %v3914
      %3984 = vmatprep.subr.bf16.mxu0 0
      %3985 = vmatpush2.bf16.msra.mxu0 0
      %3986 = vmatprep.subr.bf16.mxu0 0
      %3987 = vmatpush2.bf16.msra.mxu0 0
      %3988 = vmatprep.subr.bf16.mxu0 0
      %3989 = vmatpush2.bf16.msra.mxu0 0
      %3990 = vmatprep.subr.bf16.mxu0 0
      %3991 = vmatpush2.bf16.msra.mxu0 0
      %3992 = vmatprep.subr.bf16.mxu0 0
      %3993 = vmatpush2.bf16.msra.mxu0 0
      %3994 = vmatprep.subr.bf16.mxu0 0
      %3995 = vmatpush2.bf16.msra.mxu0 0
      %3996 = vmatprep.subr.bf16.mxu0 0
      %3997 = vmatpush2.bf16.msra.mxu0 0
      %3998 = vmatprep.subr.bf16.mxu0 0
      %3999 = vmatpush2.bf16.msra.mxu0 0
      %4000 = vmatprep.mubr.bf16.mxu0 0
      %4001 = vmatmul.mubr.bf16.gmra.mxu0 %v3918
      %v4002 = vpop.f32.mrf.mxu0
      %v4003 = vadd.f32 0.0, %v4002
      %v4004 = vpop.f32.mrf.mxu0
      %v4005 = vpop.f32.mrf.mxu0
      %v4006 = vadd.f32 0.0, %v4005
      %v4007 = vpop.f32.mrf.mxu0
      %4008 = vmatprep.mubr.bf16.mxu0 0
      %4009 = vmatmul.mubr.bf16.gmra.mxu0 %v3921
      %v4010 = vpop.f32.mrf.mxu0
      %v4011 = vadd.f32 0.0, %v4010
      %v4012 = vpop.f32.mrf.mxu0
      %v4013 = vpop.f32.mrf.mxu0
      %v4014 = vadd.f32 0.0, %v4013
      %v4015 = vpop.f32.mrf.mxu0
      %4016 = vmatprep.mubr.bf16.mxu0 0
      %4017 = vmatmul.mubr.bf16.gmra.mxu0 %v3924
      %v4018 = vpop.f32.mrf.mxu0
      %v4019 = vadd.f32 0.0, %v4018
      %v4020 = vpop.f32.mrf.mxu0
      %v4021 = vpop.f32.mrf.mxu0
      %v4022 = vadd.f32 0.0, %v4021
      %v4023 = vpop.f32.mrf.mxu0
      %4024 = vmatprep.mubr.bf16.mxu0 0
      %4025 = vmatmul.mubr.bf16.gmra.mxu0 %v3927
      %v4026 = vpop.f32.mrf.mxu0
      %v4027 = vadd.f32 0.0, %v4026
      %v4028 = vpop.f32.mrf.mxu0
      %v4029 = vpop.f32.mrf.mxu0
      %v4030 = vadd.f32 0.0, %v4029
      %v4031 = vpop.f32.mrf.mxu0
      %4032 = vmatprep.mubr.bf16.mxu0 0
      %4033 = vmatmul.mubr.bf16.gmra.mxu0 %v3930
      %v4034 = vpop.f32.mrf.mxu0
      %v4035 = vadd.f32 0.0, %v4034
      %v4036 = vpop.f32.mrf.mxu0
      %v4037 = vpop.f32.mrf.mxu0
      %v4038 = vadd.f32 0.0, %v4037
      %v4039 = vpop.f32.mrf.mxu0
      %4040 = vmatprep.mubr.bf16.mxu0 0
      %4041 = vmatmul.mubr.bf16.gmra.mxu0 %v3933
      %v4042 = vpop.f32.mrf.mxu0
      %v4043 = vadd.f32 0.0, %v4042
      %v4044 = vpop.f32.mrf.mxu0
      %v4045 = vpop.f32.mrf.mxu0
      %v4046 = vadd.f32 0.0, %v4045
      %v4047 = vpop.f32.mrf.mxu0
      %4048 = vmatprep.mubr.bf16.mxu0 0
      %4049 = vmatmul.mubr.bf16.gmra.mxu0 %v3936
      %v4050 = vpop.f32.mrf.mxu0
      %v4051 = vadd.f32 0.0, %v4050
      %v4052 = vpop.f32.mrf.mxu0
      %v4053 = vpop.f32.mrf.mxu0
      %v4054 = vadd.f32 0.0, %v4053
      %v4055 = vpop.f32.mrf.mxu0
      %4056 = vmatprep.mubr.bf16.mxu0 0
      %4057 = vmatmul.mubr.bf16.gmra.mxu0 %v3939
      %v4058 = vpop.f32.mrf.mxu0
      %v4059 = vadd.f32 0.0, %v4058
      %v4060 = vpop.f32.mrf.mxu0
      %v4061 = vpop.f32.mrf.mxu0
      %v4062 = vadd.f32 0.0, %v4061
      %v4063 = vpop.f32.mrf.mxu0
      %4064 = vmatprep.mubr.bf16.mxu0 0
      %4065 = vmatmul.mubr.bf16.gmra.mxu0 %v3942
      %v4066 = vpop.f32.mrf.mxu0
      %v4067 = vadd.f32 0.0, %v4066
      %v4068 = vpop.f32.mrf.mxu0
      %v4069 = vpop.f32.mrf.mxu0
      %v4070 = vadd.f32 0.0, %v4069
      %v4071 = vpop.f32.mrf.mxu0
      %4072 = vmatprep.mubr.bf16.mxu0 0
      %4073 = vmatmul.mubr.bf16.gmra.mxu0 %v3945
      %v4074 = vpop.f32.mrf.mxu0
      %v4075 = vadd.f32 0.0, %v4074
      %v4076 = vpop.f32.mrf.mxu0
      %v4077 = vpop.f32.mrf.mxu0
      %v4078 = vadd.f32 0.0, %v4077
      %v4079 = vpop.f32.mrf.mxu0
      %4080 = vmatprep.mubr.bf16.mxu0 0
      %4081 = vmatmul.mubr.bf16.gmra.mxu0 %v3948
      %v4082 = vpop.f32.mrf.mxu0
      %v4083 = vadd.f32 0.0, %v4082
      %v4084 = vpop.f32.mrf.mxu0
      %v4085 = vpop.f32.mrf.mxu0
      %v4086 = vadd.f32 0.0, %v4085
      %v4087 = vpop.f32.mrf.mxu0
      %4088 = vmatprep.mubr.bf16.mxu0 0
      %4089 = vmatmul.mubr.bf16.gmra.mxu0 %v3951
      %v4090 = vpop.f32.mrf.mxu0
      %v4091 = vadd.f32 0.0, %v4090
      %v4092 = vpop.f32.mrf.mxu0
      %v4093 = vpop.f32.mrf.mxu0
      %v4094 = vadd.f32 0.0, %v4093
      %v4095 = vpop.f32.mrf.mxu0
      %4096 = vmatprep.mubr.bf16.mxu0 0
      %4097 = vmatmul.mubr.bf16.gmra.mxu0 %v3954
      %v4098 = vpop.f32.mrf.mxu0
      %v4099 = vadd.f32 0.0, %v4098
      %v4100 = vpop.f32.mrf.mxu0
      %v4101 = vpop.f32.mrf.mxu0
      %v4102 = vadd.f32 0.0, %v4101
      %v4103 = vpop.f32.mrf.mxu0
      %4104 = vmatprep.mubr.bf16.mxu0 0
      %4105 = vmatmul.mubr.bf16.gmra.mxu0 %v3957
      %v4106 = vpop.f32.mrf.mxu0
      %v4107 = vadd.f32 0.0, %v4106
      %v4108 = vpop.f32.mrf.mxu0
      %v4109 = vpop.f32.mrf.mxu0
      %v4110 = vadd.f32 0.0, %v4109
      %v4111 = vpop.f32.mrf.mxu0
      %4112 = vmatprep.mubr.bf16.mxu0 0
      %4113 = vmatmul.mubr.bf16.gmra.mxu0 %v3960
      %v4114 = vpop.f32.mrf.mxu0
      %v4115 = vadd.f32 0.0, %v4114
      %v4116 = vpop.f32.mrf.mxu0
      %v4117 = vpop.f32.mrf.mxu0
      %v4118 = vadd.f32 0.0, %v4117
      %v4119 = vpop.f32.mrf.mxu0
      %4120 = vmatprep.mubr.bf16.mxu0 0
      %4121 = vmatmul.mubr.bf16.gmra.mxu0 %v3963
      %v4122 = vpop.f32.mrf.mxu0
      %v4123 = vadd.f32 0.0, %v4122
      %v4124 = vpop.f32.mrf.mxu0
      %v4125 = vpop.f32.mrf.mxu0
      %v4126 = vadd.f32 0.0, %v4125
      %v4127 = vpop.f32.mrf.mxu0
      %4128 = vdwg.mxu0
      %v4129 = vadd.f32 %v3728, %v4003
      %v4130 = vadd.f32 %v3729, %v4006
      %v4131 = vadd.f32 %v3730, %v4011
      %v4132 = vadd.f32 %v3731, %v4014
      %v4133 = vadd.f32 %v3732, %v4019
      %v4134 = vadd.f32 %v3733, %v4022
      %v4135 = vadd.f32 %v3734, %v4027
      %v4136 = vadd.f32 %v3735, %v4030
      %v4137 = vadd.f32 %v3736, %v4035
      %v4138 = vadd.f32 %v3737, %v4038
      %v4139 = vadd.f32 %v3738, %v4043
      %v4140 = vadd.f32 %v3739, %v4046
      %v4141 = vadd.f32 %v3740, %v4051
      %v4142 = vadd.f32 %v3741, %v4054
      %v4143 = vadd.f32 %v3742, %v4059
      %v4144 = vadd.f32 %v3743, %v4062
      %v4145 = vadd.f32 %v3744, %v4067
      %v4146 = vadd.f32 %v3745, %v4070
      %v4147 = vadd.f32 %v3746, %v4075
      %v4148 = vadd.f32 %v3747, %v4078
      %v4149 = vadd.f32 %v3748, %v4083
      %v4150 = vadd.f32 %v3749, %v4086
      %v4151 = vadd.f32 %v3750, %v4091
      %v4152 = vadd.f32 %v3751, %v4094
      %v4153 = vadd.f32 %v3752, %v4099
      %v4154 = vadd.f32 %v3753, %v4102
      %v4155 = vadd.f32 %v3754, %v4107
      %v4156 = vadd.f32 %v3755, %v4110
      %v4157 = vadd.f32 %v3756, %v4115
      %v4158 = vadd.f32 %v3757, %v4118
      %v4159 = vadd.f32 %v3758, %v4123
      %v4160 = vadd.f32 %v3759, %v4126
      %v4161 = vld [vmem:[%s192 + $0x10] sm:$0xf]
      %v4162 = vld [vmem:[%s192 + $0x14] sm:$0xf]
      %v4163 = vld [vmem:[%s192 + $0x18] sm:$0xf]
      %v4164 = vld [vmem:[%s192 + $0x1c] sm:$0xf]
      %v4165 = vld [vmem:[%s192 + $0x20] sm:$0xf]
      %v4166 = vld [vmem:[%s192 + $0x24] sm:$0xf]
      %v4167 = vld [vmem:[%s192 + $0x28] sm:$0xf]
      %v4168 = vld [vmem:[%s192 + $0x2c] sm:$0xf]
      %v4169 = vld [vmem:[%s192 + $0x30] sm:$0xf]
      %v4170 = vld [vmem:[%s192 + $0x34] sm:$0xf]
      %v4171 = vld [vmem:[%s192 + $0x38] sm:$0xf]
      %v4172 = vld [vmem:[%s192 + $0x3c] sm:$0xf]
      %v4173 = vld [vmem:[%s192 + $0x40] sm:$0xf]
      %v4174 = vld [vmem:[%s192 + $0x44] sm:$0xf]
      %v4175 = vld [vmem:[%s192 + $0x48] sm:$0xf]
      %v4176 = vld [vmem:[%s192 + $0x4c] sm:$0xf]
      %v4177 = vld [vmem:[%s192 + $0x50] sm:$0xf]
      %v4178 = vld [vmem:[%s192 + $0x54] sm:$0xf]
      %v4179 = vld [vmem:[%s192 + $0x58] sm:$0xf]
      %v4180 = vld [vmem:[%s192 + $0x5c] sm:$0xf]
      %v4181 = vld [vmem:[%s192 + $0x60] sm:$0xf]
      %v4182 = vld [vmem:[%s192 + $0x64] sm:$0xf]
      %v4183 = vld [vmem:[%s192 + $0x68] sm:$0xf]
      %v4184 = vld [vmem:[%s192 + $0x6c] sm:$0xf]
      %v4185 = vld [vmem:[%s192 + $0x70] sm:$0xf]
      %v4186 = vld [vmem:[%s192 + $0x74] sm:$0xf]
      %v4187 = vld [vmem:[%s192 + $0x78] sm:$0xf]
      %v4188 = vld [vmem:[%s192 + $0x7c] sm:$0xf]
      %v4189 = vld [vmem:[%s192 + $0x80] sm:$0xf]
      %v4190 = vld [vmem:[%s192 + $0x84] sm:$0xf]
      %v4191 = vld [vmem:[%s192 + $0x88] sm:$0xf]
      %v4192 = vld [vmem:[%s192 + $0x8c] sm:$0xf]
      %v4193 = vld [vmem:[%s192 + $0x90] sm:$0x1]
      %s4194 = scalar_lea.vmem %s1, 84
      %v4195 = vld [vmem:[%s4194] sm:$0xf]
      %v4196 = vld [vmem:[%s4194 + $0x4] sm:$0xf]
      %v4197 = vld [vmem:[%s4194 + $0x8] sm:$0xf]
      %v4231 = vunpack.c.l.b16 %v4161
      %v4232 = vunpack.c.l.b16 %v4162
      %v4233 = vunpack.c.l.b16 %v4163
      %v4234 = vunpack.c.l.b16 %v4164
      %v4235 = vunpack.c.l.b16 %v4165
      %v4236 = vunpack.c.l.b16 %v4166
      %v4237 = vunpack.c.l.b16 %v4167
      %v4238 = vunpack.c.l.b16 %v4168
      %v4239 = vunpack.c.l.b16 %v4169
      %v4240 = vunpack.c.l.b16 %v4170
      %v4241 = vunpack.c.l.b16 %v4171
      %v4242 = vunpack.c.l.b16 %v4172
      %v4243 = vunpack.c.l.b16 %v4173
      %v4244 = vunpack.c.l.b16 %v4174
      %v4245 = vunpack.c.l.b16 %v4175
      %v4246 = vunpack.c.l.b16 %v4176
      %v4247 = vunpack.c.l.b16 %v4177
      %v4248 = vunpack.c.l.b16 %v4178
      %v4249 = vunpack.c.l.b16 %v4179
      %v4250 = vunpack.c.l.b16 %v4180
      %v4251 = vunpack.c.l.b16 %v4181
      %v4252 = vunpack.c.l.b16 %v4182
      %v4253 = vunpack.c.l.b16 %v4183
      %v4254 = vunpack.c.l.b16 %v4184
      %v4255 = vunpack.c.l.b16 %v4185
      %v4256 = vunpack.c.l.b16 %v4186
      %v4257 = vunpack.c.l.b16 %v4187
      %v4258 = vunpack.c.l.b16 %v4188
      %v4259 = vunpack.c.l.b16 %v4189
      %v4260 = vunpack.c.l.b16 %v4190
      %v4261 = vunpack.c.l.b16 %v4191
      %v4262 = vunpack.c.l.b16 %v4192
      %v4263 = vunpack.c.l.b16 %v4193
      %v4264 = vpack.c.b16 %v4232, %v4231
      %v4265 = vpack.c.b16 %v4234, %v4233
      %v4266 = vpack.c.b16 %v4236, %v4235
      %v4267 = vpack.c.b16 %v4238, %v4237
      %v4268 = vpack.c.b16 %v4240, %v4239
      %v4269 = vpack.c.b16 %v4242, %v4241
      %v4270 = vpack.c.b16 %v4244, %v4243
      %v4271 = vpack.c.b16 %v4246, %v4245
      %v4272 = vpack.c.b16 %v4248, %v4247
      %v4273 = vpack.c.b16 %v4250, %v4249
      %v4274 = vpack.c.b16 %v4252, %v4251
      %v4275 = vpack.c.b16 %v4254, %v4253
      %v4276 = vpack.c.b16 %v4256, %v4255
      %v4277 = vpack.c.b16 %v4258, %v4257
      %v4278 = vpack.c.b16 %v4260, %v4259
      %v4279 = vpack.c.b16 %v4262, %v4261
      %v4280 = vpack.c.b16 %v4263, %v4263
      %v4282 = vshrl.u32 %v4264, 16
      %v4284 = vshll.u32 %v4264, 16
      %v4286 = vrot.slane %v4284, 1
      %v4287 = vor.u32 %v4282, %v4286
      %v4289 = vshll.u32 %v4265, 16
      %v4291 = vrot.slane %v4289, 1
      %v4292 = vsel %vm802, %v4287, %v4291
      %v4293 = vshrl.u32 %v4265, 16
      %v4295 = vor.u32 %v4293, %v4291
      %v4297 = vshll.u32 %v4266, 16
      %v4299 = vrot.slane %v4297, 1
      %v4300 = vsel %vm802, %v4295, %v4299
      %v4301 = vshrl.u32 %v4266, 16
      %v4303 = vor.u32 %v4301, %v4299
      %v4305 = vshll.u32 %v4267, 16
      %v4307 = vrot.slane %v4305, 1
      %v4308 = vsel %vm802, %v4303, %v4307
      %v4309 = vshrl.u32 %v4267, 16
      %v4311 = vor.u32 %v4309, %v4307
      %v4313 = vshll.u32 %v4268, 16
      %v4315 = vrot.slane %v4313, 1
      %v4316 = vsel %vm802, %v4311, %v4315
      %v4317 = vshrl.u32 %v4268, 16
      %v4319 = vor.u32 %v4317, %v4315
      %v4321 = vshll.u32 %v4269, 16
      %v4323 = vrot.slane %v4321, 1
      %v4324 = vsel %vm802, %v4319, %v4323
      %v4325 = vshrl.u32 %v4269, 16
      %v4327 = vor.u32 %v4325, %v4323
      %v4329 = vshll.u32 %v4270, 16
      %v4331 = vrot.slane %v4329, 1
      %v4332 = vsel %vm802, %v4327, %v4331
      %v4333 = vshrl.u32 %v4270, 16
      %v4335 = vor.u32 %v4333, %v4331
      %v4337 = vshll.u32 %v4271, 16
      %v4339 = vrot.slane %v4337, 1
      %v4340 = vsel %vm802, %v4335, %v4339
      %v4341 = vshrl.u32 %v4271, 16
      %v4343 = vor.u32 %v4341, %v4339
      %v4345 = vshll.u32 %v4272, 16
      %v4347 = vrot.slane %v4345, 1
      %v4348 = vsel %vm802, %v4343, %v4347
      %v4349 = vshrl.u32 %v4272, 16
      %v4351 = vor.u32 %v4349, %v4347
      %v4353 = vshll.u32 %v4273, 16
      %v4355 = vrot.slane %v4353, 1
      %v4356 = vsel %vm802, %v4351, %v4355
      %v4357 = vshrl.u32 %v4273, 16
      %v4359 = vor.u32 %v4357, %v4355
      %v4361 = vshll.u32 %v4274, 16
      %v4363 = vrot.slane %v4361, 1
      %v4364 = vsel %vm802, %v4359, %v4363
      %v4365 = vshrl.u32 %v4274, 16
      %v4367 = vor.u32 %v4365, %v4363
      %v4369 = vshll.u32 %v4275, 16
      %v4371 = vrot.slane %v4369, 1
      %v4372 = vsel %vm802, %v4367, %v4371
      %v4373 = vshrl.u32 %v4275, 16
      %v4375 = vor.u32 %v4373, %v4371
      %v4377 = vshll.u32 %v4276, 16
      %v4379 = vrot.slane %v4377, 1
      %v4380 = vsel %vm802, %v4375, %v4379
      %v4381 = vshrl.u32 %v4276, 16
      %v4383 = vor.u32 %v4381, %v4379
      %v4385 = vshll.u32 %v4277, 16
      %v4387 = vrot.slane %v4385, 1
      %v4388 = vsel %vm802, %v4383, %v4387
      %v4389 = vshrl.u32 %v4277, 16
      %v4391 = vor.u32 %v4389, %v4387
      %v4393 = vshll.u32 %v4278, 16
      %v4395 = vrot.slane %v4393, 1
      %v4396 = vsel %vm802, %v4391, %v4395
      %v4397 = vshrl.u32 %v4278, 16
      %v4399 = vor.u32 %v4397, %v4395
      %v4401 = vshll.u32 %v4279, 16
      %v4403 = vrot.slane %v4401, 1
      %v4404 = vsel %vm802, %v4399, %v4403
      %v4405 = vshrl.u32 %v4279, 16
      %v4407 = vor.u32 %v4405, %v4403
      %v4409 = vshll.u32 %v4280, 16
      %v4411 = vrot.slane %v4409, 1
      %v4412 = vsel %vm802, %v4407, %v4411
      %v4416 = vunpack.c.l.b16 %v4195
      %v4417 = vunpack.c.l.b16 %v4196
      %v4418 = vunpack.c.l.b16 %v4197
      %v4419 = vpack.c.b16 %v4417, %v4416
      %v4420 = vpack.c.b16 %v4418, %v4418
      %v4423 = vsel %vm944, %v4292, 0
      %v4426 = vsel %vm944, %v4300, 0
      %v4429 = vsel %vm944, %v4308, 0
      %v4432 = vsel %vm944, %v4316, 0
      %v4435 = vsel %vm944, %v4324, 0
      %v4438 = vsel %vm944, %v4332, 0
      %v4441 = vsel %vm944, %v4340, 0
      %v4444 = vsel %vm944, %v4348, 0
      %v4447 = vsel %vm944, %v4356, 0
      %v4450 = vsel %vm944, %v4364, 0
      %v4453 = vsel %vm944, %v4372, 0
      %v4456 = vsel %vm944, %v4380, 0
      %v4459 = vsel %vm944, %v4388, 0
      %v4462 = vsel %vm944, %v4396, 0
      %v4465 = vsel %vm944, %v4404, 0
      %v4468 = vsel %vm944, %v4412, 0
      %v4471 = vsel %vm993, %v4420, 0
      %4473 = vmatprep.subr.bf16.mxu0 0
      %4474 = vmatpush1.bf16.msra.mxu0 0
      %4475 = vmatprep.subr.bf16.mxu0 0
      %4476 = vmatpush1.bf16.msra.mxu0 0
      %4477 = vmatprep.subr.bf16.mxu0 0
      %4478 = vmatpush1.bf16.msra.mxu0 0
      %4479 = vmatprep.subr.bf16.mxu0 0
      %4480 = vmatpush1.bf16.msra.mxu0 0
      %4481 = vmatprep.subr.bf16.mxu0 0
      %4482 = vmatpush1.bf16.msra.mxu0 0
      %4483 = vmatprep.subr.bf16.mxu0 0
      %4484 = vmatpush1.bf16.msra.mxu0 0
      %4485 = vmatprep.subr.bf16.mxu0 0
      %4486 = vmatpush1.bf16.msra.mxu0 %v4471
      %4487 = vmatprep.subr.bf16.mxu0 0
      %4488 = vmatpush1.bf16.msra.mxu0 %v4419
      %4489 = vmatprep.subr.bf16.mxu0 0
      %4490 = vmatpush2.bf16.msra.mxu0 0
      %4491 = vmatprep.subr.bf16.mxu0 0
      %4492 = vmatpush2.bf16.msra.mxu0 0
      %4493 = vmatprep.subr.bf16.mxu0 0
      %4494 = vmatpush2.bf16.msra.mxu0 0
      %4495 = vmatprep.subr.bf16.mxu0 0
      %4496 = vmatpush2.bf16.msra.mxu0 0
      %4497 = vmatprep.subr.bf16.mxu0 0
      %4498 = vmatpush2.bf16.msra.mxu0 0
      %4499 = vmatprep.subr.bf16.mxu0 0
      %4500 = vmatpush2.bf16.msra.mxu0 0
      %4501 = vmatprep.subr.bf16.mxu0 0
      %4502 = vmatpush2.bf16.msra.mxu0 0
      %4503 = vmatprep.subr.bf16.mxu0 0
      %4504 = vmatpush2.bf16.msra.mxu0 0
      %4505 = vmatprep.mubr.bf16.mxu0 0
      %4506 = vmatmul.mubr.bf16.gmra.mxu0 %v4423
      %v4507 = vpop.f32.mrf.mxu0
      %v4508 = vadd.f32 0.0, %v4507
      %v4509 = vpop.f32.mrf.mxu0
      %v4510 = vpop.f32.mrf.mxu0
      %v4511 = vadd.f32 0.0, %v4510
      %v4512 = vpop.f32.mrf.mxu0
      %4513 = vmatprep.mubr.bf16.mxu0 0
      %4514 = vmatmul.mubr.bf16.gmra.mxu0 %v4426
      %v4515 = vpop.f32.mrf.mxu0
      %v4516 = vadd.f32 0.0, %v4515
      %v4517 = vpop.f32.mrf.mxu0
      %v4518 = vpop.f32.mrf.mxu0
      %v4519 = vadd.f32 0.0, %v4518
      %v4520 = vpop.f32.mrf.mxu0
      %4521 = vmatprep.mubr.bf16.mxu0 0
      %4522 = vmatmul.mubr.bf16.gmra.mxu0 %v4429
      %v4523 = vpop.f32.mrf.mxu0
      %v4524 = vadd.f32 0.0, %v4523
      %v4525 = vpop.f32.mrf.mxu0
      %v4526 = vpop.f32.mrf.mxu0
      %v4527 = vadd.f32 0.0, %v4526
      %v4528 = vpop.f32.mrf.mxu0
      %4529 = vmatprep.mubr.bf16.mxu0 0
      %4530 = vmatmul.mubr.bf16.gmra.mxu0 %v4432
      %v4531 = vpop.f32.mrf.mxu0
      %v4532 = vadd.f32 0.0, %v4531
      %v4533 = vpop.f32.mrf.mxu0
      %v4534 = vpop.f32.mrf.mxu0
      %v4535 = vadd.f32 0.0, %v4534
      %v4536 = vpop.f32.mrf.mxu0
      %4537 = vmatprep.mubr.bf16.mxu0 0
      %4538 = vmatmul.mubr.bf16.gmra.mxu0 %v4435
      %v4539 = vpop.f32.mrf.mxu0
      %v4540 = vadd.f32 0.0, %v4539
      %v4541 = vpop.f32.mrf.mxu0
      %v4542 = vpop.f32.mrf.mxu0
      %v4543 = vadd.f32 0.0, %v4542
      %v4544 = vpop.f32.mrf.mxu0
      %4545 = vmatprep.mubr.bf16.mxu0 0
      %4546 = vmatmul.mubr.bf16.gmra.mxu0 %v4438
      %v4547 = vpop.f32.mrf.mxu0
      %v4548 = vadd.f32 0.0, %v4547
      %v4549 = vpop.f32.mrf.mxu0
      %v4550 = vpop.f32.mrf.mxu0
      %v4551 = vadd.f32 0.0, %v4550
      %v4552 = vpop.f32.mrf.mxu0
      %4553 = vmatprep.mubr.bf16.mxu0 0
      %4554 = vmatmul.mubr.bf16.gmra.mxu0 %v4441
      %v4555 = vpop.f32.mrf.mxu0
      %v4556 = vadd.f32 0.0, %v4555
      %v4557 = vpop.f32.mrf.mxu0
      %v4558 = vpop.f32.mrf.mxu0
      %v4559 = vadd.f32 0.0, %v4558
      %v4560 = vpop.f32.mrf.mxu0
      %4561 = vmatprep.mubr.bf16.mxu0 0
      %4562 = vmatmul.mubr.bf16.gmra.mxu0 %v4444
      %v4563 = vpop.f32.mrf.mxu0
      %v4564 = vadd.f32 0.0, %v4563
      %v4565 = vpop.f32.mrf.mxu0
      %v4566 = vpop.f32.mrf.mxu0
      %v4567 = vadd.f32 0.0, %v4566
      %v4568 = vpop.f32.mrf.mxu0
      %4569 = vmatprep.mubr.bf16.mxu0 0
      %4570 = vmatmul.mubr.bf16.gmra.mxu0 %v4447
      %v4571 = vpop.f32.mrf.mxu0
      %v4572 = vadd.f32 0.0, %v4571
      %v4573 = vpop.f32.mrf.mxu0
      %v4574 = vpop.f32.mrf.mxu0
      %v4575 = vadd.f32 0.0, %v4574
      %v4576 = vpop.f32.mrf.mxu0
      %4577 = vmatprep.mubr.bf16.mxu0 0
      %4578 = vmatmul.mubr.bf16.gmra.mxu0 %v4450
      %v4579 = vpop.f32.mrf.mxu0
      %v4580 = vadd.f32 0.0, %v4579
      %v4581 = vpop.f32.mrf.mxu0
      %v4582 = vpop.f32.mrf.mxu0
      %v4583 = vadd.f32 0.0, %v4582
      %v4584 = vpop.f32.mrf.mxu0
      %4585 = vmatprep.mubr.bf16.mxu0 0
      %4586 = vmatmul.mubr.bf16.gmra.mxu0 %v4453
      %v4587 = vpop.f32.mrf.mxu0
      %v4588 = vadd.f32 0.0, %v4587
      %v4589 = vpop.f32.mrf.mxu0
      %v4590 = vpop.f32.mrf.mxu0
      %v4591 = vadd.f32 0.0, %v4590
      %v4592 = vpop.f32.mrf.mxu0
      %4593 = vmatprep.mubr.bf16.mxu0 0
      %4594 = vmatmul.mubr.bf16.gmra.mxu0 %v4456
      %v4595 = vpop.f32.mrf.mxu0
      %v4596 = vadd.f32 0.0, %v4595
      %v4597 = vpop.f32.mrf.mxu0
      %v4598 = vpop.f32.mrf.mxu0
      %v4599 = vadd.f32 0.0, %v4598
      %v4600 = vpop.f32.mrf.mxu0
      %4601 = vmatprep.mubr.bf16.mxu0 0
      %4602 = vmatmul.mubr.bf16.gmra.mxu0 %v4459
      %v4603 = vpop.f32.mrf.mxu0
      %v4604 = vadd.f32 0.0, %v4603
      %v4605 = vpop.f32.mrf.mxu0
      %v4606 = vpop.f32.mrf.mxu0
      %v4607 = vadd.f32 0.0, %v4606
      %v4608 = vpop.f32.mrf.mxu0
      %4609 = vmatprep.mubr.bf16.mxu0 0
      %4610 = vmatmul.mubr.bf16.gmra.mxu0 %v4462
      %v4611 = vpop.f32.mrf.mxu0
      %v4612 = vadd.f32 0.0, %v4611
      %v4613 = vpop.f32.mrf.mxu0
      %v4614 = vpop.f32.mrf.mxu0
      %v4615 = vadd.f32 0.0, %v4614
      %v4616 = vpop.f32.mrf.mxu0
      %4617 = vmatprep.mubr.bf16.mxu0 0
      %4618 = vmatmul.mubr.bf16.gmra.mxu0 %v4465
      %v4619 = vpop.f32.mrf.mxu0
      %v4620 = vadd.f32 0.0, %v4619
      %v4621 = vpop.f32.mrf.mxu0
      %v4622 = vpop.f32.mrf.mxu0
      %v4623 = vadd.f32 0.0, %v4622
      %v4624 = vpop.f32.mrf.mxu0
      %4625 = vmatprep.mubr.bf16.mxu0 0
      %4626 = vmatmul.mubr.bf16.gmra.mxu0 %v4468
      %v4627 = vpop.f32.mrf.mxu0
      %v4628 = vadd.f32 0.0, %v4627
      %v4629 = vpop.f32.mrf.mxu0
      %v4630 = vpop.f32.mrf.mxu0
      %v4631 = vadd.f32 0.0, %v4630
      %v4632 = vpop.f32.mrf.mxu0
      %4633 = vdwg.mxu0
      %v4634 = vadd.f32 %v4129, %v4508
      %v4635 = vadd.f32 %v4130, %v4511
      %v4636 = vadd.f32 %v4131, %v4516
      %v4637 = vadd.f32 %v4132, %v4519
      %v4638 = vadd.f32 %v4133, %v4524
      %v4639 = vadd.f32 %v4134, %v4527
      %v4640 = vadd.f32 %v4135, %v4532
      %v4641 = vadd.f32 %v4136, %v4535
      %v4642 = vadd.f32 %v4137, %v4540
      %v4643 = vadd.f32 %v4138, %v4543
      %v4644 = vadd.f32 %v4139, %v4548
      %v4645 = vadd.f32 %v4140, %v4551
      %v4646 = vadd.f32 %v4141, %v4556
      %v4647 = vadd.f32 %v4142, %v4559
      %v4648 = vadd.f32 %v4143, %v4564
      %v4649 = vadd.f32 %v4144, %v4567
      %v4650 = vadd.f32 %v4145, %v4572
      %v4651 = vadd.f32 %v4146, %v4575
      %v4652 = vadd.f32 %v4147, %v4580
      %v4653 = vadd.f32 %v4148, %v4583
      %v4654 = vadd.f32 %v4149, %v4588
      %v4655 = vadd.f32 %v4150, %v4591
      %v4656 = vadd.f32 %v4151, %v4596
      %v4657 = vadd.f32 %v4152, %v4599
      %v4658 = vadd.f32 %v4153, %v4604
      %v4659 = vadd.f32 %v4154, %v4607
      %v4660 = vadd.f32 %v4155, %v4612
      %v4661 = vadd.f32 %v4156, %v4615
      %v4662 = vadd.f32 %v4157, %v4620
      %v4663 = vadd.f32 %v4158, %v4623
      %v4664 = vadd.f32 %v4159, %v4628
      %v4665 = vadd.f32 %v4160, %v4631
      %v4666 = vld [vmem:[%s192 + $0x10] sm:$0xe]
      %v4667 = vmul.bf16 %v4666, %v1912
      %v4668 = vmul.bf16 %v4162, %v1915
      %v4669 = vmul.bf16 %v4163, %v1918
      %v4670 = vmul.bf16 %v4164, %v1921
      %v4671 = vmul.bf16 %v4165, %v1924
      %v4672 = vmul.bf16 %v4166, %v1927
      %v4673 = vmul.bf16 %v4167, %v1930
      %v4674 = vmul.bf16 %v4168, %v1933
      %v4675 = vmul.bf16 %v4169, %v1936
      %v4676 = vmul.bf16 %v4170, %v1939
      %v4677 = vmul.bf16 %v4171, %v1942
      %v4678 = vmul.bf16 %v4172, %v1945
      %v4679 = vmul.bf16 %v4173, %v1948
      %v4680 = vmul.bf16 %v4174, %v1951
      %v4681 = vmul.bf16 %v4175, %v1954
      %v4682 = vmul.bf16 %v4176, %v1957
      %v4683 = vmul.bf16 %v4177, %v1960
      %v4684 = vmul.bf16 %v4178, %v1963
      %v4685 = vmul.bf16 %v4179, %v1966
      %v4686 = vmul.bf16 %v4180, %v1969
      %v4687 = vmul.bf16 %v4181, %v1972
      %v4688 = vmul.bf16 %v4182, %v1975
      %v4689 = vmul.bf16 %v4183, %v1978
      %v4690 = vmul.bf16 %v4184, %v1981
      %v4691 = vmul.bf16 %v4185, %v1984
      %v4692 = vmul.bf16 %v4186, %v1987
      %v4693 = vmul.bf16 %v4187, %v1990
      %v4694 = vmul.bf16 %v4188, %v1993
      %v4695 = vmul.bf16 %v4189, %v1996
      %v4696 = vmul.bf16 %v4190, %v1999
      %v4697 = vmul.bf16 %v4191, %v2002
      %v4698 = vmul.bf16 %v4192, %v2005
      %v4699 = vmul.bf16 %v4193, %v2006
      %s4700 = scalar_lea.vmem %s1, 96
      %v4701 = vld [vmem:[%s4700] sm:$0xf]
      %v4702 = vld [vmem:[%s4700 + $0x4] sm:$0xf]
      %v4703 = vld [vmem:[%s4700 + $0x8] sm:$0xf]
      %v4737 = vunpack.c.l.b16 %v4667
      %v4738 = vunpack.c.l.b16 %v4668
      %v4739 = vunpack.c.l.b16 %v4669
      %v4740 = vunpack.c.l.b16 %v4670
      %v4741 = vunpack.c.l.b16 %v4671
      %v4742 = vunpack.c.l.b16 %v4672
      %v4743 = vunpack.c.l.b16 %v4673
      %v4744 = vunpack.c.l.b16 %v4674
      %v4745 = vunpack.c.l.b16 %v4675
      %v4746 = vunpack.c.l.b16 %v4676
      %v4747 = vunpack.c.l.b16 %v4677
      %v4748 = vunpack.c.l.b16 %v4678
      %v4749 = vunpack.c.l.b16 %v4679
      %v4750 = vunpack.c.l.b16 %v4680
      %v4751 = vunpack.c.l.b16 %v4681
      %v4752 = vunpack.c.l.b16 %v4682
      %v4753 = vunpack.c.l.b16 %v4683
      %v4754 = vunpack.c.l.b16 %v4684
      %v4755 = vunpack.c.l.b16 %v4685
      %v4756 = vunpack.c.l.b16 %v4686
      %v4757 = vunpack.c.l.b16 %v4687
      %v4758 = vunpack.c.l.b16 %v4688
      %v4759 = vunpack.c.l.b16 %v4689
      %v4760 = vunpack.c.l.b16 %v4690
      %v4761 = vunpack.c.l.b16 %v4691
      %v4762 = vunpack.c.l.b16 %v4692
      %v4763 = vunpack.c.l.b16 %v4693
      %v4764 = vunpack.c.l.b16 %v4694
      %v4765 = vunpack.c.l.b16 %v4695
      %v4766 = vunpack.c.l.b16 %v4696
      %v4767 = vunpack.c.l.b16 %v4697
      %v4768 = vunpack.c.l.b16 %v4698
      %v4769 = vunpack.c.l.b16 %v4699
      %v4770 = vpack.c.b16 %v4738, %v4737
      %v4771 = vpack.c.b16 %v4740, %v4739
      %v4772 = vpack.c.b16 %v4742, %v4741
      %v4773 = vpack.c.b16 %v4744, %v4743
      %v4774 = vpack.c.b16 %v4746, %v4745
      %v4775 = vpack.c.b16 %v4748, %v4747
      %v4776 = vpack.c.b16 %v4750, %v4749
      %v4777 = vpack.c.b16 %v4752, %v4751
      %v4778 = vpack.c.b16 %v4754, %v4753
      %v4779 = vpack.c.b16 %v4756, %v4755
      %v4780 = vpack.c.b16 %v4758, %v4757
      %v4781 = vpack.c.b16 %v4760, %v4759
      %v4782 = vpack.c.b16 %v4762, %v4761
      %v4783 = vpack.c.b16 %v4764, %v4763
      %v4784 = vpack.c.b16 %v4766, %v4765
      %v4785 = vpack.c.b16 %v4768, %v4767
      %v4786 = vpack.c.b16 %v4769, %v4769
      %v4787 = vrot.slane %v4770, 1
      %v4788 = vrot.slane %v4771, 1
      %v4789 = vsel %vm2160, %v4787, %v4788
      %v4790 = vrot.slane %v4772, 1
      %v4791 = vsel %vm2160, %v4788, %v4790
      %v4792 = vrot.slane %v4773, 1
      %v4793 = vsel %vm2160, %v4790, %v4792
      %v4794 = vrot.slane %v4774, 1
      %v4795 = vsel %vm2160, %v4792, %v4794
      %v4796 = vrot.slane %v4775, 1
      %v4797 = vsel %vm2160, %v4794, %v4796
      %v4798 = vrot.slane %v4776, 1
      %v4799 = vsel %vm2160, %v4796, %v4798
      %v4800 = vrot.slane %v4777, 1
      %v4801 = vsel %vm2160, %v4798, %v4800
      %v4802 = vrot.slane %v4778, 1
      %v4803 = vsel %vm2160, %v4800, %v4802
      %v4804 = vrot.slane %v4779, 1
      %v4805 = vsel %vm2160, %v4802, %v4804
      %v4806 = vrot.slane %v4780, 1
      %v4807 = vsel %vm2160, %v4804, %v4806
      %v4808 = vrot.slane %v4781, 1
      %v4809 = vsel %vm2160, %v4806, %v4808
      %v4810 = vrot.slane %v4782, 1
      %v4811 = vsel %vm2160, %v4808, %v4810
      %v4812 = vrot.slane %v4783, 1
      %v4813 = vsel %vm2160, %v4810, %v4812
      %v4814 = vrot.slane %v4784, 1
      %v4815 = vsel %vm2160, %v4812, %v4814
      %v4816 = vrot.slane %v4785, 1
      %v4817 = vsel %vm2160, %v4814, %v4816
      %v4818 = vrot.slane %v4786, 1
      %v4819 = vsel %vm2160, %v4816, %v4818
      %v4823 = vunpack.c.l.b16 %v4701
      %v4824 = vunpack.c.l.b16 %v4702
      %v4825 = vunpack.c.l.b16 %v4703
      %v4826 = vpack.c.b16 %v4824, %v4823
      %v4827 = vpack.c.b16 %v4825, %v4825
      %v4830 = vsel %vm944, %v4789, 0
      %v4833 = vsel %vm944, %v4791, 0
      %v4836 = vsel %vm944, %v4793, 0
      %v4839 = vsel %vm944, %v4795, 0
      %v4842 = vsel %vm944, %v4797, 0
      %v4845 = vsel %vm944, %v4799, 0
      %v4848 = vsel %vm944, %v4801, 0
      %v4851 = vsel %vm944, %v4803, 0
      %v4854 = vsel %vm944, %v4805, 0
      %v4857 = vsel %vm944, %v4807, 0
      %v4860 = vsel %vm944, %v4809, 0
      %v4863 = vsel %vm944, %v4811, 0
      %v4866 = vsel %vm944, %v4813, 0
      %v4869 = vsel %vm944, %v4815, 0
      %v4872 = vsel %vm944, %v4817, 0
      %v4875 = vsel %vm944, %v4819, 0
      %v4878 = vsel %vm993, %v4827, 0
      %4880 = vmatprep.subr.bf16.mxu0 0
      %4881 = vmatpush1.bf16.msra.mxu0 0
      %4882 = vmatprep.subr.bf16.mxu0 0
      %4883 = vmatpush1.bf16.msra.mxu0 0
      %4884 = vmatprep.subr.bf16.mxu0 0
      %4885 = vmatpush1.bf16.msra.mxu0 0
      %4886 = vmatprep.subr.bf16.mxu0 0
      %4887 = vmatpush1.bf16.msra.mxu0 0
      %4888 = vmatprep.subr.bf16.mxu0 0
      %4889 = vmatpush1.bf16.msra.mxu0 0
      %4890 = vmatprep.subr.bf16.mxu0 0
      %4891 = vmatpush1.bf16.msra.mxu0 0
      %4892 = vmatprep.subr.bf16.mxu0 0
      %4893 = vmatpush1.bf16.msra.mxu0 %v4878
      %4894 = vmatprep.subr.bf16.mxu0 0
      %4895 = vmatpush1.bf16.msra.mxu0 %v4826
      %4896 = vmatprep.subr.bf16.mxu0 0
      %4897 = vmatpush2.bf16.msra.mxu0 0
      %4898 = vmatprep.subr.bf16.mxu0 0
      %4899 = vmatpush2.bf16.msra.mxu0 0
      %4900 = vmatprep.subr.bf16.mxu0 0
      %4901 = vmatpush2.bf16.msra.mxu0 0
      %4902 = vmatprep.subr.bf16.mxu0 0
      %4903 = vmatpush2.bf16.msra.mxu0 0
      %4904 = vmatprep.subr.bf16.mxu0 0
      %4905 = vmatpush2.bf16.msra.mxu0 0
      %4906 = vmatprep.subr.bf16.mxu0 0
      %4907 = vmatpush2.bf16.msra.mxu0 0
      %4908 = vmatprep.subr.bf16.mxu0 0
      %4909 = vmatpush2.bf16.msra.mxu0 0
      %4910 = vmatprep.subr.bf16.mxu0 0
      %4911 = vmatpush2.bf16.msra.mxu0 0
      %4912 = vmatprep.mubr.bf16.mxu0 0
      %4913 = vmatmul.mubr.bf16.gmra.mxu0 %v4830
      %v4914 = vpop.f32.mrf.mxu0
      %v4915 = vadd.f32 0.0, %v4914
      %v4916 = vpop.f32.mrf.mxu0
      %v4917 = vpop.f32.mrf.mxu0
      %v4918 = vadd.f32 0.0, %v4917
      %v4919 = vpop.f32.mrf.mxu0
      %4920 = vmatprep.mubr.bf16.mxu0 0
      %4921 = vmatmul.mubr.bf16.gmra.mxu0 %v4833
      %v4922 = vpop.f32.mrf.mxu0
      %v4923 = vadd.f32 0.0, %v4922
      %v4924 = vpop.f32.mrf.mxu0
      %v4925 = vpop.f32.mrf.mxu0
      %v4926 = vadd.f32 0.0, %v4925
      %v4927 = vpop.f32.mrf.mxu0
      %4928 = vmatprep.mubr.bf16.mxu0 0
      %4929 = vmatmul.mubr.bf16.gmra.mxu0 %v4836
      %v4930 = vpop.f32.mrf.mxu0
      %v4931 = vadd.f32 0.0, %v4930
      %v4932 = vpop.f32.mrf.mxu0
      %v4933 = vpop.f32.mrf.mxu0
      %v4934 = vadd.f32 0.0, %v4933
      %v4935 = vpop.f32.mrf.mxu0
      %4936 = vmatprep.mubr.bf16.mxu0 0
      %4937 = vmatmul.mubr.bf16.gmra.mxu0 %v4839
      %v4938 = vpop.f32.mrf.mxu0
      %v4939 = vadd.f32 0.0, %v4938
      %v4940 = vpop.f32.mrf.mxu0
      %v4941 = vpop.f32.mrf.mxu0
      %v4942 = vadd.f32 0.0, %v4941
      %v4943 = vpop.f32.mrf.mxu0
      %4944 = vmatprep.mubr.bf16.mxu0 0
      %4945 = vmatmul.mubr.bf16.gmra.mxu0 %v4842
      %v4946 = vpop.f32.mrf.mxu0
      %v4947 = vadd.f32 0.0, %v4946
      %v4948 = vpop.f32.mrf.mxu0
      %v4949 = vpop.f32.mrf.mxu0
      %v4950 = vadd.f32 0.0, %v4949
      %v4951 = vpop.f32.mrf.mxu0
      %4952 = vmatprep.mubr.bf16.mxu0 0
      %4953 = vmatmul.mubr.bf16.gmra.mxu0 %v4845
      %v4954 = vpop.f32.mrf.mxu0
      %v4955 = vadd.f32 0.0, %v4954
      %v4956 = vpop.f32.mrf.mxu0
      %v4957 = vpop.f32.mrf.mxu0
      %v4958 = vadd.f32 0.0, %v4957
      %v4959 = vpop.f32.mrf.mxu0
      %4960 = vmatprep.mubr.bf16.mxu0 0
      %4961 = vmatmul.mubr.bf16.gmra.mxu0 %v4848
      %v4962 = vpop.f32.mrf.mxu0
      %v4963 = vadd.f32 0.0, %v4962
      %v4964 = vpop.f32.mrf.mxu0
      %v4965 = vpop.f32.mrf.mxu0
      %v4966 = vadd.f32 0.0, %v4965
      %v4967 = vpop.f32.mrf.mxu0
      %4968 = vmatprep.mubr.bf16.mxu0 0
      %4969 = vmatmul.mubr.bf16.gmra.mxu0 %v4851
      %v4970 = vpop.f32.mrf.mxu0
      %v4971 = vadd.f32 0.0, %v4970
      %v4972 = vpop.f32.mrf.mxu0
      %v4973 = vpop.f32.mrf.mxu0
      %v4974 = vadd.f32 0.0, %v4973
      %v4975 = vpop.f32.mrf.mxu0
      %4976 = vmatprep.mubr.bf16.mxu0 0
      %4977 = vmatmul.mubr.bf16.gmra.mxu0 %v4854
      %v4978 = vpop.f32.mrf.mxu0
      %v4979 = vadd.f32 0.0, %v4978
      %v4980 = vpop.f32.mrf.mxu0
      %v4981 = vpop.f32.mrf.mxu0
      %v4982 = vadd.f32 0.0, %v4981
      %v4983 = vpop.f32.mrf.mxu0
      %4984 = vmatprep.mubr.bf16.mxu0 0
      %4985 = vmatmul.mubr.bf16.gmra.mxu0 %v4857
      %v4986 = vpop.f32.mrf.mxu0
      %v4987 = vadd.f32 0.0, %v4986
      %v4988 = vpop.f32.mrf.mxu0
      %v4989 = vpop.f32.mrf.mxu0
      %v4990 = vadd.f32 0.0, %v4989
      %v4991 = vpop.f32.mrf.mxu0
      %4992 = vmatprep.mubr.bf16.mxu0 0
      %4993 = vmatmul.mubr.bf16.gmra.mxu0 %v4860
      %v4994 = vpop.f32.mrf.mxu0
      %v4995 = vadd.f32 0.0, %v4994
      %v4996 = vpop.f32.mrf.mxu0
      %v4997 = vpop.f32.mrf.mxu0
      %v4998 = vadd.f32 0.0, %v4997
      %v4999 = vpop.f32.mrf.mxu0
      %5000 = vmatprep.mubr.bf16.mxu0 0
      %5001 = vmatmul.mubr.bf16.gmra.mxu0 %v4863
      %v5002 = vpop.f32.mrf.mxu0
      %v5003 = vadd.f32 0.0, %v5002
      %v5004 = vpop.f32.mrf.mxu0
      %v5005 = vpop.f32.mrf.mxu0
      %v5006 = vadd.f32 0.0, %v5005
      %v5007 = vpop.f32.mrf.mxu0
      %5008 = vmatprep.mubr.bf16.mxu0 0
      %5009 = vmatmul.mubr.bf16.gmra.mxu0 %v4866
      %v5010 = vpop.f32.mrf.mxu0
      %v5011 = vadd.f32 0.0, %v5010
      %v5012 = vpop.f32.mrf.mxu0
      %v5013 = vpop.f32.mrf.mxu0
      %v5014 = vadd.f32 0.0, %v5013
      %v5015 = vpop.f32.mrf.mxu0
      %5016 = vmatprep.mubr.bf16.mxu0 0
      %5017 = vmatmul.mubr.bf16.gmra.mxu0 %v4869
      %v5018 = vpop.f32.mrf.mxu0
      %v5019 = vadd.f32 0.0, %v5018
      %v5020 = vpop.f32.mrf.mxu0
      %v5021 = vpop.f32.mrf.mxu0
      %v5022 = vadd.f32 0.0, %v5021
      %v5023 = vpop.f32.mrf.mxu0
      %5024 = vmatprep.mubr.bf16.mxu0 0
      %5025 = vmatmul.mubr.bf16.gmra.mxu0 %v4872
      %v5026 = vpop.f32.mrf.mxu0
      %v5027 = vadd.f32 0.0, %v5026
      %v5028 = vpop.f32.mrf.mxu0
      %v5029 = vpop.f32.mrf.mxu0
      %v5030 = vadd.f32 0.0, %v5029
      %v5031 = vpop.f32.mrf.mxu0
      %5032 = vmatprep.mubr.bf16.mxu0 0
      %5033 = vmatmul.mubr.bf16.gmra.mxu0 %v4875
      %v5034 = vpop.f32.mrf.mxu0
      %v5035 = vadd.f32 0.0, %v5034
      %v5036 = vpop.f32.mrf.mxu0
      %v5037 = vpop.f32.mrf.mxu0
      %v5038 = vadd.f32 0.0, %v5037
      %v5039 = vpop.f32.mrf.mxu0
      %5040 = vdwg.mxu0
      %v5041 = vadd.f32 %v4634, %v4915
      %v5042 = vadd.f32 %v4635, %v4918
      %v5043 = vadd.f32 %v4636, %v4923
      %v5044 = vadd.f32 %v4637, %v4926
      %v5045 = vadd.f32 %v4638, %v4931
      %v5046 = vadd.f32 %v4639, %v4934
      %v5047 = vadd.f32 %v4640, %v4939
      %v5048 = vadd.f32 %v4641, %v4942
      %v5049 = vadd.f32 %v4642, %v4947
      %v5050 = vadd.f32 %v4643, %v4950
      %v5051 = vadd.f32 %v4644, %v4955
      %v5052 = vadd.f32 %v4645, %v4958
      %v5053 = vadd.f32 %v4646, %v4963
      %v5054 = vadd.f32 %v4647, %v4966
      %v5055 = vadd.f32 %v4648, %v4971
      %v5056 = vadd.f32 %v4649, %v4974
      %v5057 = vadd.f32 %v4650, %v4979
      %v5058 = vadd.f32 %v4651, %v4982
      %v5059 = vadd.f32 %v4652, %v4987
      %v5060 = vadd.f32 %v4653, %v4990
      %v5061 = vadd.f32 %v4654, %v4995
      %v5062 = vadd.f32 %v4655, %v4998
      %v5063 = vadd.f32 %v4656, %v5003
      %v5064 = vadd.f32 %v4657, %v5006
      %v5065 = vadd.f32 %v4658, %v5011
      %v5066 = vadd.f32 %v4659, %v5014
      %v5067 = vadd.f32 %v4660, %v5019
      %v5068 = vadd.f32 %v4661, %v5022
      %v5069 = vadd.f32 %v4662, %v5027
      %v5070 = vadd.f32 %v4663, %v5030
      %v5071 = vadd.f32 %v4664, %v5035
      %v5072 = vadd.f32 %v4665, %v5038
      %v5073 = vld [vmem:[%s3] sm:$0x1]
      %v5075 = vlaneseq
      %v5076 = vshrl.u32 %v5075, 7
      %v5077 = vsub.s32 0, %v5076
      %v5078 = vrot.slane %v5073, %v5077
      %v5080 = vadd.f32 %v5041, %v5078
      %v5081 = vadd.f32 %v5042, %v5078
      %v5082 = vadd.f32 %v5043, %v5078
      %v5083 = vadd.f32 %v5044, %v5078
      %v5084 = vadd.f32 %v5045, %v5078
      %v5085 = vadd.f32 %v5046, %v5078
      %v5086 = vadd.f32 %v5047, %v5078
      %v5087 = vadd.f32 %v5048, %v5078
      %v5088 = vadd.f32 %v5049, %v5078
      %v5089 = vadd.f32 %v5050, %v5078
      %v5090 = vadd.f32 %v5051, %v5078
      %v5091 = vadd.f32 %v5052, %v5078
      %v5092 = vadd.f32 %v5053, %v5078
      %v5093 = vadd.f32 %v5054, %v5078
      %v5094 = vadd.f32 %v5055, %v5078
      %v5095 = vadd.f32 %v5056, %v5078
      %v5096 = vadd.f32 %v5057, %v5078
      %v5097 = vadd.f32 %v5058, %v5078
      %v5098 = vadd.f32 %v5059, %v5078
      %v5099 = vadd.f32 %v5060, %v5078
      %v5100 = vadd.f32 %v5061, %v5078
      %v5101 = vadd.f32 %v5062, %v5078
      %v5102 = vadd.f32 %v5063, %v5078
      %v5103 = vadd.f32 %v5064, %v5078
      %v5104 = vadd.f32 %v5065, %v5078
      %v5105 = vadd.f32 %v5066, %v5078
      %v5106 = vadd.f32 %v5067, %v5078
      %v5107 = vadd.f32 %v5068, %v5078
      %v5108 = vadd.f32 %v5069, %v5078
      %v5109 = vadd.f32 %v5070, %v5078
      %v5110 = vadd.f32 %v5071, %v5078
      %v5111 = vadd.f32 %v5072, %v5078
      %vm5112 = vcmask 39936
      %5113 = vst.msk [vmem:[%s197] sm:$0xff] %vm5112, %v5080
      %5114 = vst.msk [vmem:[%s197 + $0x8] sm:$0xff] %vm5112, %v5081
      %5115 = vst.msk [vmem:[%s197 + $0x10] sm:$0xff] %vm5112, %v5082
      %5116 = vst.msk [vmem:[%s197 + $0x18] sm:$0xff] %vm5112, %v5083
      %5117 = vst.msk [vmem:[%s197 + $0x20] sm:$0xff] %vm5112, %v5084
      %5118 = vst.msk [vmem:[%s197 + $0x28] sm:$0xff] %vm5112, %v5085
      %5119 = vst.msk [vmem:[%s197 + $0x30] sm:$0xff] %vm5112, %v5086
      %5120 = vst.msk [vmem:[%s197 + $0x38] sm:$0xff] %vm5112, %v5087
      %5121 = vst.msk [vmem:[%s197 + $0x40] sm:$0xff] %vm5112, %v5088
      %5122 = vst.msk [vmem:[%s197 + $0x48] sm:$0xff] %vm5112, %v5089
      %5123 = vst.msk [vmem:[%s197 + $0x50] sm:$0xff] %vm5112, %v5090
      %5124 = vst.msk [vmem:[%s197 + $0x58] sm:$0xff] %vm5112, %v5091
      %5125 = vst.msk [vmem:[%s197 + $0x60] sm:$0xff] %vm5112, %v5092
      %5126 = vst.msk [vmem:[%s197 + $0x68] sm:$0xff] %vm5112, %v5093
      %5127 = vst.msk [vmem:[%s197 + $0x70] sm:$0xff] %vm5112, %v5094
      %5128 = vst.msk [vmem:[%s197 + $0x78] sm:$0xff] %vm5112, %v5095
      %5129 = vst.msk [vmem:[%s197 + $0x80] sm:$0xff] %vm5112, %v5096
      %5130 = vst.msk [vmem:[%s197 + $0x88] sm:$0xff] %vm5112, %v5097
      %5131 = vst.msk [vmem:[%s197 + $0x90] sm:$0xff] %vm5112, %v5098
      %5132 = vst.msk [vmem:[%s197 + $0x98] sm:$0xff] %vm5112, %v5099
      %5133 = vst.msk [vmem:[%s197 + $0xa0] sm:$0xff] %vm5112, %v5100
      %5134 = vst.msk [vmem:[%s197 + $0xa8] sm:$0xff] %vm5112, %v5101
      %5135 = vst.msk [vmem:[%s197 + $0xb0] sm:$0xff] %vm5112, %v5102
      %5136 = vst.msk [vmem:[%s197 + $0xb8] sm:$0xff] %vm5112, %v5103
      %5137 = vst.msk [vmem:[%s197 + $0xc0] sm:$0xff] %vm5112, %v5104
      %5138 = vst.msk [vmem:[%s197 + $0xc8] sm:$0xff] %vm5112, %v5105
      %5139 = vst.msk [vmem:[%s197 + $0xd0] sm:$0xff] %vm5112, %v5106
      %5140 = vst.msk [vmem:[%s197 + $0xd8] sm:$0xff] %vm5112, %v5107
      %5141 = vst.msk [vmem:[%s197 + $0xe0] sm:$0xff] %vm5112, %v5108
      %5142 = vst.msk [vmem:[%s197 + $0xe8] sm:$0xff] %vm5112, %v5109
      %5143 = vst.msk [vmem:[%s197 + $0xf0] sm:$0xff] %vm5112, %v5110
      %5144 = vst.msk [vmem:[%s197 + $0xf8] sm:$0xff] %vm5112, %v5111
      %p5145 = scmp.lt.s32.totalorder %s15, 1
      %s5146 = scalar_select %p5145, %s15, 1
      %s5147 = smul.addr %s5146, 32
      %s5148 = smul.addr %s5147, 8
      %s5149 = scalar_lea.vmem %s4, %s5148
      // Predicated region
      $region37: #{pspnet_forward.3} parent=35 // pred_check
        %p5150 = pneg %p122
      $region38: #{pspnet_forward.3} parent=35 // pred_check_branch
        %5152 = sbr.rel (%p5150) target = $region40
      $region39: #{pspnet_forward.3} parent=35 // pred_region
        _
      $region40: #{pspnet_forward.3} parent=35 // pred_fallthru
        _
    $region36: #{pspnet_forward.3} parent=5 // pred_fallthru
      _
    %p5153 = scmp.le.s32.totalorder 2, %s10
    // Predicated region
    $region41: #{pspnet_forward.3} parent=5 // pred_check
      %p5154 = pneg %p5153
    $region42: #{pspnet_forward.3} parent=5 // pred_check_branch
      %5156 = sbr.rel (%p5154) target = $region44
    $region43: #{pspnet_forward.3} parent=5 // pred_region
      %s5157 = ssub.s32 %s10, 2
      // Predicated region
      $region45: #{pspnet_forward.3} parent=43 // pred_check
        %p5158 = pneg %p128
      $region46: #{pspnet_forward.3} parent=43 // pred_check_branch
        %5160 = sbr.rel (%p5158) target = $region48
      $region47: #{pspnet_forward.3} parent=43 // pred_region
        %p5161 = scmp.lt.s32.totalorder %s16, 1
        %s5162 = scalar_select %p5161, %s16, 1
        %s5163 = smul.addr %s5162, 32
        %s5164 = smul.addr %s5163, 8
        %s5165 = scalar_lea.vmem %s4, %s5164
      $region48: #{pspnet_forward.3} parent=43 // pred_fallthru
        _
    $region44: #{pspnet_forward.3} parent=5 // pred_fallthru
      _
  $region6: #{pspnet_forward.3} parent=0 // loop_footer
    %s14 = sadd.s32 1, %s10
  $region7: #{pspnet_forward.3} parent=0 // loop_footer_branch
    %9 = sbr.rel target = $region3
  $region8: #{pspnet_forward.3} parent=0 // loop_exit
    _

// kernel: pspnet_forward.5
$region0: #{pspnet_forward.5}
  #allocation0 [shape = 'u32[]', space=smem, size = 0x4, offset = 0x4, fixed_abs, tag = 'smem constant byte address 0x4 - core index']
  #allocation1 [shape = 'u32[144,128]{1,0:T(1,128)}', space=vmem, size = 0x12000, scoped, tag = 'internal scratch']
  %s0 = inlined_call_operand.vmem [shape: bf16[2,290,96], index: 0, kind: input, shape index: {}]
  %s1 = inlined_call_operand.vmem [shape: bf16[9,96,5], index: 1, kind: input, shape index: {}]
  %s2 = inlined_call_operand.vmem [shape: bf16[2,256,1], index: 2, kind: input, shape index: {}]
  %s3 = inlined_call_operand.vmem [shape: f32[1,5], index: 3, kind: input, shape index: {}]
  %s4 = inlined_call_operand.vmem [shape: f32[2,256,5], index: 4, kind: output, shape index: {}]
  %s5 = sld [smem:[#allocation0]]
  $region49: #{pspnet_forward.5} parent=0
    _
  %s7 = ssub.s32 1, %s5
  %s8 = scalar_select 0, %s7, %s5
  loop: start=0, step=1, limit=4
  $region2: #{pspnet_forward.5} parent=0 // loop_pre_header
    _
  $region3: #{pspnet_forward.5} parent=0 // loop_header
    %s10 = sphi 0, %s14
    %p11 = scmp.ge.s32.totalorder %s10, 4
    %s20 = sphi 0, %s22
    %s23 = sphi 0, %s20
    %s24 = sphi 0, %s23
    %s40 = sphi 0, %s24
    %s44 = sphi 0, %s44
    %s46 = sphi 0, %s44
    %s47 = sphi 0, %s46
    %s61 = sphi 0, %s47
    %s65 = sphi 0, %s65
    %s67 = sphi 0, %s65
    %s68 = sphi 0, %s67
    %s82 = sphi 0, %s68
    %s86 = sphi 0, %s86
    %s88 = sphi 0, %s86
    %s89 = sphi 0, %s88
    %s103 = sphi 0, %s89
    %s109 = sphi 0, %s111
    %s112 = sphi 0, %s109
    %s113 = sphi 0, %s112
    %s129 = sphi 0, %s113
  $region4: #{pspnet_forward.5} parent=0 // loop_header_branch
    %13 = sbr.rel (%p11) target = $region8
  $region5: #{pspnet_forward.5} parent=0 // loop_body
    %s15 = ssub.s32 %s10, 1
    %s16 = ssub.s32 %s10, 2
    %s17 = sadd.s32 %s10, 1
    %s18 = ssub.s32 %s10, %s17
    %p19 = scmp.eq.s32.totalorder %s18, 0
    %s21 = sadd.s32 %s20, 1
    %s22 = scalar_select %p19, %s20, %s21
    %p25 = pneg %p19
    %p26 = scmp.eq.s32.totalorder %s10, 1
    %p27 = por %p25, %p26
    %p28 = scmp.ne.s32.totalorder %s20, %s23
    %p29 = scmp.eq.s32.totalorder %s10, 0
    %p30 = por %p28, %p29
    %p31 = scmp.ne.s32.totalorder %s20, %s23
    %p32 = scmp.eq.s32.totalorder %s15, 1
    %p33 = por %p31, %p32
    %p34 = scmp.ne.s32.totalorder %s23, %s24
    %p35 = scmp.eq.s32.totalorder %s15, 0
    %p36 = por %p34, %p35
    %p37 = scmp.ne.s32.totalorder %s23, %s24
    %p38 = scmp.eq.s32.totalorder %s16, 1
    %p39 = por %p37, %p38
    %p41 = scmp.ne.s32.totalorder %s24, %s40
    %p42 = scmp.eq.s32.totalorder %s16, 0
    %p43 = por %p41, %p42
    %s45 = sadd.s32 %s44, 1
    %p48 = scmp.eq.s32.totalorder %s10, 1
    %p49 = scmp.ne.s32.totalorder %s44, %s46
    %p50 = scmp.eq.s32.totalorder %s10, 0
    %p51 = por %p49, %p50
    %p52 = scmp.ne.s32.totalorder %s44, %s46
    %p53 = scmp.eq.s32.totalorder %s15, 1
    %p54 = por %p52, %p53
    %p55 = scmp.ne.s32.totalorder %s46, %s47
    %p56 = scmp.eq.s32.totalorder %s15, 0
    %p57 = por %p55, %p56
    %p58 = scmp.ne.s32.totalorder %s46, %s47
    %p59 = scmp.eq.s32.totalorder %s16, 1
    %p60 = por %p58, %p59
    %p62 = scmp.ne.s32.totalorder %s47, %s61
    %p63 = scmp.eq.s32.totalorder %s16, 0
    %p64 = por %p62, %p63
    %s66 = sadd.s32 %s65, 1
    %p69 = scmp.eq.s32.totalorder %s10, 1
    %p70 = scmp.ne.s32.totalorder %s65, %s67
    %p71 = scmp.eq.s32.totalorder %s10, 0
    %p72 = por %p70, %p71
    %p73 = scmp.ne.s32.totalorder %s65, %s67
    %p74 = scmp.eq.s32.totalorder %s15, 1
    %p75 = por %p73, %p74
    %p76 = scmp.ne.s32.totalorder %s67, %s68
    %p77 = scmp.eq.s32.totalorder %s15, 0
    %p78 = por %p76, %p77
    %p79 = scmp.ne.s32.totalorder %s67, %s68
    %p80 = scmp.eq.s32.totalorder %s16, 1
    %p81 = por %p79, %p80
    %p83 = scmp.ne.s32.totalorder %s68, %s82
    %p84 = scmp.eq.s32.totalorder %s16, 0
    %p85 = por %p83, %p84
    %s87 = sadd.s32 %s86, 1
    %p90 = scmp.eq.s32.totalorder %s10, 1
    %p91 = scmp.ne.s32.totalorder %s86, %s88
    %p92 = scmp.eq.s32.totalorder %s10, 0
    %p93 = por %p91, %p92
    %p94 = scmp.ne.s32.totalorder %s86, %s88
    %p95 = scmp.eq.s32.totalorder %s15, 1
    %p96 = por %p94, %p95
    %p97 = scmp.ne.s32.totalorder %s88, %s89
    %p98 = scmp.eq.s32.totalorder %s15, 0
    %p99 = por %p97, %p98
    %p100 = scmp.ne.s32.totalorder %s88, %s89
    %p101 = scmp.eq.s32.totalorder %s16, 1
    %p102 = por %p100, %p101
    %p104 = scmp.ne.s32.totalorder %s89, %s103
    %p105 = scmp.eq.s32.totalorder %s16, 0
    %p106 = por %p104, %p105
    %s107 = ssub.s32 %s10, %s17
    %p108 = scmp.eq.s32.totalorder %s107, 0
    %s110 = sadd.s32 %s109, 1
    %s111 = scalar_select %p108, %s109, %s110
    %p114 = pneg %p108
    %p115 = scmp.eq.s32.totalorder %s10, 1
    %p116 = por %p114, %p115
    %p117 = scmp.ne.s32.totalorder %s109, %s112
    %p118 = scmp.eq.s32.totalorder %s10, 0
    %p119 = por %p117, %p118
    %p120 = scmp.ne.s32.totalorder %s109, %s112
    %p121 = scmp.eq.s32.totalorder %s15, 1
    %p122 = por %p120, %p121
    %p123 = scmp.ne.s32.totalorder %s112, %s113
    %p124 = scmp.eq.s32.totalorder %s15, 0
    %p125 = por %p123, %p124
    %p126 = scmp.ne.s32.totalorder %s112, %s113
    %p127 = scmp.eq.s32.totalorder %s16, 1
    %p128 = por %p126, %p127
    %p130 = scmp.ne.s32.totalorder %s113, %s129
    %p131 = scmp.eq.s32.totalorder %s16, 0
    %p132 = por %p130, %p131
    %p133 = scmp.le.s32.totalorder 1, %s10
    %p134 = scmp.lt.s32.totalorder %s10, 3
    %p135 = pnand %p133, %p134
    %p136 = pneg %p135
    // Predicated region
    $region9: #{pspnet_forward.5} parent=5 // pred_check
      _
    $region10: #{pspnet_forward.5} parent=5 // pred_check_branch
      %138 = sbr.rel (%p135) target = $region12
    $region11: #{pspnet_forward.5} parent=5 // pred_region
      %s139 = ssub.s32 %s10, 1
      // Predicated region
      $region13: #{pspnet_forward.5} parent=11 // pred_check
        %p140 = pneg %p57
      $region14: #{pspnet_forward.5} parent=11 // pred_check_branch
        %142 = sbr.rel (%p140) target = $region16
      $region15: #{pspnet_forward.5} parent=11 // pred_region
        _
      $region16: #{pspnet_forward.5} parent=11 // pred_fallthru
        _
      // Predicated region
      $region17: #{pspnet_forward.5} parent=11 // pred_check
        %p143 = pneg %p78
      $region18: #{pspnet_forward.5} parent=11 // pred_check_branch
        %145 = sbr.rel (%p143) target = $region20
      $region19: #{pspnet_forward.5} parent=11 // pred_region
        _
      $region20: #{pspnet_forward.5} parent=11 // pred_fallthru
        _
      // Predicated region
      $region21: #{pspnet_forward.5} parent=11 // pred_check
        %p146 = pneg %p99
      $region22: #{pspnet_forward.5} parent=11 // pred_check_branch
        %148 = sbr.rel (%p146) target = $region24
      $region23: #{pspnet_forward.5} parent=11 // pred_region
        _
      $region24: #{pspnet_forward.5} parent=11 // pred_fallthru
        _
    $region12: #{pspnet_forward.5} parent=5 // pred_fallthru
      _
    %p149 = scmp.lt.s32.totalorder %s10, 2
    // Predicated region
    $region25: #{pspnet_forward.5} parent=5 // pred_check
      %p150 = pneg %p149
    $region26: #{pspnet_forward.5} parent=5 // pred_check_branch
      %152 = sbr.rel (%p150) target = $region28
    $region27: #{pspnet_forward.5} parent=5 // pred_region
      // Predicated region
      $region29: #{pspnet_forward.5} parent=27 // pred_check
        %p153 = pneg %p30
      $region30: #{pspnet_forward.5} parent=27 // pred_check_branch
        %155 = sbr.rel (%p153) target = $region32
      $region31: #{pspnet_forward.5} parent=27 // pred_region
        %p156 = scmp.lt.s32.totalorder %s10, 1
        %s157 = scalar_select %p156, %s10, 1
        %s158 = smul.addr %s157, 37
        %s159 = smul.addr %s158, 4
        %s160 = scalar_lea.vmem %s0, %s159
      $region32: #{pspnet_forward.5} parent=27 // pred_fallthru
        _
    $region28: #{pspnet_forward.5} parent=5 // pred_fallthru
      _
    %p161 = scmp.le.s32.totalorder 1, %s10
    %p162 = scmp.lt.s32.totalorder %s10, 3
    %p163 = pnand %p161, %p162
    %p164 = pneg %p163
    // Predicated region
    $region33: #{pspnet_forward.5} parent=5 // pred_check
      _
    $region34: #{pspnet_forward.5} parent=5 // pred_check_branch
      %166 = sbr.rel (%p163) target = $region36
    $region35: #{pspnet_forward.5} parent=5 // pred_region
      %s167 = ssub.s32 %s10, 1
      %p168 = scmp.lt.s32.totalorder %s15, 1
      %s169 = scalar_select %p168, %s15, 1
      %s170 = smul.addr %s169, 37
      %s171 = smul.addr %s170, 4
      %s172 = scalar_lea.vmem %s0, %s171
      %p173 = pneg %p36
      %p174 = pneg %p33
      %p175 = pneg %p57
      %p176 = pneg %p54
      %p177 = pneg %p78
      %p178 = pneg %p75
      %p179 = pneg %p99
      %p180 = pneg %p96
      %p181 = pneg %p125
      %p182 = pneg %p122
      %p183 = scmp.lt.s32.totalorder %s15, 1
      %s184 = scalar_select %p183, %s15, 1
      %s185 = smul.addr %s184, 32
      %s186 = smul.addr %s185, 8
      %s187 = scalar_lea.vmem %s4, %s186
      %p188 = scmp.lt.s32.totalorder %s15, 1
      %s189 = scalar_select %p188, %s15, 1
      %s190 = smul.addr %s189, 37
      %s191 = smul.addr %s190, 4
      %s192 = scalar_lea.vmem %s0, %s191
      %p193 = scmp.lt.s32.totalorder %s15, 1
      %s194 = scalar_select %p193, %s15, 1
      %s195 = smul.addr %s194, 32
      %s196 = smul.addr %s195, 8
      %s197 = scalar_lea.vmem %s4, %s196
      %v199 = vld [vmem:[%s192] sm:$0xf]
      %v200 = vld [vmem:[%s192 + $0x4] sm:$0xf]
      %v201 = vld [vmem:[%s192 + $0x8] sm:$0xf]
      %v202 = vld [vmem:[%s192 + $0xc] sm:$0xf]
      %v203 = vld [vmem:[%s192 + $0x10] sm:$0xf]
      %v204 = vld [vmem:[%s192 + $0x14] sm:$0xf]
      %v205 = vld [vmem:[%s192 + $0x18] sm:$0xf]
      %v206 = vld [vmem:[%s192 + $0x1c] sm:$0xf]
      %v207 = vld [vmem:[%s192 + $0x20] sm:$0xf]
      %v208 = vld [vmem:[%s192 + $0x24] sm:$0xf]
      %v209 = vld [vmem:[%s192 + $0x28] sm:$0xf]
      %v210 = vld [vmem:[%s192 + $0x2c] sm:$0xf]
      %v211 = vld [vmem:[%s192 + $0x30] sm:$0xf]
      %v212 = vld [vmem:[%s192 + $0x34] sm:$0xf]
      %v213 = vld [vmem:[%s192 + $0x38] sm:$0xf]
      %v214 = vld [vmem:[%s192 + $0x3c] sm:$0xf]
      %v215 = vld [vmem:[%s192 + $0x40] sm:$0xf]
      %v216 = vld [vmem:[%s192 + $0x44] sm:$0xf]
      %v217 = vld [vmem:[%s192 + $0x48] sm:$0xf]
      %v218 = vld [vmem:[%s192 + $0x4c] sm:$0xf]
      %v219 = vld [vmem:[%s192 + $0x50] sm:$0xf]
      %v220 = vld [vmem:[%s192 + $0x54] sm:$0xf]
      %v221 = vld [vmem:[%s192 + $0x58] sm:$0xf]
      %v222 = vld [vmem:[%s192 + $0x5c] sm:$0xf]
      %v223 = vld [vmem:[%s192 + $0x60] sm:$0xf]
      %v224 = vld [vmem:[%s192 + $0x64] sm:$0xf]
      %v225 = vld [vmem:[%s192 + $0x68] sm:$0xf]
      %v226 = vld [vmem:[%s192 + $0x6c] sm:$0xf]
      %v227 = vld [vmem:[%s192 + $0x70] sm:$0xf]
      %v228 = vld [vmem:[%s192 + $0x74] sm:$0xf]
      %v229 = vld [vmem:[%s192 + $0x78] sm:$0xf]
      %v230 = vld [vmem:[%s192 + $0x7c] sm:$0xf]
      %v231 = vld [vmem:[%s2] sm:$0xf]
      %v232 = vld [vmem:[%s2 + $0x4] sm:$0xf]
      %v233 = vld [vmem:[%s2 + $0x8] sm:$0xf]
      %v234 = vld [vmem:[%s2 + $0xc] sm:$0xf]
      %v235 = vld [vmem:[%s2 + $0x10] sm:$0xf]
      %v236 = vld [vmem:[%s2 + $0x14] sm:$0xf]
      %v237 = vld [vmem:[%s2 + $0x18] sm:$0xf]
      %v238 = vld [vmem:[%s2 + $0x1c] sm:$0xf]
      %v239 = vld [vmem:[%s2 + $0x20] sm:$0xf]
      %v240 = vld [vmem:[%s2 + $0x24] sm:$0xf]
      %v241 = vld [vmem:[%s2 + $0x28] sm:$0xf]
      %v242 = vld [vmem:[%s2 + $0x2c] sm:$0xf]
      %v243 = vld [vmem:[%s2 + $0x30] sm:$0xf]
      %v244 = vld [vmem:[%s2 + $0x34] sm:$0xf]
      %v245 = vld [vmem:[%s2 + $0x38] sm:$0xf]
      %v246 = vld [vmem:[%s2 + $0x3c] sm:$0xf]
      %v247 = vld [vmem:[%s2 + $0x40] sm:$0xf]
      %v248 = vld [vmem:[%s2 + $0x44] sm:$0xf]
      %v249 = vld [vmem:[%s2 + $0x48] sm:$0xf]
      %v250 = vld [vmem:[%s2 + $0x4c] sm:$0xf]
      %v251 = vld [vmem:[%s2 + $0x50] sm:$0xf]
      %v252 = vld [vmem:[%s2 + $0x54] sm:$0xf]
      %v253 = vld [vmem:[%s2 + $0x58] sm:$0xf]
      %v254 = vld [vmem:[%s2 + $0x5c] sm:$0xf]
      %v255 = vld [vmem:[%s2 + $0x60] sm:$0xf]
      %v256 = vld [vmem:[%s2 + $0x64] sm:$0xf]
      %v257 = vld [vmem:[%s2 + $0x68] sm:$0xf]
      %v258 = vld [vmem:[%s2 + $0x6c] sm:$0xf]
      %v259 = vld [vmem:[%s2 + $0x70] sm:$0xf]
      %v260 = vld [vmem:[%s2 + $0x74] sm:$0xf]
      %v261 = vld [vmem:[%s2 + $0x78] sm:$0xf]
      %v262 = vld [vmem:[%s2 + $0x7c] sm:$0xf]
      %264 = vset.pattern.permute.xlu0 0
      %265 = vperm.xlu0 %264, %v231
      %v266 = vpop.permute.xlu0 %265
      %v269 = vunpack.c.l.s4 839922192
      %v270 = vunpack.c.0.s8 %v269
      %v271 = vlaneseq
      %v272 = vshrl.u32 %v271, 7
      %v273 = vsub.s32 %v270, %v272
      %v274 = vrot.slane %v266, %v273
      %276 = vset.pattern.permute.xlu0 0
      %277 = vperm.xlu0 %276, %v232
      %v278 = vpop.permute.xlu0 %277
      %v281 = vunpack.c.l.s4 839922192
      %v282 = vunpack.c.0.s8 %v281
      %v283 = vlaneseq
      %v284 = vshrl.u32 %v283, 7
      %v285 = vsub.s32 %v282, %v284
      %v286 = vrot.slane %v278, %v285
      %288 = vset.pattern.permute.xlu0 0
      %289 = vperm.xlu0 %288, %v233
      %v290 = vpop.permute.xlu0 %289
      %v293 = vunpack.c.l.s4 839922192
      %v294 = vunpack.c.0.s8 %v293
      %v295 = vlaneseq
      %v296 = vshrl.u32 %v295, 7
      %v297 = vsub.s32 %v294, %v296
      %v298 = vrot.slane %v290, %v297
      %300 = vset.pattern.permute.xlu0 0
      %301 = vperm.xlu0 %300, %v234
      %v302 = vpop.permute.xlu0 %301
      %v305 = vunpack.c.l.s4 839922192
      %v306 = vunpack.c.0.s8 %v305
      %v307 = vlaneseq
      %v308 = vshrl.u32 %v307, 7
      %v309 = vsub.s32 %v306, %v308
      %v310 = vrot.slane %v302, %v309
      %312 = vset.pattern.permute.xlu0 0
      %313 = vperm.xlu0 %312, %v235
      %v314 = vpop.permute.xlu0 %313
      %v317 = vunpack.c.l.s4 839922192
      %v318 = vunpack.c.0.s8 %v317
      %v319 = vlaneseq
      %v320 = vshrl.u32 %v319, 7
      %v321 = vsub.s32 %v318, %v320
      %v322 = vrot.slane %v314, %v321
      %324 = vset.pattern.permute.xlu0 0
      %325 = vperm.xlu0 %324, %v236
      %v326 = vpop.permute.xlu0 %325
      %v329 = vunpack.c.l.s4 839922192
      %v330 = vunpack.c.0.s8 %v329
      %v331 = vlaneseq
      %v332 = vshrl.u32 %v331, 7
      %v333 = vsub.s32 %v330, %v332
      %v334 = vrot.slane %v326, %v333
      %336 = vset.pattern.permute.xlu0 0
      %337 = vperm.xlu0 %336, %v237
      %v338 = vpop.permute.xlu0 %337
      %v341 = vunpack.c.l.s4 839922192
      %v342 = vunpack.c.0.s8 %v341
      %v343 = vlaneseq
      %v344 = vshrl.u32 %v343, 7
      %v345 = vsub.s32 %v342, %v344
      %v346 = vrot.slane %v338, %v345
      %348 = vset.pattern.permute.xlu0 0
      %349 = vperm.xlu0 %348, %v238
      %v350 = vpop.permute.xlu0 %349
      %v353 = vunpack.c.l.s4 839922192
      %v354 = vunpack.c.0.s8 %v353
      %v355 = vlaneseq
      %v356 = vshrl.u32 %v355, 7
      %v357 = vsub.s32 %v354, %v356
      %v358 = vrot.slane %v350, %v357
      %360 = vset.pattern.permute.xlu0 0
      %361 = vperm.xlu0 %360, %v239
      %v362 = vpop.permute.xlu0 %361
      %v365 = vunpack.c.l.s4 839922192
      %v366 = vunpack.c.0.s8 %v365
      %v367 = vlaneseq
      %v368 = vshrl.u32 %v367, 7
      %v369 = vsub.s32 %v366, %v368
      %v370 = vrot.slane %v362, %v369
      %372 = vset.pattern.permute.xlu0 0
      %373 = vperm.xlu0 %372, %v240
      %v374 = vpop.permute.xlu0 %373
      %v377 = vunpack.c.l.s4 839922192
      %v378 = vunpack.c.0.s8 %v377
      %v379 = vlaneseq
      %v380 = vshrl.u32 %v379, 7
      %v381 = vsub.s32 %v378, %v380
      %v382 = vrot.slane %v374, %v381
      %384 = vset.pattern.permute.xlu0 0
      %385 = vperm.xlu0 %384, %v241
      %v386 = vpop.permute.xlu0 %385
      %v389 = vunpack.c.l.s4 839922192
      %v390 = vunpack.c.0.s8 %v389
      %v391 = vlaneseq
      %v392 = vshrl.u32 %v391, 7
      %v393 = vsub.s32 %v390, %v392
      %v394 = vrot.slane %v386, %v393
      %396 = vset.pattern.permute.xlu0 0
      %397 = vperm.xlu0 %396, %v242
      %v398 = vpop.permute.xlu0 %397
      %v401 = vunpack.c.l.s4 839922192
      %v402 = vunpack.c.0.s8 %v401
      %v403 = vlaneseq
      %v404 = vshrl.u32 %v403, 7
      %v405 = vsub.s32 %v402, %v404
      %v406 = vrot.slane %v398, %v405
      %408 = vset.pattern.permute.xlu0 0
      %409 = vperm.xlu0 %408, %v243
      %v410 = vpop.permute.xlu0 %409
      %v413 = vunpack.c.l.s4 839922192
      %v414 = vunpack.c.0.s8 %v413
      %v415 = vlaneseq
      %v416 = vshrl.u32 %v415, 7
      %v417 = vsub.s32 %v414, %v416
      %v418 = vrot.slane %v410, %v417
      %420 = vset.pattern.permute.xlu0 0
      %421 = vperm.xlu0 %420, %v244
      %v422 = vpop.permute.xlu0 %421
      %v425 = vunpack.c.l.s4 839922192
      %v426 = vunpack.c.0.s8 %v425
      %v427 = vlaneseq
      %v428 = vshrl.u32 %v427, 7
      %v429 = vsub.s32 %v426, %v428
      %v430 = vrot.slane %v422, %v429
      %432 = vset.pattern.permute.xlu0 0
      %433 = vperm.xlu0 %432, %v245
      %v434 = vpop.permute.xlu0 %433
      %v437 = vunpack.c.l.s4 839922192
      %v438 = vunpack.c.0.s8 %v437
      %v439 = vlaneseq
      %v440 = vshrl.u32 %v439, 7
      %v441 = vsub.s32 %v438, %v440
      %v442 = vrot.slane %v434, %v441
      %444 = vset.pattern.permute.xlu0 0
      %445 = vperm.xlu0 %444, %v246
      %v446 = vpop.permute.xlu0 %445
      %v449 = vunpack.c.l.s4 839922192
      %v450 = vunpack.c.0.s8 %v449
      %v451 = vlaneseq
      %v452 = vshrl.u32 %v451, 7
      %v453 = vsub.s32 %v450, %v452
      %v454 = vrot.slane %v446, %v453
      %456 = vset.pattern.permute.xlu0 0
      %457 = vperm.xlu0 %456, %v247
      %v458 = vpop.permute.xlu0 %457
      %v461 = vunpack.c.l.s4 839922192
      %v462 = vunpack.c.0.s8 %v461
      %v463 = vlaneseq
      %v464 = vshrl.u32 %v463, 7
      %v465 = vsub.s32 %v462, %v464
      %v466 = vrot.slane %v458, %v465
      %468 = vset.pattern.permute.xlu0 0
      %469 = vperm.xlu0 %468, %v248
      %v470 = vpop.permute.xlu0 %469
      %v473 = vunpack.c.l.s4 839922192
      %v474 = vunpack.c.0.s8 %v473
      %v475 = vlaneseq
      %v476 = vshrl.u32 %v475, 7
      %v477 = vsub.s32 %v474, %v476
      %v478 = vrot.slane %v470, %v477
      %480 = vset.pattern.permute.xlu0 0
      %481 = vperm.xlu0 %480, %v249
      %v482 = vpop.permute.xlu0 %481
      %v485 = vunpack.c.l.s4 839922192
      %v486 = vunpack.c.0.s8 %v485
      %v487 = vlaneseq
      %v488 = vshrl.u32 %v487, 7
      %v489 = vsub.s32 %v486, %v488
      %v490 = vrot.slane %v482, %v489
      %492 = vset.pattern.permute.xlu0 0
      %493 = vperm.xlu0 %492, %v250
      %v494 = vpop.permute.xlu0 %493
      %v497 = vunpack.c.l.s4 839922192
      %v498 = vunpack.c.0.s8 %v497
      %v499 = vlaneseq
      %v500 = vshrl.u32 %v499, 7
      %v501 = vsub.s32 %v498, %v500
      %v502 = vrot.slane %v494, %v501
      %504 = vset.pattern.permute.xlu0 0
      %505 = vperm.xlu0 %504, %v251
      %v506 = vpop.permute.xlu0 %505
      %v509 = vunpack.c.l.s4 839922192
      %v510 = vunpack.c.0.s8 %v509
      %v511 = vlaneseq
      %v512 = vshrl.u32 %v511, 7
      %v513 = vsub.s32 %v510, %v512
      %v514 = vrot.slane %v506, %v513
      %516 = vset.pattern.permute.xlu0 0
      %517 = vperm.xlu0 %516, %v252
      %v518 = vpop.permute.xlu0 %517
      %v521 = vunpack.c.l.s4 839922192
      %v522 = vunpack.c.0.s8 %v521
      %v523 = vlaneseq
      %v524 = vshrl.u32 %v523, 7
      %v525 = vsub.s32 %v522, %v524
      %v526 = vrot.slane %v518, %v525
      %528 = vset.pattern.permute.xlu0 0
      %529 = vperm.xlu0 %528, %v253
      %v530 = vpop.permute.xlu0 %529
      %v533 = vunpack.c.l.s4 839922192
      %v534 = vunpack.c.0.s8 %v533
      %v535 = vlaneseq
      %v536 = vshrl.u32 %v535, 7
      %v537 = vsub.s32 %v534, %v536
      %v538 = vrot.slane %v530, %v537
      %540 = vset.pattern.permute.xlu0 0
      %541 = vperm.xlu0 %540, %v254
      %v542 = vpop.permute.xlu0 %541
      %v545 = vunpack.c.l.s4 839922192
      %v546 = vunpack.c.0.s8 %v545
      %v547 = vlaneseq
      %v548 = vshrl.u32 %v547, 7
      %v549 = vsub.s32 %v546, %v548
      %v550 = vrot.slane %v542, %v549
      %552 = vset.pattern.permute.xlu0 0
      %553 = vperm.xlu0 %552, %v255
      %v554 = vpop.permute.xlu0 %553
      %v557 = vunpack.c.l.s4 839922192
      %v558 = vunpack.c.0.s8 %v557
      %v559 = vlaneseq
      %v560 = vshrl.u32 %v559, 7
      %v561 = vsub.s32 %v558, %v560
      %v562 = vrot.slane %v554, %v561
      %564 = vset.pattern.permute.xlu0 0
      %565 = vperm.xlu0 %564, %v256
      %v566 = vpop.permute.xlu0 %565
      %v569 = vunpack.c.l.s4 839922192
      %v570 = vunpack.c.0.s8 %v569
      %v571 = vlaneseq
      %v572 = vshrl.u32 %v571, 7
      %v573 = vsub.s32 %v570, %v572
      %v574 = vrot.slane %v566, %v573
      %576 = vset.pattern.permute.xlu0 0
      %577 = vperm.xlu0 %576, %v257
      %v578 = vpop.permute.xlu0 %577
      %v581 = vunpack.c.l.s4 839922192
      %v582 = vunpack.c.0.s8 %v581
      %v583 = vlaneseq
      %v584 = vshrl.u32 %v583, 7
      %v585 = vsub.s32 %v582, %v584
      %v586 = vrot.slane %v578, %v585
      %588 = vset.pattern.permute.xlu0 0
      %589 = vperm.xlu0 %588, %v258
      %v590 = vpop.permute.xlu0 %589
      %v593 = vunpack.c.l.s4 839922192
      %v594 = vunpack.c.0.s8 %v593
      %v595 = vlaneseq
      %v596 = vshrl.u32 %v595, 7
      %v597 = vsub.s32 %v594, %v596
      %v598 = vrot.slane %v590, %v597
      %600 = vset.pattern.permute.xlu0 0
      %601 = vperm.xlu0 %600, %v259
      %v602 = vpop.permute.xlu0 %601
      %v605 = vunpack.c.l.s4 839922192
      %v606 = vunpack.c.0.s8 %v605
      %v607 = vlaneseq
      %v608 = vshrl.u32 %v607, 7
      %v609 = vsub.s32 %v606, %v608
      %v610 = vrot.slane %v602, %v609
      %612 = vset.pattern.permute.xlu0 0
      %613 = vperm.xlu0 %612, %v260
      %v614 = vpop.permute.xlu0 %613
      %v617 = vunpack.c.l.s4 839922192
      %v618 = vunpack.c.0.s8 %v617
      %v619 = vlaneseq
      %v620 = vshrl.u32 %v619, 7
      %v621 = vsub.s32 %v618, %v620
      %v622 = vrot.slane %v614, %v621
      %624 = vset.pattern.permute.xlu0 0
      %625 = vperm.xlu0 %624, %v261
      %v626 = vpop.permute.xlu0 %625
      %v629 = vunpack.c.l.s4 839922192
      %v630 = vunpack.c.0.s8 %v629
      %v631 = vlaneseq
      %v632 = vshrl.u32 %v631, 7
      %v633 = vsub.s32 %v630, %v632
      %v634 = vrot.slane %v626, %v633
      %636 = vset.pattern.permute.xlu0 0
      %637 = vperm.xlu0 %636, %v262
      %v638 = vpop.permute.xlu0 %637
      %v641 = vunpack.c.l.s4 839922192
      %v642 = vunpack.c.0.s8 %v641
      %v643 = vlaneseq
      %v644 = vshrl.u32 %v643, 7
      %v645 = vsub.s32 %v642, %v644
      %v646 = vrot.slane %v638, %v645
      %v647 = vmul.bf16 %v199, %v274
      %v648 = vmul.bf16 %v200, %v286
      %v649 = vmul.bf16 %v201, %v298
      %v650 = vmul.bf16 %v202, %v310
      %v651 = vmul.bf16 %v203, %v322
      %v652 = vmul.bf16 %v204, %v334
      %v653 = vmul.bf16 %v205, %v346
      %v654 = vmul.bf16 %v206, %v358
      %v655 = vmul.bf16 %v207, %v370
      %v656 = vmul.bf16 %v208, %v382
      %v657 = vmul.bf16 %v209, %v394
      %v658 = vmul.bf16 %v210, %v406
      %v659 = vmul.bf16 %v211, %v418
      %v660 = vmul.bf16 %v212, %v430
      %v661 = vmul.bf16 %v213, %v442
      %v662 = vmul.bf16 %v214, %v454
      %v663 = vmul.bf16 %v215, %v466
      %v664 = vmul.bf16 %v216, %v478
      %v665 = vmul.bf16 %v217, %v490
      %v666 = vmul.bf16 %v218, %v502
      %v667 = vmul.bf16 %v219, %v514
      %v668 = vmul.bf16 %v220, %v526
      %v669 = vmul.bf16 %v221, %v538
      %v670 = vmul.bf16 %v222, %v550
      %v671 = vmul.bf16 %v223, %v562
      %v672 = vmul.bf16 %v224, %v574
      %v673 = vmul.bf16 %v225, %v586
      %v674 = vmul.bf16 %v226, %v598
      %v675 = vmul.bf16 %v227, %v610
      %v676 = vmul.bf16 %v228, %v622
      %v677 = vmul.bf16 %v229, %v634
      %v678 = vmul.bf16 %v230, %v646
      %v679 = vld [vmem:[%s1] sm:$0xf]
      %v680 = vld [vmem:[%s1 + $0x4] sm:$0xf]
      %v681 = vld [vmem:[%s1 + $0x8] sm:$0xf]
      %v682 = vld [vmem:[%s1 + $0xc] sm:$0xf]
      %v683 = vld [vmem:[%s1 + $0x10] sm:$0xf]
      %v684 = vld [vmem:[%s1 + $0x14] sm:$0xf]
      %v685 = vld [vmem:[%s1 + $0x18] sm:$0xf]
      %v686 = vld [vmem:[%s1 + $0x1c] sm:$0xf]
      %v687 = vld [vmem:[%s1 + $0x20] sm:$0xf]
      %v688 = vld [vmem:[%s1 + $0x24] sm:$0xf]
      %v689 = vld [vmem:[%s1 + $0x28] sm:$0xf]
      %v690 = vld [vmem:[%s1 + $0x2c] sm:$0xf]
      %v691 = vld [vmem:[%s192] sm:$0xf]
      %v692 = vld [vmem:[%s192 + $0x4] sm:$0xf]
      %v693 = vld [vmem:[%s192 + $0x8] sm:$0xf]
      %v694 = vld [vmem:[%s192 + $0xc] sm:$0xf]
      %v695 = vld [vmem:[%s192 + $0x10] sm:$0xf]
      %v696 = vld [vmem:[%s192 + $0x14] sm:$0xf]
      %v697 = vld [vmem:[%s192 + $0x18] sm:$0xf]
      %v698 = vld [vmem:[%s192 + $0x1c] sm:$0xf]
      %v699 = vld [vmem:[%s192 + $0x20] sm:$0xf]
      %v700 = vld [vmem:[%s192 + $0x24] sm:$0xf]
      %v701 = vld [vmem:[%s192 + $0x28] sm:$0xf]
      %v702 = vld [vmem:[%s192 + $0x2c] sm:$0xf]
      %v703 = vld [vmem:[%s192 + $0x30] sm:$0xf]
      %v704 = vld [vmem:[%s192 + $0x34] sm:$0xf]
      %v705 = vld [vmem:[%s192 + $0x38] sm:$0xf]
      %v706 = vld [vmem:[%s192 + $0x3c] sm:$0xf]
      %v707 = vld [vmem:[%s192 + $0x40] sm:$0xf]
      %v708 = vld [vmem:[%s192 + $0x44] sm:$0xf]
      %v709 = vld [vmem:[%s192 + $0x48] sm:$0xf]
      %v710 = vld [vmem:[%s192 + $0x4c] sm:$0xf]
      %v711 = vld [vmem:[%s192 + $0x50] sm:$0xf]
      %v712 = vld [vmem:[%s192 + $0x54] sm:$0xf]
      %v713 = vld [vmem:[%s192 + $0x58] sm:$0xf]
      %v714 = vld [vmem:[%s192 + $0x5c] sm:$0xf]
      %v715 = vld [vmem:[%s192 + $0x60] sm:$0xf]
      %v716 = vld [vmem:[%s192 + $0x64] sm:$0xf]
      %v717 = vld [vmem:[%s192 + $0x68] sm:$0xf]
      %v718 = vld [vmem:[%s192 + $0x6c] sm:$0xf]
      %v719 = vld [vmem:[%s192 + $0x70] sm:$0xf]
      %v720 = vld [vmem:[%s192 + $0x74] sm:$0xf]
      %v721 = vld [vmem:[%s192 + $0x78] sm:$0xf]
      %v722 = vld [vmem:[%s192 + $0x7c] sm:$0xf]
      %v723 = vld [vmem:[%s192 + $0x80] sm:$0x1]
      %s724 = scalar_lea.vmem %s1, 48
      %v725 = vld [vmem:[%s724] sm:$0xf]
      %v726 = vld [vmem:[%s724 + $0x4] sm:$0xf]
      %v727 = vld [vmem:[%s724 + $0x8] sm:$0xf]
      %v728 = vld [vmem:[%s724 + $0xc] sm:$0xf]
      %v729 = vld [vmem:[%s724 + $0x10] sm:$0xf]
      %v730 = vld [vmem:[%s724 + $0x14] sm:$0xf]
      %v731 = vld [vmem:[%s724 + $0x18] sm:$0xf]
      %v732 = vld [vmem:[%s724 + $0x1c] sm:$0xf]
      %v733 = vld [vmem:[%s724 + $0x20] sm:$0xf]
      %v734 = vld [vmem:[%s724 + $0x24] sm:$0xf]
      %v735 = vld [vmem:[%s724 + $0x28] sm:$0xf]
      %v736 = vld [vmem:[%s724 + $0x2c] sm:$0xf]
      %v770 = vunpack.c.l.b16 %v691
      %v771 = vunpack.c.l.b16 %v692
      %v772 = vunpack.c.l.b16 %v693
      %v773 = vunpack.c.l.b16 %v694
      %v774 = vunpack.c.l.b16 %v695
      %v775 = vunpack.c.l.b16 %v696
      %v776 = vunpack.c.l.b16 %v697
      %v777 = vunpack.c.l.b16 %v698
      %v778 = vunpack.c.l.b16 %v699
      %v779 = vunpack.c.l.b16 %v700
      %v780 = vunpack.c.l.b16 %v701
      %v781 = vunpack.c.l.b16 %v702
      %v782 = vunpack.c.l.b16 %v703
      %v783 = vunpack.c.l.b16 %v704
      %v784 = vunpack.c.l.b16 %v705
      %v785 = vunpack.c.l.b16 %v706
      %v786 = vunpack.c.l.b16 %v707
      %v787 = vunpack.c.l.b16 %v708
      %v788 = vunpack.c.l.b16 %v709
      %v789 = vunpack.c.l.b16 %v710
      %v790 = vunpack.c.l.b16 %v711
      %v791 = vunpack.c.l.b16 %v712
      %v792 = vunpack.c.l.b16 %v713
      %v793 = vunpack.c.l.b16 %v714
      %v794 = vunpack.c.l.b16 %v715
      %v795 = vunpack.c.l.b16 %v716
      %v796 = vunpack.c.l.b16 %v717
      %v797 = vunpack.c.l.b16 %v718
      %v798 = vunpack.c.l.b16 %v719
      %v799 = vunpack.c.l.b16 %v720
      %v800 = vunpack.c.l.b16 %v721
      %v801 = vunpack.c.l.b16 %v722
      %v802 = vunpack.c.l.b16 %v723
      %v803 = vpack.c.b16 %v771, %v770
      %v804 = vpack.c.b16 %v773, %v772
      %v805 = vpack.c.b16 %v775, %v774
      %v806 = vpack.c.b16 %v777, %v776
      %v807 = vpack.c.b16 %v779, %v778
      %v808 = vpack.c.b16 %v781, %v780
      %v809 = vpack.c.b16 %v783, %v782
      %v810 = vpack.c.b16 %v785, %v784
      %v811 = vpack.c.b16 %v787, %v786
      %v812 = vpack.c.b16 %v789, %v788
      %v813 = vpack.c.b16 %v791, %v790
      %v814 = vpack.c.b16 %v793, %v792
      %v815 = vpack.c.b16 %v795, %v794
      %v816 = vpack.c.b16 %v797, %v796
      %v817 = vpack.c.b16 %v799, %v798
      %v818 = vpack.c.b16 %v801, %v800
      %v819 = vpack.c.b16 %v802, %v802
      %vm820 = vsmask.f32 7424
      %v822 = vshrl.u32 %v803, 16
      %v824 = vshll.u32 %v803, 16
      %v826 = vrot.slane %v824, 1
      %v827 = vor.u32 %v822, %v826
      %v829 = vshll.u32 %v804, 16
      %v831 = vrot.slane %v829, 1
      %v832 = vsel %vm820, %v827, %v831
      %v833 = vshrl.u32 %v804, 16
      %v835 = vor.u32 %v833, %v831
      %v837 = vshll.u32 %v805, 16
      %v839 = vrot.slane %v837, 1
      %v840 = vsel %vm820, %v835, %v839
      %v841 = vshrl.u32 %v805, 16
      %v843 = vor.u32 %v841, %v839
      %v845 = vshll.u32 %v806, 16
      %v847 = vrot.slane %v845, 1
      %v848 = vsel %vm820, %v843, %v847
      %v849 = vshrl.u32 %v806, 16
      %v851 = vor.u32 %v849, %v847
      %v853 = vshll.u32 %v807, 16
      %v855 = vrot.slane %v853, 1
      %v856 = vsel %vm820, %v851, %v855
      %v857 = vshrl.u32 %v807, 16
      %v859 = vor.u32 %v857, %v855
      %v861 = vshll.u32 %v808, 16
      %v863 = vrot.slane %v861, 1
      %v864 = vsel %vm820, %v859, %v863
      %v865 = vshrl.u32 %v808, 16
      %v867 = vor.u32 %v865, %v863
      %v869 = vshll.u32 %v809, 16
      %v871 = vrot.slane %v869, 1
      %v872 = vsel %vm820, %v867, %v871
      %v873 = vshrl.u32 %v809, 16
      %v875 = vor.u32 %v873, %v871
      %v877 = vshll.u32 %v810, 16
      %v879 = vrot.slane %v877, 1
      %v880 = vsel %vm820, %v875, %v879
      %v881 = vshrl.u32 %v810, 16
      %v883 = vor.u32 %v881, %v879
      %v885 = vshll.u32 %v811, 16
      %v887 = vrot.slane %v885, 1
      %v888 = vsel %vm820, %v883, %v887
      %v889 = vshrl.u32 %v811, 16
      %v891 = vor.u32 %v889, %v887
      %v893 = vshll.u32 %v812, 16
      %v895 = vrot.slane %v893, 1
      %v896 = vsel %vm820, %v891, %v895
      %v897 = vshrl.u32 %v812, 16
      %v899 = vor.u32 %v897, %v895
      %v901 = vshll.u32 %v813, 16
      %v903 = vrot.slane %v901, 1
      %v904 = vsel %vm820, %v899, %v903
      %v905 = vshrl.u32 %v813, 16
      %v907 = vor.u32 %v905, %v903
      %v909 = vshll.u32 %v814, 16
      %v911 = vrot.slane %v909, 1
      %v912 = vsel %vm820, %v907, %v911
      %v913 = vshrl.u32 %v814, 16
      %v915 = vor.u32 %v913, %v911
      %v917 = vshll.u32 %v815, 16
      %v919 = vrot.slane %v917, 1
      %v920 = vsel %vm820, %v915, %v919
      %v921 = vshrl.u32 %v815, 16
      %v923 = vor.u32 %v921, %v919
      %v925 = vshll.u32 %v816, 16
      %v927 = vrot.slane %v925, 1
      %v928 = vsel %vm820, %v923, %v927
      %v929 = vshrl.u32 %v816, 16
      %v931 = vor.u32 %v929, %v927
      %v933 = vshll.u32 %v817, 16
      %v935 = vrot.slane %v933, 1
      %v936 = vsel %vm820, %v931, %v935
      %v937 = vshrl.u32 %v817, 16
      %v939 = vor.u32 %v937, %v935
      %v941 = vshll.u32 %v818, 16
      %v943 = vrot.slane %v941, 1
      %v944 = vsel %vm820, %v939, %v943
      %v945 = vshrl.u32 %v818, 16
      %v947 = vor.u32 %v945, %v943
      %v949 = vshll.u32 %v819, 16
      %v951 = vrot.slane %v949, 1
      %v952 = vsel %vm820, %v947, %v951
      %v965 = vunpack.c.l.b16 %v725
      %v966 = vunpack.c.l.b16 %v726
      %v967 = vunpack.c.l.b16 %v727
      %v968 = vunpack.c.l.b16 %v728
      %v969 = vunpack.c.l.b16 %v729
      %v970 = vunpack.c.l.b16 %v730
      %v971 = vunpack.c.l.b16 %v731
      %v972 = vunpack.c.l.b16 %v732
      %v973 = vunpack.c.l.b16 %v733
      %v974 = vunpack.c.l.b16 %v734
      %v975 = vunpack.c.l.b16 %v735
      %v976 = vunpack.c.l.b16 %v736
      %v977 = vpack.c.b16 %v966, %v965
      %v978 = vpack.c.b16 %v968, %v967
      %v979 = vpack.c.b16 %v970, %v969
      %v980 = vpack.c.b16 %v972, %v971
      %v981 = vpack.c.b16 %v974, %v973
      %v982 = vpack.c.b16 %v976, %v975
      %vm989 = vcmask 785408
      %v991 = vsel %vm989, %v832, 0
      %v994 = vsel %vm989, %v840, 0
      %v997 = vsel %vm989, %v848, 0
      %v1000 = vsel %vm989, %v856, 0
      %v1003 = vsel %vm989, %v864, 0
      %v1006 = vsel %vm989, %v872, 0
      %v1009 = vsel %vm989, %v880, 0
      %v1012 = vsel %vm989, %v888, 0
      %v1015 = vsel %vm989, %v896, 0
      %v1018 = vsel %vm989, %v904, 0
      %v1021 = vsel %vm989, %v912, 0
      %v1024 = vsel %vm989, %v920, 0
      %v1027 = vsel %vm989, %v928, 0
      %v1030 = vsel %vm989, %v936, 0
      %v1033 = vsel %vm989, %v944, 0
      %v1036 = vsel %vm989, %v952, 0
      %1038 = vmatprep.subr.bf16.mxu0 0
      %1039 = vmatpush1.bf16.msra.mxu0 0
      %1040 = vmatprep.subr.bf16.mxu0 0
      %1041 = vmatpush1.bf16.msra.mxu0 0
      %1042 = vmatprep.subr.bf16.mxu0 0
      %1043 = vmatpush1.bf16.msra.mxu0 %v982
      %1044 = vmatprep.subr.bf16.mxu0 0
      %1045 = vmatpush1.bf16.msra.mxu0 %v981
      %1046 = vmatprep.subr.bf16.mxu0 0
      %1047 = vmatpush1.bf16.msra.mxu0 %v980
      %1048 = vmatprep.subr.bf16.mxu0 0
      %1049 = vmatpush1.bf16.msra.mxu0 %v979
      %1050 = vmatprep.subr.bf16.mxu0 0
      %1051 = vmatpush1.bf16.msra.mxu0 %v978
      %1052 = vmatprep.subr.bf16.mxu0 0
      %1053 = vmatpush1.bf16.msra.mxu0 %v977
      %1054 = vmatprep.subr.bf16.mxu0 0
      %1055 = vmatpush2.bf16.msra.mxu0 0
      %1056 = vmatprep.subr.bf16.mxu0 0
      %1057 = vmatpush2.bf16.msra.mxu0 0
      %1058 = vmatprep.subr.bf16.mxu0 0
      %1059 = vmatpush2.bf16.msra.mxu0 0
      %1060 = vmatprep.subr.bf16.mxu0 0
      %1061 = vmatpush2.bf16.msra.mxu0 0
      %1062 = vmatprep.subr.bf16.mxu0 0
      %1063 = vmatpush2.bf16.msra.mxu0 0
      %1064 = vmatprep.subr.bf16.mxu0 0
      %1065 = vmatpush2.bf16.msra.mxu0 0
      %1066 = vmatprep.subr.bf16.mxu0 0
      %1067 = vmatpush2.bf16.msra.mxu0 0
      %1068 = vmatprep.subr.bf16.mxu0 0
      %1069 = vmatpush2.bf16.msra.mxu0 0
      %1070 = vmatprep.mubr.bf16.mxu0 0
      %1071 = vmatmul.mubr.bf16.gmra.mxu0 %v991
      %v1072 = vpop.f32.mrf.mxu0
      %v1073 = vadd.f32 0.0, %v1072
      %v1074 = vpop.f32.mrf.mxu0
      %v1075 = vpop.f32.mrf.mxu0
      %v1076 = vadd.f32 0.0, %v1075
      %v1077 = vpop.f32.mrf.mxu0
      %1078 = vmatprep.mubr.bf16.mxu0 0
      %1079 = vmatmul.mubr.bf16.gmra.mxu0 %v994
      %v1080 = vpop.f32.mrf.mxu0
      %v1081 = vadd.f32 0.0, %v1080
      %v1082 = vpop.f32.mrf.mxu0
      %v1083 = vpop.f32.mrf.mxu0
      %v1084 = vadd.f32 0.0, %v1083
      %v1085 = vpop.f32.mrf.mxu0
      %1086 = vmatprep.mubr.bf16.mxu0 0
      %1087 = vmatmul.mubr.bf16.gmra.mxu0 %v997
      %v1088 = vpop.f32.mrf.mxu0
      %v1089 = vadd.f32 0.0, %v1088
      %v1090 = vpop.f32.mrf.mxu0
      %v1091 = vpop.f32.mrf.mxu0
      %v1092 = vadd.f32 0.0, %v1091
      %v1093 = vpop.f32.mrf.mxu0
      %1094 = vmatprep.mubr.bf16.mxu0 0
      %1095 = vmatmul.mubr.bf16.gmra.mxu0 %v1000
      %v1096 = vpop.f32.mrf.mxu0
      %v1097 = vadd.f32 0.0, %v1096
      %v1098 = vpop.f32.mrf.mxu0
      %v1099 = vpop.f32.mrf.mxu0
      %v1100 = vadd.f32 0.0, %v1099
      %v1101 = vpop.f32.mrf.mxu0
      %1102 = vmatprep.mubr.bf16.mxu0 0
      %1103 = vmatmul.mubr.bf16.gmra.mxu0 %v1003
      %v1104 = vpop.f32.mrf.mxu0
      %v1105 = vadd.f32 0.0, %v1104
      %v1106 = vpop.f32.mrf.mxu0
      %v1107 = vpop.f32.mrf.mxu0
      %v1108 = vadd.f32 0.0, %v1107
      %v1109 = vpop.f32.mrf.mxu0
      %1110 = vmatprep.mubr.bf16.mxu0 0
      %1111 = vmatmul.mubr.bf16.gmra.mxu0 %v1006
      %v1112 = vpop.f32.mrf.mxu0
      %v1113 = vadd.f32 0.0, %v1112
      %v1114 = vpop.f32.mrf.mxu0
      %v1115 = vpop.f32.mrf.mxu0
      %v1116 = vadd.f32 0.0, %v1115
      %v1117 = vpop.f32.mrf.mxu0
      %1118 = vmatprep.mubr.bf16.mxu0 0
      %1119 = vmatmul.mubr.bf16.gmra.mxu0 %v1009
      %v1120 = vpop.f32.mrf.mxu0
      %v1121 = vadd.f32 0.0, %v1120
      %v1122 = vpop.f32.mrf.mxu0
      %v1123 = vpop.f32.mrf.mxu0
      %v1124 = vadd.f32 0.0, %v1123
      %v1125 = vpop.f32.mrf.mxu0
      %1126 = vmatprep.mubr.bf16.mxu0 0
      %1127 = vmatmul.mubr.bf16.gmra.mxu0 %v1012
      %v1128 = vpop.f32.mrf.mxu0
      %v1129 = vadd.f32 0.0, %v1128
      %v1130 = vpop.f32.mrf.mxu0
      %v1131 = vpop.f32.mrf.mxu0
      %v1132 = vadd.f32 0.0, %v1131
      %v1133 = vpop.f32.mrf.mxu0
      %1134 = vmatprep.mubr.bf16.mxu0 0
      %1135 = vmatmul.mubr.bf16.gmra.mxu0 %v1015
      %v1136 = vpop.f32.mrf.mxu0
      %v1137 = vadd.f32 0.0, %v1136
      %v1138 = vpop.f32.mrf.mxu0
      %v1139 = vpop.f32.mrf.mxu0
      %v1140 = vadd.f32 0.0, %v1139
      %v1141 = vpop.f32.mrf.mxu0
      %1142 = vmatprep.mubr.bf16.mxu0 0
      %1143 = vmatmul.mubr.bf16.gmra.mxu0 %v1018
      %v1144 = vpop.f32.mrf.mxu0
      %v1145 = vadd.f32 0.0, %v1144
      %v1146 = vpop.f32.mrf.mxu0
      %v1147 = vpop.f32.mrf.mxu0
      %v1148 = vadd.f32 0.0, %v1147
      %v1149 = vpop.f32.mrf.mxu0
      %1150 = vmatprep.mubr.bf16.mxu0 0
      %1151 = vmatmul.mubr.bf16.gmra.mxu0 %v1021
      %v1152 = vpop.f32.mrf.mxu0
      %v1153 = vadd.f32 0.0, %v1152
      %v1154 = vpop.f32.mrf.mxu0
      %v1155 = vpop.f32.mrf.mxu0
      %v1156 = vadd.f32 0.0, %v1155
      %v1157 = vpop.f32.mrf.mxu0
      %1158 = vmatprep.mubr.bf16.mxu0 0
      %1159 = vmatmul.mubr.bf16.gmra.mxu0 %v1024
      %v1160 = vpop.f32.mrf.mxu0
      %v1161 = vadd.f32 0.0, %v1160
      %v1162 = vpop.f32.mrf.mxu0
      %v1163 = vpop.f32.mrf.mxu0
      %v1164 = vadd.f32 0.0, %v1163
      %v1165 = vpop.f32.mrf.mxu0
      %1166 = vmatprep.mubr.bf16.mxu0 0
      %1167 = vmatmul.mubr.bf16.gmra.mxu0 %v1027
      %v1168 = vpop.f32.mrf.mxu0
      %v1169 = vadd.f32 0.0, %v1168
      %v1170 = vpop.f32.mrf.mxu0
      %v1171 = vpop.f32.mrf.mxu0
      %v1172 = vadd.f32 0.0, %v1171
      %v1173 = vpop.f32.mrf.mxu0
      %1174 = vmatprep.mubr.bf16.mxu0 0
      %1175 = vmatmul.mubr.bf16.gmra.mxu0 %v1030
      %v1176 = vpop.f32.mrf.mxu0
      %v1177 = vadd.f32 0.0, %v1176
      %v1178 = vpop.f32.mrf.mxu0
      %v1179 = vpop.f32.mrf.mxu0
      %v1180 = vadd.f32 0.0, %v1179
      %v1181 = vpop.f32.mrf.mxu0
      %1182 = vmatprep.mubr.bf16.mxu0 0
      %1183 = vmatmul.mubr.bf16.gmra.mxu0 %v1033
      %v1184 = vpop.f32.mrf.mxu0
      %v1185 = vadd.f32 0.0, %v1184
      %v1186 = vpop.f32.mrf.mxu0
      %v1187 = vpop.f32.mrf.mxu0
      %v1188 = vadd.f32 0.0, %v1187
      %v1189 = vpop.f32.mrf.mxu0
      %1190 = vmatprep.mubr.bf16.mxu0 0
      %1191 = vmatmul.mubr.bf16.gmra.mxu0 %v1036
      %v1192 = vpop.f32.mrf.mxu0
      %v1193 = vadd.f32 0.0, %v1192
      %v1194 = vpop.f32.mrf.mxu0
      %v1195 = vpop.f32.mrf.mxu0
      %v1196 = vadd.f32 0.0, %v1195
      %v1197 = vpop.f32.mrf.mxu0
      %1198 = vdwg.mxu0
      %v1231 = vunpack.c.l.b16 %v647
      %v1232 = vunpack.c.l.b16 %v648
      %v1233 = vunpack.c.l.b16 %v649
      %v1234 = vunpack.c.l.b16 %v650
      %v1235 = vunpack.c.l.b16 %v651
      %v1236 = vunpack.c.l.b16 %v652
      %v1237 = vunpack.c.l.b16 %v653
      %v1238 = vunpack.c.l.b16 %v654
      %v1239 = vunpack.c.l.b16 %v655
      %v1240 = vunpack.c.l.b16 %v656
      %v1241 = vunpack.c.l.b16 %v657
      %v1242 = vunpack.c.l.b16 %v658
      %v1243 = vunpack.c.l.b16 %v659
      %v1244 = vunpack.c.l.b16 %v660
      %v1245 = vunpack.c.l.b16 %v661
      %v1246 = vunpack.c.l.b16 %v662
      %v1247 = vunpack.c.l.b16 %v663
      %v1248 = vunpack.c.l.b16 %v664
      %v1249 = vunpack.c.l.b16 %v665
      %v1250 = vunpack.c.l.b16 %v666
      %v1251 = vunpack.c.l.b16 %v667
      %v1252 = vunpack.c.l.b16 %v668
      %v1253 = vunpack.c.l.b16 %v669
      %v1254 = vunpack.c.l.b16 %v670
      %v1255 = vunpack.c.l.b16 %v671
      %v1256 = vunpack.c.l.b16 %v672
      %v1257 = vunpack.c.l.b16 %v673
      %v1258 = vunpack.c.l.b16 %v674
      %v1259 = vunpack.c.l.b16 %v675
      %v1260 = vunpack.c.l.b16 %v676
      %v1261 = vunpack.c.l.b16 %v677
      %v1262 = vunpack.c.l.b16 %v678
      %v1263 = vpack.c.b16 %v1232, %v1231
      %v1264 = vpack.c.b16 %v1234, %v1233
      %v1265 = vpack.c.b16 %v1236, %v1235
      %v1266 = vpack.c.b16 %v1238, %v1237
      %v1267 = vpack.c.b16 %v1240, %v1239
      %v1268 = vpack.c.b16 %v1242, %v1241
      %v1269 = vpack.c.b16 %v1244, %v1243
      %v1270 = vpack.c.b16 %v1246, %v1245
      %v1271 = vpack.c.b16 %v1248, %v1247
      %v1272 = vpack.c.b16 %v1250, %v1249
      %v1273 = vpack.c.b16 %v1252, %v1251
      %v1274 = vpack.c.b16 %v1254, %v1253
      %v1275 = vpack.c.b16 %v1256, %v1255
      %v1276 = vpack.c.b16 %v1258, %v1257
      %v1277 = vpack.c.b16 %v1260, %v1259
      %v1278 = vpack.c.b16 %v1262, %v1261
      %v1291 = vunpack.c.l.b16 %v679
      %v1292 = vunpack.c.l.b16 %v680
      %v1293 = vunpack.c.l.b16 %v681
      %v1294 = vunpack.c.l.b16 %v682
      %v1295 = vunpack.c.l.b16 %v683
      %v1296 = vunpack.c.l.b16 %v684
      %v1297 = vunpack.c.l.b16 %v685
      %v1298 = vunpack.c.l.b16 %v686
      %v1299 = vunpack.c.l.b16 %v687
      %v1300 = vunpack.c.l.b16 %v688
      %v1301 = vunpack.c.l.b16 %v689
      %v1302 = vunpack.c.l.b16 %v690
      %v1303 = vpack.c.b16 %v1292, %v1291
      %v1304 = vpack.c.b16 %v1294, %v1293
      %v1305 = vpack.c.b16 %v1296, %v1295
      %v1306 = vpack.c.b16 %v1298, %v1297
      %v1307 = vpack.c.b16 %v1300, %v1299
      %v1308 = vpack.c.b16 %v1302, %v1301
      %v1316 = vsel %vm989, %v1263, 0
      %v1319 = vsel %vm989, %v1264, 0
      %v1322 = vsel %vm989, %v1265, 0
      %v1325 = vsel %vm989, %v1266, 0
      %v1328 = vsel %vm989, %v1267, 0
      %v1331 = vsel %vm989, %v1268, 0
      %v1334 = vsel %vm989, %v1269, 0
      %v1337 = vsel %vm989, %v1270, 0
      %v1340 = vsel %vm989, %v1271, 0
      %v1343 = vsel %vm989, %v1272, 0
      %v1346 = vsel %vm989, %v1273, 0
      %v1349 = vsel %vm989, %v1274, 0
      %v1352 = vsel %vm989, %v1275, 0
      %v1355 = vsel %vm989, %v1276, 0
      %v1358 = vsel %vm989, %v1277, 0
      %v1361 = vsel %vm989, %v1278, 0
      %1363 = vmatprep.subr.bf16.mxu0 0
      %1364 = vmatpush1.bf16.msra.mxu0 0
      %1365 = vmatprep.subr.bf16.mxu0 0
      %1366 = vmatpush1.bf16.msra.mxu0 0
      %1367 = vmatprep.subr.bf16.mxu0 0
      %1368 = vmatpush1.bf16.msra.mxu0 %v1308
      %1369 = vmatprep.subr.bf16.mxu0 0
      %1370 = vmatpush1.bf16.msra.mxu0 %v1307
      %1371 = vmatprep.subr.bf16.mxu0 0
      %1372 = vmatpush1.bf16.msra.mxu0 %v1306
      %1373 = vmatprep.subr.bf16.mxu0 0
      %1374 = vmatpush1.bf16.msra.mxu0 %v1305
      %1375 = vmatprep.subr.bf16.mxu0 0
      %1376 = vmatpush1.bf16.msra.mxu0 %v1304
      %1377 = vmatprep.subr.bf16.mxu0 0
      %1378 = vmatpush1.bf16.msra.mxu0 %v1303
      %1379 = vmatprep.subr.bf16.mxu0 0
      %1380 = vmatpush2.bf16.msra.mxu0 0
      %1381 = vmatprep.subr.bf16.mxu0 0
      %1382 = vmatpush2.bf16.msra.mxu0 0
      %1383 = vmatprep.subr.bf16.mxu0 0
      %1384 = vmatpush2.bf16.msra.mxu0 0
      %1385 = vmatprep.subr.bf16.mxu0 0
      %1386 = vmatpush2.bf16.msra.mxu0 0
      %1387 = vmatprep.subr.bf16.mxu0 0
      %1388 = vmatpush2.bf16.msra.mxu0 0
      %1389 = vmatprep.subr.bf16.mxu0 0
      %1390 = vmatpush2.bf16.msra.mxu0 0
      %1391 = vmatprep.subr.bf16.mxu0 0
      %1392 = vmatpush2.bf16.msra.mxu0 0
      %1393 = vmatprep.subr.bf16.mxu0 0
      %1394 = vmatpush2.bf16.msra.mxu0 0
      %1395 = vmatprep.mubr.bf16.mxu0 0
      %1396 = vmatmul.mubr.bf16.gmra.mxu0 %v1316
      %v1397 = vpop.f32.mrf.mxu0
      %v1398 = vadd.f32 %v1073, %v1397
      %v1399 = vpop.f32.mrf.mxu0
      %v1400 = vpop.f32.mrf.mxu0
      %v1401 = vadd.f32 %v1076, %v1400
      %v1402 = vpop.f32.mrf.mxu0
      %1403 = vmatprep.mubr.bf16.mxu0 0
      %1404 = vmatmul.mubr.bf16.gmra.mxu0 %v1319
      %v1405 = vpop.f32.mrf.mxu0
      %v1406 = vadd.f32 %v1081, %v1405
      %v1407 = vpop.f32.mrf.mxu0
      %v1408 = vpop.f32.mrf.mxu0
      %v1409 = vadd.f32 %v1084, %v1408
      %v1410 = vpop.f32.mrf.mxu0
      %1411 = vmatprep.mubr.bf16.mxu0 0
      %1412 = vmatmul.mubr.bf16.gmra.mxu0 %v1322
      %v1413 = vpop.f32.mrf.mxu0
      %v1414 = vadd.f32 %v1089, %v1413
      %v1415 = vpop.f32.mrf.mxu0
      %v1416 = vpop.f32.mrf.mxu0
      %v1417 = vadd.f32 %v1092, %v1416
      %v1418 = vpop.f32.mrf.mxu0
      %1419 = vmatprep.mubr.bf16.mxu0 0
      %1420 = vmatmul.mubr.bf16.gmra.mxu0 %v1325
      %v1421 = vpop.f32.mrf.mxu0
      %v1422 = vadd.f32 %v1097, %v1421
      %v1423 = vpop.f32.mrf.mxu0
      %v1424 = vpop.f32.mrf.mxu0
      %v1425 = vadd.f32 %v1100, %v1424
      %v1426 = vpop.f32.mrf.mxu0
      %1427 = vmatprep.mubr.bf16.mxu0 0
      %1428 = vmatmul.mubr.bf16.gmra.mxu0 %v1328
      %v1429 = vpop.f32.mrf.mxu0
      %v1430 = vadd.f32 %v1105, %v1429
      %v1431 = vpop.f32.mrf.mxu0
      %v1432 = vpop.f32.mrf.mxu0
      %v1433 = vadd.f32 %v1108, %v1432
      %v1434 = vpop.f32.mrf.mxu0
      %1435 = vmatprep.mubr.bf16.mxu0 0
      %1436 = vmatmul.mubr.bf16.gmra.mxu0 %v1331
      %v1437 = vpop.f32.mrf.mxu0
      %v1438 = vadd.f32 %v1113, %v1437
      %v1439 = vpop.f32.mrf.mxu0
      %v1440 = vpop.f32.mrf.mxu0
      %v1441 = vadd.f32 %v1116, %v1440
      %v1442 = vpop.f32.mrf.mxu0
      %1443 = vmatprep.mubr.bf16.mxu0 0
      %1444 = vmatmul.mubr.bf16.gmra.mxu0 %v1334
      %v1445 = vpop.f32.mrf.mxu0
      %v1446 = vadd.f32 %v1121, %v1445
      %v1447 = vpop.f32.mrf.mxu0
      %v1448 = vpop.f32.mrf.mxu0
      %v1449 = vadd.f32 %v1124, %v1448
      %v1450 = vpop.f32.mrf.mxu0
      %1451 = vmatprep.mubr.bf16.mxu0 0
      %1452 = vmatmul.mubr.bf16.gmra.mxu0 %v1337
      %v1453 = vpop.f32.mrf.mxu0
      %v1454 = vadd.f32 %v1129, %v1453
      %v1455 = vpop.f32.mrf.mxu0
      %v1456 = vpop.f32.mrf.mxu0
      %v1457 = vadd.f32 %v1132, %v1456
      %v1458 = vpop.f32.mrf.mxu0
      %1459 = vmatprep.mubr.bf16.mxu0 0
      %1460 = vmatmul.mubr.bf16.gmra.mxu0 %v1340
      %v1461 = vpop.f32.mrf.mxu0
      %v1462 = vadd.f32 %v1137, %v1461
      %v1463 = vpop.f32.mrf.mxu0
      %v1464 = vpop.f32.mrf.mxu0
      %v1465 = vadd.f32 %v1140, %v1464
      %v1466 = vpop.f32.mrf.mxu0
      %1467 = vmatprep.mubr.bf16.mxu0 0
      %1468 = vmatmul.mubr.bf16.gmra.mxu0 %v1343
      %v1469 = vpop.f32.mrf.mxu0
      %v1470 = vadd.f32 %v1145, %v1469
      %v1471 = vpop.f32.mrf.mxu0
      %v1472 = vpop.f32.mrf.mxu0
      %v1473 = vadd.f32 %v1148, %v1472
      %v1474 = vpop.f32.mrf.mxu0
      %1475 = vmatprep.mubr.bf16.mxu0 0
      %1476 = vmatmul.mubr.bf16.gmra.mxu0 %v1346
      %v1477 = vpop.f32.mrf.mxu0
      %v1478 = vadd.f32 %v1153, %v1477
      %v1479 = vpop.f32.mrf.mxu0
      %v1480 = vpop.f32.mrf.mxu0
      %v1481 = vadd.f32 %v1156, %v1480
      %v1482 = vpop.f32.mrf.mxu0
      %1483 = vmatprep.mubr.bf16.mxu0 0
      %1484 = vmatmul.mubr.bf16.gmra.mxu0 %v1349
      %v1485 = vpop.f32.mrf.mxu0
      %v1486 = vadd.f32 %v1161, %v1485
      %v1487 = vpop.f32.mrf.mxu0
      %v1488 = vpop.f32.mrf.mxu0
      %v1489 = vadd.f32 %v1164, %v1488
      %v1490 = vpop.f32.mrf.mxu0
      %1491 = vmatprep.mubr.bf16.mxu0 0
      %1492 = vmatmul.mubr.bf16.gmra.mxu0 %v1352
      %v1493 = vpop.f32.mrf.mxu0
      %v1494 = vadd.f32 %v1169, %v1493
      %v1495 = vpop.f32.mrf.mxu0
      %v1496 = vpop.f32.mrf.mxu0
      %v1497 = vadd.f32 %v1172, %v1496
      %v1498 = vpop.f32.mrf.mxu0
      %1499 = vmatprep.mubr.bf16.mxu0 0
      %1500 = vmatmul.mubr.bf16.gmra.mxu0 %v1355
      %v1501 = vpop.f32.mrf.mxu0
      %v1502 = vadd.f32 %v1177, %v1501
      %v1503 = vpop.f32.mrf.mxu0
      %v1504 = vpop.f32.mrf.mxu0
      %v1505 = vadd.f32 %v1180, %v1504
      %v1506 = vpop.f32.mrf.mxu0
      %1507 = vmatprep.mubr.bf16.mxu0 0
      %1508 = vmatmul.mubr.bf16.gmra.mxu0 %v1358
      %v1509 = vpop.f32.mrf.mxu0
      %v1510 = vadd.f32 %v1185, %v1509
      %v1511 = vpop.f32.mrf.mxu0
      %v1512 = vpop.f32.mrf.mxu0
      %v1513 = vadd.f32 %v1188, %v1512
      %v1514 = vpop.f32.mrf.mxu0
      %1515 = vmatprep.mubr.bf16.mxu0 0
      %1516 = vmatmul.mubr.bf16.gmra.mxu0 %v1361
      %v1517 = vpop.f32.mrf.mxu0
      %v1518 = vadd.f32 %v1193, %v1517
      %v1519 = vpop.f32.mrf.mxu0
      %v1520 = vpop.f32.mrf.mxu0
      %v1521 = vadd.f32 %v1196, %v1520
      %v1522 = vpop.f32.mrf.mxu0
      %1523 = vdwg.mxu0
      %v1524 = vld [vmem:[%s192] sm:$0xe]
      %s1525 = scalar_lea.vmem %s2, 128
      %v1526 = vld [vmem:[%s1525] sm:$0xf]
      %v1527 = vld [vmem:[%s1525 + $0x4] sm:$0xf]
      %v1528 = vld [vmem:[%s1525 + $0x8] sm:$0xf]
      %v1529 = vld [vmem:[%s1525 + $0xc] sm:$0xf]
      %v1530 = vld [vmem:[%s1525 + $0x10] sm:$0xf]
      %v1531 = vld [vmem:[%s1525 + $0x14] sm:$0xf]
      %v1532 = vld [vmem:[%s1525 + $0x18] sm:$0xf]
      %v1533 = vld [vmem:[%s1525 + $0x1c] sm:$0xf]
      %v1534 = vld [vmem:[%s1525 + $0x20] sm:$0xf]
      %v1535 = vld [vmem:[%s1525 + $0x24] sm:$0xf]
      %v1536 = vld [vmem:[%s1525 + $0x28] sm:$0xf]
      %v1537 = vld [vmem:[%s1525 + $0x2c] sm:$0xf]
      %v1538 = vld [vmem:[%s1525 + $0x30] sm:$0xf]
      %v1539 = vld [vmem:[%s1525 + $0x34] sm:$0xf]
      %v1540 = vld [vmem:[%s1525 + $0x38] sm:$0xf]
      %v1541 = vld [vmem:[%s1525 + $0x3c] sm:$0xf]
      %v1542 = vld [vmem:[%s1525 + $0x40] sm:$0xf]
      %v1543 = vld [vmem:[%s1525 + $0x44] sm:$0xf]
      %v1544 = vld [vmem:[%s1525 + $0x48] sm:$0xf]
      %v1545 = vld [vmem:[%s1525 + $0x4c] sm:$0xf]
      %v1546 = vld [vmem:[%s1525 + $0x50] sm:$0xf]
      %v1547 = vld [vmem:[%s1525 + $0x54] sm:$0xf]
      %v1548 = vld [vmem:[%s1525 + $0x58] sm:$0xf]
      %v1549 = vld [vmem:[%s1525 + $0x5c] sm:$0xf]
      %v1550 = vld [vmem:[%s1525 + $0x60] sm:$0xf]
      %v1551 = vld [vmem:[%s1525 + $0x64] sm:$0xf]
      %v1552 = vld [vmem:[%s1525 + $0x68] sm:$0xf]
      %v1553 = vld [vmem:[%s1525 + $0x6c] sm:$0xf]
      %v1554 = vld [vmem:[%s1525 + $0x70] sm:$0xf]
      %v1555 = vld [vmem:[%s1525 + $0x74] sm:$0xf]
      %v1556 = vld [vmem:[%s1525 + $0x78] sm:$0xf]
      %v1557 = vld [vmem:[%s1525 + $0x7c] sm:$0xf]
      %1559 = vset.pattern.permute.xlu0 0
      %1560 = vperm.xlu0 %1559, %v1526
      %v1561 = vpop.permute.xlu0 %1560
      %v1564 = vunpack.c.l.s4 839922192
      %v1565 = vunpack.c.0.s8 %v1564
      %v1566 = vlaneseq
      %v1567 = vshrl.u32 %v1566, 7
      %v1568 = vsub.s32 %v1565, %v1567
      %v1569 = vrot.slane %v1561, %v1568
      %1571 = vset.pattern.permute.xlu0 0
      %1572 = vperm.xlu0 %1571, %v1527
      %v1573 = vpop.permute.xlu0 %1572
      %v1576 = vunpack.c.l.s4 839922192
      %v1577 = vunpack.c.0.s8 %v1576
      %v1578 = vlaneseq
      %v1579 = vshrl.u32 %v1578, 7
      %v1580 = vsub.s32 %v1577, %v1579
      %v1581 = vrot.slane %v1573, %v1580
      %1583 = vset.pattern.permute.xlu0 0
      %1584 = vperm.xlu0 %1583, %v1528
      %v1585 = vpop.permute.xlu0 %1584
      %v1588 = vunpack.c.l.s4 839922192
      %v1589 = vunpack.c.0.s8 %v1588
      %v1590 = vlaneseq
      %v1591 = vshrl.u32 %v1590, 7
      %v1592 = vsub.s32 %v1589, %v1591
      %v1593 = vrot.slane %v1585, %v1592
      %1595 = vset.pattern.permute.xlu0 0
      %1596 = vperm.xlu0 %1595, %v1529
      %v1597 = vpop.permute.xlu0 %1596
      %v1600 = vunpack.c.l.s4 839922192
      %v1601 = vunpack.c.0.s8 %v1600
      %v1602 = vlaneseq
      %v1603 = vshrl.u32 %v1602, 7
      %v1604 = vsub.s32 %v1601, %v1603
      %v1605 = vrot.slane %v1597, %v1604
      %1607 = vset.pattern.permute.xlu0 0
      %1608 = vperm.xlu0 %1607, %v1530
      %v1609 = vpop.permute.xlu0 %1608
      %v1612 = vunpack.c.l.s4 839922192
      %v1613 = vunpack.c.0.s8 %v1612
      %v1614 = vlaneseq
      %v1615 = vshrl.u32 %v1614, 7
      %v1616 = vsub.s32 %v1613, %v1615
      %v1617 = vrot.slane %v1609, %v1616
      %1619 = vset.pattern.permute.xlu0 0
      %1620 = vperm.xlu0 %1619, %v1531
      %v1621 = vpop.permute.xlu0 %1620
      %v1624 = vunpack.c.l.s4 839922192
      %v1625 = vunpack.c.0.s8 %v1624
      %v1626 = vlaneseq
      %v1627 = vshrl.u32 %v1626, 7
      %v1628 = vsub.s32 %v1625, %v1627
      %v1629 = vrot.slane %v1621, %v1628
      %1631 = vset.pattern.permute.xlu0 0
      %1632 = vperm.xlu0 %1631, %v1532
      %v1633 = vpop.permute.xlu0 %1632
      %v1636 = vunpack.c.l.s4 839922192
      %v1637 = vunpack.c.0.s8 %v1636
      %v1638 = vlaneseq
      %v1639 = vshrl.u32 %v1638, 7
      %v1640 = vsub.s32 %v1637, %v1639
      %v1641 = vrot.slane %v1633, %v1640
      %1643 = vset.pattern.permute.xlu0 0
      %1644 = vperm.xlu0 %1643, %v1533
      %v1645 = vpop.permute.xlu0 %1644
      %v1648 = vunpack.c.l.s4 839922192
      %v1649 = vunpack.c.0.s8 %v1648
      %v1650 = vlaneseq
      %v1651 = vshrl.u32 %v1650, 7
      %v1652 = vsub.s32 %v1649, %v1651
      %v1653 = vrot.slane %v1645, %v1652
      %1655 = vset.pattern.permute.xlu0 0
      %1656 = vperm.xlu0 %1655, %v1534
      %v1657 = vpop.permute.xlu0 %1656
      %v1660 = vunpack.c.l.s4 839922192
      %v1661 = vunpack.c.0.s8 %v1660
      %v1662 = vlaneseq
      %v1663 = vshrl.u32 %v1662, 7
      %v1664 = vsub.s32 %v1661, %v1663
      %v1665 = vrot.slane %v1657, %v1664
      %1667 = vset.pattern.permute.xlu0 0
      %1668 = vperm.xlu0 %1667, %v1535
      %v1669 = vpop.permute.xlu0 %1668
      %v1672 = vunpack.c.l.s4 839922192
      %v1673 = vunpack.c.0.s8 %v1672
      %v1674 = vlaneseq
      %v1675 = vshrl.u32 %v1674, 7
      %v1676 = vsub.s32 %v1673, %v1675
      %v1677 = vrot.slane %v1669, %v1676
      %1679 = vset.pattern.permute.xlu0 0
      %1680 = vperm.xlu0 %1679, %v1536
      %v1681 = vpop.permute.xlu0 %1680
      %v1684 = vunpack.c.l.s4 839922192
      %v1685 = vunpack.c.0.s8 %v1684
      %v1686 = vlaneseq
      %v1687 = vshrl.u32 %v1686, 7
      %v1688 = vsub.s32 %v1685, %v1687
      %v1689 = vrot.slane %v1681, %v1688
      %1691 = vset.pattern.permute.xlu0 0
      %1692 = vperm.xlu0 %1691, %v1537
      %v1693 = vpop.permute.xlu0 %1692
      %v1696 = vunpack.c.l.s4 839922192
      %v1697 = vunpack.c.0.s8 %v1696
      %v1698 = vlaneseq
      %v1699 = vshrl.u32 %v1698, 7
      %v1700 = vsub.s32 %v1697, %v1699
      %v1701 = vrot.slane %v1693, %v1700
      %1703 = vset.pattern.permute.xlu0 0
      %1704 = vperm.xlu0 %1703, %v1538
      %v1705 = vpop.permute.xlu0 %1704
      %v1708 = vunpack.c.l.s4 839922192
      %v1709 = vunpack.c.0.s8 %v1708
      %v1710 = vlaneseq
      %v1711 = vshrl.u32 %v1710, 7
      %v1712 = vsub.s32 %v1709, %v1711
      %v1713 = vrot.slane %v1705, %v1712
      %1715 = vset.pattern.permute.xlu0 0
      %1716 = vperm.xlu0 %1715, %v1539
      %v1717 = vpop.permute.xlu0 %1716
      %v1720 = vunpack.c.l.s4 839922192
      %v1721 = vunpack.c.0.s8 %v1720
      %v1722 = vlaneseq
      %v1723 = vshrl.u32 %v1722, 7
      %v1724 = vsub.s32 %v1721, %v1723
      %v1725 = vrot.slane %v1717, %v1724
      %1727 = vset.pattern.permute.xlu0 0
      %1728 = vperm.xlu0 %1727, %v1540
      %v1729 = vpop.permute.xlu0 %1728
      %v1732 = vunpack.c.l.s4 839922192
      %v1733 = vunpack.c.0.s8 %v1732
      %v1734 = vlaneseq
      %v1735 = vshrl.u32 %v1734, 7
      %v1736 = vsub.s32 %v1733, %v1735
      %v1737 = vrot.slane %v1729, %v1736
      %1739 = vset.pattern.permute.xlu0 0
      %1740 = vperm.xlu0 %1739, %v1541
      %v1741 = vpop.permute.xlu0 %1740
      %v1744 = vunpack.c.l.s4 839922192
      %v1745 = vunpack.c.0.s8 %v1744
      %v1746 = vlaneseq
      %v1747 = vshrl.u32 %v1746, 7
      %v1748 = vsub.s32 %v1745, %v1747
      %v1749 = vrot.slane %v1741, %v1748
      %1751 = vset.pattern.permute.xlu0 0
      %1752 = vperm.xlu0 %1751, %v1542
      %v1753 = vpop.permute.xlu0 %1752
      %v1756 = vunpack.c.l.s4 839922192
      %v1757 = vunpack.c.0.s8 %v1756
      %v1758 = vlaneseq
      %v1759 = vshrl.u32 %v1758, 7
      %v1760 = vsub.s32 %v1757, %v1759
      %v1761 = vrot.slane %v1753, %v1760
      %1763 = vset.pattern.permute.xlu0 0
      %1764 = vperm.xlu0 %1763, %v1543
      %v1765 = vpop.permute.xlu0 %1764
      %v1768 = vunpack.c.l.s4 839922192
      %v1769 = vunpack.c.0.s8 %v1768
      %v1770 = vlaneseq
      %v1771 = vshrl.u32 %v1770, 7
      %v1772 = vsub.s32 %v1769, %v1771
      %v1773 = vrot.slane %v1765, %v1772
      %1775 = vset.pattern.permute.xlu0 0
      %1776 = vperm.xlu0 %1775, %v1544
      %v1777 = vpop.permute.xlu0 %1776
      %v1780 = vunpack.c.l.s4 839922192
      %v1781 = vunpack.c.0.s8 %v1780
      %v1782 = vlaneseq
      %v1783 = vshrl.u32 %v1782, 7
      %v1784 = vsub.s32 %v1781, %v1783
      %v1785 = vrot.slane %v1777, %v1784
      %1787 = vset.pattern.permute.xlu0 0
      %1788 = vperm.xlu0 %1787, %v1545
      %v1789 = vpop.permute.xlu0 %1788
      %v1792 = vunpack.c.l.s4 839922192
      %v1793 = vunpack.c.0.s8 %v1792
      %v1794 = vlaneseq
      %v1795 = vshrl.u32 %v1794, 7
      %v1796 = vsub.s32 %v1793, %v1795
      %v1797 = vrot.slane %v1789, %v1796
      %1799 = vset.pattern.permute.xlu0 0
      %1800 = vperm.xlu0 %1799, %v1546
      %v1801 = vpop.permute.xlu0 %1800
      %v1804 = vunpack.c.l.s4 839922192
      %v1805 = vunpack.c.0.s8 %v1804
      %v1806 = vlaneseq
      %v1807 = vshrl.u32 %v1806, 7
      %v1808 = vsub.s32 %v1805, %v1807
      %v1809 = vrot.slane %v1801, %v1808
      %1811 = vset.pattern.permute.xlu0 0
      %1812 = vperm.xlu0 %1811, %v1547
      %v1813 = vpop.permute.xlu0 %1812
      %v1816 = vunpack.c.l.s4 839922192
      %v1817 = vunpack.c.0.s8 %v1816
      %v1818 = vlaneseq
      %v1819 = vshrl.u32 %v1818, 7
      %v1820 = vsub.s32 %v1817, %v1819
      %v1821 = vrot.slane %v1813, %v1820
      %1823 = vset.pattern.permute.xlu0 0
      %1824 = vperm.xlu0 %1823, %v1548
      %v1825 = vpop.permute.xlu0 %1824
      %v1828 = vunpack.c.l.s4 839922192
      %v1829 = vunpack.c.0.s8 %v1828
      %v1830 = vlaneseq
      %v1831 = vshrl.u32 %v1830, 7
      %v1832 = vsub.s32 %v1829, %v1831
      %v1833 = vrot.slane %v1825, %v1832
      %1835 = vset.pattern.permute.xlu0 0
      %1836 = vperm.xlu0 %1835, %v1549
      %v1837 = vpop.permute.xlu0 %1836
      %v1840 = vunpack.c.l.s4 839922192
      %v1841 = vunpack.c.0.s8 %v1840
      %v1842 = vlaneseq
      %v1843 = vshrl.u32 %v1842, 7
      %v1844 = vsub.s32 %v1841, %v1843
      %v1845 = vrot.slane %v1837, %v1844
      %1847 = vset.pattern.permute.xlu0 0
      %1848 = vperm.xlu0 %1847, %v1550
      %v1849 = vpop.permute.xlu0 %1848
      %v1852 = vunpack.c.l.s4 839922192
      %v1853 = vunpack.c.0.s8 %v1852
      %v1854 = vlaneseq
      %v1855 = vshrl.u32 %v1854, 7
      %v1856 = vsub.s32 %v1853, %v1855
      %v1857 = vrot.slane %v1849, %v1856
      %1859 = vset.pattern.permute.xlu0 0
      %1860 = vperm.xlu0 %1859, %v1551
      %v1861 = vpop.permute.xlu0 %1860
      %v1864 = vunpack.c.l.s4 839922192
      %v1865 = vunpack.c.0.s8 %v1864
      %v1866 = vlaneseq
      %v1867 = vshrl.u32 %v1866, 7
      %v1868 = vsub.s32 %v1865, %v1867
      %v1869 = vrot.slane %v1861, %v1868
      %1871 = vset.pattern.permute.xlu0 0
      %1872 = vperm.xlu0 %1871, %v1552
      %v1873 = vpop.permute.xlu0 %1872
      %v1876 = vunpack.c.l.s4 839922192
      %v1877 = vunpack.c.0.s8 %v1876
      %v1878 = vlaneseq
      %v1879 = vshrl.u32 %v1878, 7
      %v1880 = vsub.s32 %v1877, %v1879
      %v1881 = vrot.slane %v1873, %v1880
      %1883 = vset.pattern.permute.xlu0 0
      %1884 = vperm.xlu0 %1883, %v1553
      %v1885 = vpop.permute.xlu0 %1884
      %v1888 = vunpack.c.l.s4 839922192
      %v1889 = vunpack.c.0.s8 %v1888
      %v1890 = vlaneseq
      %v1891 = vshrl.u32 %v1890, 7
      %v1892 = vsub.s32 %v1889, %v1891
      %v1893 = vrot.slane %v1885, %v1892
      %1895 = vset.pattern.permute.xlu0 0
      %1896 = vperm.xlu0 %1895, %v1554
      %v1897 = vpop.permute.xlu0 %1896
      %v1900 = vunpack.c.l.s4 839922192
      %v1901 = vunpack.c.0.s8 %v1900
      %v1902 = vlaneseq
      %v1903 = vshrl.u32 %v1902, 7
      %v1904 = vsub.s32 %v1901, %v1903
      %v1905 = vrot.slane %v1897, %v1904
      %1907 = vset.pattern.permute.xlu0 0
      %1908 = vperm.xlu0 %1907, %v1555
      %v1909 = vpop.permute.xlu0 %1908
      %v1912 = vunpack.c.l.s4 839922192
      %v1913 = vunpack.c.0.s8 %v1912
      %v1914 = vlaneseq
      %v1915 = vshrl.u32 %v1914, 7
      %v1916 = vsub.s32 %v1913, %v1915
      %v1917 = vrot.slane %v1909, %v1916
      %1919 = vset.pattern.permute.xlu0 0
      %1920 = vperm.xlu0 %1919, %v1556
      %v1921 = vpop.permute.xlu0 %1920
      %v1924 = vunpack.c.l.s4 839922192
      %v1925 = vunpack.c.0.s8 %v1924
      %v1926 = vlaneseq
      %v1927 = vshrl.u32 %v1926, 7
      %v1928 = vsub.s32 %v1925, %v1927
      %v1929 = vrot.slane %v1921, %v1928
      %1931 = vset.pattern.permute.xlu0 0
      %1932 = vperm.xlu0 %1931, %v1557
      %v1933 = vpop.permute.xlu0 %1932
      %v1936 = vunpack.c.l.s4 839922192
      %v1937 = vunpack.c.0.s8 %v1936
      %v1938 = vlaneseq
      %v1939 = vshrl.u32 %v1938, 7
      %v1940 = vsub.s32 %v1937, %v1939
      %v1941 = vrot.slane %v1933, %v1940
      %vm1974 = vcmask 1040384
      %vm1975 = vcmask 1044484
      %vm1976 = vmor %vm1974, %vm1975
      %v1977 = vrot.slane %v1569, 7
      %v1978 = vrot.slane %v1977, 4
      %v1979 = vrot.slane %v1581, 7
      %v1980 = vsel %vm1976, %v1978, %v1979
      %v1981 = vrot.slane %v1979, 4
      %v1982 = vrot.slane %v1593, 7
      %v1983 = vsel %vm1976, %v1981, %v1982
      %v1984 = vrot.slane %v1982, 4
      %v1985 = vrot.slane %v1605, 7
      %v1986 = vsel %vm1976, %v1984, %v1985
      %v1987 = vrot.slane %v1985, 4
      %v1988 = vrot.slane %v1617, 7
      %v1989 = vsel %vm1976, %v1987, %v1988
      %v1990 = vrot.slane %v1988, 4
      %v1991 = vrot.slane %v1629, 7
      %v1992 = vsel %vm1976, %v1990, %v1991
      %v1993 = vrot.slane %v1991, 4
      %v1994 = vrot.slane %v1641, 7
      %v1995 = vsel %vm1976, %v1993, %v1994
      %v1996 = vrot.slane %v1994, 4
      %v1997 = vrot.slane %v1653, 7
      %v1998 = vsel %vm1976, %v1996, %v1997
      %v1999 = vrot.slane %v1997, 4
      %v2000 = vrot.slane %v1665, 7
      %v2001 = vsel %vm1976, %v1999, %v2000
      %v2002 = vrot.slane %v2000, 4
      %v2003 = vrot.slane %v1677, 7
      %v2004 = vsel %vm1976, %v2002, %v2003
      %v2005 = vrot.slane %v2003, 4
      %v2006 = vrot.slane %v1689, 7
      %v2007 = vsel %vm1976, %v2005, %v2006
      %v2008 = vrot.slane %v2006, 4
      %v2009 = vrot.slane %v1701, 7
      %v2010 = vsel %vm1976, %v2008, %v2009
      %v2011 = vrot.slane %v2009, 4
      %v2012 = vrot.slane %v1713, 7
      %v2013 = vsel %vm1976, %v2011, %v2012
      %v2014 = vrot.slane %v2012, 4
      %v2015 = vrot.slane %v1725, 7
      %v2016 = vsel %vm1976, %v2014, %v2015
      %v2017 = vrot.slane %v2015, 4
      %v2018 = vrot.slane %v1737, 7
      %v2019 = vsel %vm1976, %v2017, %v2018
      %v2020 = vrot.slane %v2018, 4
      %v2021 = vrot.slane %v1749, 7
      %v2022 = vsel %vm1976, %v2020, %v2021
      %v2023 = vrot.slane %v2021, 4
      %v2024 = vrot.slane %v1761, 7
      %v2025 = vsel %vm1976, %v2023, %v2024
      %v2026 = vrot.slane %v2024, 4
      %v2027 = vrot.slane %v1773, 7
      %v2028 = vsel %vm1976, %v2026, %v2027
      %v2029 = vrot.slane %v2027, 4
      %v2030 = vrot.slane %v1785, 7
      %v2031 = vsel %vm1976, %v2029, %v2030
      %v2032 = vrot.slane %v2030, 4
      %v2033 = vrot.slane %v1797, 7
      %v2034 = vsel %vm1976, %v2032, %v2033
      %v2035 = vrot.slane %v2033, 4
      %v2036 = vrot.slane %v1809, 7
      %v2037 = vsel %vm1976, %v2035, %v2036
      %v2038 = vrot.slane %v2036, 4
      %v2039 = vrot.slane %v1821, 7
      %v2040 = vsel %vm1976, %v2038, %v2039
      %v2041 = vrot.slane %v2039, 4
      %v2042 = vrot.slane %v1833, 7
      %v2043 = vsel %vm1976, %v2041, %v2042
      %v2044 = vrot.slane %v2042, 4
      %v2045 = vrot.slane %v1845, 7
      %v2046 = vsel %vm1976, %v2044, %v2045
      %v2047 = vrot.slane %v2045, 4
      %v2048 = vrot.slane %v1857, 7
      %v2049 = vsel %vm1976, %v2047, %v2048
      %v2050 = vrot.slane %v2048, 4
      %v2051 = vrot.slane %v1869, 7
      %v2052 = vsel %vm1976, %v2050, %v2051
      %v2053 = vrot.slane %v2051, 4
      %v2054 = vrot.slane %v1881, 7
      %v2055 = vsel %vm1976, %v2053, %v2054
      %v2056 = vrot.slane %v2054, 4
      %v2057 = vrot.slane %v1893, 7
      %v2058 = vsel %vm1976, %v2056, %v2057
      %v2059 = vrot.slane %v2057, 4
      %v2060 = vrot.slane %v1905, 7
      %v2061 = vsel %vm1976, %v2059, %v2060
      %v2062 = vrot.slane %v2060, 4
      %v2063 = vrot.slane %v1917, 7
      %v2064 = vsel %vm1976, %v2062, %v2063
      %v2065 = vrot.slane %v2063, 4
      %v2066 = vrot.slane %v1929, 7
      %v2067 = vsel %vm1976, %v2065, %v2066
      %v2068 = vrot.slane %v2066, 4
      %v2069 = vrot.slane %v1941, 7
      %v2070 = vsel %vm1976, %v2068, %v2069
      %v2071 = vrot.slane %v2069, 4
      %v2105 = vmul.bf16 %v1524, %v1977
      %v2106 = vmul.bf16 %v692, %v1980
      %v2107 = vmul.bf16 %v693, %v1983
      %v2108 = vmul.bf16 %v694, %v1986
      %v2109 = vmul.bf16 %v695, %v1989
      %v2110 = vmul.bf16 %v696, %v1992
      %v2111 = vmul.bf16 %v697, %v1995
      %v2112 = vmul.bf16 %v698, %v1998
      %v2113 = vmul.bf16 %v699, %v2001
      %v2114 = vmul.bf16 %v700, %v2004
      %v2115 = vmul.bf16 %v701, %v2007
      %v2116 = vmul.bf16 %v702, %v2010
      %v2117 = vmul.bf16 %v703, %v2013
      %v2118 = vmul.bf16 %v704, %v2016
      %v2119 = vmul.bf16 %v705, %v2019
      %v2120 = vmul.bf16 %v706, %v2022
      %v2121 = vmul.bf16 %v707, %v2025
      %v2122 = vmul.bf16 %v708, %v2028
      %v2123 = vmul.bf16 %v709, %v2031
      %v2124 = vmul.bf16 %v710, %v2034
      %v2125 = vmul.bf16 %v711, %v2037
      %v2126 = vmul.bf16 %v712, %v2040
      %v2127 = vmul.bf16 %v713, %v2043
      %v2128 = vmul.bf16 %v714, %v2046
      %v2129 = vmul.bf16 %v715, %v2049
      %v2130 = vmul.bf16 %v716, %v2052
      %v2131 = vmul.bf16 %v717, %v2055
      %v2132 = vmul.bf16 %v718, %v2058
      %v2133 = vmul.bf16 %v719, %v2061
      %v2134 = vmul.bf16 %v720, %v2064
      %v2135 = vmul.bf16 %v721, %v2067
      %v2136 = vmul.bf16 %v722, %v2070
      %v2137 = vmul.bf16 %v723, %v2071
      %s2138 = scalar_lea.vmem %s1, 96
      %v2139 = vld [vmem:[%s2138] sm:$0xf]
      %v2140 = vld [vmem:[%s2138 + $0x4] sm:$0xf]
      %v2141 = vld [vmem:[%s2138 + $0x8] sm:$0xf]
      %v2142 = vld [vmem:[%s2138 + $0xc] sm:$0xf]
      %v2143 = vld [vmem:[%s2138 + $0x10] sm:$0xf]
      %v2144 = vld [vmem:[%s2138 + $0x14] sm:$0xf]
      %v2145 = vld [vmem:[%s2138 + $0x18] sm:$0xf]
      %v2146 = vld [vmem:[%s2138 + $0x1c] sm:$0xf]
      %v2147 = vld [vmem:[%s2138 + $0x20] sm:$0xf]
      %v2148 = vld [vmem:[%s2138 + $0x24] sm:$0xf]
      %v2149 = vld [vmem:[%s2138 + $0x28] sm:$0xf]
      %v2150 = vld [vmem:[%s2138 + $0x2c] sm:$0xf]
      %v2184 = vunpack.c.l.b16 %v2105
      %v2185 = vunpack.c.l.b16 %v2106
      %v2186 = vunpack.c.l.b16 %v2107
      %v2187 = vunpack.c.l.b16 %v2108
      %v2188 = vunpack.c.l.b16 %v2109
      %v2189 = vunpack.c.l.b16 %v2110
      %v2190 = vunpack.c.l.b16 %v2111
      %v2191 = vunpack.c.l.b16 %v2112
      %v2192 = vunpack.c.l.b16 %v2113
      %v2193 = vunpack.c.l.b16 %v2114
      %v2194 = vunpack.c.l.b16 %v2115
      %v2195 = vunpack.c.l.b16 %v2116
      %v2196 = vunpack.c.l.b16 %v2117
      %v2197 = vunpack.c.l.b16 %v2118
      %v2198 = vunpack.c.l.b16 %v2119
      %v2199 = vunpack.c.l.b16 %v2120
      %v2200 = vunpack.c.l.b16 %v2121
      %v2201 = vunpack.c.l.b16 %v2122
      %v2202 = vunpack.c.l.b16 %v2123
      %v2203 = vunpack.c.l.b16 %v2124
      %v2204 = vunpack.c.l.b16 %v2125
      %v2205 = vunpack.c.l.b16 %v2126
      %v2206 = vunpack.c.l.b16 %v2127
      %v2207 = vunpack.c.l.b16 %v2128
      %v2208 = vunpack.c.l.b16 %v2129
      %v2209 = vunpack.c.l.b16 %v2130
      %v2210 = vunpack.c.l.b16 %v2131
      %v2211 = vunpack.c.l.b16 %v2132
      %v2212 = vunpack.c.l.b16 %v2133
      %v2213 = vunpack.c.l.b16 %v2134
      %v2214 = vunpack.c.l.b16 %v2135
      %v2215 = vunpack.c.l.b16 %v2136
      %v2216 = vunpack.c.l.b16 %v2137
      %v2217 = vpack.c.b16 %v2185, %v2184
      %v2218 = vpack.c.b16 %v2187, %v2186
      %v2219 = vpack.c.b16 %v2189, %v2188
      %v2220 = vpack.c.b16 %v2191, %v2190
      %v2221 = vpack.c.b16 %v2193, %v2192
      %v2222 = vpack.c.b16 %v2195, %v2194
      %v2223 = vpack.c.b16 %v2197, %v2196
      %v2224 = vpack.c.b16 %v2199, %v2198
      %v2225 = vpack.c.b16 %v2201, %v2200
      %v2226 = vpack.c.b16 %v2203, %v2202
      %v2227 = vpack.c.b16 %v2205, %v2204
      %v2228 = vpack.c.b16 %v2207, %v2206
      %v2229 = vpack.c.b16 %v2209, %v2208
      %v2230 = vpack.c.b16 %v2211, %v2210
      %v2231 = vpack.c.b16 %v2213, %v2212
      %v2232 = vpack.c.b16 %v2215, %v2214
      %v2233 = vpack.c.b16 %v2216, %v2216
      %vm2234 = vcmask 1046528
      %v2235 = vrot.slane %v2217, 1
      %v2236 = vrot.slane %v2218, 1
      %v2237 = vsel %vm2234, %v2235, %v2236
      %v2238 = vrot.slane %v2219, 1
      %v2239 = vsel %vm2234, %v2236, %v2238
      %v2240 = vrot.slane %v2220, 1
      %v2241 = vsel %vm2234, %v2238, %v2240
      %v2242 = vrot.slane %v2221, 1
      %v2243 = vsel %vm2234, %v2240, %v2242
      %v2244 = vrot.slane %v2222, 1
      %v2245 = vsel %vm2234, %v2242, %v2244
      %v2246 = vrot.slane %v2223, 1
      %v2247 = vsel %vm2234, %v2244, %v2246
      %v2248 = vrot.slane %v2224, 1
      %v2249 = vsel %vm2234, %v2246, %v2248
      %v2250 = vrot.slane %v2225, 1
      %v2251 = vsel %vm2234, %v2248, %v2250
      %v2252 = vrot.slane %v2226, 1
      %v2253 = vsel %vm2234, %v2250, %v2252
      %v2254 = vrot.slane %v2227, 1
      %v2255 = vsel %vm2234, %v2252, %v2254
      %v2256 = vrot.slane %v2228, 1
      %v2257 = vsel %vm2234, %v2254, %v2256
      %v2258 = vrot.slane %v2229, 1
      %v2259 = vsel %vm2234, %v2256, %v2258
      %v2260 = vrot.slane %v2230, 1
      %v2261 = vsel %vm2234, %v2258, %v2260
      %v2262 = vrot.slane %v2231, 1
      %v2263 = vsel %vm2234, %v2260, %v2262
      %v2264 = vrot.slane %v2232, 1
      %v2265 = vsel %vm2234, %v2262, %v2264
      %v2266 = vrot.slane %v2233, 1
      %v2267 = vsel %vm2234, %v2264, %v2266
      %v2280 = vunpack.c.l.b16 %v2139
      %v2281 = vunpack.c.l.b16 %v2140
      %v2282 = vunpack.c.l.b16 %v2141
      %v2283 = vunpack.c.l.b16 %v2142
      %v2284 = vunpack.c.l.b16 %v2143
      %v2285 = vunpack.c.l.b16 %v2144
      %v2286 = vunpack.c.l.b16 %v2145
      %v2287 = vunpack.c.l.b16 %v2146
      %v2288 = vunpack.c.l.b16 %v2147
      %v2289 = vunpack.c.l.b16 %v2148
      %v2290 = vunpack.c.l.b16 %v2149
      %v2291 = vunpack.c.l.b16 %v2150
      %v2292 = vpack.c.b16 %v2281, %v2280
      %v2293 = vpack.c.b16 %v2283, %v2282
      %v2294 = vpack.c.b16 %v2285, %v2284
      %v2295 = vpack.c.b16 %v2287, %v2286
      %v2296 = vpack.c.b16 %v2289, %v2288
      %v2297 = vpack.c.b16 %v2291, %v2290
      %v2305 = vsel %vm989, %v2237, 0
      %v2308 = vsel %vm989, %v2239, 0
      %v2311 = vsel %vm989, %v2241, 0
      %v2314 = vsel %vm989, %v2243, 0
      %v2317 = vsel %vm989, %v2245, 0
      %v2320 = vsel %vm989, %v2247, 0
      %v2323 = vsel %vm989, %v2249, 0
      %v2326 = vsel %vm989, %v2251, 0
      %v2329 = vsel %vm989, %v2253, 0
      %v2332 = vsel %vm989, %v2255, 0
      %v2335 = vsel %vm989, %v2257, 0
      %v2338 = vsel %vm989, %v2259, 0
      %v2341 = vsel %vm989, %v2261, 0
      %v2344 = vsel %vm989, %v2263, 0
      %v2347 = vsel %vm989, %v2265, 0
      %v2350 = vsel %vm989, %v2267, 0
      %2352 = vmatprep.subr.bf16.mxu0 0
      %2353 = vmatpush1.bf16.msra.mxu0 0
      %2354 = vmatprep.subr.bf16.mxu0 0
      %2355 = vmatpush1.bf16.msra.mxu0 0
      %2356 = vmatprep.subr.bf16.mxu0 0
      %2357 = vmatpush1.bf16.msra.mxu0 %v2297
      %2358 = vmatprep.subr.bf16.mxu0 0
      %2359 = vmatpush1.bf16.msra.mxu0 %v2296
      %2360 = vmatprep.subr.bf16.mxu0 0
      %2361 = vmatpush1.bf16.msra.mxu0 %v2295
      %2362 = vmatprep.subr.bf16.mxu0 0
      %2363 = vmatpush1.bf16.msra.mxu0 %v2294
      %2364 = vmatprep.subr.bf16.mxu0 0
      %2365 = vmatpush1.bf16.msra.mxu0 %v2293
      %2366 = vmatprep.subr.bf16.mxu0 0
      %2367 = vmatpush1.bf16.msra.mxu0 %v2292
      %2368 = vmatprep.subr.bf16.mxu0 0
      %2369 = vmatpush2.bf16.msra.mxu0 0
      %2370 = vmatprep.subr.bf16.mxu0 0
      %2371 = vmatpush2.bf16.msra.mxu0 0
      %2372 = vmatprep.subr.bf16.mxu0 0
      %2373 = vmatpush2.bf16.msra.mxu0 0
      %2374 = vmatprep.subr.bf16.mxu0 0
      %2375 = vmatpush2.bf16.msra.mxu0 0
      %2376 = vmatprep.subr.bf16.mxu0 0
      %2377 = vmatpush2.bf16.msra.mxu0 0
      %2378 = vmatprep.subr.bf16.mxu0 0
      %2379 = vmatpush2.bf16.msra.mxu0 0
      %2380 = vmatprep.subr.bf16.mxu0 0
      %2381 = vmatpush2.bf16.msra.mxu0 0
      %2382 = vmatprep.subr.bf16.mxu0 0
      %2383 = vmatpush2.bf16.msra.mxu0 0
      %2384 = vmatprep.mubr.bf16.mxu0 0
      %2385 = vmatmul.mubr.bf16.gmra.mxu0 %v2305
      %v2386 = vpop.f32.mrf.mxu0
      %v2387 = vadd.f32 0.0, %v2386
      %v2388 = vpop.f32.mrf.mxu0
      %v2389 = vpop.f32.mrf.mxu0
      %v2390 = vadd.f32 0.0, %v2389
      %v2391 = vpop.f32.mrf.mxu0
      %2392 = vmatprep.mubr.bf16.mxu0 0
      %2393 = vmatmul.mubr.bf16.gmra.mxu0 %v2308
      %v2394 = vpop.f32.mrf.mxu0
      %v2395 = vadd.f32 0.0, %v2394
      %v2396 = vpop.f32.mrf.mxu0
      %v2397 = vpop.f32.mrf.mxu0
      %v2398 = vadd.f32 0.0, %v2397
      %v2399 = vpop.f32.mrf.mxu0
      %2400 = vmatprep.mubr.bf16.mxu0 0
      %2401 = vmatmul.mubr.bf16.gmra.mxu0 %v2311
      %v2402 = vpop.f32.mrf.mxu0
      %v2403 = vadd.f32 0.0, %v2402
      %v2404 = vpop.f32.mrf.mxu0
      %v2405 = vpop.f32.mrf.mxu0
      %v2406 = vadd.f32 0.0, %v2405
      %v2407 = vpop.f32.mrf.mxu0
      %2408 = vmatprep.mubr.bf16.mxu0 0
      %2409 = vmatmul.mubr.bf16.gmra.mxu0 %v2314
      %v2410 = vpop.f32.mrf.mxu0
      %v2411 = vadd.f32 0.0, %v2410
      %v2412 = vpop.f32.mrf.mxu0
      %v2413 = vpop.f32.mrf.mxu0
      %v2414 = vadd.f32 0.0, %v2413
      %v2415 = vpop.f32.mrf.mxu0
      %2416 = vmatprep.mubr.bf16.mxu0 0
      %2417 = vmatmul.mubr.bf16.gmra.mxu0 %v2317
      %v2418 = vpop.f32.mrf.mxu0
      %v2419 = vadd.f32 0.0, %v2418
      %v2420 = vpop.f32.mrf.mxu0
      %v2421 = vpop.f32.mrf.mxu0
      %v2422 = vadd.f32 0.0, %v2421
      %v2423 = vpop.f32.mrf.mxu0
      %2424 = vmatprep.mubr.bf16.mxu0 0
      %2425 = vmatmul.mubr.bf16.gmra.mxu0 %v2320
      %v2426 = vpop.f32.mrf.mxu0
      %v2427 = vadd.f32 0.0, %v2426
      %v2428 = vpop.f32.mrf.mxu0
      %v2429 = vpop.f32.mrf.mxu0
      %v2430 = vadd.f32 0.0, %v2429
      %v2431 = vpop.f32.mrf.mxu0
      %2432 = vmatprep.mubr.bf16.mxu0 0
      %2433 = vmatmul.mubr.bf16.gmra.mxu0 %v2323
      %v2434 = vpop.f32.mrf.mxu0
      %v2435 = vadd.f32 0.0, %v2434
      %v2436 = vpop.f32.mrf.mxu0
      %v2437 = vpop.f32.mrf.mxu0
      %v2438 = vadd.f32 0.0, %v2437
      %v2439 = vpop.f32.mrf.mxu0
      %2440 = vmatprep.mubr.bf16.mxu0 0
      %2441 = vmatmul.mubr.bf16.gmra.mxu0 %v2326
      %v2442 = vpop.f32.mrf.mxu0
      %v2443 = vadd.f32 0.0, %v2442
      %v2444 = vpop.f32.mrf.mxu0
      %v2445 = vpop.f32.mrf.mxu0
      %v2446 = vadd.f32 0.0, %v2445
      %v2447 = vpop.f32.mrf.mxu0
      %2448 = vmatprep.mubr.bf16.mxu0 0
      %2449 = vmatmul.mubr.bf16.gmra.mxu0 %v2329
      %v2450 = vpop.f32.mrf.mxu0
      %v2451 = vadd.f32 0.0, %v2450
      %v2452 = vpop.f32.mrf.mxu0
      %v2453 = vpop.f32.mrf.mxu0
      %v2454 = vadd.f32 0.0, %v2453
      %v2455 = vpop.f32.mrf.mxu0
      %2456 = vmatprep.mubr.bf16.mxu0 0
      %2457 = vmatmul.mubr.bf16.gmra.mxu0 %v2332
      %v2458 = vpop.f32.mrf.mxu0
      %v2459 = vadd.f32 0.0, %v2458
      %v2460 = vpop.f32.mrf.mxu0
      %v2461 = vpop.f32.mrf.mxu0
      %v2462 = vadd.f32 0.0, %v2461
      %v2463 = vpop.f32.mrf.mxu0
      %2464 = vmatprep.mubr.bf16.mxu0 0
      %2465 = vmatmul.mubr.bf16.gmra.mxu0 %v2335
      %v2466 = vpop.f32.mrf.mxu0
      %v2467 = vadd.f32 0.0, %v2466
      %v2468 = vpop.f32.mrf.mxu0
      %v2469 = vpop.f32.mrf.mxu0
      %v2470 = vadd.f32 0.0, %v2469
      %v2471 = vpop.f32.mrf.mxu0
      %2472 = vmatprep.mubr.bf16.mxu0 0
      %2473 = vmatmul.mubr.bf16.gmra.mxu0 %v2338
      %v2474 = vpop.f32.mrf.mxu0
      %v2475 = vadd.f32 0.0, %v2474
      %v2476 = vpop.f32.mrf.mxu0
      %v2477 = vpop.f32.mrf.mxu0
      %v2478 = vadd.f32 0.0, %v2477
      %v2479 = vpop.f32.mrf.mxu0
      %2480 = vmatprep.mubr.bf16.mxu0 0
      %2481 = vmatmul.mubr.bf16.gmra.mxu0 %v2341
      %v2482 = vpop.f32.mrf.mxu0
      %v2483 = vadd.f32 0.0, %v2482
      %v2484 = vpop.f32.mrf.mxu0
      %v2485 = vpop.f32.mrf.mxu0
      %v2486 = vadd.f32 0.0, %v2485
      %v2487 = vpop.f32.mrf.mxu0
      %2488 = vmatprep.mubr.bf16.mxu0 0
      %2489 = vmatmul.mubr.bf16.gmra.mxu0 %v2344
      %v2490 = vpop.f32.mrf.mxu0
      %v2491 = vadd.f32 0.0, %v2490
      %v2492 = vpop.f32.mrf.mxu0
      %v2493 = vpop.f32.mrf.mxu0
      %v2494 = vadd.f32 0.0, %v2493
      %v2495 = vpop.f32.mrf.mxu0
      %2496 = vmatprep.mubr.bf16.mxu0 0
      %2497 = vmatmul.mubr.bf16.gmra.mxu0 %v2347
      %v2498 = vpop.f32.mrf.mxu0
      %v2499 = vadd.f32 0.0, %v2498
      %v2500 = vpop.f32.mrf.mxu0
      %v2501 = vpop.f32.mrf.mxu0
      %v2502 = vadd.f32 0.0, %v2501
      %v2503 = vpop.f32.mrf.mxu0
      %2504 = vmatprep.mubr.bf16.mxu0 0
      %2505 = vmatmul.mubr.bf16.gmra.mxu0 %v2350
      %v2506 = vpop.f32.mrf.mxu0
      %v2507 = vadd.f32 0.0, %v2506
      %v2508 = vpop.f32.mrf.mxu0
      %v2509 = vpop.f32.mrf.mxu0
      %v2510 = vadd.f32 0.0, %v2509
      %v2511 = vpop.f32.mrf.mxu0
      %2512 = vdwg.mxu0
      %v2513 = vadd.f32 %v1398, %v2387
      %v2514 = vadd.f32 %v1401, %v2390
      %v2515 = vadd.f32 %v1406, %v2395
      %v2516 = vadd.f32 %v1409, %v2398
      %v2517 = vadd.f32 %v1414, %v2403
      %v2518 = vadd.f32 %v1417, %v2406
      %v2519 = vadd.f32 %v1422, %v2411
      %v2520 = vadd.f32 %v1425, %v2414
      %v2521 = vadd.f32 %v1430, %v2419
      %v2522 = vadd.f32 %v1433, %v2422
      %v2523 = vadd.f32 %v1438, %v2427
      %v2524 = vadd.f32 %v1441, %v2430
      %v2525 = vadd.f32 %v1446, %v2435
      %v2526 = vadd.f32 %v1449, %v2438
      %v2527 = vadd.f32 %v1454, %v2443
      %v2528 = vadd.f32 %v1457, %v2446
      %v2529 = vadd.f32 %v1462, %v2451
      %v2530 = vadd.f32 %v1465, %v2454
      %v2531 = vadd.f32 %v1470, %v2459
      %v2532 = vadd.f32 %v1473, %v2462
      %v2533 = vadd.f32 %v1478, %v2467
      %v2534 = vadd.f32 %v1481, %v2470
      %v2535 = vadd.f32 %v1486, %v2475
      %v2536 = vadd.f32 %v1489, %v2478
      %v2537 = vadd.f32 %v1494, %v2483
      %v2538 = vadd.f32 %v1497, %v2486
      %v2539 = vadd.f32 %v1502, %v2491
      %v2540 = vadd.f32 %v1505, %v2494
      %v2541 = vadd.f32 %v1510, %v2499
      %v2542 = vadd.f32 %v1513, %v2502
      %v2543 = vadd.f32 %v1518, %v2507
      %v2544 = vadd.f32 %v1521, %v2510
      %v2545 = vld [vmem:[%s192 + $0x8] sm:$0xf]
      %v2546 = vld [vmem:[%s192 + $0xc] sm:$0xf]
      %v2547 = vld [vmem:[%s192 + $0x10] sm:$0xf]
      %v2548 = vld [vmem:[%s192 + $0x14] sm:$0xf]
      %v2549 = vld [vmem:[%s192 + $0x18] sm:$0xf]
      %v2550 = vld [vmem:[%s192 + $0x1c] sm:$0xf]
      %v2551 = vld [vmem:[%s192 + $0x20] sm:$0xf]
      %v2552 = vld [vmem:[%s192 + $0x24] sm:$0xf]
      %v2553 = vld [vmem:[%s192 + $0x28] sm:$0xf]
      %v2554 = vld [vmem:[%s192 + $0x2c] sm:$0xf]
      %v2555 = vld [vmem:[%s192 + $0x30] sm:$0xf]
      %v2556 = vld [vmem:[%s192 + $0x34] sm:$0xf]
      %v2557 = vld [vmem:[%s192 + $0x38] sm:$0xf]
      %v2558 = vld [vmem:[%s192 + $0x3c] sm:$0xf]
      %v2559 = vld [vmem:[%s192 + $0x40] sm:$0xf]
      %v2560 = vld [vmem:[%s192 + $0x44] sm:$0xf]
      %v2561 = vld [vmem:[%s192 + $0x48] sm:$0xf]
      %v2562 = vld [vmem:[%s192 + $0x4c] sm:$0xf]
      %v2563 = vld [vmem:[%s192 + $0x50] sm:$0xf]
      %v2564 = vld [vmem:[%s192 + $0x54] sm:$0xf]
      %v2565 = vld [vmem:[%s192 + $0x58] sm:$0xf]
      %v2566 = vld [vmem:[%s192 + $0x5c] sm:$0xf]
      %v2567 = vld [vmem:[%s192 + $0x60] sm:$0xf]
      %v2568 = vld [vmem:[%s192 + $0x64] sm:$0xf]
      %v2569 = vld [vmem:[%s192 + $0x68] sm:$0xf]
      %v2570 = vld [vmem:[%s192 + $0x6c] sm:$0xf]
      %v2571 = vld [vmem:[%s192 + $0x70] sm:$0xf]
      %v2572 = vld [vmem:[%s192 + $0x74] sm:$0xf]
      %v2573 = vld [vmem:[%s192 + $0x78] sm:$0xf]
      %v2574 = vld [vmem:[%s192 + $0x7c] sm:$0xf]
      %v2575 = vld [vmem:[%s192 + $0x80] sm:$0xf]
      %v2576 = vld [vmem:[%s192 + $0x84] sm:$0xf]
      %v2577 = vmul.bf16 %v2545, %v274
      %v2578 = vmul.bf16 %v2546, %v286
      %v2579 = vmul.bf16 %v2547, %v298
      %v2580 = vmul.bf16 %v2548, %v310
      %v2581 = vmul.bf16 %v2549, %v322
      %v2582 = vmul.bf16 %v2550, %v334
      %v2583 = vmul.bf16 %v2551, %v346
      %v2584 = vmul.bf16 %v2552, %v358
      %v2585 = vmul.bf16 %v2553, %v370
      %v2586 = vmul.bf16 %v2554, %v382
      %v2587 = vmul.bf16 %v2555, %v394
      %v2588 = vmul.bf16 %v2556, %v406
      %v2589 = vmul.bf16 %v2557, %v418
      %v2590 = vmul.bf16 %v2558, %v430
      %v2591 = vmul.bf16 %v2559, %v442
      %v2592 = vmul.bf16 %v2560, %v454
      %v2593 = vmul.bf16 %v2561, %v466
      %v2594 = vmul.bf16 %v2562, %v478
      %v2595 = vmul.bf16 %v2563, %v490
      %v2596 = vmul.bf16 %v2564, %v502
      %v2597 = vmul.bf16 %v2565, %v514
      %v2598 = vmul.bf16 %v2566, %v526
      %v2599 = vmul.bf16 %v2567, %v538
      %v2600 = vmul.bf16 %v2568, %v550
      %v2601 = vmul.bf16 %v2569, %v562
      %v2602 = vmul.bf16 %v2570, %v574
      %v2603 = vmul.bf16 %v2571, %v586
      %v2604 = vmul.bf16 %v2572, %v598
      %v2605 = vmul.bf16 %v2573, %v610
      %v2606 = vmul.bf16 %v2574, %v622
      %v2607 = vmul.bf16 %v2575, %v634
      %v2608 = vmul.bf16 %v2576, %v646
      %s2609 = scalar_lea.vmem %s1, 144
      %v2610 = vld [vmem:[%s2609] sm:$0xf]
      %v2611 = vld [vmem:[%s2609 + $0x4] sm:$0xf]
      %v2612 = vld [vmem:[%s2609 + $0x8] sm:$0xf]
      %v2613 = vld [vmem:[%s2609 + $0xc] sm:$0xf]
      %v2614 = vld [vmem:[%s2609 + $0x10] sm:$0xf]
      %v2615 = vld [vmem:[%s2609 + $0x14] sm:$0xf]
      %v2616 = vld [vmem:[%s2609 + $0x18] sm:$0xf]
      %v2617 = vld [vmem:[%s2609 + $0x1c] sm:$0xf]
      %v2618 = vld [vmem:[%s2609 + $0x20] sm:$0xf]
      %v2619 = vld [vmem:[%s2609 + $0x24] sm:$0xf]
      %v2620 = vld [vmem:[%s2609 + $0x28] sm:$0xf]
      %v2621 = vld [vmem:[%s2609 + $0x2c] sm:$0xf]
      %v2654 = vunpack.c.l.b16 %v2577
      %v2655 = vunpack.c.l.b16 %v2578
      %v2656 = vunpack.c.l.b16 %v2579
      %v2657 = vunpack.c.l.b16 %v2580
      %v2658 = vunpack.c.l.b16 %v2581
      %v2659 = vunpack.c.l.b16 %v2582
      %v2660 = vunpack.c.l.b16 %v2583
      %v2661 = vunpack.c.l.b16 %v2584
      %v2662 = vunpack.c.l.b16 %v2585
      %v2663 = vunpack.c.l.b16 %v2586
      %v2664 = vunpack.c.l.b16 %v2587
      %v2665 = vunpack.c.l.b16 %v2588
      %v2666 = vunpack.c.l.b16 %v2589
      %v2667 = vunpack.c.l.b16 %v2590
      %v2668 = vunpack.c.l.b16 %v2591
      %v2669 = vunpack.c.l.b16 %v2592
      %v2670 = vunpack.c.l.b16 %v2593
      %v2671 = vunpack.c.l.b16 %v2594
      %v2672 = vunpack.c.l.b16 %v2595
      %v2673 = vunpack.c.l.b16 %v2596
      %v2674 = vunpack.c.l.b16 %v2597
      %v2675 = vunpack.c.l.b16 %v2598
      %v2676 = vunpack.c.l.b16 %v2599
      %v2677 = vunpack.c.l.b16 %v2600
      %v2678 = vunpack.c.l.b16 %v2601
      %v2679 = vunpack.c.l.b16 %v2602
      %v2680 = vunpack.c.l.b16 %v2603
      %v2681 = vunpack.c.l.b16 %v2604
      %v2682 = vunpack.c.l.b16 %v2605
      %v2683 = vunpack.c.l.b16 %v2606
      %v2684 = vunpack.c.l.b16 %v2607
      %v2685 = vunpack.c.l.b16 %v2608
      %v2686 = vpack.c.b16 %v2655, %v2654
      %v2687 = vpack.c.b16 %v2657, %v2656
      %v2688 = vpack.c.b16 %v2659, %v2658
      %v2689 = vpack.c.b16 %v2661, %v2660
      %v2690 = vpack.c.b16 %v2663, %v2662
      %v2691 = vpack.c.b16 %v2665, %v2664
      %v2692 = vpack.c.b16 %v2667, %v2666
      %v2693 = vpack.c.b16 %v2669, %v2668
      %v2694 = vpack.c.b16 %v2671, %v2670
      %v2695 = vpack.c.b16 %v2673, %v2672
      %v2696 = vpack.c.b16 %v2675, %v2674
      %v2697 = vpack.c.b16 %v2677, %v2676
      %v2698 = vpack.c.b16 %v2679, %v2678
      %v2699 = vpack.c.b16 %v2681, %v2680
      %v2700 = vpack.c.b16 %v2683, %v2682
      %v2701 = vpack.c.b16 %v2685, %v2684
      %v2714 = vunpack.c.l.b16 %v2610
      %v2715 = vunpack.c.l.b16 %v2611
      %v2716 = vunpack.c.l.b16 %v2612
      %v2717 = vunpack.c.l.b16 %v2613
      %v2718 = vunpack.c.l.b16 %v2614
      %v2719 = vunpack.c.l.b16 %v2615
      %v2720 = vunpack.c.l.b16 %v2616
      %v2721 = vunpack.c.l.b16 %v2617
      %v2722 = vunpack.c.l.b16 %v2618
      %v2723 = vunpack.c.l.b16 %v2619
      %v2724 = vunpack.c.l.b16 %v2620
      %v2725 = vunpack.c.l.b16 %v2621
      %v2726 = vpack.c.b16 %v2715, %v2714
      %v2727 = vpack.c.b16 %v2717, %v2716
      %v2728 = vpack.c.b16 %v2719, %v2718
      %v2729 = vpack.c.b16 %v2721, %v2720
      %v2730 = vpack.c.b16 %v2723, %v2722
      %v2731 = vpack.c.b16 %v2725, %v2724
      %v2739 = vsel %vm989, %v2686, 0
      %v2742 = vsel %vm989, %v2687, 0
      %v2745 = vsel %vm989, %v2688, 0
      %v2748 = vsel %vm989, %v2689, 0
      %v2751 = vsel %vm989, %v2690, 0
      %v2754 = vsel %vm989, %v2691, 0
      %v2757 = vsel %vm989, %v2692, 0
      %v2760 = vsel %vm989, %v2693, 0
      %v2763 = vsel %vm989, %v2694, 0
      %v2766 = vsel %vm989, %v2695, 0
      %v2769 = vsel %vm989, %v2696, 0
      %v2772 = vsel %vm989, %v2697, 0
      %v2775 = vsel %vm989, %v2698, 0
      %v2778 = vsel %vm989, %v2699, 0
      %v2781 = vsel %vm989, %v2700, 0
      %v2784 = vsel %vm989, %v2701, 0
      %2786 = vmatprep.subr.bf16.mxu0 0
      %2787 = vmatpush1.bf16.msra.mxu0 0
      %2788 = vmatprep.subr.bf16.mxu0 0
      %2789 = vmatpush1.bf16.msra.mxu0 0
      %2790 = vmatprep.subr.bf16.mxu0 0
      %2791 = vmatpush1.bf16.msra.mxu0 %v2731
      %2792 = vmatprep.subr.bf16.mxu0 0
      %2793 = vmatpush1.bf16.msra.mxu0 %v2730
      %2794 = vmatprep.subr.bf16.mxu0 0
      %2795 = vmatpush1.bf16.msra.mxu0 %v2729
      %2796 = vmatprep.subr.bf16.mxu0 0
      %2797 = vmatpush1.bf16.msra.mxu0 %v2728
      %2798 = vmatprep.subr.bf16.mxu0 0
      %2799 = vmatpush1.bf16.msra.mxu0 %v2727
      %2800 = vmatprep.subr.bf16.mxu0 0
      %2801 = vmatpush1.bf16.msra.mxu0 %v2726
      %2802 = vmatprep.subr.bf16.mxu0 0
      %2803 = vmatpush2.bf16.msra.mxu0 0
      %2804 = vmatprep.subr.bf16.mxu0 0
      %2805 = vmatpush2.bf16.msra.mxu0 0
      %2806 = vmatprep.subr.bf16.mxu0 0
      %2807 = vmatpush2.bf16.msra.mxu0 0
      %2808 = vmatprep.subr.bf16.mxu0 0
      %2809 = vmatpush2.bf16.msra.mxu0 0
      %2810 = vmatprep.subr.bf16.mxu0 0
      %2811 = vmatpush2.bf16.msra.mxu0 0
      %2812 = vmatprep.subr.bf16.mxu0 0
      %2813 = vmatpush2.bf16.msra.mxu0 0
      %2814 = vmatprep.subr.bf16.mxu0 0
      %2815 = vmatpush2.bf16.msra.mxu0 0
      %2816 = vmatprep.subr.bf16.mxu0 0
      %2817 = vmatpush2.bf16.msra.mxu0 0
      %2818 = vmatprep.mubr.bf16.mxu0 0
      %2819 = vmatmul.mubr.bf16.gmra.mxu0 %v2739
      %v2820 = vpop.f32.mrf.mxu0
      %v2821 = vadd.f32 0.0, %v2820
      %v2822 = vpop.f32.mrf.mxu0
      %v2823 = vpop.f32.mrf.mxu0
      %v2824 = vadd.f32 0.0, %v2823
      %v2825 = vpop.f32.mrf.mxu0
      %2826 = vmatprep.mubr.bf16.mxu0 0
      %2827 = vmatmul.mubr.bf16.gmra.mxu0 %v2742
      %v2828 = vpop.f32.mrf.mxu0
      %v2829 = vadd.f32 0.0, %v2828
      %v2830 = vpop.f32.mrf.mxu0
      %v2831 = vpop.f32.mrf.mxu0
      %v2832 = vadd.f32 0.0, %v2831
      %v2833 = vpop.f32.mrf.mxu0
      %2834 = vmatprep.mubr.bf16.mxu0 0
      %2835 = vmatmul.mubr.bf16.gmra.mxu0 %v2745
      %v2836 = vpop.f32.mrf.mxu0
      %v2837 = vadd.f32 0.0, %v2836
      %v2838 = vpop.f32.mrf.mxu0
      %v2839 = vpop.f32.mrf.mxu0
      %v2840 = vadd.f32 0.0, %v2839
      %v2841 = vpop.f32.mrf.mxu0
      %2842 = vmatprep.mubr.bf16.mxu0 0
      %2843 = vmatmul.mubr.bf16.gmra.mxu0 %v2748
      %v2844 = vpop.f32.mrf.mxu0
      %v2845 = vadd.f32 0.0, %v2844
      %v2846 = vpop.f32.mrf.mxu0
      %v2847 = vpop.f32.mrf.mxu0
      %v2848 = vadd.f32 0.0, %v2847
      %v2849 = vpop.f32.mrf.mxu0
      %2850 = vmatprep.mubr.bf16.mxu0 0
      %2851 = vmatmul.mubr.bf16.gmra.mxu0 %v2751
      %v2852 = vpop.f32.mrf.mxu0
      %v2853 = vadd.f32 0.0, %v2852
      %v2854 = vpop.f32.mrf.mxu0
      %v2855 = vpop.f32.mrf.mxu0
      %v2856 = vadd.f32 0.0, %v2855
      %v2857 = vpop.f32.mrf.mxu0
      %2858 = vmatprep.mubr.bf16.mxu0 0
      %2859 = vmatmul.mubr.bf16.gmra.mxu0 %v2754
      %v2860 = vpop.f32.mrf.mxu0
      %v2861 = vadd.f32 0.0, %v2860
      %v2862 = vpop.f32.mrf.mxu0
      %v2863 = vpop.f32.mrf.mxu0
      %v2864 = vadd.f32 0.0, %v2863
      %v2865 = vpop.f32.mrf.mxu0
      %2866 = vmatprep.mubr.bf16.mxu0 0
      %2867 = vmatmul.mubr.bf16.gmra.mxu0 %v2757
      %v2868 = vpop.f32.mrf.mxu0
      %v2869 = vadd.f32 0.0, %v2868
      %v2870 = vpop.f32.mrf.mxu0
      %v2871 = vpop.f32.mrf.mxu0
      %v2872 = vadd.f32 0.0, %v2871
      %v2873 = vpop.f32.mrf.mxu0
      %2874 = vmatprep.mubr.bf16.mxu0 0
      %2875 = vmatmul.mubr.bf16.gmra.mxu0 %v2760
      %v2876 = vpop.f32.mrf.mxu0
      %v2877 = vadd.f32 0.0, %v2876
      %v2878 = vpop.f32.mrf.mxu0
      %v2879 = vpop.f32.mrf.mxu0
      %v2880 = vadd.f32 0.0, %v2879
      %v2881 = vpop.f32.mrf.mxu0
      %2882 = vmatprep.mubr.bf16.mxu0 0
      %2883 = vmatmul.mubr.bf16.gmra.mxu0 %v2763
      %v2884 = vpop.f32.mrf.mxu0
      %v2885 = vadd.f32 0.0, %v2884
      %v2886 = vpop.f32.mrf.mxu0
      %v2887 = vpop.f32.mrf.mxu0
      %v2888 = vadd.f32 0.0, %v2887
      %v2889 = vpop.f32.mrf.mxu0
      %2890 = vmatprep.mubr.bf16.mxu0 0
      %2891 = vmatmul.mubr.bf16.gmra.mxu0 %v2766
      %v2892 = vpop.f32.mrf.mxu0
      %v2893 = vadd.f32 0.0, %v2892
      %v2894 = vpop.f32.mrf.mxu0
      %v2895 = vpop.f32.mrf.mxu0
      %v2896 = vadd.f32 0.0, %v2895
      %v2897 = vpop.f32.mrf.mxu0
      %2898 = vmatprep.mubr.bf16.mxu0 0
      %2899 = vmatmul.mubr.bf16.gmra.mxu0 %v2769
      %v2900 = vpop.f32.mrf.mxu0
      %v2901 = vadd.f32 0.0, %v2900
      %v2902 = vpop.f32.mrf.mxu0
      %v2903 = vpop.f32.mrf.mxu0
      %v2904 = vadd.f32 0.0, %v2903
      %v2905 = vpop.f32.mrf.mxu0
      %2906 = vmatprep.mubr.bf16.mxu0 0
      %2907 = vmatmul.mubr.bf16.gmra.mxu0 %v2772
      %v2908 = vpop.f32.mrf.mxu0
      %v2909 = vadd.f32 0.0, %v2908
      %v2910 = vpop.f32.mrf.mxu0
      %v2911 = vpop.f32.mrf.mxu0
      %v2912 = vadd.f32 0.0, %v2911
      %v2913 = vpop.f32.mrf.mxu0
      %2914 = vmatprep.mubr.bf16.mxu0 0
      %2915 = vmatmul.mubr.bf16.gmra.mxu0 %v2775
      %v2916 = vpop.f32.mrf.mxu0
      %v2917 = vadd.f32 0.0, %v2916
      %v2918 = vpop.f32.mrf.mxu0
      %v2919 = vpop.f32.mrf.mxu0
      %v2920 = vadd.f32 0.0, %v2919
      %v2921 = vpop.f32.mrf.mxu0
      %2922 = vmatprep.mubr.bf16.mxu0 0
      %2923 = vmatmul.mubr.bf16.gmra.mxu0 %v2778
      %v2924 = vpop.f32.mrf.mxu0
      %v2925 = vadd.f32 0.0, %v2924
      %v2926 = vpop.f32.mrf.mxu0
      %v2927 = vpop.f32.mrf.mxu0
      %v2928 = vadd.f32 0.0, %v2927
      %v2929 = vpop.f32.mrf.mxu0
      %2930 = vmatprep.mubr.bf16.mxu0 0
      %2931 = vmatmul.mubr.bf16.gmra.mxu0 %v2781
      %v2932 = vpop.f32.mrf.mxu0
      %v2933 = vadd.f32 0.0, %v2932
      %v2934 = vpop.f32.mrf.mxu0
      %v2935 = vpop.f32.mrf.mxu0
      %v2936 = vadd.f32 0.0, %v2935
      %v2937 = vpop.f32.mrf.mxu0
      %2938 = vmatprep.mubr.bf16.mxu0 0
      %2939 = vmatmul.mubr.bf16.gmra.mxu0 %v2784
      %v2940 = vpop.f32.mrf.mxu0
      %v2941 = vadd.f32 0.0, %v2940
      %v2942 = vpop.f32.mrf.mxu0
      %v2943 = vpop.f32.mrf.mxu0
      %v2944 = vadd.f32 0.0, %v2943
      %v2945 = vpop.f32.mrf.mxu0
      %2946 = vdwg.mxu0
      %v2947 = vadd.f32 %v2513, %v2821
      %v2948 = vadd.f32 %v2514, %v2824
      %v2949 = vadd.f32 %v2515, %v2829
      %v2950 = vadd.f32 %v2516, %v2832
      %v2951 = vadd.f32 %v2517, %v2837
      %v2952 = vadd.f32 %v2518, %v2840
      %v2953 = vadd.f32 %v2519, %v2845
      %v2954 = vadd.f32 %v2520, %v2848
      %v2955 = vadd.f32 %v2521, %v2853
      %v2956 = vadd.f32 %v2522, %v2856
      %v2957 = vadd.f32 %v2523, %v2861
      %v2958 = vadd.f32 %v2524, %v2864
      %v2959 = vadd.f32 %v2525, %v2869
      %v2960 = vadd.f32 %v2526, %v2872
      %v2961 = vadd.f32 %v2527, %v2877
      %v2962 = vadd.f32 %v2528, %v2880
      %v2963 = vadd.f32 %v2529, %v2885
      %v2964 = vadd.f32 %v2530, %v2888
      %v2965 = vadd.f32 %v2531, %v2893
      %v2966 = vadd.f32 %v2532, %v2896
      %v2967 = vadd.f32 %v2533, %v2901
      %v2968 = vadd.f32 %v2534, %v2904
      %v2969 = vadd.f32 %v2535, %v2909
      %v2970 = vadd.f32 %v2536, %v2912
      %v2971 = vadd.f32 %v2537, %v2917
      %v2972 = vadd.f32 %v2538, %v2920
      %v2973 = vadd.f32 %v2539, %v2925
      %v2974 = vadd.f32 %v2540, %v2928
      %v2975 = vadd.f32 %v2541, %v2933
      %v2976 = vadd.f32 %v2542, %v2936
      %v2977 = vadd.f32 %v2543, %v2941
      %v2978 = vadd.f32 %v2544, %v2944
      %v2979 = vld [vmem:[%s192 + $0x8] sm:$0xf]
      %v2980 = vld [vmem:[%s192 + $0xc] sm:$0xf]
      %v2981 = vld [vmem:[%s192 + $0x10] sm:$0xf]
      %v2982 = vld [vmem:[%s192 + $0x14] sm:$0xf]
      %v2983 = vld [vmem:[%s192 + $0x18] sm:$0xf]
      %v2984 = vld [vmem:[%s192 + $0x1c] sm:$0xf]
      %v2985 = vld [vmem:[%s192 + $0x20] sm:$0xf]
      %v2986 = vld [vmem:[%s192 + $0x24] sm:$0xf]
      %v2987 = vld [vmem:[%s192 + $0x28] sm:$0xf]
      %v2988 = vld [vmem:[%s192 + $0x2c] sm:$0xf]
      %v2989 = vld [vmem:[%s192 + $0x30] sm:$0xf]
      %v2990 = vld [vmem:[%s192 + $0x34] sm:$0xf]
      %v2991 = vld [vmem:[%s192 + $0x38] sm:$0xf]
      %v2992 = vld [vmem:[%s192 + $0x3c] sm:$0xf]
      %v2993 = vld [vmem:[%s192 + $0x40] sm:$0xf]
      %v2994 = vld [vmem:[%s192 + $0x44] sm:$0xf]
      %v2995 = vld [vmem:[%s192 + $0x48] sm:$0xf]
      %v2996 = vld [vmem:[%s192 + $0x4c] sm:$0xf]
      %v2997 = vld [vmem:[%s192 + $0x50] sm:$0xf]
      %v2998 = vld [vmem:[%s192 + $0x54] sm:$0xf]
      %v2999 = vld [vmem:[%s192 + $0x58] sm:$0xf]
      %v3000 = vld [vmem:[%s192 + $0x5c] sm:$0xf]
      %v3001 = vld [vmem:[%s192 + $0x60] sm:$0xf]
      %v3002 = vld [vmem:[%s192 + $0x64] sm:$0xf]
      %v3003 = vld [vmem:[%s192 + $0x68] sm:$0xf]
      %v3004 = vld [vmem:[%s192 + $0x6c] sm:$0xf]
      %v3005 = vld [vmem:[%s192 + $0x70] sm:$0xf]
      %v3006 = vld [vmem:[%s192 + $0x74] sm:$0xf]
      %v3007 = vld [vmem:[%s192 + $0x78] sm:$0xf]
      %v3008 = vld [vmem:[%s192 + $0x7c] sm:$0xf]
      %v3009 = vld [vmem:[%s192 + $0x80] sm:$0xf]
      %v3010 = vld [vmem:[%s192 + $0x84] sm:$0xf]
      %v3011 = vld [vmem:[%s192 + $0x88] sm:$0x1]
      %s3012 = scalar_lea.vmem %s1, 192
      %v3013 = vld [vmem:[%s3012] sm:$0xf]
      %v3014 = vld [vmem:[%s3012 + $0x4] sm:$0xf]
      %v3015 = vld [vmem:[%s3012 + $0x8] sm:$0xf]
      %v3016 = vld [vmem:[%s3012 + $0xc] sm:$0xf]
      %v3017 = vld [vmem:[%s3012 + $0x10] sm:$0xf]
      %v3018 = vld [vmem:[%s3012 + $0x14] sm:$0xf]
      %v3019 = vld [vmem:[%s3012 + $0x18] sm:$0xf]
      %v3020 = vld [vmem:[%s3012 + $0x1c] sm:$0xf]
      %v3021 = vld [vmem:[%s3012 + $0x20] sm:$0xf]
      %v3022 = vld [vmem:[%s3012 + $0x24] sm:$0xf]
      %v3023 = vld [vmem:[%s3012 + $0x28] sm:$0xf]
      %v3024 = vld [vmem:[%s3012 + $0x2c] sm:$0xf]
      %v3058 = vunpack.c.l.b16 %v2979
      %v3059 = vunpack.c.l.b16 %v2980
      %v3060 = vunpack.c.l.b16 %v2981
      %v3061 = vunpack.c.l.b16 %v2982
      %v3062 = vunpack.c.l.b16 %v2983
      %v3063 = vunpack.c.l.b16 %v2984
      %v3064 = vunpack.c.l.b16 %v2985
      %v3065 = vunpack.c.l.b16 %v2986
      %v3066 = vunpack.c.l.b16 %v2987
      %v3067 = vunpack.c.l.b16 %v2988
      %v3068 = vunpack.c.l.b16 %v2989
      %v3069 = vunpack.c.l.b16 %v2990
      %v3070 = vunpack.c.l.b16 %v2991
      %v3071 = vunpack.c.l.b16 %v2992
      %v3072 = vunpack.c.l.b16 %v2993
      %v3073 = vunpack.c.l.b16 %v2994
      %v3074 = vunpack.c.l.b16 %v2995
      %v3075 = vunpack.c.l.b16 %v2996
      %v3076 = vunpack.c.l.b16 %v2997
      %v3077 = vunpack.c.l.b16 %v2998
      %v3078 = vunpack.c.l.b16 %v2999
      %v3079 = vunpack.c.l.b16 %v3000
      %v3080 = vunpack.c.l.b16 %v3001
      %v3081 = vunpack.c.l.b16 %v3002
      %v3082 = vunpack.c.l.b16 %v3003
      %v3083 = vunpack.c.l.b16 %v3004
      %v3084 = vunpack.c.l.b16 %v3005
      %v3085 = vunpack.c.l.b16 %v3006
      %v3086 = vunpack.c.l.b16 %v3007
      %v3087 = vunpack.c.l.b16 %v3008
      %v3088 = vunpack.c.l.b16 %v3009
      %v3089 = vunpack.c.l.b16 %v3010
      %v3090 = vunpack.c.l.b16 %v3011
      %v3091 = vpack.c.b16 %v3059, %v3058
      %v3092 = vpack.c.b16 %v3061, %v3060
      %v3093 = vpack.c.b16 %v3063, %v3062
      %v3094 = vpack.c.b16 %v3065, %v3064
      %v3095 = vpack.c.b16 %v3067, %v3066
      %v3096 = vpack.c.b16 %v3069, %v3068
      %v3097 = vpack.c.b16 %v3071, %v3070
      %v3098 = vpack.c.b16 %v3073, %v3072
      %v3099 = vpack.c.b16 %v3075, %v3074
      %v3100 = vpack.c.b16 %v3077, %v3076
      %v3101 = vpack.c.b16 %v3079, %v3078
      %v3102 = vpack.c.b16 %v3081, %v3080
      %v3103 = vpack.c.b16 %v3083, %v3082
      %v3104 = vpack.c.b16 %v3085, %v3084
      %v3105 = vpack.c.b16 %v3087, %v3086
      %v3106 = vpack.c.b16 %v3089, %v3088
      %v3107 = vpack.c.b16 %v3090, %v3090
      %v3109 = vshrl.u32 %v3091, 16
      %v3111 = vshll.u32 %v3091, 16
      %v3113 = vrot.slane %v3111, 1
      %v3114 = vor.u32 %v3109, %v3113
      %v3116 = vshll.u32 %v3092, 16
      %v3118 = vrot.slane %v3116, 1
      %v3119 = vsel %vm820, %v3114, %v3118
      %v3120 = vshrl.u32 %v3092, 16
      %v3122 = vor.u32 %v3120, %v3118
      %v3124 = vshll.u32 %v3093, 16
      %v3126 = vrot.slane %v3124, 1
      %v3127 = vsel %vm820, %v3122, %v3126
      %v3128 = vshrl.u32 %v3093, 16
      %v3130 = vor.u32 %v3128, %v3126
      %v3132 = vshll.u32 %v3094, 16
      %v3134 = vrot.slane %v3132, 1
      %v3135 = vsel %vm820, %v3130, %v3134
      %v3136 = vshrl.u32 %v3094, 16
      %v3138 = vor.u32 %v3136, %v3134
      %v3140 = vshll.u32 %v3095, 16
      %v3142 = vrot.slane %v3140, 1
      %v3143 = vsel %vm820, %v3138, %v3142
      %v3144 = vshrl.u32 %v3095, 16
      %v3146 = vor.u32 %v3144, %v3142
      %v3148 = vshll.u32 %v3096, 16
      %v3150 = vrot.slane %v3148, 1
      %v3151 = vsel %vm820, %v3146, %v3150
      %v3152 = vshrl.u32 %v3096, 16
      %v3154 = vor.u32 %v3152, %v3150
      %v3156 = vshll.u32 %v3097, 16
      %v3158 = vrot.slane %v3156, 1
      %v3159 = vsel %vm820, %v3154, %v3158
      %v3160 = vshrl.u32 %v3097, 16
      %v3162 = vor.u32 %v3160, %v3158
      %v3164 = vshll.u32 %v3098, 16
      %v3166 = vrot.slane %v3164, 1
      %v3167 = vsel %vm820, %v3162, %v3166
      %v3168 = vshrl.u32 %v3098, 16
      %v3170 = vor.u32 %v3168, %v3166
      %v3172 = vshll.u32 %v3099, 16
      %v3174 = vrot.slane %v3172, 1
      %v3175 = vsel %vm820, %v3170, %v3174
      %v3176 = vshrl.u32 %v3099, 16
      %v3178 = vor.u32 %v3176, %v3174
      %v3180 = vshll.u32 %v3100, 16
      %v3182 = vrot.slane %v3180, 1
      %v3183 = vsel %vm820, %v3178, %v3182
      %v3184 = vshrl.u32 %v3100, 16
      %v3186 = vor.u32 %v3184, %v3182
      %v3188 = vshll.u32 %v3101, 16
      %v3190 = vrot.slane %v3188, 1
      %v3191 = vsel %vm820, %v3186, %v3190
      %v3192 = vshrl.u32 %v3101, 16
      %v3194 = vor.u32 %v3192, %v3190
      %v3196 = vshll.u32 %v3102, 16
      %v3198 = vrot.slane %v3196, 1
      %v3199 = vsel %vm820, %v3194, %v3198
      %v3200 = vshrl.u32 %v3102, 16
      %v3202 = vor.u32 %v3200, %v3198
      %v3204 = vshll.u32 %v3103, 16
      %v3206 = vrot.slane %v3204, 1
      %v3207 = vsel %vm820, %v3202, %v3206
      %v3208 = vshrl.u32 %v3103, 16
      %v3210 = vor.u32 %v3208, %v3206
      %v3212 = vshll.u32 %v3104, 16
      %v3214 = vrot.slane %v3212, 1
      %v3215 = vsel %vm820, %v3210, %v3214
      %v3216 = vshrl.u32 %v3104, 16
      %v3218 = vor.u32 %v3216, %v3214
      %v3220 = vshll.u32 %v3105, 16
      %v3222 = vrot.slane %v3220, 1
      %v3223 = vsel %vm820, %v3218, %v3222
      %v3224 = vshrl.u32 %v3105, 16
      %v3226 = vor.u32 %v3224, %v3222
      %v3228 = vshll.u32 %v3106, 16
      %v3230 = vrot.slane %v3228, 1
      %v3231 = vsel %vm820, %v3226, %v3230
      %v3232 = vshrl.u32 %v3106, 16
      %v3234 = vor.u32 %v3232, %v3230
      %v3236 = vshll.u32 %v3107, 16
      %v3238 = vrot.slane %v3236, 1
      %v3239 = vsel %vm820, %v3234, %v3238
      %v3252 = vunpack.c.l.b16 %v3013
      %v3253 = vunpack.c.l.b16 %v3014
      %v3254 = vunpack.c.l.b16 %v3015
      %v3255 = vunpack.c.l.b16 %v3016
      %v3256 = vunpack.c.l.b16 %v3017
      %v3257 = vunpack.c.l.b16 %v3018
      %v3258 = vunpack.c.l.b16 %v3019
      %v3259 = vunpack.c.l.b16 %v3020
      %v3260 = vunpack.c.l.b16 %v3021
      %v3261 = vunpack.c.l.b16 %v3022
      %v3262 = vunpack.c.l.b16 %v3023
      %v3263 = vunpack.c.l.b16 %v3024
      %v3264 = vpack.c.b16 %v3253, %v3252
      %v3265 = vpack.c.b16 %v3255, %v3254
      %v3266 = vpack.c.b16 %v3257, %v3256
      %v3267 = vpack.c.b16 %v3259, %v3258
      %v3268 = vpack.c.b16 %v3261, %v3260
      %v3269 = vpack.c.b16 %v3263, %v3262
      %v3277 = vsel %vm989, %v3119, 0
      %v3280 = vsel %vm989, %v3127, 0
      %v3283 = vsel %vm989, %v3135, 0
      %v3286 = vsel %vm989, %v3143, 0
      %v3289 = vsel %vm989, %v3151, 0
      %v3292 = vsel %vm989, %v3159, 0
      %v3295 = vsel %vm989, %v3167, 0
      %v3298 = vsel %vm989, %v3175, 0
      %v3301 = vsel %vm989, %v3183, 0
      %v3304 = vsel %vm989, %v3191, 0
      %v3307 = vsel %vm989, %v3199, 0
      %v3310 = vsel %vm989, %v3207, 0
      %v3313 = vsel %vm989, %v3215, 0
      %v3316 = vsel %vm989, %v3223, 0
      %v3319 = vsel %vm989, %v3231, 0
      %v3322 = vsel %vm989, %v3239, 0
      %3324 = vmatprep.subr.bf16.mxu0 0
      %3325 = vmatpush1.bf16.msra.mxu0 0
      %3326 = vmatprep.subr.bf16.mxu0 0
      %3327 = vmatpush1.bf16.msra.mxu0 0
      %3328 = vmatprep.subr.bf16.mxu0 0
      %3329 = vmatpush1.bf16.msra.mxu0 %v3269
      %3330 = vmatprep.subr.bf16.mxu0 0
      %3331 = vmatpush1.bf16.msra.mxu0 %v3268
      %3332 = vmatprep.subr.bf16.mxu0 0
      %3333 = vmatpush1.bf16.msra.mxu0 %v3267
      %3334 = vmatprep.subr.bf16.mxu0 0
      %3335 = vmatpush1.bf16.msra.mxu0 %v3266
      %3336 = vmatprep.subr.bf16.mxu0 0
      %3337 = vmatpush1.bf16.msra.mxu0 %v3265
      %3338 = vmatprep.subr.bf16.mxu0 0
      %3339 = vmatpush1.bf16.msra.mxu0 %v3264
      %3340 = vmatprep.subr.bf16.mxu0 0
      %3341 = vmatpush2.bf16.msra.mxu0 0
      %3342 = vmatprep.subr.bf16.mxu0 0
      %3343 = vmatpush2.bf16.msra.mxu0 0
      %3344 = vmatprep.subr.bf16.mxu0 0
      %3345 = vmatpush2.bf16.msra.mxu0 0
      %3346 = vmatprep.subr.bf16.mxu0 0
      %3347 = vmatpush2.bf16.msra.mxu0 0
      %3348 = vmatprep.subr.bf16.mxu0 0
      %3349 = vmatpush2.bf16.msra.mxu0 0
      %3350 = vmatprep.subr.bf16.mxu0 0
      %3351 = vmatpush2.bf16.msra.mxu0 0
      %3352 = vmatprep.subr.bf16.mxu0 0
      %3353 = vmatpush2.bf16.msra.mxu0 0
      %3354 = vmatprep.subr.bf16.mxu0 0
      %3355 = vmatpush2.bf16.msra.mxu0 0
      %3356 = vmatprep.mubr.bf16.mxu0 0
      %3357 = vmatmul.mubr.bf16.gmra.mxu0 %v3277
      %v3358 = vpop.f32.mrf.mxu0
      %v3359 = vadd.f32 0.0, %v3358
      %v3360 = vpop.f32.mrf.mxu0
      %v3361 = vpop.f32.mrf.mxu0
      %v3362 = vadd.f32 0.0, %v3361
      %v3363 = vpop.f32.mrf.mxu0
      %3364 = vmatprep.mubr.bf16.mxu0 0
      %3365 = vmatmul.mubr.bf16.gmra.mxu0 %v3280
      %v3366 = vpop.f32.mrf.mxu0
      %v3367 = vadd.f32 0.0, %v3366
      %v3368 = vpop.f32.mrf.mxu0
      %v3369 = vpop.f32.mrf.mxu0
      %v3370 = vadd.f32 0.0, %v3369
      %v3371 = vpop.f32.mrf.mxu0
      %3372 = vmatprep.mubr.bf16.mxu0 0
      %3373 = vmatmul.mubr.bf16.gmra.mxu0 %v3283
      %v3374 = vpop.f32.mrf.mxu0
      %v3375 = vadd.f32 0.0, %v3374
      %v3376 = vpop.f32.mrf.mxu0
      %v3377 = vpop.f32.mrf.mxu0
      %v3378 = vadd.f32 0.0, %v3377
      %v3379 = vpop.f32.mrf.mxu0
      %3380 = vmatprep.mubr.bf16.mxu0 0
      %3381 = vmatmul.mubr.bf16.gmra.mxu0 %v3286
      %v3382 = vpop.f32.mrf.mxu0
      %v3383 = vadd.f32 0.0, %v3382
      %v3384 = vpop.f32.mrf.mxu0
      %v3385 = vpop.f32.mrf.mxu0
      %v3386 = vadd.f32 0.0, %v3385
      %v3387 = vpop.f32.mrf.mxu0
      %3388 = vmatprep.mubr.bf16.mxu0 0
      %3389 = vmatmul.mubr.bf16.gmra.mxu0 %v3289
      %v3390 = vpop.f32.mrf.mxu0
      %v3391 = vadd.f32 0.0, %v3390
      %v3392 = vpop.f32.mrf.mxu0
      %v3393 = vpop.f32.mrf.mxu0
      %v3394 = vadd.f32 0.0, %v3393
      %v3395 = vpop.f32.mrf.mxu0
      %3396 = vmatprep.mubr.bf16.mxu0 0
      %3397 = vmatmul.mubr.bf16.gmra.mxu0 %v3292
      %v3398 = vpop.f32.mrf.mxu0
      %v3399 = vadd.f32 0.0, %v3398
      %v3400 = vpop.f32.mrf.mxu0
      %v3401 = vpop.f32.mrf.mxu0
      %v3402 = vadd.f32 0.0, %v3401
      %v3403 = vpop.f32.mrf.mxu0
      %3404 = vmatprep.mubr.bf16.mxu0 0
      %3405 = vmatmul.mubr.bf16.gmra.mxu0 %v3295
      %v3406 = vpop.f32.mrf.mxu0
      %v3407 = vadd.f32 0.0, %v3406
      %v3408 = vpop.f32.mrf.mxu0
      %v3409 = vpop.f32.mrf.mxu0
      %v3410 = vadd.f32 0.0, %v3409
      %v3411 = vpop.f32.mrf.mxu0
      %3412 = vmatprep.mubr.bf16.mxu0 0
      %3413 = vmatmul.mubr.bf16.gmra.mxu0 %v3298
      %v3414 = vpop.f32.mrf.mxu0
      %v3415 = vadd.f32 0.0, %v3414
      %v3416 = vpop.f32.mrf.mxu0
      %v3417 = vpop.f32.mrf.mxu0
      %v3418 = vadd.f32 0.0, %v3417
      %v3419 = vpop.f32.mrf.mxu0
      %3420 = vmatprep.mubr.bf16.mxu0 0
      %3421 = vmatmul.mubr.bf16.gmra.mxu0 %v3301
      %v3422 = vpop.f32.mrf.mxu0
      %v3423 = vadd.f32 0.0, %v3422
      %v3424 = vpop.f32.mrf.mxu0
      %v3425 = vpop.f32.mrf.mxu0
      %v3426 = vadd.f32 0.0, %v3425
      %v3427 = vpop.f32.mrf.mxu0
      %3428 = vmatprep.mubr.bf16.mxu0 0
      %3429 = vmatmul.mubr.bf16.gmra.mxu0 %v3304
      %v3430 = vpop.f32.mrf.mxu0
      %v3431 = vadd.f32 0.0, %v3430
      %v3432 = vpop.f32.mrf.mxu0
      %v3433 = vpop.f32.mrf.mxu0
      %v3434 = vadd.f32 0.0, %v3433
      %v3435 = vpop.f32.mrf.mxu0
      %3436 = vmatprep.mubr.bf16.mxu0 0
      %3437 = vmatmul.mubr.bf16.gmra.mxu0 %v3307
      %v3438 = vpop.f32.mrf.mxu0
      %v3439 = vadd.f32 0.0, %v3438
      %v3440 = vpop.f32.mrf.mxu0
      %v3441 = vpop.f32.mrf.mxu0
      %v3442 = vadd.f32 0.0, %v3441
      %v3443 = vpop.f32.mrf.mxu0
      %3444 = vmatprep.mubr.bf16.mxu0 0
      %3445 = vmatmul.mubr.bf16.gmra.mxu0 %v3310
      %v3446 = vpop.f32.mrf.mxu0
      %v3447 = vadd.f32 0.0, %v3446
      %v3448 = vpop.f32.mrf.mxu0
      %v3449 = vpop.f32.mrf.mxu0
      %v3450 = vadd.f32 0.0, %v3449
      %v3451 = vpop.f32.mrf.mxu0
      %3452 = vmatprep.mubr.bf16.mxu0 0
      %3453 = vmatmul.mubr.bf16.gmra.mxu0 %v3313
      %v3454 = vpop.f32.mrf.mxu0
      %v3455 = vadd.f32 0.0, %v3454
      %v3456 = vpop.f32.mrf.mxu0
      %v3457 = vpop.f32.mrf.mxu0
      %v3458 = vadd.f32 0.0, %v3457
      %v3459 = vpop.f32.mrf.mxu0
      %3460 = vmatprep.mubr.bf16.mxu0 0
      %3461 = vmatmul.mubr.bf16.gmra.mxu0 %v3316
      %v3462 = vpop.f32.mrf.mxu0
      %v3463 = vadd.f32 0.0, %v3462
      %v3464 = vpop.f32.mrf.mxu0
      %v3465 = vpop.f32.mrf.mxu0
      %v3466 = vadd.f32 0.0, %v3465
      %v3467 = vpop.f32.mrf.mxu0
      %3468 = vmatprep.mubr.bf16.mxu0 0
      %3469 = vmatmul.mubr.bf16.gmra.mxu0 %v3319
      %v3470 = vpop.f32.mrf.mxu0
      %v3471 = vadd.f32 0.0, %v3470
      %v3472 = vpop.f32.mrf.mxu0
      %v3473 = vpop.f32.mrf.mxu0
      %v3474 = vadd.f32 0.0, %v3473
      %v3475 = vpop.f32.mrf.mxu0
      %3476 = vmatprep.mubr.bf16.mxu0 0
      %3477 = vmatmul.mubr.bf16.gmra.mxu0 %v3322
      %v3478 = vpop.f32.mrf.mxu0
      %v3479 = vadd.f32 0.0, %v3478
      %v3480 = vpop.f32.mrf.mxu0
      %v3481 = vpop.f32.mrf.mxu0
      %v3482 = vadd.f32 0.0, %v3481
      %v3483 = vpop.f32.mrf.mxu0
      %3484 = vdwg.mxu0
      %v3485 = vadd.f32 %v2947, %v3359
      %v3486 = vadd.f32 %v2948, %v3362
      %v3487 = vadd.f32 %v2949, %v3367
      %v3488 = vadd.f32 %v2950, %v3370
      %v3489 = vadd.f32 %v2951, %v3375
      %v3490 = vadd.f32 %v2952, %v3378
      %v3491 = vadd.f32 %v2953, %v3383
      %v3492 = vadd.f32 %v2954, %v3386
      %v3493 = vadd.f32 %v2955, %v3391
      %v3494 = vadd.f32 %v2956, %v3394
      %v3495 = vadd.f32 %v2957, %v3399
      %v3496 = vadd.f32 %v2958, %v3402
      %v3497 = vadd.f32 %v2959, %v3407
      %v3498 = vadd.f32 %v2960, %v3410
      %v3499 = vadd.f32 %v2961, %v3415
      %v3500 = vadd.f32 %v2962, %v3418
      %v3501 = vadd.f32 %v2963, %v3423
      %v3502 = vadd.f32 %v2964, %v3426
      %v3503 = vadd.f32 %v2965, %v3431
      %v3504 = vadd.f32 %v2966, %v3434
      %v3505 = vadd.f32 %v2967, %v3439
      %v3506 = vadd.f32 %v2968, %v3442
      %v3507 = vadd.f32 %v2969, %v3447
      %v3508 = vadd.f32 %v2970, %v3450
      %v3509 = vadd.f32 %v2971, %v3455
      %v3510 = vadd.f32 %v2972, %v3458
      %v3511 = vadd.f32 %v2973, %v3463
      %v3512 = vadd.f32 %v2974, %v3466
      %v3513 = vadd.f32 %v2975, %v3471
      %v3514 = vadd.f32 %v2976, %v3474
      %v3515 = vadd.f32 %v2977, %v3479
      %v3516 = vadd.f32 %v2978, %v3482
      %v3517 = vld [vmem:[%s192 + $0x8] sm:$0xe]
      %v3518 = vmul.bf16 %v3517, %v1977
      %v3519 = vmul.bf16 %v2980, %v1980
      %v3520 = vmul.bf16 %v2981, %v1983
      %v3521 = vmul.bf16 %v2982, %v1986
      %v3522 = vmul.bf16 %v2983, %v1989
      %v3523 = vmul.bf16 %v2984, %v1992
      %v3524 = vmul.bf16 %v2985, %v1995
      %v3525 = vmul.bf16 %v2986, %v1998
      %v3526 = vmul.bf16 %v2987, %v2001
      %v3527 = vmul.bf16 %v2988, %v2004
      %v3528 = vmul.bf16 %v2989, %v2007
      %v3529 = vmul.bf16 %v2990, %v2010
      %v3530 = vmul.bf16 %v2991, %v2013
      %v3531 = vmul.bf16 %v2992, %v2016
      %v3532 = vmul.bf16 %v2993, %v2019
      %v3533 = vmul.bf16 %v2994, %v2022
      %v3534 = vmul.bf16 %v2995, %v2025
      %v3535 = vmul.bf16 %v2996, %v2028
      %v3536 = vmul.bf16 %v2997, %v2031
      %v3537 = vmul.bf16 %v2998, %v2034
      %v3538 = vmul.bf16 %v2999, %v2037
      %v3539 = vmul.bf16 %v3000, %v2040
      %v3540 = vmul.bf16 %v3001, %v2043
      %v3541 = vmul.bf16 %v3002, %v2046
      %v3542 = vmul.bf16 %v3003, %v2049
      %v3543 = vmul.bf16 %v3004, %v2052
      %v3544 = vmul.bf16 %v3005, %v2055
      %v3545 = vmul.bf16 %v3006, %v2058
      %v3546 = vmul.bf16 %v3007, %v2061
      %v3547 = vmul.bf16 %v3008, %v2064
      %v3548 = vmul.bf16 %v3009, %v2067
      %v3549 = vmul.bf16 %v3010, %v2070
      %v3550 = vmul.bf16 %v3011, %v2071
      %s3551 = scalar_lea.vmem %s1, 240
      %v3552 = vld [vmem:[%s3551] sm:$0xf]
      %v3553 = vld [vmem:[%s3551 + $0x4] sm:$0xf]
      %v3554 = vld [vmem:[%s3551 + $0x8] sm:$0xf]
      %v3555 = vld [vmem:[%s3551 + $0xc] sm:$0xf]
      %v3556 = vld [vmem:[%s3551 + $0x10] sm:$0xf]
      %v3557 = vld [vmem:[%s3551 + $0x14] sm:$0xf]
      %v3558 = vld [vmem:[%s3551 + $0x18] sm:$0xf]
      %v3559 = vld [vmem:[%s3551 + $0x1c] sm:$0xf]
      %v3560 = vld [vmem:[%s3551 + $0x20] sm:$0xf]
      %v3561 = vld [vmem:[%s3551 + $0x24] sm:$0xf]
      %v3562 = vld [vmem:[%s3551 + $0x28] sm:$0xf]
      %v3563 = vld [vmem:[%s3551 + $0x2c] sm:$0xf]
      %v3597 = vunpack.c.l.b16 %v3518
      %v3598 = vunpack.c.l.b16 %v3519
      %v3599 = vunpack.c.l.b16 %v3520
      %v3600 = vunpack.c.l.b16 %v3521
      %v3601 = vunpack.c.l.b16 %v3522
      %v3602 = vunpack.c.l.b16 %v3523
      %v3603 = vunpack.c.l.b16 %v3524
      %v3604 = vunpack.c.l.b16 %v3525
      %v3605 = vunpack.c.l.b16 %v3526
      %v3606 = vunpack.c.l.b16 %v3527
      %v3607 = vunpack.c.l.b16 %v3528
      %v3608 = vunpack.c.l.b16 %v3529
      %v3609 = vunpack.c.l.b16 %v3530
      %v3610 = vunpack.c.l.b16 %v3531
      %v3611 = vunpack.c.l.b16 %v3532
      %v3612 = vunpack.c.l.b16 %v3533
      %v3613 = vunpack.c.l.b16 %v3534
      %v3614 = vunpack.c.l.b16 %v3535
      %v3615 = vunpack.c.l.b16 %v3536
      %v3616 = vunpack.c.l.b16 %v3537
      %v3617 = vunpack.c.l.b16 %v3538
      %v3618 = vunpack.c.l.b16 %v3539
      %v3619 = vunpack.c.l.b16 %v3540
      %v3620 = vunpack.c.l.b16 %v3541
      %v3621 = vunpack.c.l.b16 %v3542
      %v3622 = vunpack.c.l.b16 %v3543
      %v3623 = vunpack.c.l.b16 %v3544
      %v3624 = vunpack.c.l.b16 %v3545
      %v3625 = vunpack.c.l.b16 %v3546
      %v3626 = vunpack.c.l.b16 %v3547
      %v3627 = vunpack.c.l.b16 %v3548
      %v3628 = vunpack.c.l.b16 %v3549
      %v3629 = vunpack.c.l.b16 %v3550
      %v3630 = vpack.c.b16 %v3598, %v3597
      %v3631 = vpack.c.b16 %v3600, %v3599
      %v3632 = vpack.c.b16 %v3602, %v3601
      %v3633 = vpack.c.b16 %v3604, %v3603
      %v3634 = vpack.c.b16 %v3606, %v3605
      %v3635 = vpack.c.b16 %v3608, %v3607
      %v3636 = vpack.c.b16 %v3610, %v3609
      %v3637 = vpack.c.b16 %v3612, %v3611
      %v3638 = vpack.c.b16 %v3614, %v3613
      %v3639 = vpack.c.b16 %v3616, %v3615
      %v3640 = vpack.c.b16 %v3618, %v3617
      %v3641 = vpack.c.b16 %v3620, %v3619
      %v3642 = vpack.c.b16 %v3622, %v3621
      %v3643 = vpack.c.b16 %v3624, %v3623
      %v3644 = vpack.c.b16 %v3626, %v3625
      %v3645 = vpack.c.b16 %v3628, %v3627
      %v3646 = vpack.c.b16 %v3629, %v3629
      %v3647 = vrot.slane %v3630, 1
      %v3648 = vrot.slane %v3631, 1
      %v3649 = vsel %vm2234, %v3647, %v3648
      %v3650 = vrot.slane %v3632, 1
      %v3651 = vsel %vm2234, %v3648, %v3650
      %v3652 = vrot.slane %v3633, 1
      %v3653 = vsel %vm2234, %v3650, %v3652
      %v3654 = vrot.slane %v3634, 1
      %v3655 = vsel %vm2234, %v3652, %v3654
      %v3656 = vrot.slane %v3635, 1
      %v3657 = vsel %vm2234, %v3654, %v3656
      %v3658 = vrot.slane %v3636, 1
      %v3659 = vsel %vm2234, %v3656, %v3658
      %v3660 = vrot.slane %v3637, 1
      %v3661 = vsel %vm2234, %v3658, %v3660
      %v3662 = vrot.slane %v3638, 1
      %v3663 = vsel %vm2234, %v3660, %v3662
      %v3664 = vrot.slane %v3639, 1
      %v3665 = vsel %vm2234, %v3662, %v3664
      %v3666 = vrot.slane %v3640, 1
      %v3667 = vsel %vm2234, %v3664, %v3666
      %v3668 = vrot.slane %v3641, 1
      %v3669 = vsel %vm2234, %v3666, %v3668
      %v3670 = vrot.slane %v3642, 1
      %v3671 = vsel %vm2234, %v3668, %v3670
      %v3672 = vrot.slane %v3643, 1
      %v3673 = vsel %vm2234, %v3670, %v3672
      %v3674 = vrot.slane %v3644, 1
      %v3675 = vsel %vm2234, %v3672, %v3674
      %v3676 = vrot.slane %v3645, 1
      %v3677 = vsel %vm2234, %v3674, %v3676
      %v3678 = vrot.slane %v3646, 1
      %v3679 = vsel %vm2234, %v3676, %v3678
      %v3692 = vunpack.c.l.b16 %v3552
      %v3693 = vunpack.c.l.b16 %v3553
      %v3694 = vunpack.c.l.b16 %v3554
      %v3695 = vunpack.c.l.b16 %v3555
      %v3696 = vunpack.c.l.b16 %v3556
      %v3697 = vunpack.c.l.b16 %v3557
      %v3698 = vunpack.c.l.b16 %v3558
      %v3699 = vunpack.c.l.b16 %v3559
      %v3700 = vunpack.c.l.b16 %v3560
      %v3701 = vunpack.c.l.b16 %v3561
      %v3702 = vunpack.c.l.b16 %v3562
      %v3703 = vunpack.c.l.b16 %v3563
      %v3704 = vpack.c.b16 %v3693, %v3692
      %v3705 = vpack.c.b16 %v3695, %v3694
      %v3706 = vpack.c.b16 %v3697, %v3696
      %v3707 = vpack.c.b16 %v3699, %v3698
      %v3708 = vpack.c.b16 %v3701, %v3700
      %v3709 = vpack.c.b16 %v3703, %v3702
      %v3717 = vsel %vm989, %v3649, 0
      %v3720 = vsel %vm989, %v3651, 0
      %v3723 = vsel %vm989, %v3653, 0
      %v3726 = vsel %vm989, %v3655, 0
      %v3729 = vsel %vm989, %v3657, 0
      %v3732 = vsel %vm989, %v3659, 0
      %v3735 = vsel %vm989, %v3661, 0
      %v3738 = vsel %vm989, %v3663, 0
      %v3741 = vsel %vm989, %v3665, 0
      %v3744 = vsel %vm989, %v3667, 0
      %v3747 = vsel %vm989, %v3669, 0
      %v3750 = vsel %vm989, %v3671, 0
      %v3753 = vsel %vm989, %v3673, 0
      %v3756 = vsel %vm989, %v3675, 0
      %v3759 = vsel %vm989, %v3677, 0
      %v3762 = vsel %vm989, %v3679, 0
      %3764 = vmatprep.subr.bf16.mxu0 0
      %3765 = vmatpush1.bf16.msra.mxu0 0
      %3766 = vmatprep.subr.bf16.mxu0 0
      %3767 = vmatpush1.bf16.msra.mxu0 0
      %3768 = vmatprep.subr.bf16.mxu0 0
      %3769 = vmatpush1.bf16.msra.mxu0 %v3709
      %3770 = vmatprep.subr.bf16.mxu0 0
      %3771 = vmatpush1.bf16.msra.mxu0 %v3708
      %3772 = vmatprep.subr.bf16.mxu0 0
      %3773 = vmatpush1.bf16.msra.mxu0 %v3707
      %3774 = vmatprep.subr.bf16.mxu0 0
      %3775 = vmatpush1.bf16.msra.mxu0 %v3706
      %3776 = vmatprep.subr.bf16.mxu0 0
      %3777 = vmatpush1.bf16.msra.mxu0 %v3705
      %3778 = vmatprep.subr.bf16.mxu0 0
      %3779 = vmatpush1.bf16.msra.mxu0 %v3704
      %3780 = vmatprep.subr.bf16.mxu0 0
      %3781 = vmatpush2.bf16.msra.mxu0 0
      %3782 = vmatprep.subr.bf16.mxu0 0
      %3783 = vmatpush2.bf16.msra.mxu0 0
      %3784 = vmatprep.subr.bf16.mxu0 0
      %3785 = vmatpush2.bf16.msra.mxu0 0
      %3786 = vmatprep.subr.bf16.mxu0 0
      %3787 = vmatpush2.bf16.msra.mxu0 0
      %3788 = vmatprep.subr.bf16.mxu0 0
      %3789 = vmatpush2.bf16.msra.mxu0 0
      %3790 = vmatprep.subr.bf16.mxu0 0
      %3791 = vmatpush2.bf16.msra.mxu0 0
      %3792 = vmatprep.subr.bf16.mxu0 0
      %3793 = vmatpush2.bf16.msra.mxu0 0
      %3794 = vmatprep.subr.bf16.mxu0 0
      %3795 = vmatpush2.bf16.msra.mxu0 0
      %3796 = vmatprep.mubr.bf16.mxu0 0
      %3797 = vmatmul.mubr.bf16.gmra.mxu0 %v3717
      %v3798 = vpop.f32.mrf.mxu0
      %v3799 = vadd.f32 0.0, %v3798
      %v3800 = vpop.f32.mrf.mxu0
      %v3801 = vpop.f32.mrf.mxu0
      %v3802 = vadd.f32 0.0, %v3801
      %v3803 = vpop.f32.mrf.mxu0
      %3804 = vmatprep.mubr.bf16.mxu0 0
      %3805 = vmatmul.mubr.bf16.gmra.mxu0 %v3720
      %v3806 = vpop.f32.mrf.mxu0
      %v3807 = vadd.f32 0.0, %v3806
      %v3808 = vpop.f32.mrf.mxu0
      %v3809 = vpop.f32.mrf.mxu0
      %v3810 = vadd.f32 0.0, %v3809
      %v3811 = vpop.f32.mrf.mxu0
      %3812 = vmatprep.mubr.bf16.mxu0 0
      %3813 = vmatmul.mubr.bf16.gmra.mxu0 %v3723
      %v3814 = vpop.f32.mrf.mxu0
      %v3815 = vadd.f32 0.0, %v3814
      %v3816 = vpop.f32.mrf.mxu0
      %v3817 = vpop.f32.mrf.mxu0
      %v3818 = vadd.f32 0.0, %v3817
      %v3819 = vpop.f32.mrf.mxu0
      %3820 = vmatprep.mubr.bf16.mxu0 0
      %3821 = vmatmul.mubr.bf16.gmra.mxu0 %v3726
      %v3822 = vpop.f32.mrf.mxu0
      %v3823 = vadd.f32 0.0, %v3822
      %v3824 = vpop.f32.mrf.mxu0
      %v3825 = vpop.f32.mrf.mxu0
      %v3826 = vadd.f32 0.0, %v3825
      %v3827 = vpop.f32.mrf.mxu0
      %3828 = vmatprep.mubr.bf16.mxu0 0
      %3829 = vmatmul.mubr.bf16.gmra.mxu0 %v3729
      %v3830 = vpop.f32.mrf.mxu0
      %v3831 = vadd.f32 0.0, %v3830
      %v3832 = vpop.f32.mrf.mxu0
      %v3833 = vpop.f32.mrf.mxu0
      %v3834 = vadd.f32 0.0, %v3833
      %v3835 = vpop.f32.mrf.mxu0
      %3836 = vmatprep.mubr.bf16.mxu0 0
      %3837 = vmatmul.mubr.bf16.gmra.mxu0 %v3732
      %v3838 = vpop.f32.mrf.mxu0
      %v3839 = vadd.f32 0.0, %v3838
      %v3840 = vpop.f32.mrf.mxu0
      %v3841 = vpop.f32.mrf.mxu0
      %v3842 = vadd.f32 0.0, %v3841
      %v3843 = vpop.f32.mrf.mxu0
      %3844 = vmatprep.mubr.bf16.mxu0 0
      %3845 = vmatmul.mubr.bf16.gmra.mxu0 %v3735
      %v3846 = vpop.f32.mrf.mxu0
      %v3847 = vadd.f32 0.0, %v3846
      %v3848 = vpop.f32.mrf.mxu0
      %v3849 = vpop.f32.mrf.mxu0
      %v3850 = vadd.f32 0.0, %v3849
      %v3851 = vpop.f32.mrf.mxu0
      %3852 = vmatprep.mubr.bf16.mxu0 0
      %3853 = vmatmul.mubr.bf16.gmra.mxu0 %v3738
      %v3854 = vpop.f32.mrf.mxu0
      %v3855 = vadd.f32 0.0, %v3854
      %v3856 = vpop.f32.mrf.mxu0
      %v3857 = vpop.f32.mrf.mxu0
      %v3858 = vadd.f32 0.0, %v3857
      %v3859 = vpop.f32.mrf.mxu0
      %3860 = vmatprep.mubr.bf16.mxu0 0
      %3861 = vmatmul.mubr.bf16.gmra.mxu0 %v3741
      %v3862 = vpop.f32.mrf.mxu0
      %v3863 = vadd.f32 0.0, %v3862
      %v3864 = vpop.f32.mrf.mxu0
      %v3865 = vpop.f32.mrf.mxu0
      %v3866 = vadd.f32 0.0, %v3865
      %v3867 = vpop.f32.mrf.mxu0
      %3868 = vmatprep.mubr.bf16.mxu0 0
      %3869 = vmatmul.mubr.bf16.gmra.mxu0 %v3744
      %v3870 = vpop.f32.mrf.mxu0
      %v3871 = vadd.f32 0.0, %v3870
      %v3872 = vpop.f32.mrf.mxu0
      %v3873 = vpop.f32.mrf.mxu0
      %v3874 = vadd.f32 0.0, %v3873
      %v3875 = vpop.f32.mrf.mxu0
      %3876 = vmatprep.mubr.bf16.mxu0 0
      %3877 = vmatmul.mubr.bf16.gmra.mxu0 %v3747
      %v3878 = vpop.f32.mrf.mxu0
      %v3879 = vadd.f32 0.0, %v3878
      %v3880 = vpop.f32.mrf.mxu0
      %v3881 = vpop.f32.mrf.mxu0
      %v3882 = vadd.f32 0.0, %v3881
      %v3883 = vpop.f32.mrf.mxu0
      %3884 = vmatprep.mubr.bf16.mxu0 0
      %3885 = vmatmul.mubr.bf16.gmra.mxu0 %v3750
      %v3886 = vpop.f32.mrf.mxu0
      %v3887 = vadd.f32 0.0, %v3886
      %v3888 = vpop.f32.mrf.mxu0
      %v3889 = vpop.f32.mrf.mxu0
      %v3890 = vadd.f32 0.0, %v3889
      %v3891 = vpop.f32.mrf.mxu0
      %3892 = vmatprep.mubr.bf16.mxu0 0
      %3893 = vmatmul.mubr.bf16.gmra.mxu0 %v3753
      %v3894 = vpop.f32.mrf.mxu0
      %v3895 = vadd.f32 0.0, %v3894
      %v3896 = vpop.f32.mrf.mxu0
      %v3897 = vpop.f32.mrf.mxu0
      %v3898 = vadd.f32 0.0, %v3897
      %v3899 = vpop.f32.mrf.mxu0
      %3900 = vmatprep.mubr.bf16.mxu0 0
      %3901 = vmatmul.mubr.bf16.gmra.mxu0 %v3756
      %v3902 = vpop.f32.mrf.mxu0
      %v3903 = vadd.f32 0.0, %v3902
      %v3904 = vpop.f32.mrf.mxu0
      %v3905 = vpop.f32.mrf.mxu0
      %v3906 = vadd.f32 0.0, %v3905
      %v3907 = vpop.f32.mrf.mxu0
      %3908 = vmatprep.mubr.bf16.mxu0 0
      %3909 = vmatmul.mubr.bf16.gmra.mxu0 %v3759
      %v3910 = vpop.f32.mrf.mxu0
      %v3911 = vadd.f32 0.0, %v3910
      %v3912 = vpop.f32.mrf.mxu0
      %v3913 = vpop.f32.mrf.mxu0
      %v3914 = vadd.f32 0.0, %v3913
      %v3915 = vpop.f32.mrf.mxu0
      %3916 = vmatprep.mubr.bf16.mxu0 0
      %3917 = vmatmul.mubr.bf16.gmra.mxu0 %v3762
      %v3918 = vpop.f32.mrf.mxu0
      %v3919 = vadd.f32 0.0, %v3918
      %v3920 = vpop.f32.mrf.mxu0
      %v3921 = vpop.f32.mrf.mxu0
      %v3922 = vadd.f32 0.0, %v3921
      %v3923 = vpop.f32.mrf.mxu0
      %3924 = vdwg.mxu0
      %v3925 = vadd.f32 %v3485, %v3799
      %v3926 = vadd.f32 %v3486, %v3802
      %v3927 = vadd.f32 %v3487, %v3807
      %v3928 = vadd.f32 %v3488, %v3810
      %v3929 = vadd.f32 %v3489, %v3815
      %v3930 = vadd.f32 %v3490, %v3818
      %v3931 = vadd.f32 %v3491, %v3823
      %v3932 = vadd.f32 %v3492, %v3826
      %v3933 = vadd.f32 %v3493, %v3831
      %v3934 = vadd.f32 %v3494, %v3834
      %v3935 = vadd.f32 %v3495, %v3839
      %v3936 = vadd.f32 %v3496, %v3842
      %v3937 = vadd.f32 %v3497, %v3847
      %v3938 = vadd.f32 %v3498, %v3850
      %v3939 = vadd.f32 %v3499, %v3855
      %v3940 = vadd.f32 %v3500, %v3858
      %v3941 = vadd.f32 %v3501, %v3863
      %v3942 = vadd.f32 %v3502, %v3866
      %v3943 = vadd.f32 %v3503, %v3871
      %v3944 = vadd.f32 %v3504, %v3874
      %v3945 = vadd.f32 %v3505, %v3879
      %v3946 = vadd.f32 %v3506, %v3882
      %v3947 = vadd.f32 %v3507, %v3887
      %v3948 = vadd.f32 %v3508, %v3890
      %v3949 = vadd.f32 %v3509, %v3895
      %v3950 = vadd.f32 %v3510, %v3898
      %v3951 = vadd.f32 %v3511, %v3903
      %v3952 = vadd.f32 %v3512, %v3906
      %v3953 = vadd.f32 %v3513, %v3911
      %v3954 = vadd.f32 %v3514, %v3914
      %v3955 = vadd.f32 %v3515, %v3919
      %v3956 = vadd.f32 %v3516, %v3922
      %v3957 = vld [vmem:[%s192 + $0x10] sm:$0xf]
      %v3958 = vld [vmem:[%s192 + $0x14] sm:$0xf]
      %v3959 = vld [vmem:[%s192 + $0x18] sm:$0xf]
      %v3960 = vld [vmem:[%s192 + $0x1c] sm:$0xf]
      %v3961 = vld [vmem:[%s192 + $0x20] sm:$0xf]
      %v3962 = vld [vmem:[%s192 + $0x24] sm:$0xf]
      %v3963 = vld [vmem:[%s192 + $0x28] sm:$0xf]
      %v3964 = vld [vmem:[%s192 + $0x2c] sm:$0xf]
      %v3965 = vld [vmem:[%s192 + $0x30] sm:$0xf]
      %v3966 = vld [vmem:[%s192 + $0x34] sm:$0xf]
      %v3967 = vld [vmem:[%s192 + $0x38] sm:$0xf]
      %v3968 = vld [vmem:[%s192 + $0x3c] sm:$0xf]
      %v3969 = vld [vmem:[%s192 + $0x40] sm:$0xf]
      %v3970 = vld [vmem:[%s192 + $0x44] sm:$0xf]
      %v3971 = vld [vmem:[%s192 + $0x48] sm:$0xf]
      %v3972 = vld [vmem:[%s192 + $0x4c] sm:$0xf]
      %v3973 = vld [vmem:[%s192 + $0x50] sm:$0xf]
      %v3974 = vld [vmem:[%s192 + $0x54] sm:$0xf]
      %v3975 = vld [vmem:[%s192 + $0x58] sm:$0xf]
      %v3976 = vld [vmem:[%s192 + $0x5c] sm:$0xf]
      %v3977 = vld [vmem:[%s192 + $0x60] sm:$0xf]
      %v3978 = vld [vmem:[%s192 + $0x64] sm:$0xf]
      %v3979 = vld [vmem:[%s192 + $0x68] sm:$0xf]
      %v3980 = vld [vmem:[%s192 + $0x6c] sm:$0xf]
      %v3981 = vld [vmem:[%s192 + $0x70] sm:$0xf]
      %v3982 = vld [vmem:[%s192 + $0x74] sm:$0xf]
      %v3983 = vld [vmem:[%s192 + $0x78] sm:$0xf]
      %v3984 = vld [vmem:[%s192 + $0x7c] sm:$0xf]
      %v3985 = vld [vmem:[%s192 + $0x80] sm:$0xf]
      %v3986 = vld [vmem:[%s192 + $0x84] sm:$0xf]
      %v3987 = vld [vmem:[%s192 + $0x88] sm:$0xf]
      %v3988 = vld [vmem:[%s192 + $0x8c] sm:$0xf]
      %v3989 = vmul.bf16 %v3957, %v274
      %v3990 = vmul.bf16 %v3958, %v286
      %v3991 = vmul.bf16 %v3959, %v298
      %v3992 = vmul.bf16 %v3960, %v310
      %v3993 = vmul.bf16 %v3961, %v322
      %v3994 = vmul.bf16 %v3962, %v334
      %v3995 = vmul.bf16 %v3963, %v346
      %v3996 = vmul.bf16 %v3964, %v358
      %v3997 = vmul.bf16 %v3965, %v370
      %v3998 = vmul.bf16 %v3966, %v382
      %v3999 = vmul.bf16 %v3967, %v394
      %v4000 = vmul.bf16 %v3968, %v406
      %v4001 = vmul.bf16 %v3969, %v418
      %v4002 = vmul.bf16 %v3970, %v430
      %v4003 = vmul.bf16 %v3971, %v442
      %v4004 = vmul.bf16 %v3972, %v454
      %v4005 = vmul.bf16 %v3973, %v466
      %v4006 = vmul.bf16 %v3974, %v478
      %v4007 = vmul.bf16 %v3975, %v490
      %v4008 = vmul.bf16 %v3976, %v502
      %v4009 = vmul.bf16 %v3977, %v514
      %v4010 = vmul.bf16 %v3978, %v526
      %v4011 = vmul.bf16 %v3979, %v538
      %v4012 = vmul.bf16 %v3980, %v550
      %v4013 = vmul.bf16 %v3981, %v562
      %v4014 = vmul.bf16 %v3982, %v574
      %v4015 = vmul.bf16 %v3983, %v586
      %v4016 = vmul.bf16 %v3984, %v598
      %v4017 = vmul.bf16 %v3985, %v610
      %v4018 = vmul.bf16 %v3986, %v622
      %v4019 = vmul.bf16 %v3987, %v634
      %v4020 = vmul.bf16 %v3988, %v646
      %s4021 = scalar_lea.vmem %s1, 288
      %v4022 = vld [vmem:[%s4021] sm:$0xf]
      %v4023 = vld [vmem:[%s4021 + $0x4] sm:$0xf]
      %v4024 = vld [vmem:[%s4021 + $0x8] sm:$0xf]
      %v4025 = vld [vmem:[%s4021 + $0xc] sm:$0xf]
      %v4026 = vld [vmem:[%s4021 + $0x10] sm:$0xf]
      %v4027 = vld [vmem:[%s4021 + $0x14] sm:$0xf]
      %v4028 = vld [vmem:[%s4021 + $0x18] sm:$0xf]
      %v4029 = vld [vmem:[%s4021 + $0x1c] sm:$0xf]
      %v4030 = vld [vmem:[%s4021 + $0x20] sm:$0xf]
      %v4031 = vld [vmem:[%s4021 + $0x24] sm:$0xf]
      %v4032 = vld [vmem:[%s4021 + $0x28] sm:$0xf]
      %v4033 = vld [vmem:[%s4021 + $0x2c] sm:$0xf]
      %v4066 = vunpack.c.l.b16 %v3989
      %v4067 = vunpack.c.l.b16 %v3990
      %v4068 = vunpack.c.l.b16 %v3991
      %v4069 = vunpack.c.l.b16 %v3992
      %v4070 = vunpack.c.l.b16 %v3993
      %v4071 = vunpack.c.l.b16 %v3994
      %v4072 = vunpack.c.l.b16 %v3995
      %v4073 = vunpack.c.l.b16 %v3996
      %v4074 = vunpack.c.l.b16 %v3997
      %v4075 = vunpack.c.l.b16 %v3998
      %v4076 = vunpack.c.l.b16 %v3999
      %v4077 = vunpack.c.l.b16 %v4000
      %v4078 = vunpack.c.l.b16 %v4001
      %v4079 = vunpack.c.l.b16 %v4002
      %v4080 = vunpack.c.l.b16 %v4003
      %v4081 = vunpack.c.l.b16 %v4004
      %v4082 = vunpack.c.l.b16 %v4005
      %v4083 = vunpack.c.l.b16 %v4006
      %v4084 = vunpack.c.l.b16 %v4007
      %v4085 = vunpack.c.l.b16 %v4008
      %v4086 = vunpack.c.l.b16 %v4009
      %v4087 = vunpack.c.l.b16 %v4010
      %v4088 = vunpack.c.l.b16 %v4011
      %v4089 = vunpack.c.l.b16 %v4012
      %v4090 = vunpack.c.l.b16 %v4013
      %v4091 = vunpack.c.l.b16 %v4014
      %v4092 = vunpack.c.l.b16 %v4015
      %v4093 = vunpack.c.l.b16 %v4016
      %v4094 = vunpack.c.l.b16 %v4017
      %v4095 = vunpack.c.l.b16 %v4018
      %v4096 = vunpack.c.l.b16 %v4019
      %v4097 = vunpack.c.l.b16 %v4020
      %v4098 = vpack.c.b16 %v4067, %v4066
      %v4099 = vpack.c.b16 %v4069, %v4068
      %v4100 = vpack.c.b16 %v4071, %v4070
      %v4101 = vpack.c.b16 %v4073, %v4072
      %v4102 = vpack.c.b16 %v4075, %v4074
      %v4103 = vpack.c.b16 %v4077, %v4076
      %v4104 = vpack.c.b16 %v4079, %v4078
      %v4105 = vpack.c.b16 %v4081, %v4080
      %v4106 = vpack.c.b16 %v4083, %v4082
      %v4107 = vpack.c.b16 %v4085, %v4084
      %v4108 = vpack.c.b16 %v4087, %v4086
      %v4109 = vpack.c.b16 %v4089, %v4088
      %v4110 = vpack.c.b16 %v4091, %v4090
      %v4111 = vpack.c.b16 %v4093, %v4092
      %v4112 = vpack.c.b16 %v4095, %v4094
      %v4113 = vpack.c.b16 %v4097, %v4096
      %v4126 = vunpack.c.l.b16 %v4022
      %v4127 = vunpack.c.l.b16 %v4023
      %v4128 = vunpack.c.l.b16 %v4024
      %v4129 = vunpack.c.l.b16 %v4025
      %v4130 = vunpack.c.l.b16 %v4026
      %v4131 = vunpack.c.l.b16 %v4027
      %v4132 = vunpack.c.l.b16 %v4028
      %v4133 = vunpack.c.l.b16 %v4029
      %v4134 = vunpack.c.l.b16 %v4030
      %v4135 = vunpack.c.l.b16 %v4031
      %v4136 = vunpack.c.l.b16 %v4032
      %v4137 = vunpack.c.l.b16 %v4033
      %v4138 = vpack.c.b16 %v4127, %v4126
      %v4139 = vpack.c.b16 %v4129, %v4128
      %v4140 = vpack.c.b16 %v4131, %v4130
      %v4141 = vpack.c.b16 %v4133, %v4132
      %v4142 = vpack.c.b16 %v4135, %v4134
      %v4143 = vpack.c.b16 %v4137, %v4136
      %v4151 = vsel %vm989, %v4098, 0
      %v4154 = vsel %vm989, %v4099, 0
      %v4157 = vsel %vm989, %v4100, 0
      %v4160 = vsel %vm989, %v4101, 0
      %v4163 = vsel %vm989, %v4102, 0
      %v4166 = vsel %vm989, %v4103, 0
      %v4169 = vsel %vm989, %v4104, 0
      %v4172 = vsel %vm989, %v4105, 0
      %v4175 = vsel %vm989, %v4106, 0
      %v4178 = vsel %vm989, %v4107, 0
      %v4181 = vsel %vm989, %v4108, 0
      %v4184 = vsel %vm989, %v4109, 0
      %v4187 = vsel %vm989, %v4110, 0
      %v4190 = vsel %vm989, %v4111, 0
      %v4193 = vsel %vm989, %v4112, 0
      %v4196 = vsel %vm989, %v4113, 0
      %4198 = vmatprep.subr.bf16.mxu0 0
      %4199 = vmatpush1.bf16.msra.mxu0 0
      %4200 = vmatprep.subr.bf16.mxu0 0
      %4201 = vmatpush1.bf16.msra.mxu0 0
      %4202 = vmatprep.subr.bf16.mxu0 0
      %4203 = vmatpush1.bf16.msra.mxu0 %v4143
      %4204 = vmatprep.subr.bf16.mxu0 0
      %4205 = vmatpush1.bf16.msra.mxu0 %v4142
      %4206 = vmatprep.subr.bf16.mxu0 0
      %4207 = vmatpush1.bf16.msra.mxu0 %v4141
      %4208 = vmatprep.subr.bf16.mxu0 0
      %4209 = vmatpush1.bf16.msra.mxu0 %v4140
      %4210 = vmatprep.subr.bf16.mxu0 0
      %4211 = vmatpush1.bf16.msra.mxu0 %v4139
      %4212 = vmatprep.subr.bf16.mxu0 0
      %4213 = vmatpush1.bf16.msra.mxu0 %v4138
      %4214 = vmatprep.subr.bf16.mxu0 0
      %4215 = vmatpush2.bf16.msra.mxu0 0
      %4216 = vmatprep.subr.bf16.mxu0 0
      %4217 = vmatpush2.bf16.msra.mxu0 0
      %4218 = vmatprep.subr.bf16.mxu0 0
      %4219 = vmatpush2.bf16.msra.mxu0 0
      %4220 = vmatprep.subr.bf16.mxu0 0
      %4221 = vmatpush2.bf16.msra.mxu0 0
      %4222 = vmatprep.subr.bf16.mxu0 0
      %4223 = vmatpush2.bf16.msra.mxu0 0
      %4224 = vmatprep.subr.bf16.mxu0 0
      %4225 = vmatpush2.bf16.msra.mxu0 0
      %4226 = vmatprep.subr.bf16.mxu0 0
      %4227 = vmatpush2.bf16.msra.mxu0 0
      %4228 = vmatprep.subr.bf16.mxu0 0
      %4229 = vmatpush2.bf16.msra.mxu0 0
      %4230 = vmatprep.mubr.bf16.mxu0 0
      %4231 = vmatmul.mubr.bf16.gmra.mxu0 %v4151
      %v4232 = vpop.f32.mrf.mxu0
      %v4233 = vadd.f32 0.0, %v4232
      %v4234 = vpop.f32.mrf.mxu0
      %v4235 = vpop.f32.mrf.mxu0
      %v4236 = vadd.f32 0.0, %v4235
      %v4237 = vpop.f32.mrf.mxu0
      %4238 = vmatprep.mubr.bf16.mxu0 0
      %4239 = vmatmul.mubr.bf16.gmra.mxu0 %v4154
      %v4240 = vpop.f32.mrf.mxu0
      %v4241 = vadd.f32 0.0, %v4240
      %v4242 = vpop.f32.mrf.mxu0
      %v4243 = vpop.f32.mrf.mxu0
      %v4244 = vadd.f32 0.0, %v4243
      %v4245 = vpop.f32.mrf.mxu0
      %4246 = vmatprep.mubr.bf16.mxu0 0
      %4247 = vmatmul.mubr.bf16.gmra.mxu0 %v4157
      %v4248 = vpop.f32.mrf.mxu0
      %v4249 = vadd.f32 0.0, %v4248
      %v4250 = vpop.f32.mrf.mxu0
      %v4251 = vpop.f32.mrf.mxu0
      %v4252 = vadd.f32 0.0, %v4251
      %v4253 = vpop.f32.mrf.mxu0
      %4254 = vmatprep.mubr.bf16.mxu0 0
      %4255 = vmatmul.mubr.bf16.gmra.mxu0 %v4160
      %v4256 = vpop.f32.mrf.mxu0
      %v4257 = vadd.f32 0.0, %v4256
      %v4258 = vpop.f32.mrf.mxu0
      %v4259 = vpop.f32.mrf.mxu0
      %v4260 = vadd.f32 0.0, %v4259
      %v4261 = vpop.f32.mrf.mxu0
      %4262 = vmatprep.mubr.bf16.mxu0 0
      %4263 = vmatmul.mubr.bf16.gmra.mxu0 %v4163
      %v4264 = vpop.f32.mrf.mxu0
      %v4265 = vadd.f32 0.0, %v4264
      %v4266 = vpop.f32.mrf.mxu0
      %v4267 = vpop.f32.mrf.mxu0
      %v4268 = vadd.f32 0.0, %v4267
      %v4269 = vpop.f32.mrf.mxu0
      %4270 = vmatprep.mubr.bf16.mxu0 0
      %4271 = vmatmul.mubr.bf16.gmra.mxu0 %v4166
      %v4272 = vpop.f32.mrf.mxu0
      %v4273 = vadd.f32 0.0, %v4272
      %v4274 = vpop.f32.mrf.mxu0
      %v4275 = vpop.f32.mrf.mxu0
      %v4276 = vadd.f32 0.0, %v4275
      %v4277 = vpop.f32.mrf.mxu0
      %4278 = vmatprep.mubr.bf16.mxu0 0
      %4279 = vmatmul.mubr.bf16.gmra.mxu0 %v4169
      %v4280 = vpop.f32.mrf.mxu0
      %v4281 = vadd.f32 0.0, %v4280
      %v4282 = vpop.f32.mrf.mxu0
      %v4283 = vpop.f32.mrf.mxu0
      %v4284 = vadd.f32 0.0, %v4283
      %v4285 = vpop.f32.mrf.mxu0
      %4286 = vmatprep.mubr.bf16.mxu0 0
      %4287 = vmatmul.mubr.bf16.gmra.mxu0 %v4172
      %v4288 = vpop.f32.mrf.mxu0
      %v4289 = vadd.f32 0.0, %v4288
      %v4290 = vpop.f32.mrf.mxu0
      %v4291 = vpop.f32.mrf.mxu0
      %v4292 = vadd.f32 0.0, %v4291
      %v4293 = vpop.f32.mrf.mxu0
      %4294 = vmatprep.mubr.bf16.mxu0 0
      %4295 = vmatmul.mubr.bf16.gmra.mxu0 %v4175
      %v4296 = vpop.f32.mrf.mxu0
      %v4297 = vadd.f32 0.0, %v4296
      %v4298 = vpop.f32.mrf.mxu0
      %v4299 = vpop.f32.mrf.mxu0
      %v4300 = vadd.f32 0.0, %v4299
      %v4301 = vpop.f32.mrf.mxu0
      %4302 = vmatprep.mubr.bf16.mxu0 0
      %4303 = vmatmul.mubr.bf16.gmra.mxu0 %v4178
      %v4304 = vpop.f32.mrf.mxu0
      %v4305 = vadd.f32 0.0, %v4304
      %v4306 = vpop.f32.mrf.mxu0
      %v4307 = vpop.f32.mrf.mxu0
      %v4308 = vadd.f32 0.0, %v4307
      %v4309 = vpop.f32.mrf.mxu0
      %4310 = vmatprep.mubr.bf16.mxu0 0
      %4311 = vmatmul.mubr.bf16.gmra.mxu0 %v4181
      %v4312 = vpop.f32.mrf.mxu0
      %v4313 = vadd.f32 0.0, %v4312
      %v4314 = vpop.f32.mrf.mxu0
      %v4315 = vpop.f32.mrf.mxu0
      %v4316 = vadd.f32 0.0, %v4315
      %v4317 = vpop.f32.mrf.mxu0
      %4318 = vmatprep.mubr.bf16.mxu0 0
      %4319 = vmatmul.mubr.bf16.gmra.mxu0 %v4184
      %v4320 = vpop.f32.mrf.mxu0
      %v4321 = vadd.f32 0.0, %v4320
      %v4322 = vpop.f32.mrf.mxu0
      %v4323 = vpop.f32.mrf.mxu0
      %v4324 = vadd.f32 0.0, %v4323
      %v4325 = vpop.f32.mrf.mxu0
      %4326 = vmatprep.mubr.bf16.mxu0 0
      %4327 = vmatmul.mubr.bf16.gmra.mxu0 %v4187
      %v4328 = vpop.f32.mrf.mxu0
      %v4329 = vadd.f32 0.0, %v4328
      %v4330 = vpop.f32.mrf.mxu0
      %v4331 = vpop.f32.mrf.mxu0
      %v4332 = vadd.f32 0.0, %v4331
      %v4333 = vpop.f32.mrf.mxu0
      %4334 = vmatprep.mubr.bf16.mxu0 0
      %4335 = vmatmul.mubr.bf16.gmra.mxu0 %v4190
      %v4336 = vpop.f32.mrf.mxu0
      %v4337 = vadd.f32 0.0, %v4336
      %v4338 = vpop.f32.mrf.mxu0
      %v4339 = vpop.f32.mrf.mxu0
      %v4340 = vadd.f32 0.0, %v4339
      %v4341 = vpop.f32.mrf.mxu0
      %4342 = vmatprep.mubr.bf16.mxu0 0
      %4343 = vmatmul.mubr.bf16.gmra.mxu0 %v4193
      %v4344 = vpop.f32.mrf.mxu0
      %v4345 = vadd.f32 0.0, %v4344
      %v4346 = vpop.f32.mrf.mxu0
      %v4347 = vpop.f32.mrf.mxu0
      %v4348 = vadd.f32 0.0, %v4347
      %v4349 = vpop.f32.mrf.mxu0
      %4350 = vmatprep.mubr.bf16.mxu0 0
      %4351 = vmatmul.mubr.bf16.gmra.mxu0 %v4196
      %v4352 = vpop.f32.mrf.mxu0
      %v4353 = vadd.f32 0.0, %v4352
      %v4354 = vpop.f32.mrf.mxu0
      %v4355 = vpop.f32.mrf.mxu0
      %v4356 = vadd.f32 0.0, %v4355
      %v4357 = vpop.f32.mrf.mxu0
      %4358 = vdwg.mxu0
      %v4359 = vadd.f32 %v3925, %v4233
      %v4360 = vadd.f32 %v3926, %v4236
      %v4361 = vadd.f32 %v3927, %v4241
      %v4362 = vadd.f32 %v3928, %v4244
      %v4363 = vadd.f32 %v3929, %v4249
      %v4364 = vadd.f32 %v3930, %v4252
      %v4365 = vadd.f32 %v3931, %v4257
      %v4366 = vadd.f32 %v3932, %v4260
      %v4367 = vadd.f32 %v3933, %v4265
      %v4368 = vadd.f32 %v3934, %v4268
      %v4369 = vadd.f32 %v3935, %v4273
      %v4370 = vadd.f32 %v3936, %v4276
      %v4371 = vadd.f32 %v3937, %v4281
      %v4372 = vadd.f32 %v3938, %v4284
      %v4373 = vadd.f32 %v3939, %v4289
      %v4374 = vadd.f32 %v3940, %v4292
      %v4375 = vadd.f32 %v3941, %v4297
      %v4376 = vadd.f32 %v3942, %v4300
      %v4377 = vadd.f32 %v3943, %v4305
      %v4378 = vadd.f32 %v3944, %v4308
      %v4379 = vadd.f32 %v3945, %v4313
      %v4380 = vadd.f32 %v3946, %v4316
      %v4381 = vadd.f32 %v3947, %v4321
      %v4382 = vadd.f32 %v3948, %v4324
      %v4383 = vadd.f32 %v3949, %v4329
      %v4384 = vadd.f32 %v3950, %v4332
      %v4385 = vadd.f32 %v3951, %v4337
      %v4386 = vadd.f32 %v3952, %v4340
      %v4387 = vadd.f32 %v3953, %v4345
      %v4388 = vadd.f32 %v3954, %v4348
      %v4389 = vadd.f32 %v3955, %v4353
      %v4390 = vadd.f32 %v3956, %v4356
      %v4391 = vld [vmem:[%s192 + $0x10] sm:$0xf]
      %v4392 = vld [vmem:[%s192 + $0x14] sm:$0xf]
      %v4393 = vld [vmem:[%s192 + $0x18] sm:$0xf]
      %v4394 = vld [vmem:[%s192 + $0x1c] sm:$0xf]
      %v4395 = vld [vmem:[%s192 + $0x20] sm:$0xf]
      %v4396 = vld [vmem:[%s192 + $0x24] sm:$0xf]
      %v4397 = vld [vmem:[%s192 + $0x28] sm:$0xf]
      %v4398 = vld [vmem:[%s192 + $0x2c] sm:$0xf]
      %v4399 = vld [vmem:[%s192 + $0x30] sm:$0xf]
      %v4400 = vld [vmem:[%s192 + $0x34] sm:$0xf]
      %v4401 = vld [vmem:[%s192 + $0x38] sm:$0xf]
      %v4402 = vld [vmem:[%s192 + $0x3c] sm:$0xf]
      %v4403 = vld [vmem:[%s192 + $0x40] sm:$0xf]
      %v4404 = vld [vmem:[%s192 + $0x44] sm:$0xf]
      %v4405 = vld [vmem:[%s192 + $0x48] sm:$0xf]
      %v4406 = vld [vmem:[%s192 + $0x4c] sm:$0xf]
      %v4407 = vld [vmem:[%s192 + $0x50] sm:$0xf]
      %v4408 = vld [vmem:[%s192 + $0x54] sm:$0xf]
      %v4409 = vld [vmem:[%s192 + $0x58] sm:$0xf]
      %v4410 = vld [vmem:[%s192 + $0x5c] sm:$0xf]
      %v4411 = vld [vmem:[%s192 + $0x60] sm:$0xf]
      %v4412 = vld [vmem:[%s192 + $0x64] sm:$0xf]
      %v4413 = vld [vmem:[%s192 + $0x68] sm:$0xf]
      %v4414 = vld [vmem:[%s192 + $0x6c] sm:$0xf]
      %v4415 = vld [vmem:[%s192 + $0x70] sm:$0xf]
      %v4416 = vld [vmem:[%s192 + $0x74] sm:$0xf]
      %v4417 = vld [vmem:[%s192 + $0x78] sm:$0xf]
      %v4418 = vld [vmem:[%s192 + $0x7c] sm:$0xf]
      %v4419 = vld [vmem:[%s192 + $0x80] sm:$0xf]
      %v4420 = vld [vmem:[%s192 + $0x84] sm:$0xf]
      %v4421 = vld [vmem:[%s192 + $0x88] sm:$0xf]
      %v4422 = vld [vmem:[%s192 + $0x8c] sm:$0xf]
      %v4423 = vld [vmem:[%s192 + $0x90] sm:$0x1]
      %s4424 = scalar_lea.vmem %s1, 336
      %v4425 = vld [vmem:[%s4424] sm:$0xf]
      %v4426 = vld [vmem:[%s4424 + $0x4] sm:$0xf]
      %v4427 = vld [vmem:[%s4424 + $0x8] sm:$0xf]
      %v4428 = vld [vmem:[%s4424 + $0xc] sm:$0xf]
      %v4429 = vld [vmem:[%s4424 + $0x10] sm:$0xf]
      %v4430 = vld [vmem:[%s4424 + $0x14] sm:$0xf]
      %v4431 = vld [vmem:[%s4424 + $0x18] sm:$0xf]
      %v4432 = vld [vmem:[%s4424 + $0x1c] sm:$0xf]
      %v4433 = vld [vmem:[%s4424 + $0x20] sm:$0xf]
      %v4434 = vld [vmem:[%s4424 + $0x24] sm:$0xf]
      %v4435 = vld [vmem:[%s4424 + $0x28] sm:$0xf]
      %v4436 = vld [vmem:[%s4424 + $0x2c] sm:$0xf]
      %v4470 = vunpack.c.l.b16 %v4391
      %v4471 = vunpack.c.l.b16 %v4392
      %v4472 = vunpack.c.l.b16 %v4393
      %v4473 = vunpack.c.l.b16 %v4394
      %v4474 = vunpack.c.l.b16 %v4395
      %v4475 = vunpack.c.l.b16 %v4396
      %v4476 = vunpack.c.l.b16 %v4397
      %v4477 = vunpack.c.l.b16 %v4398
      %v4478 = vunpack.c.l.b16 %v4399
      %v4479 = vunpack.c.l.b16 %v4400
      %v4480 = vunpack.c.l.b16 %v4401
      %v4481 = vunpack.c.l.b16 %v4402
      %v4482 = vunpack.c.l.b16 %v4403
      %v4483 = vunpack.c.l.b16 %v4404
      %v4484 = vunpack.c.l.b16 %v4405
      %v4485 = vunpack.c.l.b16 %v4406
      %v4486 = vunpack.c.l.b16 %v4407
      %v4487 = vunpack.c.l.b16 %v4408
      %v4488 = vunpack.c.l.b16 %v4409
      %v4489 = vunpack.c.l.b16 %v4410
      %v4490 = vunpack.c.l.b16 %v4411
      %v4491 = vunpack.c.l.b16 %v4412
      %v4492 = vunpack.c.l.b16 %v4413
      %v4493 = vunpack.c.l.b16 %v4414
      %v4494 = vunpack.c.l.b16 %v4415
      %v4495 = vunpack.c.l.b16 %v4416
      %v4496 = vunpack.c.l.b16 %v4417
      %v4497 = vunpack.c.l.b16 %v4418
      %v4498 = vunpack.c.l.b16 %v4419
      %v4499 = vunpack.c.l.b16 %v4420
      %v4500 = vunpack.c.l.b16 %v4421
      %v4501 = vunpack.c.l.b16 %v4422
      %v4502 = vunpack.c.l.b16 %v4423
      %v4503 = vpack.c.b16 %v4471, %v4470
      %v4504 = vpack.c.b16 %v4473, %v4472
      %v4505 = vpack.c.b16 %v4475, %v4474
      %v4506 = vpack.c.b16 %v4477, %v4476
      %v4507 = vpack.c.b16 %v4479, %v4478
      %v4508 = vpack.c.b16 %v4481, %v4480
      %v4509 = vpack.c.b16 %v4483, %v4482
      %v4510 = vpack.c.b16 %v4485, %v4484
      %v4511 = vpack.c.b16 %v4487, %v4486
      %v4512 = vpack.c.b16 %v4489, %v4488
      %v4513 = vpack.c.b16 %v4491, %v4490
      %v4514 = vpack.c.b16 %v4493, %v4492
      %v4515 = vpack.c.b16 %v4495, %v4494
      %v4516 = vpack.c.b16 %v4497, %v4496
      %v4517 = vpack.c.b16 %v4499, %v4498
      %v4518 = vpack.c.b16 %v4501, %v4500
      %v4519 = vpack.c.b16 %v4502, %v4502
      %v4521 = vshrl.u32 %v4503, 16
      %v4523 = vshll.u32 %v4503, 16
      %v4525 = vrot.slane %v4523, 1
      %v4526 = vor.u32 %v4521, %v4525
      %v4528 = vshll.u32 %v4504, 16
      %v4530 = vrot.slane %v4528, 1
      %v4531 = vsel %vm820, %v4526, %v4530
      %v4532 = vshrl.u32 %v4504, 16
      %v4534 = vor.u32 %v4532, %v4530
      %v4536 = vshll.u32 %v4505, 16
      %v4538 = vrot.slane %v4536, 1
      %v4539 = vsel %vm820, %v4534, %v4538
      %v4540 = vshrl.u32 %v4505, 16
      %v4542 = vor.u32 %v4540, %v4538
      %v4544 = vshll.u32 %v4506, 16
      %v4546 = vrot.slane %v4544, 1
      %v4547 = vsel %vm820, %v4542, %v4546
      %v4548 = vshrl.u32 %v4506, 16
      %v4550 = vor.u32 %v4548, %v4546
      %v4552 = vshll.u32 %v4507, 16
      %v4554 = vrot.slane %v4552, 1
      %v4555 = vsel %vm820, %v4550, %v4554
      %v4556 = vshrl.u32 %v4507, 16
      %v4558 = vor.u32 %v4556, %v4554
      %v4560 = vshll.u32 %v4508, 16
      %v4562 = vrot.slane %v4560, 1
      %v4563 = vsel %vm820, %v4558, %v4562
      %v4564 = vshrl.u32 %v4508, 16
      %v4566 = vor.u32 %v4564, %v4562
      %v4568 = vshll.u32 %v4509, 16
      %v4570 = vrot.slane %v4568, 1
      %v4571 = vsel %vm820, %v4566, %v4570
      %v4572 = vshrl.u32 %v4509, 16
      %v4574 = vor.u32 %v4572, %v4570
      %v4576 = vshll.u32 %v4510, 16
      %v4578 = vrot.slane %v4576, 1
      %v4579 = vsel %vm820, %v4574, %v4578
      %v4580 = vshrl.u32 %v4510, 16
      %v4582 = vor.u32 %v4580, %v4578
      %v4584 = vshll.u32 %v4511, 16
      %v4586 = vrot.slane %v4584, 1
      %v4587 = vsel %vm820, %v4582, %v4586
      %v4588 = vshrl.u32 %v4511, 16
      %v4590 = vor.u32 %v4588, %v4586
      %v4592 = vshll.u32 %v4512, 16
      %v4594 = vrot.slane %v4592, 1
      %v4595 = vsel %vm820, %v4590, %v4594
      %v4596 = vshrl.u32 %v4512, 16
      %v4598 = vor.u32 %v4596, %v4594
      %v4600 = vshll.u32 %v4513, 16
      %v4602 = vrot.slane %v4600, 1
      %v4603 = vsel %vm820, %v4598, %v4602
      %v4604 = vshrl.u32 %v4513, 16
      %v4606 = vor.u32 %v4604, %v4602
      %v4608 = vshll.u32 %v4514, 16
      %v4610 = vrot.slane %v4608, 1
      %v4611 = vsel %vm820, %v4606, %v4610
      %v4612 = vshrl.u32 %v4514, 16
      %v4614 = vor.u32 %v4612, %v4610
      %v4616 = vshll.u32 %v4515, 16
      %v4618 = vrot.slane %v4616, 1
      %v4619 = vsel %vm820, %v4614, %v4618
      %v4620 = vshrl.u32 %v4515, 16
      %v4622 = vor.u32 %v4620, %v4618
      %v4624 = vshll.u32 %v4516, 16
      %v4626 = vrot.slane %v4624, 1
      %v4627 = vsel %vm820, %v4622, %v4626
      %v4628 = vshrl.u32 %v4516, 16
      %v4630 = vor.u32 %v4628, %v4626
      %v4632 = vshll.u32 %v4517, 16
      %v4634 = vrot.slane %v4632, 1
      %v4635 = vsel %vm820, %v4630, %v4634
      %v4636 = vshrl.u32 %v4517, 16
      %v4638 = vor.u32 %v4636, %v4634
      %v4640 = vshll.u32 %v4518, 16
      %v4642 = vrot.slane %v4640, 1
      %v4643 = vsel %vm820, %v4638, %v4642
      %v4644 = vshrl.u32 %v4518, 16
      %v4646 = vor.u32 %v4644, %v4642
      %v4648 = vshll.u32 %v4519, 16
      %v4650 = vrot.slane %v4648, 1
      %v4651 = vsel %vm820, %v4646, %v4650
      %v4664 = vunpack.c.l.b16 %v4425
      %v4665 = vunpack.c.l.b16 %v4426
      %v4666 = vunpack.c.l.b16 %v4427
      %v4667 = vunpack.c.l.b16 %v4428
      %v4668 = vunpack.c.l.b16 %v4429
      %v4669 = vunpack.c.l.b16 %v4430
      %v4670 = vunpack.c.l.b16 %v4431
      %v4671 = vunpack.c.l.b16 %v4432
      %v4672 = vunpack.c.l.b16 %v4433
      %v4673 = vunpack.c.l.b16 %v4434
      %v4674 = vunpack.c.l.b16 %v4435
      %v4675 = vunpack.c.l.b16 %v4436
      %v4676 = vpack.c.b16 %v4665, %v4664
      %v4677 = vpack.c.b16 %v4667, %v4666
      %v4678 = vpack.c.b16 %v4669, %v4668
      %v4679 = vpack.c.b16 %v4671, %v4670
      %v4680 = vpack.c.b16 %v4673, %v4672
      %v4681 = vpack.c.b16 %v4675, %v4674
      %v4689 = vsel %vm989, %v4531, 0
      %v4692 = vsel %vm989, %v4539, 0
      %v4695 = vsel %vm989, %v4547, 0
      %v4698 = vsel %vm989, %v4555, 0
      %v4701 = vsel %vm989, %v4563, 0
      %v4704 = vsel %vm989, %v4571, 0
      %v4707 = vsel %vm989, %v4579, 0
      %v4710 = vsel %vm989, %v4587, 0
      %v4713 = vsel %vm989, %v4595, 0
      %v4716 = vsel %vm989, %v4603, 0
      %v4719 = vsel %vm989, %v4611, 0
      %v4722 = vsel %vm989, %v4619, 0
      %v4725 = vsel %vm989, %v4627, 0
      %v4728 = vsel %vm989, %v4635, 0
      %v4731 = vsel %vm989, %v4643, 0
      %v4734 = vsel %vm989, %v4651, 0
      %4736 = vmatprep.subr.bf16.mxu0 0
      %4737 = vmatpush1.bf16.msra.mxu0 0
      %4738 = vmatprep.subr.bf16.mxu0 0
      %4739 = vmatpush1.bf16.msra.mxu0 0
      %4740 = vmatprep.subr.bf16.mxu0 0
      %4741 = vmatpush1.bf16.msra.mxu0 %v4681
      %4742 = vmatprep.subr.bf16.mxu0 0
      %4743 = vmatpush1.bf16.msra.mxu0 %v4680
      %4744 = vmatprep.subr.bf16.mxu0 0
      %4745 = vmatpush1.bf16.msra.mxu0 %v4679
      %4746 = vmatprep.subr.bf16.mxu0 0
      %4747 = vmatpush1.bf16.msra.mxu0 %v4678
      %4748 = vmatprep.subr.bf16.mxu0 0
      %4749 = vmatpush1.bf16.msra.mxu0 %v4677
      %4750 = vmatprep.subr.bf16.mxu0 0
      %4751 = vmatpush1.bf16.msra.mxu0 %v4676
      %4752 = vmatprep.subr.bf16.mxu0 0
      %4753 = vmatpush2.bf16.msra.mxu0 0
      %4754 = vmatprep.subr.bf16.mxu0 0
      %4755 = vmatpush2.bf16.msra.mxu0 0
      %4756 = vmatprep.subr.bf16.mxu0 0
      %4757 = vmatpush2.bf16.msra.mxu0 0
      %4758 = vmatprep.subr.bf16.mxu0 0
      %4759 = vmatpush2.bf16.msra.mxu0 0
      %4760 = vmatprep.subr.bf16.mxu0 0
      %4761 = vmatpush2.bf16.msra.mxu0 0
      %4762 = vmatprep.subr.bf16.mxu0 0
      %4763 = vmatpush2.bf16.msra.mxu0 0
      %4764 = vmatprep.subr.bf16.mxu0 0
      %4765 = vmatpush2.bf16.msra.mxu0 0
      %4766 = vmatprep.subr.bf16.mxu0 0
      %4767 = vmatpush2.bf16.msra.mxu0 0
      %4768 = vmatprep.mubr.bf16.mxu0 0
      %4769 = vmatmul.mubr.bf16.gmra.mxu0 %v4689
      %v4770 = vpop.f32.mrf.mxu0
      %v4771 = vadd.f32 0.0, %v4770
      %v4772 = vpop.f32.mrf.mxu0
      %v4773 = vpop.f32.mrf.mxu0
      %v4774 = vadd.f32 0.0, %v4773
      %v4775 = vpop.f32.mrf.mxu0
      %4776 = vmatprep.mubr.bf16.mxu0 0
      %4777 = vmatmul.mubr.bf16.gmra.mxu0 %v4692
      %v4778 = vpop.f32.mrf.mxu0
      %v4779 = vadd.f32 0.0, %v4778
      %v4780 = vpop.f32.mrf.mxu0
      %v4781 = vpop.f32.mrf.mxu0
      %v4782 = vadd.f32 0.0, %v4781
      %v4783 = vpop.f32.mrf.mxu0
      %4784 = vmatprep.mubr.bf16.mxu0 0
      %4785 = vmatmul.mubr.bf16.gmra.mxu0 %v4695
      %v4786 = vpop.f32.mrf.mxu0
      %v4787 = vadd.f32 0.0, %v4786
      %v4788 = vpop.f32.mrf.mxu0
      %v4789 = vpop.f32.mrf.mxu0
      %v4790 = vadd.f32 0.0, %v4789
      %v4791 = vpop.f32.mrf.mxu0
      %4792 = vmatprep.mubr.bf16.mxu0 0
      %4793 = vmatmul.mubr.bf16.gmra.mxu0 %v4698
      %v4794 = vpop.f32.mrf.mxu0
      %v4795 = vadd.f32 0.0, %v4794
      %v4796 = vpop.f32.mrf.mxu0
      %v4797 = vpop.f32.mrf.mxu0
      %v4798 = vadd.f32 0.0, %v4797
      %v4799 = vpop.f32.mrf.mxu0
      %4800 = vmatprep.mubr.bf16.mxu0 0
      %4801 = vmatmul.mubr.bf16.gmra.mxu0 %v4701
      %v4802 = vpop.f32.mrf.mxu0
      %v4803 = vadd.f32 0.0, %v4802
      %v4804 = vpop.f32.mrf.mxu0
      %v4805 = vpop.f32.mrf.mxu0
      %v4806 = vadd.f32 0.0, %v4805
      %v4807 = vpop.f32.mrf.mxu0
      %4808 = vmatprep.mubr.bf16.mxu0 0
      %4809 = vmatmul.mubr.bf16.gmra.mxu0 %v4704
      %v4810 = vpop.f32.mrf.mxu0
      %v4811 = vadd.f32 0.0, %v4810
      %v4812 = vpop.f32.mrf.mxu0
      %v4813 = vpop.f32.mrf.mxu0
      %v4814 = vadd.f32 0.0, %v4813
      %v4815 = vpop.f32.mrf.mxu0
      %4816 = vmatprep.mubr.bf16.mxu0 0
      %4817 = vmatmul.mubr.bf16.gmra.mxu0 %v4707
      %v4818 = vpop.f32.mrf.mxu0
      %v4819 = vadd.f32 0.0, %v4818
      %v4820 = vpop.f32.mrf.mxu0
      %v4821 = vpop.f32.mrf.mxu0
      %v4822 = vadd.f32 0.0, %v4821
      %v4823 = vpop.f32.mrf.mxu0
      %4824 = vmatprep.mubr.bf16.mxu0 0
      %4825 = vmatmul.mubr.bf16.gmra.mxu0 %v4710
      %v4826 = vpop.f32.mrf.mxu0
      %v4827 = vadd.f32 0.0, %v4826
      %v4828 = vpop.f32.mrf.mxu0
      %v4829 = vpop.f32.mrf.mxu0
      %v4830 = vadd.f32 0.0, %v4829
      %v4831 = vpop.f32.mrf.mxu0
      %4832 = vmatprep.mubr.bf16.mxu0 0
      %4833 = vmatmul.mubr.bf16.gmra.mxu0 %v4713
      %v4834 = vpop.f32.mrf.mxu0
      %v4835 = vadd.f32 0.0, %v4834
      %v4836 = vpop.f32.mrf.mxu0
      %v4837 = vpop.f32.mrf.mxu0
      %v4838 = vadd.f32 0.0, %v4837
      %v4839 = vpop.f32.mrf.mxu0
      %4840 = vmatprep.mubr.bf16.mxu0 0
      %4841 = vmatmul.mubr.bf16.gmra.mxu0 %v4716
      %v4842 = vpop.f32.mrf.mxu0
      %v4843 = vadd.f32 0.0, %v4842
      %v4844 = vpop.f32.mrf.mxu0
      %v4845 = vpop.f32.mrf.mxu0
      %v4846 = vadd.f32 0.0, %v4845
      %v4847 = vpop.f32.mrf.mxu0
      %4848 = vmatprep.mubr.bf16.mxu0 0
      %4849 = vmatmul.mubr.bf16.gmra.mxu0 %v4719
      %v4850 = vpop.f32.mrf.mxu0
      %v4851 = vadd.f32 0.0, %v4850
      %v4852 = vpop.f32.mrf.mxu0
      %v4853 = vpop.f32.mrf.mxu0
      %v4854 = vadd.f32 0.0, %v4853
      %v4855 = vpop.f32.mrf.mxu0
      %4856 = vmatprep.mubr.bf16.mxu0 0
      %4857 = vmatmul.mubr.bf16.gmra.mxu0 %v4722
      %v4858 = vpop.f32.mrf.mxu0
      %v4859 = vadd.f32 0.0, %v4858
      %v4860 = vpop.f32.mrf.mxu0
      %v4861 = vpop.f32.mrf.mxu0
      %v4862 = vadd.f32 0.0, %v4861
      %v4863 = vpop.f32.mrf.mxu0
      %4864 = vmatprep.mubr.bf16.mxu0 0
      %4865 = vmatmul.mubr.bf16.gmra.mxu0 %v4725
      %v4866 = vpop.f32.mrf.mxu0
      %v4867 = vadd.f32 0.0, %v4866
      %v4868 = vpop.f32.mrf.mxu0
      %v4869 = vpop.f32.mrf.mxu0
      %v4870 = vadd.f32 0.0, %v4869
      %v4871 = vpop.f32.mrf.mxu0
      %4872 = vmatprep.mubr.bf16.mxu0 0
      %4873 = vmatmul.mubr.bf16.gmra.mxu0 %v4728
      %v4874 = vpop.f32.mrf.mxu0
      %v4875 = vadd.f32 0.0, %v4874
      %v4876 = vpop.f32.mrf.mxu0
      %v4877 = vpop.f32.mrf.mxu0
      %v4878 = vadd.f32 0.0, %v4877
      %v4879 = vpop.f32.mrf.mxu0
      %4880 = vmatprep.mubr.bf16.mxu0 0
      %4881 = vmatmul.mubr.bf16.gmra.mxu0 %v4731
      %v4882 = vpop.f32.mrf.mxu0
      %v4883 = vadd.f32 0.0, %v4882
      %v4884 = vpop.f32.mrf.mxu0
      %v4885 = vpop.f32.mrf.mxu0
      %v4886 = vadd.f32 0.0, %v4885
      %v4887 = vpop.f32.mrf.mxu0
      %4888 = vmatprep.mubr.bf16.mxu0 0
      %4889 = vmatmul.mubr.bf16.gmra.mxu0 %v4734
      %v4890 = vpop.f32.mrf.mxu0
      %v4891 = vadd.f32 0.0, %v4890
      %v4892 = vpop.f32.mrf.mxu0
      %v4893 = vpop.f32.mrf.mxu0
      %v4894 = vadd.f32 0.0, %v4893
      %v4895 = vpop.f32.mrf.mxu0
      %4896 = vdwg.mxu0
      %v4897 = vadd.f32 %v4359, %v4771
      %v4898 = vadd.f32 %v4360, %v4774
      %v4899 = vadd.f32 %v4361, %v4779
      %v4900 = vadd.f32 %v4362, %v4782
      %v4901 = vadd.f32 %v4363, %v4787
      %v4902 = vadd.f32 %v4364, %v4790
      %v4903 = vadd.f32 %v4365, %v4795
      %v4904 = vadd.f32 %v4366, %v4798
      %v4905 = vadd.f32 %v4367, %v4803
      %v4906 = vadd.f32 %v4368, %v4806
      %v4907 = vadd.f32 %v4369, %v4811
      %v4908 = vadd.f32 %v4370, %v4814
      %v4909 = vadd.f32 %v4371, %v4819
      %v4910 = vadd.f32 %v4372, %v4822
      %v4911 = vadd.f32 %v4373, %v4827
      %v4912 = vadd.f32 %v4374, %v4830
      %v4913 = vadd.f32 %v4375, %v4835
      %v4914 = vadd.f32 %v4376, %v4838
      %v4915 = vadd.f32 %v4377, %v4843
      %v4916 = vadd.f32 %v4378, %v4846
      %v4917 = vadd.f32 %v4379, %v4851
      %v4918 = vadd.f32 %v4380, %v4854
      %v4919 = vadd.f32 %v4381, %v4859
      %v4920 = vadd.f32 %v4382, %v4862
      %v4921 = vadd.f32 %v4383, %v4867
      %v4922 = vadd.f32 %v4384, %v4870
      %v4923 = vadd.f32 %v4385, %v4875
      %v4924 = vadd.f32 %v4386, %v4878
      %v4925 = vadd.f32 %v4387, %v4883
      %v4926 = vadd.f32 %v4388, %v4886
      %v4927 = vadd.f32 %v4389, %v4891
      %v4928 = vadd.f32 %v4390, %v4894
      %v4929 = vld [vmem:[%s192 + $0x10] sm:$0xe]
      %v4930 = vmul.bf16 %v4929, %v1977
      %v4931 = vmul.bf16 %v4392, %v1980
      %v4932 = vmul.bf16 %v4393, %v1983
      %v4933 = vmul.bf16 %v4394, %v1986
      %v4934 = vmul.bf16 %v4395, %v1989
      %v4935 = vmul.bf16 %v4396, %v1992
      %v4936 = vmul.bf16 %v4397, %v1995
      %v4937 = vmul.bf16 %v4398, %v1998
      %v4938 = vmul.bf16 %v4399, %v2001
      %v4939 = vmul.bf16 %v4400, %v2004
      %v4940 = vmul.bf16 %v4401, %v2007
      %v4941 = vmul.bf16 %v4402, %v2010
      %v4942 = vmul.bf16 %v4403, %v2013
      %v4943 = vmul.bf16 %v4404, %v2016
      %v4944 = vmul.bf16 %v4405, %v2019
      %v4945 = vmul.bf16 %v4406, %v2022
      %v4946 = vmul.bf16 %v4407, %v2025
      %v4947 = vmul.bf16 %v4408, %v2028
      %v4948 = vmul.bf16 %v4409, %v2031
      %v4949 = vmul.bf16 %v4410, %v2034
      %v4950 = vmul.bf16 %v4411, %v2037
      %v4951 = vmul.bf16 %v4412, %v2040
      %v4952 = vmul.bf16 %v4413, %v2043
      %v4953 = vmul.bf16 %v4414, %v2046
      %v4954 = vmul.bf16 %v4415, %v2049
      %v4955 = vmul.bf16 %v4416, %v2052
      %v4956 = vmul.bf16 %v4417, %v2055
      %v4957 = vmul.bf16 %v4418, %v2058
      %v4958 = vmul.bf16 %v4419, %v2061
      %v4959 = vmul.bf16 %v4420, %v2064
      %v4960 = vmul.bf16 %v4421, %v2067
      %v4961 = vmul.bf16 %v4422, %v2070
      %v4962 = vmul.bf16 %v4423, %v2071
      %s4963 = scalar_lea.vmem %s1, 384
      %v4964 = vld [vmem:[%s4963] sm:$0xf]
      %v4965 = vld [vmem:[%s4963 + $0x4] sm:$0xf]
      %v4966 = vld [vmem:[%s4963 + $0x8] sm:$0xf]
      %v4967 = vld [vmem:[%s4963 + $0xc] sm:$0xf]
      %v4968 = vld [vmem:[%s4963 + $0x10] sm:$0xf]
      %v4969 = vld [vmem:[%s4963 + $0x14] sm:$0xf]
      %v4970 = vld [vmem:[%s4963 + $0x18] sm:$0xf]
      %v4971 = vld [vmem:[%s4963 + $0x1c] sm:$0xf]
      %v4972 = vld [vmem:[%s4963 + $0x20] sm:$0xf]
      %v4973 = vld [vmem:[%s4963 + $0x24] sm:$0xf]
      %v4974 = vld [vmem:[%s4963 + $0x28] sm:$0xf]
      %v4975 = vld [vmem:[%s4963 + $0x2c] sm:$0xf]
      %v5009 = vunpack.c.l.b16 %v4930
      %v5010 = vunpack.c.l.b16 %v4931
      %v5011 = vunpack.c.l.b16 %v4932
      %v5012 = vunpack.c.l.b16 %v4933
      %v5013 = vunpack.c.l.b16 %v4934
      %v5014 = vunpack.c.l.b16 %v4935
      %v5015 = vunpack.c.l.b16 %v4936
      %v5016 = vunpack.c.l.b16 %v4937
      %v5017 = vunpack.c.l.b16 %v4938
      %v5018 = vunpack.c.l.b16 %v4939
      %v5019 = vunpack.c.l.b16 %v4940
      %v5020 = vunpack.c.l.b16 %v4941
      %v5021 = vunpack.c.l.b16 %v4942
      %v5022 = vunpack.c.l.b16 %v4943
      %v5023 = vunpack.c.l.b16 %v4944
      %v5024 = vunpack.c.l.b16 %v4945
      %v5025 = vunpack.c.l.b16 %v4946
      %v5026 = vunpack.c.l.b16 %v4947
      %v5027 = vunpack.c.l.b16 %v4948
      %v5028 = vunpack.c.l.b16 %v4949
      %v5029 = vunpack.c.l.b16 %v4950
      %v5030 = vunpack.c.l.b16 %v4951
      %v5031 = vunpack.c.l.b16 %v4952
      %v5032 = vunpack.c.l.b16 %v4953
      %v5033 = vunpack.c.l.b16 %v4954
      %v5034 = vunpack.c.l.b16 %v4955
      %v5035 = vunpack.c.l.b16 %v4956
      %v5036 = vunpack.c.l.b16 %v4957
      %v5037 = vunpack.c.l.b16 %v4958
      %v5038 = vunpack.c.l.b16 %v4959
      %v5039 = vunpack.c.l.b16 %v4960
      %v5040 = vunpack.c.l.b16 %v4961
      %v5041 = vunpack.c.l.b16 %v4962
      %v5042 = vpack.c.b16 %v5010, %v5009
      %v5043 = vpack.c.b16 %v5012, %v5011
      %v5044 = vpack.c.b16 %v5014, %v5013
      %v5045 = vpack.c.b16 %v5016, %v5015
      %v5046 = vpack.c.b16 %v5018, %v5017
      %v5047 = vpack.c.b16 %v5020, %v5019
      %v5048 = vpack.c.b16 %v5022, %v5021
      %v5049 = vpack.c.b16 %v5024, %v5023
      %v5050 = vpack.c.b16 %v5026, %v5025
      %v5051 = vpack.c.b16 %v5028, %v5027
      %v5052 = vpack.c.b16 %v5030, %v5029
      %v5053 = vpack.c.b16 %v5032, %v5031
      %v5054 = vpack.c.b16 %v5034, %v5033
      %v5055 = vpack.c.b16 %v5036, %v5035
      %v5056 = vpack.c.b16 %v5038, %v5037
      %v5057 = vpack.c.b16 %v5040, %v5039
      %v5058 = vpack.c.b16 %v5041, %v5041
      %v5059 = vrot.slane %v5042, 1
      %v5060 = vrot.slane %v5043, 1
      %v5061 = vsel %vm2234, %v5059, %v5060
      %v5062 = vrot.slane %v5044, 1
      %v5063 = vsel %vm2234, %v5060, %v5062
      %v5064 = vrot.slane %v5045, 1
      %v5065 = vsel %vm2234, %v5062, %v5064
      %v5066 = vrot.slane %v5046, 1
      %v5067 = vsel %vm2234, %v5064, %v5066
      %v5068 = vrot.slane %v5047, 1
      %v5069 = vsel %vm2234, %v5066, %v5068
      %v5070 = vrot.slane %v5048, 1
      %v5071 = vsel %vm2234, %v5068, %v5070
      %v5072 = vrot.slane %v5049, 1
      %v5073 = vsel %vm2234, %v5070, %v5072
      %v5074 = vrot.slane %v5050, 1
      %v5075 = vsel %vm2234, %v5072, %v5074
      %v5076 = vrot.slane %v5051, 1
      %v5077 = vsel %vm2234, %v5074, %v5076
      %v5078 = vrot.slane %v5052, 1
      %v5079 = vsel %vm2234, %v5076, %v5078
      %v5080 = vrot.slane %v5053, 1
      %v5081 = vsel %vm2234, %v5078, %v5080
      %v5082 = vrot.slane %v5054, 1
      %v5083 = vsel %vm2234, %v5080, %v5082
      %v5084 = vrot.slane %v5055, 1
      %v5085 = vsel %vm2234, %v5082, %v5084
      %v5086 = vrot.slane %v5056, 1
      %v5087 = vsel %vm2234, %v5084, %v5086
      %v5088 = vrot.slane %v5057, 1
      %v5089 = vsel %vm2234, %v5086, %v5088
      %v5090 = vrot.slane %v5058, 1
      %v5091 = vsel %vm2234, %v5088, %v5090
      %v5104 = vunpack.c.l.b16 %v4964
      %v5105 = vunpack.c.l.b16 %v4965
      %v5106 = vunpack.c.l.b16 %v4966
      %v5107 = vunpack.c.l.b16 %v4967
      %v5108 = vunpack.c.l.b16 %v4968
      %v5109 = vunpack.c.l.b16 %v4969
      %v5110 = vunpack.c.l.b16 %v4970
      %v5111 = vunpack.c.l.b16 %v4971
      %v5112 = vunpack.c.l.b16 %v4972
      %v5113 = vunpack.c.l.b16 %v4973
      %v5114 = vunpack.c.l.b16 %v4974
      %v5115 = vunpack.c.l.b16 %v4975
      %v5116 = vpack.c.b16 %v5105, %v5104
      %v5117 = vpack.c.b16 %v5107, %v5106
      %v5118 = vpack.c.b16 %v5109, %v5108
      %v5119 = vpack.c.b16 %v5111, %v5110
      %v5120 = vpack.c.b16 %v5113, %v5112
      %v5121 = vpack.c.b16 %v5115, %v5114
      %v5129 = vsel %vm989, %v5061, 0
      %v5132 = vsel %vm989, %v5063, 0
      %v5135 = vsel %vm989, %v5065, 0
      %v5138 = vsel %vm989, %v5067, 0
      %v5141 = vsel %vm989, %v5069, 0
      %v5144 = vsel %vm989, %v5071, 0
      %v5147 = vsel %vm989, %v5073, 0
      %v5150 = vsel %vm989, %v5075, 0
      %v5153 = vsel %vm989, %v5077, 0
      %v5156 = vsel %vm989, %v5079, 0
      %v5159 = vsel %vm989, %v5081, 0
      %v5162 = vsel %vm989, %v5083, 0
      %v5165 = vsel %vm989, %v5085, 0
      %v5168 = vsel %vm989, %v5087, 0
      %v5171 = vsel %vm989, %v5089, 0
      %v5174 = vsel %vm989, %v5091, 0
      %5176 = vmatprep.subr.bf16.mxu0 0
      %5177 = vmatpush1.bf16.msra.mxu0 0
      %5178 = vmatprep.subr.bf16.mxu0 0
      %5179 = vmatpush1.bf16.msra.mxu0 0
      %5180 = vmatprep.subr.bf16.mxu0 0
      %5181 = vmatpush1.bf16.msra.mxu0 %v5121
      %5182 = vmatprep.subr.bf16.mxu0 0
      %5183 = vmatpush1.bf16.msra.mxu0 %v5120
      %5184 = vmatprep.subr.bf16.mxu0 0
      %5185 = vmatpush1.bf16.msra.mxu0 %v5119
      %5186 = vmatprep.subr.bf16.mxu0 0
      %5187 = vmatpush1.bf16.msra.mxu0 %v5118
      %5188 = vmatprep.subr.bf16.mxu0 0
      %5189 = vmatpush1.bf16.msra.mxu0 %v5117
      %5190 = vmatprep.subr.bf16.mxu0 0
      %5191 = vmatpush1.bf16.msra.mxu0 %v5116
      %5192 = vmatprep.subr.bf16.mxu0 0
      %5193 = vmatpush2.bf16.msra.mxu0 0
      %5194 = vmatprep.subr.bf16.mxu0 0
      %5195 = vmatpush2.bf16.msra.mxu0 0
      %5196 = vmatprep.subr.bf16.mxu0 0
      %5197 = vmatpush2.bf16.msra.mxu0 0
      %5198 = vmatprep.subr.bf16.mxu0 0
      %5199 = vmatpush2.bf16.msra.mxu0 0
      %5200 = vmatprep.subr.bf16.mxu0 0
      %5201 = vmatpush2.bf16.msra.mxu0 0
      %5202 = vmatprep.subr.bf16.mxu0 0
      %5203 = vmatpush2.bf16.msra.mxu0 0
      %5204 = vmatprep.subr.bf16.mxu0 0
      %5205 = vmatpush2.bf16.msra.mxu0 0
      %5206 = vmatprep.subr.bf16.mxu0 0
      %5207 = vmatpush2.bf16.msra.mxu0 0
      %5208 = vmatprep.mubr.bf16.mxu0 0
      %5209 = vmatmul.mubr.bf16.gmra.mxu0 %v5129
      %v5210 = vpop.f32.mrf.mxu0
      %v5211 = vadd.f32 0.0, %v5210
      %v5212 = vpop.f32.mrf.mxu0
      %v5213 = vpop.f32.mrf.mxu0
      %v5214 = vadd.f32 0.0, %v5213
      %v5215 = vpop.f32.mrf.mxu0
      %5216 = vmatprep.mubr.bf16.mxu0 0
      %5217 = vmatmul.mubr.bf16.gmra.mxu0 %v5132
      %v5218 = vpop.f32.mrf.mxu0
      %v5219 = vadd.f32 0.0, %v5218
      %v5220 = vpop.f32.mrf.mxu0
      %v5221 = vpop.f32.mrf.mxu0
      %v5222 = vadd.f32 0.0, %v5221
      %v5223 = vpop.f32.mrf.mxu0
      %5224 = vmatprep.mubr.bf16.mxu0 0
      %5225 = vmatmul.mubr.bf16.gmra.mxu0 %v5135
      %v5226 = vpop.f32.mrf.mxu0
      %v5227 = vadd.f32 0.0, %v5226
      %v5228 = vpop.f32.mrf.mxu0
      %v5229 = vpop.f32.mrf.mxu0
      %v5230 = vadd.f32 0.0, %v5229
      %v5231 = vpop.f32.mrf.mxu0
      %5232 = vmatprep.mubr.bf16.mxu0 0
      %5233 = vmatmul.mubr.bf16.gmra.mxu0 %v5138
      %v5234 = vpop.f32.mrf.mxu0
      %v5235 = vadd.f32 0.0, %v5234
      %v5236 = vpop.f32.mrf.mxu0
      %v5237 = vpop.f32.mrf.mxu0
      %v5238 = vadd.f32 0.0, %v5237
      %v5239 = vpop.f32.mrf.mxu0
      %5240 = vmatprep.mubr.bf16.mxu0 0
      %5241 = vmatmul.mubr.bf16.gmra.mxu0 %v5141
      %v5242 = vpop.f32.mrf.mxu0
      %v5243 = vadd.f32 0.0, %v5242
      %v5244 = vpop.f32.mrf.mxu0
      %v5245 = vpop.f32.mrf.mxu0
      %v5246 = vadd.f32 0.0, %v5245
      %v5247 = vpop.f32.mrf.mxu0
      %5248 = vmatprep.mubr.bf16.mxu0 0
      %5249 = vmatmul.mubr.bf16.gmra.mxu0 %v5144
      %v5250 = vpop.f32.mrf.mxu0
      %v5251 = vadd.f32 0.0, %v5250
      %v5252 = vpop.f32.mrf.mxu0
      %v5253 = vpop.f32.mrf.mxu0
      %v5254 = vadd.f32 0.0, %v5253
      %v5255 = vpop.f32.mrf.mxu0
      %5256 = vmatprep.mubr.bf16.mxu0 0
      %5257 = vmatmul.mubr.bf16.gmra.mxu0 %v5147
      %v5258 = vpop.f32.mrf.mxu0
      %v5259 = vadd.f32 0.0, %v5258
      %v5260 = vpop.f32.mrf.mxu0
      %v5261 = vpop.f32.mrf.mxu0
      %v5262 = vadd.f32 0.0, %v5261
      %v5263 = vpop.f32.mrf.mxu0
      %5264 = vmatprep.mubr.bf16.mxu0 0
      %5265 = vmatmul.mubr.bf16.gmra.mxu0 %v5150
      %v5266 = vpop.f32.mrf.mxu0
      %v5267 = vadd.f32 0.0, %v5266
      %v5268 = vpop.f32.mrf.mxu0
      %v5269 = vpop.f32.mrf.mxu0
      %v5270 = vadd.f32 0.0, %v5269
      %v5271 = vpop.f32.mrf.mxu0
      %5272 = vmatprep.mubr.bf16.mxu0 0
      %5273 = vmatmul.mubr.bf16.gmra.mxu0 %v5153
      %v5274 = vpop.f32.mrf.mxu0
      %v5275 = vadd.f32 0.0, %v5274
      %v5276 = vpop.f32.mrf.mxu0
      %v5277 = vpop.f32.mrf.mxu0
      %v5278 = vadd.f32 0.0, %v5277
      %v5279 = vpop.f32.mrf.mxu0
      %5280 = vmatprep.mubr.bf16.mxu0 0
      %5281 = vmatmul.mubr.bf16.gmra.mxu0 %v5156
      %v5282 = vpop.f32.mrf.mxu0
      %v5283 = vadd.f32 0.0, %v5282
      %v5284 = vpop.f32.mrf.mxu0
      %v5285 = vpop.f32.mrf.mxu0
      %v5286 = vadd.f32 0.0, %v5285
      %v5287 = vpop.f32.mrf.mxu0
      %5288 = vmatprep.mubr.bf16.mxu0 0
      %5289 = vmatmul.mubr.bf16.gmra.mxu0 %v5159
      %v5290 = vpop.f32.mrf.mxu0
      %v5291 = vadd.f32 0.0, %v5290
      %v5292 = vpop.f32.mrf.mxu0
      %v5293 = vpop.f32.mrf.mxu0
      %v5294 = vadd.f32 0.0, %v5293
      %v5295 = vpop.f32.mrf.mxu0
      %5296 = vmatprep.mubr.bf16.mxu0 0
      %5297 = vmatmul.mubr.bf16.gmra.mxu0 %v5162
      %v5298 = vpop.f32.mrf.mxu0
      %v5299 = vadd.f32 0.0, %v5298
      %v5300 = vpop.f32.mrf.mxu0
      %v5301 = vpop.f32.mrf.mxu0
      %v5302 = vadd.f32 0.0, %v5301
      %v5303 = vpop.f32.mrf.mxu0
      %5304 = vmatprep.mubr.bf16.mxu0 0
      %5305 = vmatmul.mubr.bf16.gmra.mxu0 %v5165
      %v5306 = vpop.f32.mrf.mxu0
      %v5307 = vadd.f32 0.0, %v5306
      %v5308 = vpop.f32.mrf.mxu0
      %v5309 = vpop.f32.mrf.mxu0
      %v5310 = vadd.f32 0.0, %v5309
      %v5311 = vpop.f32.mrf.mxu0
      %5312 = vmatprep.mubr.bf16.mxu0 0
      %5313 = vmatmul.mubr.bf16.gmra.mxu0 %v5168
      %v5314 = vpop.f32.mrf.mxu0
      %v5315 = vadd.f32 0.0, %v5314
      %v5316 = vpop.f32.mrf.mxu0
      %v5317 = vpop.f32.mrf.mxu0
      %v5318 = vadd.f32 0.0, %v5317
      %v5319 = vpop.f32.mrf.mxu0
      %5320 = vmatprep.mubr.bf16.mxu0 0
      %5321 = vmatmul.mubr.bf16.gmra.mxu0 %v5171
      %v5322 = vpop.f32.mrf.mxu0
      %v5323 = vadd.f32 0.0, %v5322
      %v5324 = vpop.f32.mrf.mxu0
      %v5325 = vpop.f32.mrf.mxu0
      %v5326 = vadd.f32 0.0, %v5325
      %v5327 = vpop.f32.mrf.mxu0
      %5328 = vmatprep.mubr.bf16.mxu0 0
      %5329 = vmatmul.mubr.bf16.gmra.mxu0 %v5174
      %v5330 = vpop.f32.mrf.mxu0
      %v5331 = vadd.f32 0.0, %v5330
      %v5332 = vpop.f32.mrf.mxu0
      %v5333 = vpop.f32.mrf.mxu0
      %v5334 = vadd.f32 0.0, %v5333
      %v5335 = vpop.f32.mrf.mxu0
      %5336 = vdwg.mxu0
      %v5337 = vadd.f32 %v4897, %v5211
      %v5338 = vadd.f32 %v4898, %v5214
      %v5339 = vadd.f32 %v4899, %v5219
      %v5340 = vadd.f32 %v4900, %v5222
      %v5341 = vadd.f32 %v4901, %v5227
      %v5342 = vadd.f32 %v4902, %v5230
      %v5343 = vadd.f32 %v4903, %v5235
      %v5344 = vadd.f32 %v4904, %v5238
      %v5345 = vadd.f32 %v4905, %v5243
      %v5346 = vadd.f32 %v4906, %v5246
      %v5347 = vadd.f32 %v4907, %v5251
      %v5348 = vadd.f32 %v4908, %v5254
      %v5349 = vadd.f32 %v4909, %v5259
      %v5350 = vadd.f32 %v4910, %v5262
      %v5351 = vadd.f32 %v4911, %v5267
      %v5352 = vadd.f32 %v4912, %v5270
      %v5353 = vadd.f32 %v4913, %v5275
      %v5354 = vadd.f32 %v4914, %v5278
      %v5355 = vadd.f32 %v4915, %v5283
      %v5356 = vadd.f32 %v4916, %v5286
      %v5357 = vadd.f32 %v4917, %v5291
      %v5358 = vadd.f32 %v4918, %v5294
      %v5359 = vadd.f32 %v4919, %v5299
      %v5360 = vadd.f32 %v4920, %v5302
      %v5361 = vadd.f32 %v4921, %v5307
      %v5362 = vadd.f32 %v4922, %v5310
      %v5363 = vadd.f32 %v4923, %v5315
      %v5364 = vadd.f32 %v4924, %v5318
      %v5365 = vadd.f32 %v4925, %v5323
      %v5366 = vadd.f32 %v4926, %v5326
      %v5367 = vadd.f32 %v4927, %v5331
      %v5368 = vadd.f32 %v4928, %v5334
      %v5369 = vld [vmem:[%s3] sm:$0x1]
      %v5371 = vlaneseq
      %v5372 = vshrl.u32 %v5371, 7
      %v5373 = vsub.s32 0, %v5372
      %v5374 = vrot.slane %v5369, %v5373
      %v5376 = vadd.f32 %v5337, %v5374
      %v5377 = vadd.f32 %v5338, %v5374
      %v5378 = vadd.f32 %v5339, %v5374
      %v5379 = vadd.f32 %v5340, %v5374
      %v5380 = vadd.f32 %v5341, %v5374
      %v5381 = vadd.f32 %v5342, %v5374
      %v5382 = vadd.f32 %v5343, %v5374
      %v5383 = vadd.f32 %v5344, %v5374
      %v5384 = vadd.f32 %v5345, %v5374
      %v5385 = vadd.f32 %v5346, %v5374
      %v5386 = vadd.f32 %v5347, %v5374
      %v5387 = vadd.f32 %v5348, %v5374
      %v5388 = vadd.f32 %v5349, %v5374
      %v5389 = vadd.f32 %v5350, %v5374
      %v5390 = vadd.f32 %v5351, %v5374
      %v5391 = vadd.f32 %v5352, %v5374
      %v5392 = vadd.f32 %v5353, %v5374
      %v5393 = vadd.f32 %v5354, %v5374
      %v5394 = vadd.f32 %v5355, %v5374
      %v5395 = vadd.f32 %v5356, %v5374
      %v5396 = vadd.f32 %v5357, %v5374
      %v5397 = vadd.f32 %v5358, %v5374
      %v5398 = vadd.f32 %v5359, %v5374
      %v5399 = vadd.f32 %v5360, %v5374
      %v5400 = vadd.f32 %v5361, %v5374
      %v5401 = vadd.f32 %v5362, %v5374
      %v5402 = vadd.f32 %v5363, %v5374
      %v5403 = vadd.f32 %v5364, %v5374
      %v5404 = vadd.f32 %v5365, %v5374
      %v5405 = vadd.f32 %v5366, %v5374
      %v5406 = vadd.f32 %v5367, %v5374
      %v5407 = vadd.f32 %v5368, %v5374
      %vm5408 = vcmask 39936
      %5409 = vst.msk [vmem:[%s197] sm:$0xff] %vm5408, %v5376
      %5410 = vst.msk [vmem:[%s197 + $0x8] sm:$0xff] %vm5408, %v5377
      %5411 = vst.msk [vmem:[%s197 + $0x10] sm:$0xff] %vm5408, %v5378
      %5412 = vst.msk [vmem:[%s197 + $0x18] sm:$0xff] %vm5408, %v5379
      %5413 = vst.msk [vmem:[%s197 + $0x20] sm:$0xff] %vm5408, %v5380
      %5414 = vst.msk [vmem:[%s197 + $0x28] sm:$0xff] %vm5408, %v5381
      %5415 = vst.msk [vmem:[%s197 + $0x30] sm:$0xff] %vm5408, %v5382
      %5416 = vst.msk [vmem:[%s197 + $0x38] sm:$0xff] %vm5408, %v5383
      %5417 = vst.msk [vmem:[%s197 + $0x40] sm:$0xff] %vm5408, %v5384
      %5418 = vst.msk [vmem:[%s197 + $0x48] sm:$0xff] %vm5408, %v5385
      %5419 = vst.msk [vmem:[%s197 + $0x50] sm:$0xff] %vm5408, %v5386
      %5420 = vst.msk [vmem:[%s197 + $0x58] sm:$0xff] %vm5408, %v5387
      %5421 = vst.msk [vmem:[%s197 + $0x60] sm:$0xff] %vm5408, %v5388
      %5422 = vst.msk [vmem:[%s197 + $0x68] sm:$0xff] %vm5408, %v5389
      %5423 = vst.msk [vmem:[%s197 + $0x70] sm:$0xff] %vm5408, %v5390
      %5424 = vst.msk [vmem:[%s197 + $0x78] sm:$0xff] %vm5408, %v5391
      %5425 = vst.msk [vmem:[%s197 + $0x80] sm:$0xff] %vm5408, %v5392
      %5426 = vst.msk [vmem:[%s197 + $0x88] sm:$0xff] %vm5408, %v5393
      %5427 = vst.msk [vmem:[%s197 + $0x90] sm:$0xff] %vm5408, %v5394
      %5428 = vst.msk [vmem:[%s197 + $0x98] sm:$0xff] %vm5408, %v5395
      %5429 = vst.msk [vmem:[%s197 + $0xa0] sm:$0xff] %vm5408, %v5396
      %5430 = vst.msk [vmem:[%s197 + $0xa8] sm:$0xff] %vm5408, %v5397
      %5431 = vst.msk [vmem:[%s197 + $0xb0] sm:$0xff] %vm5408, %v5398
      %5432 = vst.msk [vmem:[%s197 + $0xb8] sm:$0xff] %vm5408, %v5399
      %5433 = vst.msk [vmem:[%s197 + $0xc0] sm:$0xff] %vm5408, %v5400
      %5434 = vst.msk [vmem:[%s197 + $0xc8] sm:$0xff] %vm5408, %v5401
      %5435 = vst.msk [vmem:[%s197 + $0xd0] sm:$0xff] %vm5408, %v5402
      %5436 = vst.msk [vmem:[%s197 + $0xd8] sm:$0xff] %vm5408, %v5403
      %5437 = vst.msk [vmem:[%s197 + $0xe0] sm:$0xff] %vm5408, %v5404
      %5438 = vst.msk [vmem:[%s197 + $0xe8] sm:$0xff] %vm5408, %v5405
      %5439 = vst.msk [vmem:[%s197 + $0xf0] sm:$0xff] %vm5408, %v5406
      %5440 = vst.msk [vmem:[%s197 + $0xf8] sm:$0xff] %vm5408, %v5407
      %p5441 = scmp.lt.s32.totalorder %s15, 1
      %s5442 = scalar_select %p5441, %s15, 1
      %s5443 = smul.addr %s5442, 32
      %s5444 = smul.addr %s5443, 8
      %s5445 = scalar_lea.vmem %s4, %s5444
      // Predicated region
      $region37: #{pspnet_forward.5} parent=35 // pred_check
        %p5446 = pneg %p122
      $region38: #{pspnet_forward.5} parent=35 // pred_check_branch
        %5448 = sbr.rel (%p5446) target = $region40
      $region39: #{pspnet_forward.5} parent=35 // pred_region
        _
      $region40: #{pspnet_forward.5} parent=35 // pred_fallthru
        _
    $region36: #{pspnet_forward.5} parent=5 // pred_fallthru
      _
    %p5449 = scmp.le.s32.totalorder 2, %s10
    // Predicated region
    $region41: #{pspnet_forward.5} parent=5 // pred_check
      %p5450 = pneg %p5449
    $region42: #{pspnet_forward.5} parent=5 // pred_check_branch
      %5452 = sbr.rel (%p5450) target = $region44
    $region43: #{pspnet_forward.5} parent=5 // pred_region
      %s5453 = ssub.s32 %s10, 2
      // Predicated region
      $region45: #{pspnet_forward.5} parent=43 // pred_check
        %p5454 = pneg %p128
      $region46: #{pspnet_forward.5} parent=43 // pred_check_branch
        %5456 = sbr.rel (%p5454) target = $region48
      $region47: #{pspnet_forward.5} parent=43 // pred_region
        %p5457 = scmp.lt.s32.totalorder %s16, 1
        %s5458 = scalar_select %p5457, %s16, 1
        %s5459 = smul.addr %s5458, 32
        %s5460 = smul.addr %s5459, 8
        %s5461 = scalar_lea.vmem %s4, %s5460
      $region48: #{pspnet_forward.5} parent=43 // pred_fallthru
        _
    $region44: #{pspnet_forward.5} parent=5 // pred_fallthru
      _
  $region6: #{pspnet_forward.5} parent=0 // loop_footer
    %s14 = sadd.s32 1, %s10
  $region7: #{pspnet_forward.5} parent=0 // loop_footer_branch
    %9 = sbr.rel target = $region3
  $region8: #{pspnet_forward.5} parent=0 // loop_exit
    _

</llo_original>
